<compile_context>
chip_gen: v7x
topology: tpu7x:2x2x1
jax: 0.10.0
libtpu: 0.0.40
codegen_flags: <defaults>
</compile_context>

<pallas_src>
import numpy as np
import jax
import jax.numpy as jnp
from jax import lax
from jax.experimental import pallas as pl
from jax.experimental.pallas import tpu as pltpu

IMG_SIZE = 12          # img_size passed to EncodeDecode.__init__
C1, C2 = 32, 64        # conv channel counts
HID = 10               # fc2 / LSTM width


# --------------------------- fused Pallas kernel -----------------------------

def fused_encode_decode(patches, dist, kp, *, B, T, K, NPAD, P2):
    """conv1+conv2 -> fc1 -> fc2 -> LSTM -> distance MLP -> cosine -> softmax.

    patches: (P2*NPAD, 25) bf16, rows ordered (conv-output position, image),
             images ordered [time-major sequence | (b,k) neighbors | zero pad].
    dist:    (B, K) float32.
    Returns  (B, K) probabilities (float32).
    """
    R, KK = patches.shape                 # (P2*NPAD, 25)
    H = HID

    def kernel(p_ref, w1_ref, b1_ref, w2_ref, b2_ref, wf1_hbm, bf1_ref,
               wf2_ref, bf2_ref, wx_ref, wh_ref, bl_ref,
               d_ref, dw1_ref, db1_ref, dw2_ref, db2_ref,
               o_ref, z2_ref, feat_ref, wf1_vmem, dma_sem):
        # Start the 1 MiB bf16 fc1-weight DMA so it overlaps the conv matmuls.
        wf1_cp = pltpu.make_async_copy(wf1_hbm, wf1_vmem, dma_sem.at[0])
        wf1_cp.start()

        # conv1 + conv2 as two dense MXU matmuls over all (position, image) rows
        x1 = jnp.maximum(
            jnp.dot(p_ref[...], w1_ref[...], preferred_element_type=jnp.float32)
            + b1_ref[...], 0.0)                                    # (R, 288) f32
        z2_ref[...] = jnp.maximum(
            jnp.dot(x1, w2_ref[...], preferred_element_type=jnp.float32)
            + b2_ref[...], 0.0).astype(jnp.bfloat16)               # (R, 64) bf16

        # (position, channel) -> feature-lane flatten: 64 tiny tile-aligned
        # VMEM copies (ld/st slots are idle here); keeps fc1 as one big matmul.
        for p_ in range(P2):
            feat_ref[:, p_ * C2:(p_ + 1) * C2] = \
                z2_ref[p_ * NPAD:(p_ + 1) * NPAD, :]               # (NPAD, 64)

        wf1_cp.wait()
        h1 = jnp.maximum(
            jnp.dot(feat_ref[...], wf1_vmem[...],
                    preferred_element_type=jnp.float32) + bf1_ref[...], 0.0)
        enc = jnp.maximum(
            jnp.dot(h1, wf2_ref[...], preferred_element_type=jnp.float32)
            + bf2_ref[...], 0.0)                                   # (NPAD, 10)

        # LSTM over the sequence rows (0..B*T-1, time-major); input projection
        # hoisted out of the recurrence (PyTorch gate order i,f,g,o).
        gx = jnp.dot(enc[0:B * T, :], wx_ref[...],
                     preferred_element_type=jnp.float32) + bl_ref[...]  # (B*T, 4H)
        wh = wh_ref[...]
        h = jnp.zeros((B, H), jnp.float32)
        c = jnp.zeros((B, H), jnp.float32)
        for t in range(T):
            gates = gx[t * B:(t + 1) * B, :] + jnp.dot(
                h, wh, preferred_element_type=jnp.float32)
            gi = jax.nn.sigmoid(gates[:, 0:H])
            gf = jax.nn.sigmoid(gates[:, H:2 * H])
            gg = jnp.tanh(gates[:, 2 * H:3 * H])
            go = jax.nn.sigmoid(gates[:, 3 * H:4 * H])
            c = gf * c + gi * gg
            h = go * jnp.tanh(c)

        # neighbor encodings + F.normalize (eps folded into the squared norm)
        y = enc[B * T:B * T + B * K, :]                            # (B*K, 10)
        hn = h * lax.rsqrt(jnp.maximum(jnp.sum(h * h, -1, keepdims=True), 1e-24))
        yn = y * lax.rsqrt(jnp.maximum(jnp.sum(y * y, -1, keepdims=True), 1e-24))

        # per-batch cosine rows (B tiny dot_generals; kept because the VPU
        # variant would need a (B*K,H)->(B,K,H) relayout at these odd shapes)
        rows = []
        for bi in range(B):
            ynb = yn[bi * K:(bi + 1) * K, :]
            rows.append(lax.dot_general(hn[bi:bi + 1, :], ynb,
                                        (((1,), (1,)), ((), ())),
                                        preferred_element_type=jnp.float32))
        sim = jnp.concatenate(rows, axis=0)                        # (B, K)

        # distance MLP, kept in (B, K) layout
        d = d_ref[...]                                             # (B, K)
        hd = jnp.maximum(d[:, :, None] * dw1_ref[...] + db1_ref[...], 0.0)
        dwt = jnp.maximum(jnp.sum(hd * dw2_ref[...], axis=-1) + db2_ref[...], 0.0)

        # weighted softmax over K (denominator reciprocal on the EUP slot)
        z = sim * dwt
        m = jnp.max(z, -1, keepdims=True)
        e = jnp.exp(z - m)
        o_ref[...] = e * pl.reciprocal(jnp.sum(e, -1, keepdims=True), approx=True)

    vm = pl.BlockSpec(memory_space=pltpu.MemorySpace.VMEM)
    in_specs = [vm] * 5 + [pl.BlockSpec(memory_space=pl.ANY)] + [vm] * 11

    return pl.pallas_call(
        kernel,
        out_shape=jax.ShapeDtypeStruct((B, K), jnp.float32),
        in_specs=in_specs,
        out_specs=vm,
        scratch_shapes=[
            pltpu.VMEM((R, C2), jnp.bfloat16),          # conv2 output
            pltpu.VMEM((NPAD, P2 * C2), jnp.bfloat16),  # fc1 input (flattened)
            pltpu.VMEM((P2 * C2, 128), jnp.bfloat16),   # fc1 weight landing buf
            pltpu.SemaphoreType.DMA((1,)),
        ],
    )(patches, kp["w1blk"], kp["b1t"], kp["w2r"], kp["b2r"], kp["wf1"],
      kp["bf1"], kp["wf2"], kp["bf2"], kp["wx"], kp["wh"], kp["bl"],
      dist, kp["dw1t"], kp["db1"], kp["dw2t"], kp["db2"])


# ----------------------------- parameters -----------------------------------

def init_params(key, img_size):
    """Deterministic synthetic params in PyTorch shape conventions."""
    cos = img_size - 4
    F = C2 * cos * cos
    ks = jax.random.split(key, 16)

    def nrm(k, shape, scale):
        return jax.random.normal(k, shape, jnp.float32) * scale

    p = {}
    p["conv1_w"] = nrm(ks[0], (C1, 1, 3, 3), 1.0 / 3.0)
    p["conv1_b"] = nrm(ks[1], (C1,), 0.1)
    p["conv2_w"] = nrm(ks[2], (C2, C1, 3, 3), 1.0 / np.sqrt(9 * C1))
    p["conv2_b"] = nrm(ks[3], (C2,), 0.1)
    p["fc1_w"] = nrm(ks[4], (128, F), 1.0 / np.sqrt(F))
    p["fc1_b"] = nrm(ks[5], (128,), 0.1)
    p["fc2_w"] = nrm(ks[6], (HID, 128), 1.0 / np.sqrt(128))
    p["fc2_b"] = nrm(ks[7], (HID,), 0.1)
    p["w_ih"] = nrm(ks[8], (4 * HID, HID), 1.0 / np.sqrt(HID))
    p["w_hh"] = nrm(ks[9], (4 * HID, HID), 1.0 / np.sqrt(HID))
    p["b_ih"] = nrm(ks[10], (4 * HID,), 0.1)
    p["b_hh"] = nrm(ks[11], (4 * HID,), 0.1)
    p["dfc1_w"] = nrm(ks[12], (64, 1), 1.0)
    p["dfc1_b"] = nrm(ks[13], (64,), 0.1)
    p["dfc2_w"] = nrm(ks[14], (1, 64), 1.0 / 8.0)
    p["dfc2_b"] = nrm(ks[15], (1,), 0.1)
    return p


def kernel_params(p, img_size):
    """Repack torch-convention params into the layouts the fused kernel consumes."""
    cos = img_size - 4
    P2 = cos * cos
    kp = {}

    # --- conv1 as a single dense matmul over 5x5 receptive-field patches -----
    # Probe lax.conv_general_dilated_patches with an index ramp so the tap
    # ordering of the im2col columns is derived, not assumed.
    probe = jnp.arange(img_size * img_size, dtype=jnp.float32).reshape(
        1, 1, img_size, img_size)
    pr = lax.conv_general_dilated_patches(probe, (5, 5), (1, 1), "VALID")
    taps = np.asarray(pr[0, :, 0, 0]).round().astype(int)        # (25,) flat px idx
    w1 = np.asarray(p["conv1_w"][:, 0])                          # (32, 3, 3)
    w1blk = np.zeros((25, 9 * C1), np.float32)
    for f, tflat in enumerate(taps):
        dy, dx = divmod(int(tflat), img_size)
        for a in range(3):
            for b in range(3):
                pp_, qq_ = dy - a, dx - b
                if 0 <= pp_ < 3 and 0 <= qq_ < 3:
                    w1blk[f, (a * 3 + b) * C1:(a * 3 + b + 1) * C1] = w1[:, pp_, qq_]
    kp["w1blk"] = jnp.asarray(w1blk)                              # (25, 288)
    kp["b1t"] = jnp.tile(p["conv1_b"].reshape(1, C1), (1, 9))     # (1, 288)

    # conv2 weight rows ordered (a, b, ci)
    kp["w2r"] = jnp.transpose(p["conv2_w"], (2, 3, 1, 0)).reshape(9 * C1, C2)
    kp["b2r"] = p["conv2_b"].reshape(1, C2)

    # fc1 with feature order (i, j, c); streamed in bf16 (largest HBM read)
    w4 = p["fc1_w"].reshape(128, C2, cos, cos)                    # [out, c, i, j]
    kp["wf1"] = jnp.transpose(w4, (2, 3, 1, 0)).reshape(P2 * C2, 128).astype(
        jnp.bfloat16)                                             # (4096, 128)
    kp["bf1"] = p["fc1_b"].reshape(1, 128)
    kp["wf2"] = p["fc2_w"].T                                      # (128, 10)
    kp["bf2"] = p["fc2_b"].reshape(1, HID)

    # LSTM: input projection hoisted out of the recurrence
    kp["wx"] = p["w_ih"].T                                        # (10, 40)
    kp["wh"] = p["w_hh"].T                                        # (10, 40)
    kp["bl"] = (p["b_ih"] + p["b_hh"]).reshape(1, 4 * HID)

    kp["dw1t"] = p["dfc1_w"].T                                    # (1, 64)
    kp["db1"] = p["dfc1_b"].reshape(1, 64)
    kp["dw2t"] = p["dfc2_w"]                                      # (1, 64)
    kp["db2"] = p["dfc2_b"].reshape(1, 1)
    return kp


# ----------------------------- forward pass ---------------------------------

def encode_decode_forward(kp, img_seq_t, img_tp1, dist_to_neighbors):
    B, T, C, Hh, Ww = img_seq_t.shape
    _, K, _, _, _ = img_tp1.shape
    Ho = Hh - 4
    P2 = Ho * Ho
    N = B * T + B * K
    NPAD = -(-N // 8) * 8        # pad image count to a sublane multiple (16)

    # combined image batch: sequence time-major, then neighbors (b,k), then pad
    x_imgs = jnp.transpose(img_seq_t.reshape(B, T, Hh, Ww), (1, 0, 2, 3)).reshape(
        B * T, Hh, Ww)
    y_imgs = img_tp1.reshape(B * K, Hh, Ww)
    segs = [x_imgs, y_imgs]
    if NPAD > N:
        segs.append(jnp.zeros((NPAD - N, Hh, Ww), jnp.float32))
    imgs = jnp.concatenate(segs, axis=0)[:, None, :, :]            # (NPAD,1,H,W)

    # im2col in one XLA op; rows reordered to (position, image) so the kernel
    # can take tile-aligned row slabs without any in-kernel relayout.
    pt = lax.conv_general_dilated_patches(imgs, (5, 5), (1, 1), "VALID")
    patches = jnp.transpose(pt, (2, 3, 0, 1)).reshape(P2 * NPAD, 25).astype(
        jnp.bfloat16)                                              # (1024, 25)

    probs = fused_encode_decode(patches, dist_to_neighbors, kp,
                                B=B, T=T, K=K, NPAD=NPAD, P2=P2)   # (B, K)
    return probs.reshape(B, 1, K)


# ----------------------- pure-JAX reference (for check) ---------------------

def reference_forward(p, img_seq_t, img_tp1, dist):
    B, T, C, Hh, Ww = img_seq_t.shape
    _, K, _, _, _ = img_tp1.shape

    def conv(x, w, b):
        y = lax.conv_general_dilated(x, w, (1, 1), "VALID",
                                     dimension_numbers=("NCHW", "OIHW", "NCHW"))
        return jax.nn.relu(y + b[None, :, None, None])

    def encode(x):
        n = x.shape[0]
        x = conv(x, p["conv1_w"], p["conv1_b"])
        x = conv(x, p["conv2_w"], p["conv2_b"])
        x = x.reshape(n, -1)
        x = jax.nn.relu(x @ p["fc1_w"].T + p["fc1_b"])
        x = jax.nn.relu(x @ p["fc2_w"].T + p["fc2_b"])
        return x

    x_enc = encode(img_seq_t.reshape(B * T, C, Hh, Ww)).reshape(B, T, HID)
    y_enc = encode(img_tp1.reshape(B * K, C, Hh, Ww)).reshape(B, K, HID)

    h = jnp.zeros((B, HID), jnp.float32)
    c = jnp.zeros((B, HID), jnp.float32)
    bb = p["b_ih"] + p["b_hh"]
    for t in range(T):
        gates = x_enc[:, t, :] @ p["w_ih"].T + h @ p["w_hh"].T + bb
        i = jax.nn.sigmoid(gates[:, :HID])
        f = jax.nn.sigmoid(gates[:, HID:2 * HID])
        g = jnp.tanh(gates[:, 2 * HID:3 * HID])
        o = jax.nn.sigmoid(gates[:, 3 * HID:])
        c = f * c + i * g
        h = o * jnp.tanh(c)
    lstm_out = h

    d = dist.reshape(B * K, 1)
    dwv = jax.nn.relu(d @ p["dfc1_w"].T + p["dfc1_b"])
    dwv = jax.nn.relu(dwv @ p["dfc2_w"].T + p["dfc2_b"]).reshape(B, 1, K)

    def norml(x):
        return x / jnp.maximum(jnp.linalg.norm(x, axis=-1, keepdims=True), 1e-12)

    sim = jnp.einsum("bd,bkd->bk", norml(lstm_out), norml(y_enc))[:, None, :]
    return jax.nn.softmax(sim * dwv, axis=-1)


# --------------------------------- main --------------------------------------

if __name__ == "__main__":
    B, T, K = 2, 4, 3
    H = W = IMG_SIZE

    key = jax.random.PRNGKey(0)
    kparam, kx, kyy, kd = jax.random.split(key, 4)
    p = init_params(kparam, IMG_SIZE)
    kp = kernel_params(p, IMG_SIZE)

    img_seq_t = jax.random.normal(kx, (B, T, 1, H, W), jnp.float32)
    img_tp1 = jax.random.normal(kyy, (B, K, 1, H, W), jnp.float32)
    dist_to_neighbors = jax.random.uniform(kd, (B, K), jnp.float32)

    fwd = jax.jit(lambda a, b, c: encode_decode_forward(kp, a, b, c))
    out = jax.block_until_ready(fwd(img_seq_t, img_tp1, dist_to_neighbors))

    assert out.shape == (B, 1, K)
    assert bool(jnp.all(jnp.isfinite(out)))
    ref = reference_forward(p, img_seq_t, img_tp1, dist_to_neighbors)
    # bf16 streaming of the patches / conv features / fc1 weight (per the perf
    # review) costs a few 1e-3 of absolute accuracy on the output
    # probabilities, so the check tolerance is 1e-2 instead of the f32 5e-3.
    assert jnp.allclose(out, ref, atol=1e-2, rtol=1e-2), (np.asarray(out),
                                                          np.asarray(ref))

    print("KERNEL_OK")
</pallas_src>

<mosaic_0001>
module attributes {stable_mosaic.version = 11 : i64} {
  func.func @kernel(%arg0: memref<1024x25xbf16, #tpu.memory_space<vmem>>, %arg1: memref<25x288xf32, #tpu.memory_space<vmem>>, %arg2: memref<1x288xf32, #tpu.memory_space<vmem>>, %arg3: memref<288x64xf32, #tpu.memory_space<vmem>>, %arg4: memref<1x64xf32, #tpu.memory_space<vmem>>, %arg5: memref<4096x128xbf16, #tpu.memory_space<any>>, %arg6: memref<1x128xf32, #tpu.memory_space<vmem>>, %arg7: memref<128x10xf32, #tpu.memory_space<vmem>>, %arg8: memref<1x10xf32, #tpu.memory_space<vmem>>, %arg9: memref<10x40xf32, #tpu.memory_space<vmem>>, %arg10: memref<10x40xf32, #tpu.memory_space<vmem>>, %arg11: memref<1x40xf32, #tpu.memory_space<vmem>>, %arg12: memref<2x3xf32, #tpu.memory_space<vmem>>, %arg13: memref<1x64xf32, #tpu.memory_space<vmem>>, %arg14: memref<1x64xf32, #tpu.memory_space<vmem>>, %arg15: memref<1x64xf32, #tpu.memory_space<vmem>>, %arg16: memref<1x1xf32, #tpu.memory_space<vmem>>, %arg17: memref<2x3xf32, #tpu.memory_space<vmem>>, %arg18: memref<1024x64xbf16, #tpu.memory_space<vmem>>, %arg19: memref<16x4096xbf16, #tpu.memory_space<vmem>>, %arg20: memref<4096x128xbf16, #tpu.memory_space<vmem>>, %arg21: memref<1x!tpu.dma_semaphore, #tpu.memory_space<semaphore_mem>>) attributes {dimension_semantics = [], scalar_prefetch = 0 : i64, scratch_operands = 4 : i64, tpu.core_type = #tpu.core_type<tc>} {
    %c0_i32 = arith.constant 0 : i32
    %0 = tpu.memref_slice %arg21[%c0_i32] : memref<1x!tpu.dma_semaphore, #tpu.memory_space<semaphore_mem>> -> memref<1x!tpu.dma_semaphore, #tpu.memory_space<semaphore_mem>>
    %1 = tpu.memref_squeeze %0 : memref<1x!tpu.dma_semaphore, #tpu.memory_space<semaphore_mem>> -> memref<!tpu.dma_semaphore, #tpu.memory_space<semaphore_mem>>
    tpu.enqueue_dma source(%arg5 : memref<4096x128xbf16, #tpu.memory_space<any>>) target(%arg20 : memref<4096x128xbf16, #tpu.memory_space<vmem>>) target_semaphore(%1 : memref<!tpu.dma_semaphore, #tpu.memory_space<semaphore_mem>>)
    %c0 = arith.constant 0 : index
    %c0_0 = arith.constant 0 : index
    %2 = vector.load %arg0[%c0, %c0_0] : memref<1024x25xbf16, #tpu.memory_space<vmem>>, vector<1024x25xbf16>
    %c0_1 = arith.constant 0 : index
    %c0_2 = arith.constant 0 : index
    %3 = vector.load %arg1[%c0_1, %c0_2] : memref<25x288xf32, #tpu.memory_space<vmem>>, vector<25x288xf32>
    %cst = arith.constant dense<0.000000e+00> : vector<1024x288xf32>
    %4 = tpu.matmul %2, %3, %cst {dimension_numbers = #tpu.dot_dimension_numbers<[1], [0], [0], [1], [0, 0, 1, 1], [], []>} : vector<1024x25xbf16>, vector<25x288xf32>, vector<1024x288xf32> -> vector<1024x288xf32>
    %c0_3 = arith.constant 0 : index
    %c0_4 = arith.constant 0 : index
    %5 = vector.load %arg2[%c0_3, %c0_4] : memref<1x288xf32, #tpu.memory_space<vmem>>, vector<1x288xf32>
    %6 = vector.broadcast %5 : vector<1x288xf32> to vector<1024x288xf32>
    %7 = arith.addf %4, %6 : vector<1024x288xf32>
    %cst_5 = arith.constant 0.000000e+00 : f32
    %8 = vector.broadcast %cst_5 : f32 to vector<1024x288xf32>
    %9 = arith.maximumf %7, %8 : vector<1024x288xf32>
    %c0_6 = arith.constant 0 : index
    %c0_7 = arith.constant 0 : index
    %10 = vector.load %arg3[%c0_6, %c0_7] : memref<288x64xf32, #tpu.memory_space<vmem>>, vector<288x64xf32>
    %cst_8 = arith.constant dense<0.000000e+00> : vector<1024x64xf32>
    %11 = tpu.matmul %9, %10, %cst_8 {dimension_numbers = #tpu.dot_dimension_numbers<[1], [0], [0], [1], [0, 0, 1, 1], [], []>} : vector<1024x288xf32>, vector<288x64xf32>, vector<1024x64xf32> -> vector<1024x64xf32>
    %c0_9 = arith.constant 0 : index
    %c0_10 = arith.constant 0 : index
    %12 = vector.load %arg4[%c0_9, %c0_10] : memref<1x64xf32, #tpu.memory_space<vmem>>, vector<1x64xf32>
    %13 = vector.broadcast %12 : vector<1x64xf32> to vector<1024x64xf32>
    %14 = arith.addf %11, %13 : vector<1024x64xf32>
    %cst_11 = arith.constant 0.000000e+00 : f32
    %15 = vector.broadcast %cst_11 : f32 to vector<1024x64xf32>
    %16 = arith.maximumf %14, %15 : vector<1024x64xf32>
    %17 = arith.truncf %16 : vector<1024x64xf32> to vector<1024x64xbf16>
    %c0_12 = arith.constant 0 : index
    %c0_13 = arith.constant 0 : index
    %18 = vector.load %arg18[%c0_12, %c0_13] : memref<1024x64xbf16, #tpu.memory_space<vmem>>, vector<1024x64xbf16>
    tpu.vector_store %arg18[%c0_12, %c0_13], %17 {strides = array<i32>} : memref<1024x64xbf16, #tpu.memory_space<vmem>>, vector<1024x64xbf16>,
    %c0_14 = arith.constant 0 : index
    %c0_15 = arith.constant 0 : index
    %19 = vector.load %arg18[%c0_14, %c0_15] : memref<1024x64xbf16, #tpu.memory_space<vmem>>, vector<16x64xbf16>
    %c0_16 = arith.constant 0 : index
    %c0_17 = arith.constant 0 : index
    %20 = vector.load %arg19[%c0_16, %c0_17] : memref<16x4096xbf16, #tpu.memory_space<vmem>>, vector<16x64xbf16>
    tpu.vector_store %arg19[%c0_16, %c0_17], %19 {strides = array<i32>} : memref<16x4096xbf16, #tpu.memory_space<vmem>>, vector<16x64xbf16>,
    %c16 = arith.constant 16 : index
    %c0_18 = arith.constant 0 : index
    %21 = vector.load %arg18[%c16, %c0_18] : memref<1024x64xbf16, #tpu.memory_space<vmem>>, vector<16x64xbf16>
    %c0_19 = arith.constant 0 : index
    %c64 = arith.constant 64 : index
    %22 = vector.load %arg19[%c0_19, %c64] : memref<16x4096xbf16, #tpu.memory_space<vmem>>, vector<16x64xbf16>
    tpu.vector_store %arg19[%c0_19, %c64], %21 {strides = array<i32>} : memref<16x4096xbf16, #tpu.memory_space<vmem>>, vector<16x64xbf16>,
    %c32 = arith.constant 32 : index
    %c0_20 = arith.constant 0 : index
    %23 = vector.load %arg18[%c32, %c0_20] : memref<1024x64xbf16, #tpu.memory_space<vmem>>, vector<16x64xbf16>
    %c0_21 = arith.constant 0 : index
    %c128 = arith.constant 128 : index
    %24 = vector.load %arg19[%c0_21, %c128] : memref<16x4096xbf16, #tpu.memory_space<vmem>>, vector<16x64xbf16>
    tpu.vector_store %arg19[%c0_21, %c128], %23 {strides = array<i32>} : memref<16x4096xbf16, #tpu.memory_space<vmem>>, vector<16x64xbf16>,
    %c48 = arith.constant 48 : index
    %c0_22 = arith.constant 0 : index
    %25 = vector.load %arg18[%c48, %c0_22] : memref<1024x64xbf16, #tpu.memory_space<vmem>>, vector<16x64xbf16>
    %c0_23 = arith.constant 0 : index
    %c192 = arith.constant 192 : index
    %26 = vector.load %arg19[%c0_23, %c192] : memref<16x4096xbf16, #tpu.memory_space<vmem>>, vector<16x64xbf16>
    tpu.vector_store %arg19[%c0_23, %c192], %25 {strides = array<i32>} : memref<16x4096xbf16, #tpu.memory_space<vmem>>, vector<16x64xbf16>,
    %c64_24 = arith.constant 64 : index
    %c0_25 = arith.constant 0 : index
    %27 = vector.load %arg18[%c64_24, %c0_25] : memref<1024x64xbf16, #tpu.memory_space<vmem>>, vector<16x64xbf16>
    %c0_26 = arith.constant 0 : index
    %c256 = arith.constant 256 : index
    %28 = vector.load %arg19[%c0_26, %c256] : memref<16x4096xbf16, #tpu.memory_space<vmem>>, vector<16x64xbf16>
    tpu.vector_store %arg19[%c0_26, %c256], %27 {strides = array<i32>} : memref<16x4096xbf16, #tpu.memory_space<vmem>>, vector<16x64xbf16>,
    %c80 = arith.constant 80 : index
    %c0_27 = arith.constant 0 : index
    %29 = vector.load %arg18[%c80, %c0_27] : memref<1024x64xbf16, #tpu.memory_space<vmem>>, vector<16x64xbf16>
    %c0_28 = arith.constant 0 : index
    %c320 = arith.constant 320 : index
    %30 = vector.load %arg19[%c0_28, %c320] : memref<16x4096xbf16, #tpu.memory_space<vmem>>, vector<16x64xbf16>
    tpu.vector_store %arg19[%c0_28, %c320], %29 {strides = array<i32>} : memref<16x4096xbf16, #tpu.memory_space<vmem>>, vector<16x64xbf16>,
    %c96 = arith.constant 96 : index
    %c0_29 = arith.constant 0 : index
    %31 = vector.load %arg18[%c96, %c0_29] : memref<1024x64xbf16, #tpu.memory_space<vmem>>, vector<16x64xbf16>
    %c0_30 = arith.constant 0 : index
    %c384 = arith.constant 384 : index
    %32 = vector.load %arg19[%c0_30, %c384] : memref<16x4096xbf16, #tpu.memory_space<vmem>>, vector<16x64xbf16>
    tpu.vector_store %arg19[%c0_30, %c384], %31 {strides = array<i32>} : memref<16x4096xbf16, #tpu.memory_space<vmem>>, vector<16x64xbf16>,
    %c112 = arith.constant 112 : index
    %c0_31 = arith.constant 0 : index
    %33 = vector.load %arg18[%c112, %c0_31] : memref<1024x64xbf16, #tpu.memory_space<vmem>>, vector<16x64xbf16>
    %c0_32 = arith.constant 0 : index
    %c448 = arith.constant 448 : index
    %34 = vector.load %arg19[%c0_32, %c448] : memref<16x4096xbf16, #tpu.memory_space<vmem>>, vector<16x64xbf16>
    tpu.vector_store %arg19[%c0_32, %c448], %33 {strides = array<i32>} : memref<16x4096xbf16, #tpu.memory_space<vmem>>, vector<16x64xbf16>,
    %c128_33 = arith.constant 128 : index
    %c0_34 = arith.constant 0 : index
    %35 = vector.load %arg18[%c128_33, %c0_34] : memref<1024x64xbf16, #tpu.memory_space<vmem>>, vector<16x64xbf16>
    %c0_35 = arith.constant 0 : index
    %c512 = arith.constant 512 : index
    %36 = vector.load %arg19[%c0_35, %c512] : memref<16x4096xbf16, #tpu.memory_space<vmem>>, vector<16x64xbf16>
    tpu.vector_store %arg19[%c0_35, %c512], %35 {strides = array<i32>} : memref<16x4096xbf16, #tpu.memory_space<vmem>>, vector<16x64xbf16>,
    %c144 = arith.constant 144 : index
    %c0_36 = arith.constant 0 : index
    %37 = vector.load %arg18[%c144, %c0_36] : memref<1024x64xbf16, #tpu.memory_space<vmem>>, vector<16x64xbf16>
    %c0_37 = arith.constant 0 : index
    %c576 = arith.constant 576 : index
    %38 = vector.load %arg19[%c0_37, %c576] : memref<16x4096xbf16, #tpu.memory_space<vmem>>, vector<16x64xbf16>
    tpu.vector_store %arg19[%c0_37, %c576], %37 {strides = array<i32>} : memref<16x4096xbf16, #tpu.memory_space<vmem>>, vector<16x64xbf16>,
    %c160 = arith.constant 160 : index
    %c0_38 = arith.constant 0 : index
    %39 = vector.load %arg18[%c160, %c0_38] : memref<1024x64xbf16, #tpu.memory_space<vmem>>, vector<16x64xbf16>
    %c0_39 = arith.constant 0 : index
    %c640 = arith.constant 640 : index
    %40 = vector.load %arg19[%c0_39, %c640] : memref<16x4096xbf16, #tpu.memory_space<vmem>>, vector<16x64xbf16>
    tpu.vector_store %arg19[%c0_39, %c640], %39 {strides = array<i32>} : memref<16x4096xbf16, #tpu.memory_space<vmem>>, vector<16x64xbf16>,
    %c176 = arith.constant 176 : index
    %c0_40 = arith.constant 0 : index
    %41 = vector.load %arg18[%c176, %c0_40] : memref<1024x64xbf16, #tpu.memory_space<vmem>>, vector<16x64xbf16>
    %c0_41 = arith.constant 0 : index
    %c704 = arith.constant 704 : index
    %42 = vector.load %arg19[%c0_41, %c704] : memref<16x4096xbf16, #tpu.memory_space<vmem>>, vector<16x64xbf16>
    tpu.vector_store %arg19[%c0_41, %c704], %41 {strides = array<i32>} : memref<16x4096xbf16, #tpu.memory_space<vmem>>, vector<16x64xbf16>,
    %c192_42 = arith.constant 192 : index
    %c0_43 = arith.constant 0 : index
    %43 = vector.load %arg18[%c192_42, %c0_43] : memref<1024x64xbf16, #tpu.memory_space<vmem>>, vector<16x64xbf16>
    %c0_44 = arith.constant 0 : index
    %c768 = arith.constant 768 : index
    %44 = vector.load %arg19[%c0_44, %c768] : memref<16x4096xbf16, #tpu.memory_space<vmem>>, vector<16x64xbf16>
    tpu.vector_store %arg19[%c0_44, %c768], %43 {strides = array<i32>} : memref<16x4096xbf16, #tpu.memory_space<vmem>>, vector<16x64xbf16>,
    %c208 = arith.constant 208 : index
    %c0_45 = arith.constant 0 : index
    %45 = vector.load %arg18[%c208, %c0_45] : memref<1024x64xbf16, #tpu.memory_space<vmem>>, vector<16x64xbf16>
    %c0_46 = arith.constant 0 : index
    %c832 = arith.constant 832 : index
    %46 = vector.load %arg19[%c0_46, %c832] : memref<16x4096xbf16, #tpu.memory_space<vmem>>, vector<16x64xbf16>
    tpu.vector_store %arg19[%c0_46, %c832], %45 {strides = array<i32>} : memref<16x4096xbf16, #tpu.memory_space<vmem>>, vector<16x64xbf16>,
    %c224 = arith.constant 224 : index
    %c0_47 = arith.constant 0 : index
    %47 = vector.load %arg18[%c224, %c0_47] : memref<1024x64xbf16, #tpu.memory_space<vmem>>, vector<16x64xbf16>
    %c0_48 = arith.constant 0 : index
    %c896 = arith.constant 896 : index
    %48 = vector.load %arg19[%c0_48, %c896] : memref<16x4096xbf16, #tpu.memory_space<vmem>>, vector<16x64xbf16>
    tpu.vector_store %arg19[%c0_48, %c896], %47 {strides = array<i32>} : memref<16x4096xbf16, #tpu.memory_space<vmem>>, vector<16x64xbf16>,
    %c240 = arith.constant 240 : index
    %c0_49 = arith.constant 0 : index
    %49 = vector.load %arg18[%c240, %c0_49] : memref<1024x64xbf16, #tpu.memory_space<vmem>>, vector<16x64xbf16>
    %c0_50 = arith.constant 0 : index
    %c960 = arith.constant 960 : index
    %50 = vector.load %arg19[%c0_50, %c960] : memref<16x4096xbf16, #tpu.memory_space<vmem>>, vector<16x64xbf16>
    tpu.vector_store %arg19[%c0_50, %c960], %49 {strides = array<i32>} : memref<16x4096xbf16, #tpu.memory_space<vmem>>, vector<16x64xbf16>,
    %c256_51 = arith.constant 256 : index
    %c0_52 = arith.constant 0 : index
    %51 = vector.load %arg18[%c256_51, %c0_52] : memref<1024x64xbf16, #tpu.memory_space<vmem>>, vector<16x64xbf16>
    %c0_53 = arith.constant 0 : index
    %c1024 = arith.constant 1024 : index
    %52 = vector.load %arg19[%c0_53, %c1024] : memref<16x4096xbf16, #tpu.memory_space<vmem>>, vector<16x64xbf16>
    tpu.vector_store %arg19[%c0_53, %c1024], %51 {strides = array<i32>} : memref<16x4096xbf16, #tpu.memory_space<vmem>>, vector<16x64xbf16>,
    %c272 = arith.constant 272 : index
    %c0_54 = arith.constant 0 : index
    %53 = vector.load %arg18[%c272, %c0_54] : memref<1024x64xbf16, #tpu.memory_space<vmem>>, vector<16x64xbf16>
    %c0_55 = arith.constant 0 : index
    %c1088 = arith.constant 1088 : index
    %54 = vector.load %arg19[%c0_55, %c1088] : memref<16x4096xbf16, #tpu.memory_space<vmem>>, vector<16x64xbf16>
    tpu.vector_store %arg19[%c0_55, %c1088], %53 {strides = array<i32>} : memref<16x4096xbf16, #tpu.memory_space<vmem>>, vector<16x64xbf16>,
    %c288 = arith.constant 288 : index
    %c0_56 = arith.constant 0 : index
    %55 = vector.load %arg18[%c288, %c0_56] : memref<1024x64xbf16, #tpu.memory_space<vmem>>, vector<16x64xbf16>
    %c0_57 = arith.constant 0 : index
    %c1152 = arith.constant 1152 : index
    %56 = vector.load %arg19[%c0_57, %c1152] : memref<16x4096xbf16, #tpu.memory_space<vmem>>, vector<16x64xbf16>
    tpu.vector_store %arg19[%c0_57, %c1152], %55 {strides = array<i32>} : memref<16x4096xbf16, #tpu.memory_space<vmem>>, vector<16x64xbf16>,
    %c304 = arith.constant 304 : index
    %c0_58 = arith.constant 0 : index
    %57 = vector.load %arg18[%c304, %c0_58] : memref<1024x64xbf16, #tpu.memory_space<vmem>>, vector<16x64xbf16>
    %c0_59 = arith.constant 0 : index
    %c1216 = arith.constant 1216 : index
    %58 = vector.load %arg19[%c0_59, %c1216] : memref<16x4096xbf16, #tpu.memory_space<vmem>>, vector<16x64xbf16>
    tpu.vector_store %arg19[%c0_59, %c1216], %57 {strides = array<i32>} : memref<16x4096xbf16, #tpu.memory_space<vmem>>, vector<16x64xbf16>,
    %c320_60 = arith.constant 320 : index
    %c0_61 = arith.constant 0 : index
    %59 = vector.load %arg18[%c320_60, %c0_61] : memref<1024x64xbf16, #tpu.memory_space<vmem>>, vector<16x64xbf16>
    %c0_62 = arith.constant 0 : index
    %c1280 = arith.constant 1280 : index
    %60 = vector.load %arg19[%c0_62, %c1280] : memref<16x4096xbf16, #tpu.memory_space<vmem>>, vector<16x64xbf16>
    tpu.vector_store %arg19[%c0_62, %c1280], %59 {strides = array<i32>} : memref<16x4096xbf16, #tpu.memory_space<vmem>>, vector<16x64xbf16>,
    %c336 = arith.constant 336 : index
    %c0_63 = arith.constant 0 : index
    %61 = vector.load %arg18[%c336, %c0_63] : memref<1024x64xbf16, #tpu.memory_space<vmem>>, vector<16x64xbf16>
    %c0_64 = arith.constant 0 : index
    %c1344 = arith.constant 1344 : index
    %62 = vector.load %arg19[%c0_64, %c1344] : memref<16x4096xbf16, #tpu.memory_space<vmem>>, vector<16x64xbf16>
    tpu.vector_store %arg19[%c0_64, %c1344], %61 {strides = array<i32>} : memref<16x4096xbf16, #tpu.memory_space<vmem>>, vector<16x64xbf16>,
    %c352 = arith.constant 352 : index
    %c0_65 = arith.constant 0 : index
    %63 = vector.load %arg18[%c352, %c0_65] : memref<1024x64xbf16, #tpu.memory_space<vmem>>, vector<16x64xbf16>
    %c0_66 = arith.constant 0 : index
    %c1408 = arith.constant 1408 : index
    %64 = vector.load %arg19[%c0_66, %c1408] : memref<16x4096xbf16, #tpu.memory_space<vmem>>, vector<16x64xbf16>
    tpu.vector_store %arg19[%c0_66, %c1408], %63 {strides = array<i32>} : memref<16x4096xbf16, #tpu.memory_space<vmem>>, vector<16x64xbf16>,
    %c368 = arith.constant 368 : index
    %c0_67 = arith.constant 0 : index
    %65 = vector.load %arg18[%c368, %c0_67] : memref<1024x64xbf16, #tpu.memory_space<vmem>>, vector<16x64xbf16>
    %c0_68 = arith.constant 0 : index
    %c1472 = arith.constant 1472 : index
    %66 = vector.load %arg19[%c0_68, %c1472] : memref<16x4096xbf16, #tpu.memory_space<vmem>>, vector<16x64xbf16>
    tpu.vector_store %arg19[%c0_68, %c1472], %65 {strides = array<i32>} : memref<16x4096xbf16, #tpu.memory_space<vmem>>, vector<16x64xbf16>,
    %c384_69 = arith.constant 384 : index
    %c0_70 = arith.constant 0 : index
    %67 = vector.load %arg18[%c384_69, %c0_70] : memref<1024x64xbf16, #tpu.memory_space<vmem>>, vector<16x64xbf16>
    %c0_71 = arith.constant 0 : index
    %c1536 = arith.constant 1536 : index
    %68 = vector.load %arg19[%c0_71, %c1536] : memref<16x4096xbf16, #tpu.memory_space<vmem>>, vector<16x64xbf16>
    tpu.vector_store %arg19[%c0_71, %c1536], %67 {strides = array<i32>} : memref<16x4096xbf16, #tpu.memory_space<vmem>>, vector<16x64xbf16>,
    %c400 = arith.constant 400 : index
    %c0_72 = arith.constant 0 : index
    %69 = vector.load %arg18[%c400, %c0_72] : memref<1024x64xbf16, #tpu.memory_space<vmem>>, vector<16x64xbf16>
    %c0_73 = arith.constant 0 : index
    %c1600 = arith.constant 1600 : index
    %70 = vector.load %arg19[%c0_73, %c1600] : memref<16x4096xbf16, #tpu.memory_space<vmem>>, vector<16x64xbf16>
    tpu.vector_store %arg19[%c0_73, %c1600], %69 {strides = array<i32>} : memref<16x4096xbf16, #tpu.memory_space<vmem>>, vector<16x64xbf16>,
    %c416 = arith.constant 416 : index
    %c0_74 = arith.constant 0 : index
    %71 = vector.load %arg18[%c416, %c0_74] : memref<1024x64xbf16, #tpu.memory_space<vmem>>, vector<16x64xbf16>
    %c0_75 = arith.constant 0 : index
    %c1664 = arith.constant 1664 : index
    %72 = vector.load %arg19[%c0_75, %c1664] : memref<16x4096xbf16, #tpu.memory_space<vmem>>, vector<16x64xbf16>
    tpu.vector_store %arg19[%c0_75, %c1664], %71 {strides = array<i32>} : memref<16x4096xbf16, #tpu.memory_space<vmem>>, vector<16x64xbf16>,
    %c432 = arith.constant 432 : index
    %c0_76 = arith.constant 0 : index
    %73 = vector.load %arg18[%c432, %c0_76] : memref<1024x64xbf16, #tpu.memory_space<vmem>>, vector<16x64xbf16>
    %c0_77 = arith.constant 0 : index
    %c1728 = arith.constant 1728 : index
    %74 = vector.load %arg19[%c0_77, %c1728] : memref<16x4096xbf16, #tpu.memory_space<vmem>>, vector<16x64xbf16>
    tpu.vector_store %arg19[%c0_77, %c1728], %73 {strides = array<i32>} : memref<16x4096xbf16, #tpu.memory_space<vmem>>, vector<16x64xbf16>,
    %c448_78 = arith.constant 448 : index
    %c0_79 = arith.constant 0 : index
    %75 = vector.load %arg18[%c448_78, %c0_79] : memref<1024x64xbf16, #tpu.memory_space<vmem>>, vector<16x64xbf16>
    %c0_80 = arith.constant 0 : index
    %c1792 = arith.constant 1792 : index
    %76 = vector.load %arg19[%c0_80, %c1792] : memref<16x4096xbf16, #tpu.memory_space<vmem>>, vector<16x64xbf16>
    tpu.vector_store %arg19[%c0_80, %c1792], %75 {strides = array<i32>} : memref<16x4096xbf16, #tpu.memory_space<vmem>>, vector<16x64xbf16>,
    %c464 = arith.constant 464 : index
    %c0_81 = arith.constant 0 : index
    %77 = vector.load %arg18[%c464, %c0_81] : memref<1024x64xbf16, #tpu.memory_space<vmem>>, vector<16x64xbf16>
    %c0_82 = arith.constant 0 : index
    %c1856 = arith.constant 1856 : index
    %78 = vector.load %arg19[%c0_82, %c1856] : memref<16x4096xbf16, #tpu.memory_space<vmem>>, vector<16x64xbf16>
    tpu.vector_store %arg19[%c0_82, %c1856], %77 {strides = array<i32>} : memref<16x4096xbf16, #tpu.memory_space<vmem>>, vector<16x64xbf16>,
    %c480 = arith.constant 480 : index
    %c0_83 = arith.constant 0 : index
    %79 = vector.load %arg18[%c480, %c0_83] : memref<1024x64xbf16, #tpu.memory_space<vmem>>, vector<16x64xbf16>
    %c0_84 = arith.constant 0 : index
    %c1920 = arith.constant 1920 : index
    %80 = vector.load %arg19[%c0_84, %c1920] : memref<16x4096xbf16, #tpu.memory_space<vmem>>, vector<16x64xbf16>
    tpu.vector_store %arg19[%c0_84, %c1920], %79 {strides = array<i32>} : memref<16x4096xbf16, #tpu.memory_space<vmem>>, vector<16x64xbf16>,
    %c496 = arith.constant 496 : index
    %c0_85 = arith.constant 0 : index
    %81 = vector.load %arg18[%c496, %c0_85] : memref<1024x64xbf16, #tpu.memory_space<vmem>>, vector<16x64xbf16>
    %c0_86 = arith.constant 0 : index
    %c1984 = arith.constant 1984 : index
    %82 = vector.load %arg19[%c0_86, %c1984] : memref<16x4096xbf16, #tpu.memory_space<vmem>>, vector<16x64xbf16>
    tpu.vector_store %arg19[%c0_86, %c1984], %81 {strides = array<i32>} : memref<16x4096xbf16, #tpu.memory_space<vmem>>, vector<16x64xbf16>,
    %c512_87 = arith.constant 512 : index
    %c0_88 = arith.constant 0 : index
    %83 = vector.load %arg18[%c512_87, %c0_88] : memref<1024x64xbf16, #tpu.memory_space<vmem>>, vector<16x64xbf16>
    %c0_89 = arith.constant 0 : index
    %c2048 = arith.constant 2048 : index
    %84 = vector.load %arg19[%c0_89, %c2048] : memref<16x4096xbf16, #tpu.memory_space<vmem>>, vector<16x64xbf16>
    tpu.vector_store %arg19[%c0_89, %c2048], %83 {strides = array<i32>} : memref<16x4096xbf16, #tpu.memory_space<vmem>>, vector<16x64xbf16>,
    %c528 = arith.constant 528 : index
    %c0_90 = arith.constant 0 : index
    %85 = vector.load %arg18[%c528, %c0_90] : memref<1024x64xbf16, #tpu.memory_space<vmem>>, vector<16x64xbf16>
    %c0_91 = arith.constant 0 : index
    %c2112 = arith.constant 2112 : index
    %86 = vector.load %arg19[%c0_91, %c2112] : memref<16x4096xbf16, #tpu.memory_space<vmem>>, vector<16x64xbf16>
    tpu.vector_store %arg19[%c0_91, %c2112], %85 {strides = array<i32>} : memref<16x4096xbf16, #tpu.memory_space<vmem>>, vector<16x64xbf16>,
    %c544 = arith.constant 544 : index
    %c0_92 = arith.constant 0 : index
    %87 = vector.load %arg18[%c544, %c0_92] : memref<1024x64xbf16, #tpu.memory_space<vmem>>, vector<16x64xbf16>
    %c0_93 = arith.constant 0 : index
    %c2176 = arith.constant 2176 : index
    %88 = vector.load %arg19[%c0_93, %c2176] : memref<16x4096xbf16, #tpu.memory_space<vmem>>, vector<16x64xbf16>
    tpu.vector_store %arg19[%c0_93, %c2176], %87 {strides = array<i32>} : memref<16x4096xbf16, #tpu.memory_space<vmem>>, vector<16x64xbf16>,
    %c560 = arith.constant 560 : index
    %c0_94 = arith.constant 0 : index
    %89 = vector.load %arg18[%c560, %c0_94] : memref<1024x64xbf16, #tpu.memory_space<vmem>>, vector<16x64xbf16>
    %c0_95 = arith.constant 0 : index
    %c2240 = arith.constant 2240 : index
    %90 = vector.load %arg19[%c0_95, %c2240] : memref<16x4096xbf16, #tpu.memory_space<vmem>>, vector<16x64xbf16>
    tpu.vector_store %arg19[%c0_95, %c2240], %89 {strides = array<i32>} : memref<16x4096xbf16, #tpu.memory_space<vmem>>, vector<16x64xbf16>,
    %c576_96 = arith.constant 576 : index
    %c0_97 = arith.constant 0 : index
    %91 = vector.load %arg18[%c576_96, %c0_97] : memref<1024x64xbf16, #tpu.memory_space<vmem>>, vector<16x64xbf16>
    %c0_98 = arith.constant 0 : index
    %c2304 = arith.constant 2304 : index
    %92 = vector.load %arg19[%c0_98, %c2304] : memref<16x4096xbf16, #tpu.memory_space<vmem>>, vector<16x64xbf16>
    tpu.vector_store %arg19[%c0_98, %c2304], %91 {strides = array<i32>} : memref<16x4096xbf16, #tpu.memory_space<vmem>>, vector<16x64xbf16>,
    %c592 = arith.constant 592 : index
    %c0_99 = arith.constant 0 : index
    %93 = vector.load %arg18[%c592, %c0_99] : memref<1024x64xbf16, #tpu.memory_space<vmem>>, vector<16x64xbf16>
    %c0_100 = arith.constant 0 : index
    %c2368 = arith.constant 2368 : index
    %94 = vector.load %arg19[%c0_100, %c2368] : memref<16x4096xbf16, #tpu.memory_space<vmem>>, vector<16x64xbf16>
    tpu.vector_store %arg19[%c0_100, %c2368], %93 {strides = array<i32>} : memref<16x4096xbf16, #tpu.memory_space<vmem>>, vector<16x64xbf16>,
    %c608 = arith.constant 608 : index
    %c0_101 = arith.constant 0 : index
    %95 = vector.load %arg18[%c608, %c0_101] : memref<1024x64xbf16, #tpu.memory_space<vmem>>, vector<16x64xbf16>
    %c0_102 = arith.constant 0 : index
    %c2432 = arith.constant 2432 : index
    %96 = vector.load %arg19[%c0_102, %c2432] : memref<16x4096xbf16, #tpu.memory_space<vmem>>, vector<16x64xbf16>
    tpu.vector_store %arg19[%c0_102, %c2432], %95 {strides = array<i32>} : memref<16x4096xbf16, #tpu.memory_space<vmem>>, vector<16x64xbf16>,
    %c624 = arith.constant 624 : index
    %c0_103 = arith.constant 0 : index
    %97 = vector.load %arg18[%c624, %c0_103] : memref<1024x64xbf16, #tpu.memory_space<vmem>>, vector<16x64xbf16>
    %c0_104 = arith.constant 0 : index
    %c2496 = arith.constant 2496 : index
    %98 = vector.load %arg19[%c0_104, %c2496] : memref<16x4096xbf16, #tpu.memory_space<vmem>>, vector<16x64xbf16>
    tpu.vector_store %arg19[%c0_104, %c2496], %97 {strides = array<i32>} : memref<16x4096xbf16, #tpu.memory_space<vmem>>, vector<16x64xbf16>,
    %c640_105 = arith.constant 640 : index
    %c0_106 = arith.constant 0 : index
    %99 = vector.load %arg18[%c640_105, %c0_106] : memref<1024x64xbf16, #tpu.memory_space<vmem>>, vector<16x64xbf16>
    %c0_107 = arith.constant 0 : index
    %c2560 = arith.constant 2560 : index
    %100 = vector.load %arg19[%c0_107, %c2560] : memref<16x4096xbf16, #tpu.memory_space<vmem>>, vector<16x64xbf16>
    tpu.vector_store %arg19[%c0_107, %c2560], %99 {strides = array<i32>} : memref<16x4096xbf16, #tpu.memory_space<vmem>>, vector<16x64xbf16>,
    %c656 = arith.constant 656 : index
    %c0_108 = arith.constant 0 : index
    %101 = vector.load %arg18[%c656, %c0_108] : memref<1024x64xbf16, #tpu.memory_space<vmem>>, vector<16x64xbf16>
    %c0_109 = arith.constant 0 : index
    %c2624 = arith.constant 2624 : index
    %102 = vector.load %arg19[%c0_109, %c2624] : memref<16x4096xbf16, #tpu.memory_space<vmem>>, vector<16x64xbf16>
    tpu.vector_store %arg19[%c0_109, %c2624], %101 {strides = array<i32>} : memref<16x4096xbf16, #tpu.memory_space<vmem>>, vector<16x64xbf16>,
    %c672 = arith.constant 672 : index
    %c0_110 = arith.constant 0 : index
    %103 = vector.load %arg18[%c672, %c0_110] : memref<1024x64xbf16, #tpu.memory_space<vmem>>, vector<16x64xbf16>
    %c0_111 = arith.constant 0 : index
    %c2688 = arith.constant 2688 : index
    %104 = vector.load %arg19[%c0_111, %c2688] : memref<16x4096xbf16, #tpu.memory_space<vmem>>, vector<16x64xbf16>
    tpu.vector_store %arg19[%c0_111, %c2688], %103 {strides = array<i32>} : memref<16x4096xbf16, #tpu.memory_space<vmem>>, vector<16x64xbf16>,
    %c688 = arith.constant 688 : index
    %c0_112 = arith.constant 0 : index
    %105 = vector.load %arg18[%c688, %c0_112] : memref<1024x64xbf16, #tpu.memory_space<vmem>>, vector<16x64xbf16>
    %c0_113 = arith.constant 0 : index
    %c2752 = arith.constant 2752 : index
    %106 = vector.load %arg19[%c0_113, %c2752] : memref<16x4096xbf16, #tpu.memory_space<vmem>>, vector<16x64xbf16>
    tpu.vector_store %arg19[%c0_113, %c2752], %105 {strides = array<i32>} : memref<16x4096xbf16, #tpu.memory_space<vmem>>, vector<16x64xbf16>,
    %c704_114 = arith.constant 704 : index
    %c0_115 = arith.constant 0 : index
    %107 = vector.load %arg18[%c704_114, %c0_115] : memref<1024x64xbf16, #tpu.memory_space<vmem>>, vector<16x64xbf16>
    %c0_116 = arith.constant 0 : index
    %c2816 = arith.constant 2816 : index
    %108 = vector.load %arg19[%c0_116, %c2816] : memref<16x4096xbf16, #tpu.memory_space<vmem>>, vector<16x64xbf16>
    tpu.vector_store %arg19[%c0_116, %c2816], %107 {strides = array<i32>} : memref<16x4096xbf16, #tpu.memory_space<vmem>>, vector<16x64xbf16>,
    %c720 = arith.constant 720 : index
    %c0_117 = arith.constant 0 : index
    %109 = vector.load %arg18[%c720, %c0_117] : memref<1024x64xbf16, #tpu.memory_space<vmem>>, vector<16x64xbf16>
    %c0_118 = arith.constant 0 : index
    %c2880 = arith.constant 2880 : index
    %110 = vector.load %arg19[%c0_118, %c2880] : memref<16x4096xbf16, #tpu.memory_space<vmem>>, vector<16x64xbf16>
    tpu.vector_store %arg19[%c0_118, %c2880], %109 {strides = array<i32>} : memref<16x4096xbf16, #tpu.memory_space<vmem>>, vector<16x64xbf16>,
    %c736 = arith.constant 736 : index
    %c0_119 = arith.constant 0 : index
    %111 = vector.load %arg18[%c736, %c0_119] : memref<1024x64xbf16, #tpu.memory_space<vmem>>, vector<16x64xbf16>
    %c0_120 = arith.constant 0 : index
    %c2944 = arith.constant 2944 : index
    %112 = vector.load %arg19[%c0_120, %c2944] : memref<16x4096xbf16, #tpu.memory_space<vmem>>, vector<16x64xbf16>
    tpu.vector_store %arg19[%c0_120, %c2944], %111 {strides = array<i32>} : memref<16x4096xbf16, #tpu.memory_space<vmem>>, vector<16x64xbf16>,
    %c752 = arith.constant 752 : index
    %c0_121 = arith.constant 0 : index
    %113 = vector.load %arg18[%c752, %c0_121] : memref<1024x64xbf16, #tpu.memory_space<vmem>>, vector<16x64xbf16>
    %c0_122 = arith.constant 0 : index
    %c3008 = arith.constant 3008 : index
    %114 = vector.load %arg19[%c0_122, %c3008] : memref<16x4096xbf16, #tpu.memory_space<vmem>>, vector<16x64xbf16>
    tpu.vector_store %arg19[%c0_122, %c3008], %113 {strides = array<i32>} : memref<16x4096xbf16, #tpu.memory_space<vmem>>, vector<16x64xbf16>,
    %c768_123 = arith.constant 768 : index
    %c0_124 = arith.constant 0 : index
    %115 = vector.load %arg18[%c768_123, %c0_124] : memref<1024x64xbf16, #tpu.memory_space<vmem>>, vector<16x64xbf16>
    %c0_125 = arith.constant 0 : index
    %c3072 = arith.constant 3072 : index
    %116 = vector.load %arg19[%c0_125, %c3072] : memref<16x4096xbf16, #tpu.memory_space<vmem>>, vector<16x64xbf16>
    tpu.vector_store %arg19[%c0_125, %c3072], %115 {strides = array<i32>} : memref<16x4096xbf16, #tpu.memory_space<vmem>>, vector<16x64xbf16>,
    %c784 = arith.constant 784 : index
    %c0_126 = arith.constant 0 : index
    %117 = vector.load %arg18[%c784, %c0_126] : memref<1024x64xbf16, #tpu.memory_space<vmem>>, vector<16x64xbf16>
    %c0_127 = arith.constant 0 : index
    %c3136 = arith.constant 3136 : index
    %118 = vector.load %arg19[%c0_127, %c3136] : memref<16x4096xbf16, #tpu.memory_space<vmem>>, vector<16x64xbf16>
    tpu.vector_store %arg19[%c0_127, %c3136], %117 {strides = array<i32>} : memref<16x4096xbf16, #tpu.memory_space<vmem>>, vector<16x64xbf16>,
    %c800 = arith.constant 800 : index
    %c0_128 = arith.constant 0 : index
    %119 = vector.load %arg18[%c800, %c0_128] : memref<1024x64xbf16, #tpu.memory_space<vmem>>, vector<16x64xbf16>
    %c0_129 = arith.constant 0 : index
    %c3200 = arith.constant 3200 : index
    %120 = vector.load %arg19[%c0_129, %c3200] : memref<16x4096xbf16, #tpu.memory_space<vmem>>, vector<16x64xbf16>
    tpu.vector_store %arg19[%c0_129, %c3200], %119 {strides = array<i32>} : memref<16x4096xbf16, #tpu.memory_space<vmem>>, vector<16x64xbf16>,
    %c816 = arith.constant 816 : index
    %c0_130 = arith.constant 0 : index
    %121 = vector.load %arg18[%c816, %c0_130] : memref<1024x64xbf16, #tpu.memory_space<vmem>>, vector<16x64xbf16>
    %c0_131 = arith.constant 0 : index
    %c3264 = arith.constant 3264 : index
    %122 = vector.load %arg19[%c0_131, %c3264] : memref<16x4096xbf16, #tpu.memory_space<vmem>>, vector<16x64xbf16>
    tpu.vector_store %arg19[%c0_131, %c3264], %121 {strides = array<i32>} : memref<16x4096xbf16, #tpu.memory_space<vmem>>, vector<16x64xbf16>,
    %c832_132 = arith.constant 832 : index
    %c0_133 = arith.constant 0 : index
    %123 = vector.load %arg18[%c832_132, %c0_133] : memref<1024x64xbf16, #tpu.memory_space<vmem>>, vector<16x64xbf16>
    %c0_134 = arith.constant 0 : index
    %c3328 = arith.constant 3328 : index
    %124 = vector.load %arg19[%c0_134, %c3328] : memref<16x4096xbf16, #tpu.memory_space<vmem>>, vector<16x64xbf16>
    tpu.vector_store %arg19[%c0_134, %c3328], %123 {strides = array<i32>} : memref<16x4096xbf16, #tpu.memory_space<vmem>>, vector<16x64xbf16>,
    %c848 = arith.constant 848 : index
    %c0_135 = arith.constant 0 : index
    %125 = vector.load %arg18[%c848, %c0_135] : memref<1024x64xbf16, #tpu.memory_space<vmem>>, vector<16x64xbf16>
    %c0_136 = arith.constant 0 : index
    %c3392 = arith.constant 3392 : index
    %126 = vector.load %arg19[%c0_136, %c3392] : memref<16x4096xbf16, #tpu.memory_space<vmem>>, vector<16x64xbf16>
    tpu.vector_store %arg19[%c0_136, %c3392], %125 {strides = array<i32>} : memref<16x4096xbf16, #tpu.memory_space<vmem>>, vector<16x64xbf16>,
    %c864 = arith.constant 864 : index
    %c0_137 = arith.constant 0 : index
    %127 = vector.load %arg18[%c864, %c0_137] : memref<1024x64xbf16, #tpu.memory_space<vmem>>, vector<16x64xbf16>
    %c0_138 = arith.constant 0 : index
    %c3456 = arith.constant 3456 : index
    %128 = vector.load %arg19[%c0_138, %c3456] : memref<16x4096xbf16, #tpu.memory_space<vmem>>, vector<16x64xbf16>
    tpu.vector_store %arg19[%c0_138, %c3456], %127 {strides = array<i32>} : memref<16x4096xbf16, #tpu.memory_space<vmem>>, vector<16x64xbf16>,
    %c880 = arith.constant 880 : index
    %c0_139 = arith.constant 0 : index
    %129 = vector.load %arg18[%c880, %c0_139] : memref<1024x64xbf16, #tpu.memory_space<vmem>>, vector<16x64xbf16>
    %c0_140 = arith.constant 0 : index
    %c3520 = arith.constant 3520 : index
    %130 = vector.load %arg19[%c0_140, %c3520] : memref<16x4096xbf16, #tpu.memory_space<vmem>>, vector<16x64xbf16>
    tpu.vector_store %arg19[%c0_140, %c3520], %129 {strides = array<i32>} : memref<16x4096xbf16, #tpu.memory_space<vmem>>, vector<16x64xbf16>,
    %c896_141 = arith.constant 896 : index
    %c0_142 = arith.constant 0 : index
    %131 = vector.load %arg18[%c896_141, %c0_142] : memref<1024x64xbf16, #tpu.memory_space<vmem>>, vector<16x64xbf16>
    %c0_143 = arith.constant 0 : index
    %c3584 = arith.constant 3584 : index
    %132 = vector.load %arg19[%c0_143, %c3584] : memref<16x4096xbf16, #tpu.memory_space<vmem>>, vector<16x64xbf16>
    tpu.vector_store %arg19[%c0_143, %c3584], %131 {strides = array<i32>} : memref<16x4096xbf16, #tpu.memory_space<vmem>>, vector<16x64xbf16>,
    %c912 = arith.constant 912 : index
    %c0_144 = arith.constant 0 : index
    %133 = vector.load %arg18[%c912, %c0_144] : memref<1024x64xbf16, #tpu.memory_space<vmem>>, vector<16x64xbf16>
    %c0_145 = arith.constant 0 : index
    %c3648 = arith.constant 3648 : index
    %134 = vector.load %arg19[%c0_145, %c3648] : memref<16x4096xbf16, #tpu.memory_space<vmem>>, vector<16x64xbf16>
    tpu.vector_store %arg19[%c0_145, %c3648], %133 {strides = array<i32>} : memref<16x4096xbf16, #tpu.memory_space<vmem>>, vector<16x64xbf16>,
    %c928 = arith.constant 928 : index
    %c0_146 = arith.constant 0 : index
    %135 = vector.load %arg18[%c928, %c0_146] : memref<1024x64xbf16, #tpu.memory_space<vmem>>, vector<16x64xbf16>
    %c0_147 = arith.constant 0 : index
    %c3712 = arith.constant 3712 : index
    %136 = vector.load %arg19[%c0_147, %c3712] : memref<16x4096xbf16, #tpu.memory_space<vmem>>, vector<16x64xbf16>
    tpu.vector_store %arg19[%c0_147, %c3712], %135 {strides = array<i32>} : memref<16x4096xbf16, #tpu.memory_space<vmem>>, vector<16x64xbf16>,
    %c944 = arith.constant 944 : index
    %c0_148 = arith.constant 0 : index
    %137 = vector.load %arg18[%c944, %c0_148] : memref<1024x64xbf16, #tpu.memory_space<vmem>>, vector<16x64xbf16>
    %c0_149 = arith.constant 0 : index
    %c3776 = arith.constant 3776 : index
    %138 = vector.load %arg19[%c0_149, %c3776] : memref<16x4096xbf16, #tpu.memory_space<vmem>>, vector<16x64xbf16>
    tpu.vector_store %arg19[%c0_149, %c3776], %137 {strides = array<i32>} : memref<16x4096xbf16, #tpu.memory_space<vmem>>, vector<16x64xbf16>,
    %c960_150 = arith.constant 960 : index
    %c0_151 = arith.constant 0 : index
    %139 = vector.load %arg18[%c960_150, %c0_151] : memref<1024x64xbf16, #tpu.memory_space<vmem>>, vector<16x64xbf16>
    %c0_152 = arith.constant 0 : index
    %c3840 = arith.constant 3840 : index
    %140 = vector.load %arg19[%c0_152, %c3840] : memref<16x4096xbf16, #tpu.memory_space<vmem>>, vector<16x64xbf16>
    tpu.vector_store %arg19[%c0_152, %c3840], %139 {strides = array<i32>} : memref<16x4096xbf16, #tpu.memory_space<vmem>>, vector<16x64xbf16>,
    %c976 = arith.constant 976 : index
    %c0_153 = arith.constant 0 : index
    %141 = vector.load %arg18[%c976, %c0_153] : memref<1024x64xbf16, #tpu.memory_space<vmem>>, vector<16x64xbf16>
    %c0_154 = arith.constant 0 : index
    %c3904 = arith.constant 3904 : index
    %142 = vector.load %arg19[%c0_154, %c3904] : memref<16x4096xbf16, #tpu.memory_space<vmem>>, vector<16x64xbf16>
    tpu.vector_store %arg19[%c0_154, %c3904], %141 {strides = array<i32>} : memref<16x4096xbf16, #tpu.memory_space<vmem>>, vector<16x64xbf16>,
    %c992 = arith.constant 992 : index
    %c0_155 = arith.constant 0 : index
    %143 = vector.load %arg18[%c992, %c0_155] : memref<1024x64xbf16, #tpu.memory_space<vmem>>, vector<16x64xbf16>
    %c0_156 = arith.constant 0 : index
    %c3968 = arith.constant 3968 : index
    %144 = vector.load %arg19[%c0_156, %c3968] : memref<16x4096xbf16, #tpu.memory_space<vmem>>, vector<16x64xbf16>
    tpu.vector_store %arg19[%c0_156, %c3968], %143 {strides = array<i32>} : memref<16x4096xbf16, #tpu.memory_space<vmem>>, vector<16x64xbf16>,
    %c1008 = arith.constant 1008 : index
    %c0_157 = arith.constant 0 : index
    %145 = vector.load %arg18[%c1008, %c0_157] : memref<1024x64xbf16, #tpu.memory_space<vmem>>, vector<16x64xbf16>
    %c0_158 = arith.constant 0 : index
    %c4032 = arith.constant 4032 : index
    %146 = vector.load %arg19[%c0_158, %c4032] : memref<16x4096xbf16, #tpu.memory_space<vmem>>, vector<16x64xbf16>
    tpu.vector_store %arg19[%c0_158, %c4032], %145 {strides = array<i32>} : memref<16x4096xbf16, #tpu.memory_space<vmem>>, vector<16x64xbf16>,
    %c0_i32_159 = arith.constant 0 : i32
    %147 = tpu.memref_slice %arg21[%c0_i32_159] : memref<1x!tpu.dma_semaphore, #tpu.memory_space<semaphore_mem>> -> memref<1x!tpu.dma_semaphore, #tpu.memory_space<semaphore_mem>>
    %148 = tpu.memref_squeeze %147 : memref<1x!tpu.dma_semaphore, #tpu.memory_space<semaphore_mem>> -> memref<!tpu.dma_semaphore, #tpu.memory_space<semaphore_mem>>
    tpu.wait_dma2 semaphore(%148 : memref<!tpu.dma_semaphore, #tpu.memory_space<semaphore_mem>>) src(%arg5 : memref<4096x128xbf16, #tpu.memory_space<any>>) dst(%arg20 : memref<4096x128xbf16, #tpu.memory_space<vmem>>)
    %c0_160 = arith.constant 0 : index
    %c0_161 = arith.constant 0 : index
    %149 = vector.load %arg19[%c0_160, %c0_161] : memref<16x4096xbf16, #tpu.memory_space<vmem>>, vector<16x4096xbf16>
    %c0_162 = arith.constant 0 : index
    %c0_163 = arith.constant 0 : index
    %150 = vector.load %arg20[%c0_162, %c0_163] : memref<4096x128xbf16, #tpu.memory_space<vmem>>, vector<4096x128xbf16>
    %cst_164 = arith.constant dense<0.000000e+00> : vector<16x128xf32>
    %151 = tpu.matmul %149, %150, %cst_164 {dimension_numbers = #tpu.dot_dimension_numbers<[1], [0], [0], [1], [0, 0, 1, 1], [], []>} : vector<16x4096xbf16>, vector<4096x128xbf16>, vector<16x128xf32> -> vector<16x128xf32>
    %c0_165 = arith.constant 0 : index
    %c0_166 = arith.constant 0 : index
    %152 = vector.load %arg6[%c0_165, %c0_166] : memref<1x128xf32, #tpu.memory_space<vmem>>, vector<1x128xf32>
    %153 = vector.broadcast %152 : vector<1x128xf32> to vector<16x128xf32>
    %154 = arith.addf %151, %153 : vector<16x128xf32>
    %cst_167 = arith.constant 0.000000e+00 : f32
    %155 = vector.broadcast %cst_167 : f32 to vector<16x128xf32>
    %156 = arith.maximumf %154, %155 : vector<16x128xf32>
    %c0_168 = arith.constant 0 : index
    %c0_169 = arith.constant 0 : index
    %157 = vector.load %arg7[%c0_168, %c0_169] : memref<128x10xf32, #tpu.memory_space<vmem>>, vector<128x10xf32>
    %cst_170 = arith.constant dense<0.000000e+00> : vector<16x10xf32>
    %158 = tpu.matmul %156, %157, %cst_170 {dimension_numbers = #tpu.dot_dimension_numbers<[1], [0], [0], [1], [0, 0, 1, 1], [], []>} : vector<16x128xf32>, vector<128x10xf32>, vector<16x10xf32> -> vector<16x10xf32>
    %c0_171 = arith.constant 0 : index
    %c0_172 = arith.constant 0 : index
    %159 = vector.load %arg8[%c0_171, %c0_172] : memref<1x10xf32, #tpu.memory_space<vmem>>, vector<1x10xf32>
    %160 = vector.broadcast %159 : vector<1x10xf32> to vector<16x10xf32>
    %161 = arith.addf %158, %160 : vector<16x10xf32>
    %cst_173 = arith.constant 0.000000e+00 : f32
    %162 = vector.broadcast %cst_173 : f32 to vector<16x10xf32>
    %163 = arith.maximumf %161, %162 : vector<16x10xf32>
    %164 = vector.extract_strided_slice %163 {offsets = [0, 0], sizes = [8, 10], strides = [1, 1]} : vector<16x10xf32> to vector<8x10xf32>
    %c0_174 = arith.constant 0 : index
    %c0_175 = arith.constant 0 : index
    %165 = vector.load %arg9[%c0_174, %c0_175] : memref<10x40xf32, #tpu.memory_space<vmem>>, vector<10x40xf32>
    %cst_176 = arith.constant dense<0.000000e+00> : vector<8x40xf32>
    %166 = tpu.matmul %164, %165, %cst_176 {dimension_numbers = #tpu.dot_dimension_numbers<[1], [0], [0], [1], [0, 0, 1, 1], [], []>} : vector<8x10xf32>, vector<10x40xf32>, vector<8x40xf32> -> vector<8x40xf32>
    %c0_177 = arith.constant 0 : index
    %c0_178 = arith.constant 0 : index
    %167 = vector.load %arg11[%c0_177, %c0_178] : memref<1x40xf32, #tpu.memory_space<vmem>>, vector<1x40xf32>
    %168 = vector.broadcast %167 : vector<1x40xf32> to vector<8x40xf32>
    %169 = arith.addf %166, %168 : vector<8x40xf32>
    %c0_179 = arith.constant 0 : index
    %c0_180 = arith.constant 0 : index
    %170 = vector.load %arg10[%c0_179, %c0_180] : memref<10x40xf32, #tpu.memory_space<vmem>>, vector<10x40xf32>
    %cst_181 = arith.constant 0.000000e+00 : f32
    %171 = vector.broadcast %cst_181 : f32 to vector<2x10xf32>
    %cst_182 = arith.constant 0.000000e+00 : f32
    %172 = vector.broadcast %cst_182 : f32 to vector<2x10xf32>
    %173 = vector.extract_strided_slice %169 {offsets = [0, 0], sizes = [2, 40], strides = [1, 1]} : vector<8x40xf32> to vector<2x40xf32>
    %cst_183 = arith.constant dense<0.000000e+00> : vector<2x40xf32>
    %174 = tpu.matmul %171, %170, %cst_183 {dimension_numbers = #tpu.dot_dimension_numbers<[1], [0], [0], [1], [0, 0, 1, 1], [], []>} : vector<2x10xf32>, vector<10x40xf32>, vector<2x40xf32> -> vector<2x40xf32>
    %175 = arith.addf %173, %174 : vector<2x40xf32>
    %176 = vector.extract_strided_slice %175 {offsets = [0, 0], sizes = [2, 10], strides = [1, 1]} : vector<2x40xf32> to vector<2x10xf32>
    %177 = arith.negf %176 : vector<2x10xf32>
    %178 = math.exp %177 : vector<2x10xf32>
    %cst_184 = arith.constant 1.000000e+00 : f32
    %179 = vector.broadcast %cst_184 : f32 to vector<2x10xf32>
    %180 = arith.addf %179, %178 : vector<2x10xf32>
    %181 = arith.divf %179, %180 : vector<2x10xf32>
    %182 = vector.extract_strided_slice %175 {offsets = [0, 10], sizes = [2, 10], strides = [1, 1]} : vector<2x40xf32> to vector<2x10xf32>
    %183 = arith.negf %182 : vector<2x10xf32>
    %184 = math.exp %183 : vector<2x10xf32>
    %cst_185 = arith.constant 1.000000e+00 : f32
    %185 = vector.broadcast %cst_185 : f32 to vector<2x10xf32>
    %186 = arith.addf %185, %184 : vector<2x10xf32>
    %187 = arith.divf %185, %186 : vector<2x10xf32>
    %188 = vector.extract_strided_slice %175 {offsets = [0, 20], sizes = [2, 10], strides = [1, 1]} : vector<2x40xf32> to vector<2x10xf32>
    %189 = math.tanh %188 : vector<2x10xf32>
    %190 = vector.extract_strided_slice %175 {offsets = [0, 30], sizes = [2, 10], strides = [1, 1]} : vector<2x40xf32> to vector<2x10xf32>
    %191 = arith.negf %190 : vector<2x10xf32>
    %192 = math.exp %191 : vector<2x10xf32>
    %cst_186 = arith.constant 1.000000e+00 : f32
    %193 = vector.broadcast %cst_186 : f32 to vector<2x10xf32>
    %194 = arith.addf %193, %192 : vector<2x10xf32>
    %195 = arith.divf %193, %194 : vector<2x10xf32>
    %196 = arith.mulf %187, %172 : vector<2x10xf32>
    %197 = arith.mulf %181, %189 : vector<2x10xf32>
    %198 = arith.addf %196, %197 : vector<2x10xf32>
    %199 = math.tanh %198 : vector<2x10xf32>
    %200 = arith.mulf %195, %199 : vector<2x10xf32>
    %201 = vector.extract_strided_slice %169 {offsets = [2, 0], sizes = [2, 40], strides = [1, 1]} : vector<8x40xf32> to vector<2x40xf32>
    %cst_187 = arith.constant dense<0.000000e+00> : vector<2x40xf32>
    %202 = tpu.matmul %200, %170, %cst_187 {dimension_numbers = #tpu.dot_dimension_numbers<[1], [0], [0], [1], [0, 0, 1, 1], [], []>} : vector<2x10xf32>, vector<10x40xf32>, vector<2x40xf32> -> vector<2x40xf32>
    %203 = arith.addf %201, %202 : vector<2x40xf32>
    %204 = vector.extract_strided_slice %203 {offsets = [0, 0], sizes = [2, 10], strides = [1, 1]} : vector<2x40xf32> to vector<2x10xf32>
    %205 = arith.negf %204 : vector<2x10xf32>
    %206 = math.exp %205 : vector<2x10xf32>
    %cst_188 = arith.constant 1.000000e+00 : f32
    %207 = vector.broadcast %cst_188 : f32 to vector<2x10xf32>
    %208 = arith.addf %207, %206 : vector<2x10xf32>
    %209 = arith.divf %207, %208 : vector<2x10xf32>
    %210 = vector.extract_strided_slice %203 {offsets = [0, 10], sizes = [2, 10], strides = [1, 1]} : vector<2x40xf32> to vector<2x10xf32>
    %211 = arith.negf %210 : vector<2x10xf32>
    %212 = math.exp %211 : vector<2x10xf32>
    %cst_189 = arith.constant 1.000000e+00 : f32
    %213 = vector.broadcast %cst_189 : f32 to vector<2x10xf32>
    %214 = arith.addf %213, %212 : vector<2x10xf32>
    %215 = arith.divf %213, %214 : vector<2x10xf32>
    %216 = vector.extract_strided_slice %203 {offsets = [0, 20], sizes = [2, 10], strides = [1, 1]} : vector<2x40xf32> to vector<2x10xf32>
    %217 = math.tanh %216 : vector<2x10xf32>
    %218 = vector.extract_strided_slice %203 {offsets = [0, 30], sizes = [2, 10], strides = [1, 1]} : vector<2x40xf32> to vector<2x10xf32>
    %219 = arith.negf %218 : vector<2x10xf32>
    %220 = math.exp %219 : vector<2x10xf32>
    %cst_190 = arith.constant 1.000000e+00 : f32
    %221 = vector.broadcast %cst_190 : f32 to vector<2x10xf32>
    %222 = arith.addf %221, %220 : vector<2x10xf32>
    %223 = arith.divf %221, %222 : vector<2x10xf32>
    %224 = arith.mulf %215, %198 : vector<2x10xf32>
    %225 = arith.mulf %209, %217 : vector<2x10xf32>
    %226 = arith.addf %224, %225 : vector<2x10xf32>
    %227 = math.tanh %226 : vector<2x10xf32>
    %228 = arith.mulf %223, %227 : vector<2x10xf32>
    %229 = vector.extract_strided_slice %169 {offsets = [4, 0], sizes = [2, 40], strides = [1, 1]} : vector<8x40xf32> to vector<2x40xf32>
    %cst_191 = arith.constant dense<0.000000e+00> : vector<2x40xf32>
    %230 = tpu.matmul %228, %170, %cst_191 {dimension_numbers = #tpu.dot_dimension_numbers<[1], [0], [0], [1], [0, 0, 1, 1], [], []>} : vector<2x10xf32>, vector<10x40xf32>, vector<2x40xf32> -> vector<2x40xf32>
    %231 = arith.addf %229, %230 : vector<2x40xf32>
    %232 = vector.extract_strided_slice %231 {offsets = [0, 0], sizes = [2, 10], strides = [1, 1]} : vector<2x40xf32> to vector<2x10xf32>
    %233 = arith.negf %232 : vector<2x10xf32>
    %234 = math.exp %233 : vector<2x10xf32>
    %cst_192 = arith.constant 1.000000e+00 : f32
    %235 = vector.broadcast %cst_192 : f32 to vector<2x10xf32>
    %236 = arith.addf %235, %234 : vector<2x10xf32>
    %237 = arith.divf %235, %236 : vector<2x10xf32>
    %238 = vector.extract_strided_slice %231 {offsets = [0, 10], sizes = [2, 10], strides = [1, 1]} : vector<2x40xf32> to vector<2x10xf32>
    %239 = arith.negf %238 : vector<2x10xf32>
    %240 = math.exp %239 : vector<2x10xf32>
    %cst_193 = arith.constant 1.000000e+00 : f32
    %241 = vector.broadcast %cst_193 : f32 to vector<2x10xf32>
    %242 = arith.addf %241, %240 : vector<2x10xf32>
    %243 = arith.divf %241, %242 : vector<2x10xf32>
    %244 = vector.extract_strided_slice %231 {offsets = [0, 20], sizes = [2, 10], strides = [1, 1]} : vector<2x40xf32> to vector<2x10xf32>
    %245 = math.tanh %244 : vector<2x10xf32>
    %246 = vector.extract_strided_slice %231 {offsets = [0, 30], sizes = [2, 10], strides = [1, 1]} : vector<2x40xf32> to vector<2x10xf32>
    %247 = arith.negf %246 : vector<2x10xf32>
    %248 = math.exp %247 : vector<2x10xf32>
    %cst_194 = arith.constant 1.000000e+00 : f32
    %249 = vector.broadcast %cst_194 : f32 to vector<2x10xf32>
    %250 = arith.addf %249, %248 : vector<2x10xf32>
    %251 = arith.divf %249, %250 : vector<2x10xf32>
    %252 = arith.mulf %243, %226 : vector<2x10xf32>
    %253 = arith.mulf %237, %245 : vector<2x10xf32>
    %254 = arith.addf %252, %253 : vector<2x10xf32>
    %255 = math.tanh %254 : vector<2x10xf32>
    %256 = arith.mulf %251, %255 : vector<2x10xf32>
    %257 = vector.extract_strided_slice %169 {offsets = [6, 0], sizes = [2, 40], strides = [1, 1]} : vector<8x40xf32> to vector<2x40xf32>
    %cst_195 = arith.constant dense<0.000000e+00> : vector<2x40xf32>
    %258 = tpu.matmul %256, %170, %cst_195 {dimension_numbers = #tpu.dot_dimension_numbers<[1], [0], [0], [1], [0, 0, 1, 1], [], []>} : vector<2x10xf32>, vector<10x40xf32>, vector<2x40xf32> -> vector<2x40xf32>
    %259 = arith.addf %257, %258 : vector<2x40xf32>
    %260 = vector.extract_strided_slice %259 {offsets = [0, 0], sizes = [2, 10], strides = [1, 1]} : vector<2x40xf32> to vector<2x10xf32>
    %261 = arith.negf %260 : vector<2x10xf32>
    %262 = math.exp %261 : vector<2x10xf32>
    %cst_196 = arith.constant 1.000000e+00 : f32
    %263 = vector.broadcast %cst_196 : f32 to vector<2x10xf32>
    %264 = arith.addf %263, %262 : vector<2x10xf32>
    %265 = arith.divf %263, %264 : vector<2x10xf32>
    %266 = vector.extract_strided_slice %259 {offsets = [0, 10], sizes = [2, 10], strides = [1, 1]} : vector<2x40xf32> to vector<2x10xf32>
    %267 = arith.negf %266 : vector<2x10xf32>
    %268 = math.exp %267 : vector<2x10xf32>
    %cst_197 = arith.constant 1.000000e+00 : f32
    %269 = vector.broadcast %cst_197 : f32 to vector<2x10xf32>
    %270 = arith.addf %269, %268 : vector<2x10xf32>
    %271 = arith.divf %269, %270 : vector<2x10xf32>
    %272 = vector.extract_strided_slice %259 {offsets = [0, 20], sizes = [2, 10], strides = [1, 1]} : vector<2x40xf32> to vector<2x10xf32>
    %273 = math.tanh %272 : vector<2x10xf32>
    %274 = vector.extract_strided_slice %259 {offsets = [0, 30], sizes = [2, 10], strides = [1, 1]} : vector<2x40xf32> to vector<2x10xf32>
    %275 = arith.negf %274 : vector<2x10xf32>
    %276 = math.exp %275 : vector<2x10xf32>
    %cst_198 = arith.constant 1.000000e+00 : f32
    %277 = vector.broadcast %cst_198 : f32 to vector<2x10xf32>
    %278 = arith.addf %277, %276 : vector<2x10xf32>
    %279 = arith.divf %277, %278 : vector<2x10xf32>
    %280 = arith.mulf %271, %254 : vector<2x10xf32>
    %281 = arith.mulf %265, %273 : vector<2x10xf32>
    %282 = arith.addf %280, %281 : vector<2x10xf32>
    %283 = math.tanh %282 : vector<2x10xf32>
    %284 = arith.mulf %279, %283 : vector<2x10xf32>
    %285 = vector.extract_strided_slice %163 {offsets = [8, 0], sizes = [6, 10], strides = [1, 1]} : vector<16x10xf32> to vector<6x10xf32>
    %286 = arith.mulf %284, %284 : vector<2x10xf32>
    %cst_199 = arith.constant dense<0.000000e+00> : vector<2xf32>
    %287 = vector.multi_reduction <add>, %286, %cst_199 [1] : vector<2x10xf32> to vector<2xf32>
    %288 = vector.shape_cast %287 : vector<2xf32> to vector<2x1xf32>
    %cst_200 = arith.constant 1.000000e-24 : f32
    %289 = vector.broadcast %cst_200 : f32 to vector<2x1xf32>
    %290 = arith.maximumf %288, %289 : vector<2x1xf32>
    %291 = math.rsqrt %290 : vector<2x1xf32>
    %292 = vector.broadcast %291 : vector<2x1xf32> to vector<2x10xf32>
    %293 = arith.mulf %284, %292 : vector<2x10xf32>
    %294 = arith.mulf %285, %285 : vector<6x10xf32>
    %cst_201 = arith.constant dense<0.000000e+00> : vector<6xf32>
    %295 = vector.multi_reduction <add>, %294, %cst_201 [1] : vector<6x10xf32> to vector<6xf32>
    %296 = vector.shape_cast %295 : vector<6xf32> to vector<6x1xf32>
    %cst_202 = arith.constant 1.000000e-24 : f32
    %297 = vector.broadcast %cst_202 : f32 to vector<6x1xf32>
    %298 = arith.maximumf %296, %297 : vector<6x1xf32>
    %299 = math.rsqrt %298 : vector<6x1xf32>
    %300 = vector.broadcast %299 : vector<6x1xf32> to vector<6x10xf32>
    %301 = arith.mulf %285, %300 : vector<6x10xf32>
    %302 = vector.extract_strided_slice %301 {offsets = [0, 0], sizes = [3, 10], strides = [1, 1]} : vector<6x10xf32> to vector<3x10xf32>
    %303 = vector.extract_strided_slice %293 {offsets = [0, 0], sizes = [1, 10], strides = [1, 1]} : vector<2x10xf32> to vector<1x10xf32>
    %cst_203 = arith.constant dense<0.000000e+00> : vector<1x3xf32>
    %304 = tpu.matmul %303, %302, %cst_203 {dimension_numbers = #tpu.dot_dimension_numbers<[1], [1], [0], [0], [0, 0, 1, 0], [], []>} : vector<1x10xf32>, vector<3x10xf32>, vector<1x3xf32> -> vector<1x3xf32>
    %305 = vector.extract_strided_slice %301 {offsets = [3, 0], sizes = [3, 10], strides = [1, 1]} : vector<6x10xf32> to vector<3x10xf32>
    %306 = vector.extract_strided_slice %293 {offsets = [1, 0], sizes = [1, 10], strides = [1, 1]} : vector<2x10xf32> to vector<1x10xf32>
    %cst_204 = arith.constant dense<0.000000e+00> : vector<1x3xf32>
    %307 = tpu.matmul %306, %305, %cst_204 {dimension_numbers = #tpu.dot_dimension_numbers<[1], [1], [0], [0], [0, 0, 1, 0], [], []>} : vector<1x10xf32>, vector<3x10xf32>, vector<1x3xf32> -> vector<1x3xf32>
    %308 = tpu.concatenate %304, %307 in 0 : vector<1x3xf32>, vector<1x3xf32> -> vector<2x3xf32>
    %c0_205 = arith.constant 0 : index
    %c0_206 = arith.constant 0 : index
    %309 = vector.load %arg12[%c0_205, %c0_206] : memref<2x3xf32, #tpu.memory_space<vmem>>, vector<2x3xf32>
    %310 = vector.shape_cast %309 : vector<2x3xf32> to vector<2x3x1xf32>
    %c0_207 = arith.constant 0 : index
    %c0_208 = arith.constant 0 : index
    %311 = vector.load %arg13[%c0_207, %c0_208] : memref<1x64xf32, #tpu.memory_space<vmem>>, vector<1x64xf32>
    %312 = vector.shape_cast %311 : vector<1x64xf32> to vector<1x1x64xf32>
    %313 = vector.broadcast %310 : vector<2x3x1xf32> to vector<2x3x64xf32>
    %314 = vector.broadcast %312 : vector<1x1x64xf32> to vector<2x3x64xf32>
    %315 = arith.mulf %313, %314 : vector<2x3x64xf32>
    %c0_209 = arith.constant 0 : index
    %c0_210 = arith.constant 0 : index
    %316 = vector.load %arg14[%c0_209, %c0_210] : memref<1x64xf32, #tpu.memory_space<vmem>>, vector<1x64xf32>
    %317 = vector.shape_cast %316 : vector<1x64xf32> to vector<1x1x64xf32>
    %318 = vector.broadcast %317 : vector<1x1x64xf32> to vector<2x3x64xf32>
    %319 = arith.addf %315, %318 : vector<2x3x64xf32>
    %cst_211 = arith.constant 0.000000e+00 : f32
    %320 = vector.broadcast %cst_211 : f32 to vector<2x3x64xf32>
    %321 = arith.maximumf %319, %320 : vector<2x3x64xf32>
    %c0_212 = arith.constant 0 : index
    %c0_213 = arith.constant 0 : index
    %322 = vector.load %arg15[%c0_212, %c0_213] : memref<1x64xf32, #tpu.memory_space<vmem>>, vector<1x64xf32>
    %323 = vector.shape_cast %322 : vector<1x64xf32> to vector<1x1x64xf32>
    %324 = vector.broadcast %323 : vector<1x1x64xf32> to vector<2x3x64xf32>
    %325 = arith.mulf %321, %324 : vector<2x3x64xf32>
    %cst_214 = arith.constant dense<0.000000e+00> : vector<2x3xf32>
    %326 = vector.multi_reduction <add>, %325, %cst_214 [2] : vector<2x3x64xf32> to vector<2x3xf32>
    %c0_215 = arith.constant 0 : index
    %c0_216 = arith.constant 0 : index
    %327 = vector.load %arg16[%c0_215, %c0_216] : memref<1x1xf32, #tpu.memory_space<vmem>>, vector<1x1xf32>
    %328 = vector.broadcast %327 : vector<1x1xf32> to vector<2x3xf32>
    %329 = arith.addf %326, %328 : vector<2x3xf32>
    %cst_217 = arith.constant 0.000000e+00 : f32
    %330 = vector.broadcast %cst_217 : f32 to vector<2x3xf32>
    %331 = arith.maximumf %329, %330 : vector<2x3xf32>
    %332 = arith.mulf %308, %331 : vector<2x3xf32>
    %cst_218 = arith.constant dense<0xFF800000> : vector<2xf32>
    %333 = vector.multi_reduction <maximumf>, %332, %cst_218 [1] : vector<2x3xf32> to vector<2xf32>
    %334 = vector.shape_cast %333 : vector<2xf32> to vector<2x1xf32>
    %335 = vector.broadcast %334 : vector<2x1xf32> to vector<2x3xf32>
    %336 = arith.subf %332, %335 : vector<2x3xf32>
    %337 = math.exp %336 : vector<2x3xf32>
    %cst_219 = arith.constant dense<0.000000e+00> : vector<2xf32>
    %338 = vector.multi_reduction <add>, %337, %cst_219 [1] : vector<2x3xf32> to vector<2xf32>
    %339 = vector.shape_cast %338 : vector<2xf32> to vector<2x1xf32>
    %340 = tpu.reciprocal %339 {approx = true} : vector<2x1xf32> -> vector<2x1xf32>
    %341 = vector.broadcast %340 : vector<2x1xf32> to vector<2x3xf32>
    %342 = arith.mulf %337, %341 : vector<2x3xf32>
    %c0_220 = arith.constant 0 : index
    %c0_221 = arith.constant 0 : index
    %343 = vector.load %arg17[%c0_220, %c0_221] : memref<2x3xf32, #tpu.memory_space<vmem>>, vector<2x3xf32>
    tpu.vector_store %arg17[%c0_220, %c0_221], %342 {strides = array<i32>} : memref<2x3xf32, #tpu.memory_space<vmem>>, vector<2x3xf32>,
    return
  }
}

</mosaic_0001>

<llo_original>
// kernel: _lambda_.1
$region0: #{_lambda_.1}
  #allocation0 [shape = 'u32[]', space=smem, size = 0x4, offset = 0x4, fixed_abs, tag = 'smem constant byte address 0x4 - core index']
  #allocation1 [shape = 'u32[144,128]{1,0:T(1,128)}', space=vmem, size = 0x12000, scoped, tag = 'internal scratch']
  #allocation2 [shape = 'bf16[1024,64]{1,0:T(16,128)(2,1)}', space=vmem, size = 0x40000, scoped, tag = 'scratch operand']
  #allocation3 [shape = 'bf16[16,4096]{1,0:T(16,128)(2,1)}', space=vmem, size = 0x20000, scoped, tag = 'scratch operand']
  #allocation4 [shape = 'bf16[4096,128]{1,0:T(16,128)(2,1)}', space=vmem, size = 0x100000, scoped, tag = 'scratch operand']
  #allocation5 [shape = 's32[1]{0}', space=sflag, size = 0x4, scoped, tag = 'scratch operand']
  #allocation6 [shape = 'f32[1,1]{1,0:T(1,128)S(1)}', space=vmem, size = 0x200, scoped, tag = 'scoped memory for _lambda_.1']
  #allocation9 [shape = 's32[]', space=sflag, size = 0x4, offset = 0, fixed_abs, tag = 'sflag constant byte address 0x0 - dummy sync flag']
  %s0 = inlined_call_operand.vmem [shape: bf16[1024,25], index: 0, kind: input, shape index: {}]
  %s1 = inlined_call_operand.vmem [shape: f32[25,288], index: 1, kind: input, shape index: {}]
  %s2 = inlined_call_operand.vmem [shape: f32[1,288], index: 2, kind: input, shape index: {}]
  %s3 = inlined_call_operand.vmem [shape: f32[288,64], index: 3, kind: input, shape index: {}]
  %s4 = inlined_call_operand.vmem [shape: f32[1,64], index: 4, kind: input, shape index: {}]
  %s5 = inlined_call_operand.vmem [shape: bf16[4096,128], index: 5, kind: input, shape index: {}]
  %s6 = inlined_call_operand.vmem [shape: f32[1,128], index: 6, kind: input, shape index: {}]
  %s7 = inlined_call_operand.vmem [shape: f32[128,10], index: 7, kind: input, shape index: {}]
  %s8 = inlined_call_operand.vmem [shape: f32[1,10], index: 8, kind: input, shape index: {}]
  %s9 = inlined_call_operand.vmem [shape: f32[10,40], index: 9, kind: input, shape index: {}]
  %s10 = inlined_call_operand.vmem [shape: f32[10,40], index: 10, kind: input, shape index: {}]
  %s11 = inlined_call_operand.vmem [shape: f32[1,40], index: 11, kind: input, shape index: {}]
  %s12 = inlined_call_operand.vmem [shape: f32[2,3], index: 12, kind: input, shape index: {}]
  %s13 = inlined_call_operand.vmem [shape: f32[1,64], index: 13, kind: input, shape index: {}]
  %s14 = inlined_call_operand.vmem [shape: f32[1,64], index: 14, kind: input, shape index: {}]
  %s15 = inlined_call_operand.vmem [shape: f32[1,64], index: 15, kind: input, shape index: {}]
  %s16 = inlined_call_operand.<no memory space> [shape: f32[1,1], index: 16, kind: input, shape index: {}]
  %s17 = inlined_call_operand.hbm [shape: f32[2,3], index: 17, kind: output, shape index: {}]
  %s18 = sld [smem:[#allocation0]]
  $region108: #{_lambda_.1} parent=0
    _
  %s20 = ssub.s32 1, %s18
  %s21 = scalar_select 0, %s20, %s18
  %v22 = vstv %s16
  %23 = vst [vmem:[#allocation6] sm:$0x1] %v22
  $region1: #{_lambda_.1} parent=0
    #allocation7 [shape = 'u8[1024]{0}', space=vmem, size = 0x400, scoped, tag = 'output window, operand 0, single buffered']
    #allocation8 [shape = 's32[1]{0}', space=sflag, size = 0x4, scoped, tag = 'scoped memory for _lambda_.1']
    %24 = vsyncpa [#allocation8], 0
    // Predicated region
    $region2: #{_lambda_.1} parent=1 // pred_check
      _
    $region3: #{_lambda_.1} parent=1 // pred_check_branch
      %26 = sbr.rel (0) target = $region5
    $region4: #{_lambda_.1} parent=1 // pred_region
      _
    $region5: #{_lambda_.1} parent=1 // pred_fallthru
      _
    // Predicated region
    $region6: #{_lambda_.1} parent=1 // pred_check
      _
    $region7: #{_lambda_.1} parent=1 // pred_check_branch
      %28 = sbr.rel (0) target = $region9
    $region8: #{_lambda_.1} parent=1 // pred_region
      _
    $region9: #{_lambda_.1} parent=1 // pred_fallthru
      _
    // Predicated region
    $region10: #{_lambda_.1} parent=1 // pred_check
      _
    $region11: #{_lambda_.1} parent=1 // pred_check_branch
      %30 = sbr.rel (0) target = $region13
    $region12: #{_lambda_.1} parent=1 // pred_region
      _
    $region13: #{_lambda_.1} parent=1 // pred_fallthru
      _
    // Predicated region
    $region14: #{_lambda_.1} parent=1 // pred_check
      _
    $region15: #{_lambda_.1} parent=1 // pred_check_branch
      %32 = sbr.rel (0) target = $region17
    $region16: #{_lambda_.1} parent=1 // pred_region
      _
    $region17: #{_lambda_.1} parent=1 // pred_fallthru
      _
    // Predicated region
    $region18: #{_lambda_.1} parent=1 // pred_check
      _
    $region19: #{_lambda_.1} parent=1 // pred_check_branch
      %34 = sbr.rel (0) target = $region21
    $region20: #{_lambda_.1} parent=1 // pred_region
      _
    $region21: #{_lambda_.1} parent=1 // pred_fallthru
      _
    // Predicated region
    $region22: #{_lambda_.1} parent=1 // pred_check
      _
    $region23: #{_lambda_.1} parent=1 // pred_check_branch
      %36 = sbr.rel (0) target = $region25
    $region24: #{_lambda_.1} parent=1 // pred_region
      _
    $region25: #{_lambda_.1} parent=1 // pred_fallthru
      _
    // Predicated region
    $region26: #{_lambda_.1} parent=1 // pred_check
      _
    $region27: #{_lambda_.1} parent=1 // pred_check_branch
      %38 = sbr.rel (0) target = $region29
    $region28: #{_lambda_.1} parent=1 // pred_region
      _
    $region29: #{_lambda_.1} parent=1 // pred_fallthru
      _
    // Predicated region
    $region30: #{_lambda_.1} parent=1 // pred_check
      _
    $region31: #{_lambda_.1} parent=1 // pred_check_branch
      %40 = sbr.rel (0) target = $region33
    $region32: #{_lambda_.1} parent=1 // pred_region
      _
    $region33: #{_lambda_.1} parent=1 // pred_fallthru
      _
    // Predicated region
    $region34: #{_lambda_.1} parent=1 // pred_check
      _
    $region35: #{_lambda_.1} parent=1 // pred_check_branch
      %42 = sbr.rel (0) target = $region37
    $region36: #{_lambda_.1} parent=1 // pred_region
      _
    $region37: #{_lambda_.1} parent=1 // pred_fallthru
      _
    // Predicated region
    $region38: #{_lambda_.1} parent=1 // pred_check
      _
    $region39: #{_lambda_.1} parent=1 // pred_check_branch
      %44 = sbr.rel (0) target = $region41
    $region40: #{_lambda_.1} parent=1 // pred_region
      _
    $region41: #{_lambda_.1} parent=1 // pred_fallthru
      _
    // Predicated region
    $region42: #{_lambda_.1} parent=1 // pred_check
      _
    $region43: #{_lambda_.1} parent=1 // pred_check_branch
      %46 = sbr.rel (0) target = $region45
    $region44: #{_lambda_.1} parent=1 // pred_region
      _
    $region45: #{_lambda_.1} parent=1 // pred_fallthru
      _
    // Predicated region
    $region46: #{_lambda_.1} parent=1 // pred_check
      _
    $region47: #{_lambda_.1} parent=1 // pred_check_branch
      %48 = sbr.rel (0) target = $region49
    $region48: #{_lambda_.1} parent=1 // pred_region
      _
    $region49: #{_lambda_.1} parent=1 // pred_fallthru
      _
    // Predicated region
    $region50: #{_lambda_.1} parent=1 // pred_check
      _
    $region51: #{_lambda_.1} parent=1 // pred_check_branch
      %50 = sbr.rel (0) target = $region53
    $region52: #{_lambda_.1} parent=1 // pred_region
      _
    $region53: #{_lambda_.1} parent=1 // pred_fallthru
      _
    // Predicated region
    $region54: #{_lambda_.1} parent=1 // pred_check
      _
    $region55: #{_lambda_.1} parent=1 // pred_check_branch
      %52 = sbr.rel (0) target = $region57
    $region56: #{_lambda_.1} parent=1 // pred_region
      _
    $region57: #{_lambda_.1} parent=1 // pred_fallthru
      _
    // Predicated region
    $region58: #{_lambda_.1} parent=1 // pred_check
      _
    $region59: #{_lambda_.1} parent=1 // pred_check_branch
      %54 = sbr.rel (0) target = $region61
    $region60: #{_lambda_.1} parent=1 // pred_region
      _
    $region61: #{_lambda_.1} parent=1 // pred_fallthru
      _
    // Predicated region
    $region62: #{_lambda_.1} parent=1 // pred_check
      _
    $region63: #{_lambda_.1} parent=1 // pred_check_branch
      %56 = sbr.rel (0) target = $region65
    $region64: #{_lambda_.1} parent=1 // pred_region
      _
    $region65: #{_lambda_.1} parent=1 // pred_fallthru
      _
    %p59 = scmp.lt.u32.totalorder 2048, 8
    %p60 = pneg %p59
    // Predicated region
    $region66: #{_lambda_.1} parent=1 // pred_check
      _
    $region67: #{_lambda_.1} parent=1 // pred_check_branch
      %62 = sbr.rel (%p59) target = $region69
    $region68: #{_lambda_.1} parent=1 // pred_region
      %s77 = sand.u32 2048, 7
      %p78 = scmp.eq.s32.totalorder %s77, 0
      // Predicated region
      $region81: #{_lambda_.1} parent=68 // pred_check
        %p79 = pneg %p78
      $region82: #{_lambda_.1} parent=68 // pred_check_branch
        %81 = sbr.rel (%p79) target = $region84
      $region83: #{_lambda_.1} parent=68 // pred_region
        loop: start=0, step=1, limit=1
        $region85: #{_lambda_.1} parent=83 // loop_pre_header
          _
        $region86: #{_lambda_.1} parent=83 // loop_header
          %s83 = sphi 0, %s87
          %p84 = scmp.ge.s32.totalorder %s83, 1
          %s88 = sphi %s5, %s5
          %s89 = sphi [#allocation4], [#allocation4]
        $region87: #{_lambda_.1} parent=83 // loop_header_branch
          %86 = sbr.rel (%p84) target = $region91
        $region88: #{_lambda_.1} parent=83 // loop_body
          %v90 = vld [vmem:[%s88] sm:$0xff]
          %91 = vst [vmem:[%s89] sm:$0xff] %v90
          %v92 = vld [vmem:[%s88 + $0x8] sm:$0xff]
          %93 = vst [vmem:[%s89 + $0x8] sm:$0xff] %v92
          %v94 = vld [vmem:[%s88 + $0x10] sm:$0xff]
          %95 = vst [vmem:[%s89 + $0x10] sm:$0xff] %v94
          %v96 = vld [vmem:[%s88 + $0x18] sm:$0xff]
          %97 = vst [vmem:[%s89 + $0x18] sm:$0xff] %v96
          %v98 = vld [vmem:[%s88 + $0x20] sm:$0xff]
          %99 = vst [vmem:[%s89 + $0x20] sm:$0xff] %v98
          %v100 = vld [vmem:[%s88 + $0x28] sm:$0xff]
          %101 = vst [vmem:[%s89 + $0x28] sm:$0xff] %v100
          %v102 = vld [vmem:[%s88 + $0x30] sm:$0xff]
          %103 = vst [vmem:[%s89 + $0x30] sm:$0xff] %v102
          %v104 = vld [vmem:[%s88 + $0x38] sm:$0xff]
          %105 = vst [vmem:[%s89 + $0x38] sm:$0xff] %v104
          %v106 = vld [vmem:[%s88 + $0x40] sm:$0xff]
          %107 = vst [vmem:[%s89 + $0x40] sm:$0xff] %v106
          %v108 = vld [vmem:[%s88 + $0x48] sm:$0xff]
          %109 = vst [vmem:[%s89 + $0x48] sm:$0xff] %v108
          %v110 = vld [vmem:[%s88 + $0x50] sm:$0xff]
          %111 = vst [vmem:[%s89 + $0x50] sm:$0xff] %v110
          %v112 = vld [vmem:[%s88 + $0x58] sm:$0xff]
          %113 = vst [vmem:[%s89 + $0x58] sm:$0xff] %v112
          %v114 = vld [vmem:[%s88 + $0x60] sm:$0xff]
          %115 = vst [vmem:[%s89 + $0x60] sm:$0xff] %v114
          %v116 = vld [vmem:[%s88 + $0x68] sm:$0xff]
          %117 = vst [vmem:[%s89 + $0x68] sm:$0xff] %v116
          %v118 = vld [vmem:[%s88 + $0x70] sm:$0xff]
          %119 = vst [vmem:[%s89 + $0x70] sm:$0xff] %v118
          %v120 = vld [vmem:[%s88 + $0x78] sm:$0xff]
          %121 = vst [vmem:[%s89 + $0x78] sm:$0xff] %v120
          %v122 = vld [vmem:[%s88 + $0x80] sm:$0xff]
          %123 = vst [vmem:[%s89 + $0x80] sm:$0xff] %v122
          %v124 = vld [vmem:[%s88 + $0x88] sm:$0xff]
          %125 = vst [vmem:[%s89 + $0x88] sm:$0xff] %v124
          %v126 = vld [vmem:[%s88 + $0x90] sm:$0xff]
          %127 = vst [vmem:[%s89 + $0x90] sm:$0xff] %v126
          %v128 = vld [vmem:[%s88 + $0x98] sm:$0xff]
          %129 = vst [vmem:[%s89 + $0x98] sm:$0xff] %v128
          %v130 = vld [vmem:[%s88 + $0xa0] sm:$0xff]
          %131 = vst [vmem:[%s89 + $0xa0] sm:$0xff] %v130
          %v132 = vld [vmem:[%s88 + $0xa8] sm:$0xff]
          %133 = vst [vmem:[%s89 + $0xa8] sm:$0xff] %v132
          %v134 = vld [vmem:[%s88 + $0xb0] sm:$0xff]
          %135 = vst [vmem:[%s89 + $0xb0] sm:$0xff] %v134
          %v136 = vld [vmem:[%s88 + $0xb8] sm:$0xff]
          %137 = vst [vmem:[%s89 + $0xb8] sm:$0xff] %v136
          %v138 = vld [vmem:[%s88 + $0xc0] sm:$0xff]
          %139 = vst [vmem:[%s89 + $0xc0] sm:$0xff] %v138
          %v140 = vld [vmem:[%s88 + $0xc8] sm:$0xff]
          %141 = vst [vmem:[%s89 + $0xc8] sm:$0xff] %v140
          %v142 = vld [vmem:[%s88 + $0xd0] sm:$0xff]
          %143 = vst [vmem:[%s89 + $0xd0] sm:$0xff] %v142
          %v144 = vld [vmem:[%s88 + $0xd8] sm:$0xff]
          %145 = vst [vmem:[%s89 + $0xd8] sm:$0xff] %v144
          %v146 = vld [vmem:[%s88 + $0xe0] sm:$0xff]
          %147 = vst [vmem:[%s89 + $0xe0] sm:$0xff] %v146
          %v148 = vld [vmem:[%s88 + $0xe8] sm:$0xff]
          %149 = vst [vmem:[%s89 + $0xe8] sm:$0xff] %v148
          %v150 = vld [vmem:[%s88 + $0xf0] sm:$0xff]
          %151 = vst [vmem:[%s89 + $0xf0] sm:$0xff] %v150
          %v152 = vld [vmem:[%s88 + $0xf8] sm:$0xff]
          %153 = vst [vmem:[%s89 + $0xf8] sm:$0xff] %v152
          %v154 = vld [vmem:[%s88 + $0x100] sm:$0xff]
          %155 = vst [vmem:[%s89 + $0x100] sm:$0xff] %v154
          %v156 = vld [vmem:[%s88 + $0x108] sm:$0xff]
          %157 = vst [vmem:[%s89 + $0x108] sm:$0xff] %v156
          %v158 = vld [vmem:[%s88 + $0x110] sm:$0xff]
          %159 = vst [vmem:[%s89 + $0x110] sm:$0xff] %v158
          %v160 = vld [vmem:[%s88 + $0x118] sm:$0xff]
          %161 = vst [vmem:[%s89 + $0x118] sm:$0xff] %v160
          %v162 = vld [vmem:[%s88 + $0x120] sm:$0xff]
          %163 = vst [vmem:[%s89 + $0x120] sm:$0xff] %v162
          %v164 = vld [vmem:[%s88 + $0x128] sm:$0xff]
          %165 = vst [vmem:[%s89 + $0x128] sm:$0xff] %v164
          %v166 = vld [vmem:[%s88 + $0x130] sm:$0xff]
          %167 = vst [vmem:[%s89 + $0x130] sm:$0xff] %v166
          %v168 = vld [vmem:[%s88 + $0x138] sm:$0xff]
          %169 = vst [vmem:[%s89 + $0x138] sm:$0xff] %v168
          %v170 = vld [vmem:[%s88 + $0x140] sm:$0xff]
          %171 = vst [vmem:[%s89 + $0x140] sm:$0xff] %v170
          %v172 = vld [vmem:[%s88 + $0x148] sm:$0xff]
          %173 = vst [vmem:[%s89 + $0x148] sm:$0xff] %v172
          %v174 = vld [vmem:[%s88 + $0x150] sm:$0xff]
          %175 = vst [vmem:[%s89 + $0x150] sm:$0xff] %v174
          %v176 = vld [vmem:[%s88 + $0x158] sm:$0xff]
          %177 = vst [vmem:[%s89 + $0x158] sm:$0xff] %v176
          %v178 = vld [vmem:[%s88 + $0x160] sm:$0xff]
          %179 = vst [vmem:[%s89 + $0x160] sm:$0xff] %v178
          %v180 = vld [vmem:[%s88 + $0x168] sm:$0xff]
          %181 = vst [vmem:[%s89 + $0x168] sm:$0xff] %v180
          %v182 = vld [vmem:[%s88 + $0x170] sm:$0xff]
          %183 = vst [vmem:[%s89 + $0x170] sm:$0xff] %v182
          %v184 = vld [vmem:[%s88 + $0x178] sm:$0xff]
          %185 = vst [vmem:[%s89 + $0x178] sm:$0xff] %v184
          %v186 = vld [vmem:[%s88 + $0x180] sm:$0xff]
          %187 = vst [vmem:[%s89 + $0x180] sm:$0xff] %v186
          %v188 = vld [vmem:[%s88 + $0x188] sm:$0xff]
          %189 = vst [vmem:[%s89 + $0x188] sm:$0xff] %v188
          %v190 = vld [vmem:[%s88 + $0x190] sm:$0xff]
          %191 = vst [vmem:[%s89 + $0x190] sm:$0xff] %v190
          %v192 = vld [vmem:[%s88 + $0x198] sm:$0xff]
          %193 = vst [vmem:[%s89 + $0x198] sm:$0xff] %v192
          %v194 = vld [vmem:[%s88 + $0x1a0] sm:$0xff]
          %195 = vst [vmem:[%s89 + $0x1a0] sm:$0xff] %v194
          %v196 = vld [vmem:[%s88 + $0x1a8] sm:$0xff]
          %197 = vst [vmem:[%s89 + $0x1a8] sm:$0xff] %v196
          %v198 = vld [vmem:[%s88 + $0x1b0] sm:$0xff]
          %199 = vst [vmem:[%s89 + $0x1b0] sm:$0xff] %v198
          %v200 = vld [vmem:[%s88 + $0x1b8] sm:$0xff]
          %201 = vst [vmem:[%s89 + $0x1b8] sm:$0xff] %v200
          %v202 = vld [vmem:[%s88 + $0x1c0] sm:$0xff]
          %203 = vst [vmem:[%s89 + $0x1c0] sm:$0xff] %v202
          %v204 = vld [vmem:[%s88 + $0x1c8] sm:$0xff]
          %205 = vst [vmem:[%s89 + $0x1c8] sm:$0xff] %v204
          %v206 = vld [vmem:[%s88 + $0x1d0] sm:$0xff]
          %207 = vst [vmem:[%s89 + $0x1d0] sm:$0xff] %v206
          %v208 = vld [vmem:[%s88 + $0x1d8] sm:$0xff]
          %209 = vst [vmem:[%s89 + $0x1d8] sm:$0xff] %v208
          %v210 = vld [vmem:[%s88 + $0x1e0] sm:$0xff]
          %211 = vst [vmem:[%s89 + $0x1e0] sm:$0xff] %v210
          %v212 = vld [vmem:[%s88 + $0x1e8] sm:$0xff]
          %213 = vst [vmem:[%s89 + $0x1e8] sm:$0xff] %v212
          %v214 = vld [vmem:[%s88 + $0x1f0] sm:$0xff]
          %215 = vst [vmem:[%s89 + $0x1f0] sm:$0xff] %v214
          %v216 = vld [vmem:[%s88 + $0x1f8] sm:$0xff]
          %217 = vst [vmem:[%s89 + $0x1f8] sm:$0xff] %v216
          %v218 = vld [vmem:[%s88 + $0x200] sm:$0xff]
          %219 = vst [vmem:[%s89 + $0x200] sm:$0xff] %v218
          %v220 = vld [vmem:[%s88 + $0x208] sm:$0xff]
          %221 = vst [vmem:[%s89 + $0x208] sm:$0xff] %v220
          %v222 = vld [vmem:[%s88 + $0x210] sm:$0xff]
          %223 = vst [vmem:[%s89 + $0x210] sm:$0xff] %v222
          %v224 = vld [vmem:[%s88 + $0x218] sm:$0xff]
          %225 = vst [vmem:[%s89 + $0x218] sm:$0xff] %v224
          %v226 = vld [vmem:[%s88 + $0x220] sm:$0xff]
          %227 = vst [vmem:[%s89 + $0x220] sm:$0xff] %v226
          %v228 = vld [vmem:[%s88 + $0x228] sm:$0xff]
          %229 = vst [vmem:[%s89 + $0x228] sm:$0xff] %v228
          %v230 = vld [vmem:[%s88 + $0x230] sm:$0xff]
          %231 = vst [vmem:[%s89 + $0x230] sm:$0xff] %v230
          %v232 = vld [vmem:[%s88 + $0x238] sm:$0xff]
          %233 = vst [vmem:[%s89 + $0x238] sm:$0xff] %v232
          %v234 = vld [vmem:[%s88 + $0x240] sm:$0xff]
          %235 = vst [vmem:[%s89 + $0x240] sm:$0xff] %v234
          %v236 = vld [vmem:[%s88 + $0x248] sm:$0xff]
          %237 = vst [vmem:[%s89 + $0x248] sm:$0xff] %v236
          %v238 = vld [vmem:[%s88 + $0x250] sm:$0xff]
          %239 = vst [vmem:[%s89 + $0x250] sm:$0xff] %v238
          %v240 = vld [vmem:[%s88 + $0x258] sm:$0xff]
          %241 = vst [vmem:[%s89 + $0x258] sm:$0xff] %v240
          %v242 = vld [vmem:[%s88 + $0x260] sm:$0xff]
          %243 = vst [vmem:[%s89 + $0x260] sm:$0xff] %v242
          %v244 = vld [vmem:[%s88 + $0x268] sm:$0xff]
          %245 = vst [vmem:[%s89 + $0x268] sm:$0xff] %v244
          %v246 = vld [vmem:[%s88 + $0x270] sm:$0xff]
          %247 = vst [vmem:[%s89 + $0x270] sm:$0xff] %v246
          %v248 = vld [vmem:[%s88 + $0x278] sm:$0xff]
          %249 = vst [vmem:[%s89 + $0x278] sm:$0xff] %v248
          %v250 = vld [vmem:[%s88 + $0x280] sm:$0xff]
          %251 = vst [vmem:[%s89 + $0x280] sm:$0xff] %v250
          %v252 = vld [vmem:[%s88 + $0x288] sm:$0xff]
          %253 = vst [vmem:[%s89 + $0x288] sm:$0xff] %v252
          %v254 = vld [vmem:[%s88 + $0x290] sm:$0xff]
          %255 = vst [vmem:[%s89 + $0x290] sm:$0xff] %v254
          %v256 = vld [vmem:[%s88 + $0x298] sm:$0xff]
          %257 = vst [vmem:[%s89 + $0x298] sm:$0xff] %v256
          %v258 = vld [vmem:[%s88 + $0x2a0] sm:$0xff]
          %259 = vst [vmem:[%s89 + $0x2a0] sm:$0xff] %v258
          %v260 = vld [vmem:[%s88 + $0x2a8] sm:$0xff]
          %261 = vst [vmem:[%s89 + $0x2a8] sm:$0xff] %v260
          %v262 = vld [vmem:[%s88 + $0x2b0] sm:$0xff]
          %263 = vst [vmem:[%s89 + $0x2b0] sm:$0xff] %v262
          %v264 = vld [vmem:[%s88 + $0x2b8] sm:$0xff]
          %265 = vst [vmem:[%s89 + $0x2b8] sm:$0xff] %v264
          %v266 = vld [vmem:[%s88 + $0x2c0] sm:$0xff]
          %267 = vst [vmem:[%s89 + $0x2c0] sm:$0xff] %v266
          %v268 = vld [vmem:[%s88 + $0x2c8] sm:$0xff]
          %269 = vst [vmem:[%s89 + $0x2c8] sm:$0xff] %v268
          %v270 = vld [vmem:[%s88 + $0x2d0] sm:$0xff]
          %271 = vst [vmem:[%s89 + $0x2d0] sm:$0xff] %v270
          %v272 = vld [vmem:[%s88 + $0x2d8] sm:$0xff]
          %273 = vst [vmem:[%s89 + $0x2d8] sm:$0xff] %v272
          %v274 = vld [vmem:[%s88 + $0x2e0] sm:$0xff]
          %275 = vst [vmem:[%s89 + $0x2e0] sm:$0xff] %v274
          %v276 = vld [vmem:[%s88 + $0x2e8] sm:$0xff]
          %277 = vst [vmem:[%s89 + $0x2e8] sm:$0xff] %v276
          %v278 = vld [vmem:[%s88 + $0x2f0] sm:$0xff]
          %279 = vst [vmem:[%s89 + $0x2f0] sm:$0xff] %v278
          %v280 = vld [vmem:[%s88 + $0x2f8] sm:$0xff]
          %281 = vst [vmem:[%s89 + $0x2f8] sm:$0xff] %v280
          %v282 = vld [vmem:[%s88 + $0x300] sm:$0xff]
          %283 = vst [vmem:[%s89 + $0x300] sm:$0xff] %v282
          %v284 = vld [vmem:[%s88 + $0x308] sm:$0xff]
          %285 = vst [vmem:[%s89 + $0x308] sm:$0xff] %v284
          %v286 = vld [vmem:[%s88 + $0x310] sm:$0xff]
          %287 = vst [vmem:[%s89 + $0x310] sm:$0xff] %v286
          %v288 = vld [vmem:[%s88 + $0x318] sm:$0xff]
          %289 = vst [vmem:[%s89 + $0x318] sm:$0xff] %v288
          %v290 = vld [vmem:[%s88 + $0x320] sm:$0xff]
          %291 = vst [vmem:[%s89 + $0x320] sm:$0xff] %v290
          %v292 = vld [vmem:[%s88 + $0x328] sm:$0xff]
          %293 = vst [vmem:[%s89 + $0x328] sm:$0xff] %v292
          %v294 = vld [vmem:[%s88 + $0x330] sm:$0xff]
          %295 = vst [vmem:[%s89 + $0x330] sm:$0xff] %v294
          %v296 = vld [vmem:[%s88 + $0x338] sm:$0xff]
          %297 = vst [vmem:[%s89 + $0x338] sm:$0xff] %v296
          %v298 = vld [vmem:[%s88 + $0x340] sm:$0xff]
          %299 = vst [vmem:[%s89 + $0x340] sm:$0xff] %v298
          %v300 = vld [vmem:[%s88 + $0x348] sm:$0xff]
          %301 = vst [vmem:[%s89 + $0x348] sm:$0xff] %v300
          %v302 = vld [vmem:[%s88 + $0x350] sm:$0xff]
          %303 = vst [vmem:[%s89 + $0x350] sm:$0xff] %v302
          %v304 = vld [vmem:[%s88 + $0x358] sm:$0xff]
          %305 = vst [vmem:[%s89 + $0x358] sm:$0xff] %v304
          %v306 = vld [vmem:[%s88 + $0x360] sm:$0xff]
          %307 = vst [vmem:[%s89 + $0x360] sm:$0xff] %v306
          %v308 = vld [vmem:[%s88 + $0x368] sm:$0xff]
          %309 = vst [vmem:[%s89 + $0x368] sm:$0xff] %v308
          %v310 = vld [vmem:[%s88 + $0x370] sm:$0xff]
          %311 = vst [vmem:[%s89 + $0x370] sm:$0xff] %v310
          %v312 = vld [vmem:[%s88 + $0x378] sm:$0xff]
          %313 = vst [vmem:[%s89 + $0x378] sm:$0xff] %v312
          %v314 = vld [vmem:[%s88 + $0x380] sm:$0xff]
          %315 = vst [vmem:[%s89 + $0x380] sm:$0xff] %v314
          %v316 = vld [vmem:[%s88 + $0x388] sm:$0xff]
          %317 = vst [vmem:[%s89 + $0x388] sm:$0xff] %v316
          %v318 = vld [vmem:[%s88 + $0x390] sm:$0xff]
          %319 = vst [vmem:[%s89 + $0x390] sm:$0xff] %v318
          %v320 = vld [vmem:[%s88 + $0x398] sm:$0xff]
          %321 = vst [vmem:[%s89 + $0x398] sm:$0xff] %v320
          %v322 = vld [vmem:[%s88 + $0x3a0] sm:$0xff]
          %323 = vst [vmem:[%s89 + $0x3a0] sm:$0xff] %v322
          %v324 = vld [vmem:[%s88 + $0x3a8] sm:$0xff]
          %325 = vst [vmem:[%s89 + $0x3a8] sm:$0xff] %v324
          %v326 = vld [vmem:[%s88 + $0x3b0] sm:$0xff]
          %327 = vst [vmem:[%s89 + $0x3b0] sm:$0xff] %v326
          %v328 = vld [vmem:[%s88 + $0x3b8] sm:$0xff]
          %329 = vst [vmem:[%s89 + $0x3b8] sm:$0xff] %v328
          %v330 = vld [vmem:[%s88 + $0x3c0] sm:$0xff]
          %331 = vst [vmem:[%s89 + $0x3c0] sm:$0xff] %v330
          %v332 = vld [vmem:[%s88 + $0x3c8] sm:$0xff]
          %333 = vst [vmem:[%s89 + $0x3c8] sm:$0xff] %v332
          %v334 = vld [vmem:[%s88 + $0x3d0] sm:$0xff]
          %335 = vst [vmem:[%s89 + $0x3d0] sm:$0xff] %v334
          %v336 = vld [vmem:[%s88 + $0x3d8] sm:$0xff]
          %337 = vst [vmem:[%s89 + $0x3d8] sm:$0xff] %v336
          %v338 = vld [vmem:[%s88 + $0x3e0] sm:$0xff]
          %339 = vst [vmem:[%s89 + $0x3e0] sm:$0xff] %v338
          %v340 = vld [vmem:[%s88 + $0x3e8] sm:$0xff]
          %341 = vst [vmem:[%s89 + $0x3e8] sm:$0xff] %v340
          %v342 = vld [vmem:[%s88 + $0x3f0] sm:$0xff]
          %343 = vst [vmem:[%s89 + $0x3f0] sm:$0xff] %v342
          %v344 = vld [vmem:[%s88 + $0x3f8] sm:$0xff]
          %345 = vst [vmem:[%s89 + $0x3f8] sm:$0xff] %v344
          %v346 = vld [vmem:[%s88 + $0x400] sm:$0xff]
          %347 = vst [vmem:[%s89 + $0x400] sm:$0xff] %v346
          %v348 = vld [vmem:[%s88 + $0x408] sm:$0xff]
          %349 = vst [vmem:[%s89 + $0x408] sm:$0xff] %v348
          %v350 = vld [vmem:[%s88 + $0x410] sm:$0xff]
          %351 = vst [vmem:[%s89 + $0x410] sm:$0xff] %v350
          %v352 = vld [vmem:[%s88 + $0x418] sm:$0xff]
          %353 = vst [vmem:[%s89 + $0x418] sm:$0xff] %v352
          %v354 = vld [vmem:[%s88 + $0x420] sm:$0xff]
          %355 = vst [vmem:[%s89 + $0x420] sm:$0xff] %v354
          %v356 = vld [vmem:[%s88 + $0x428] sm:$0xff]
          %357 = vst [vmem:[%s89 + $0x428] sm:$0xff] %v356
          %v358 = vld [vmem:[%s88 + $0x430] sm:$0xff]
          %359 = vst [vmem:[%s89 + $0x430] sm:$0xff] %v358
          %v360 = vld [vmem:[%s88 + $0x438] sm:$0xff]
          %361 = vst [vmem:[%s89 + $0x438] sm:$0xff] %v360
          %v362 = vld [vmem:[%s88 + $0x440] sm:$0xff]
          %363 = vst [vmem:[%s89 + $0x440] sm:$0xff] %v362
          %v364 = vld [vmem:[%s88 + $0x448] sm:$0xff]
          %365 = vst [vmem:[%s89 + $0x448] sm:$0xff] %v364
          %v366 = vld [vmem:[%s88 + $0x450] sm:$0xff]
          %367 = vst [vmem:[%s89 + $0x450] sm:$0xff] %v366
          %v368 = vld [vmem:[%s88 + $0x458] sm:$0xff]
          %369 = vst [vmem:[%s89 + $0x458] sm:$0xff] %v368
          %v370 = vld [vmem:[%s88 + $0x460] sm:$0xff]
          %371 = vst [vmem:[%s89 + $0x460] sm:$0xff] %v370
          %v372 = vld [vmem:[%s88 + $0x468] sm:$0xff]
          %373 = vst [vmem:[%s89 + $0x468] sm:$0xff] %v372
          %v374 = vld [vmem:[%s88 + $0x470] sm:$0xff]
          %375 = vst [vmem:[%s89 + $0x470] sm:$0xff] %v374
          %v376 = vld [vmem:[%s88 + $0x478] sm:$0xff]
          %377 = vst [vmem:[%s89 + $0x478] sm:$0xff] %v376
          %v378 = vld [vmem:[%s88 + $0x480] sm:$0xff]
          %379 = vst [vmem:[%s89 + $0x480] sm:$0xff] %v378
          %v380 = vld [vmem:[%s88 + $0x488] sm:$0xff]
          %381 = vst [vmem:[%s89 + $0x488] sm:$0xff] %v380
          %v382 = vld [vmem:[%s88 + $0x490] sm:$0xff]
          %383 = vst [vmem:[%s89 + $0x490] sm:$0xff] %v382
          %v384 = vld [vmem:[%s88 + $0x498] sm:$0xff]
          %385 = vst [vmem:[%s89 + $0x498] sm:$0xff] %v384
          %v386 = vld [vmem:[%s88 + $0x4a0] sm:$0xff]
          %387 = vst [vmem:[%s89 + $0x4a0] sm:$0xff] %v386
          %v388 = vld [vmem:[%s88 + $0x4a8] sm:$0xff]
          %389 = vst [vmem:[%s89 + $0x4a8] sm:$0xff] %v388
          %v390 = vld [vmem:[%s88 + $0x4b0] sm:$0xff]
          %391 = vst [vmem:[%s89 + $0x4b0] sm:$0xff] %v390
          %v392 = vld [vmem:[%s88 + $0x4b8] sm:$0xff]
          %393 = vst [vmem:[%s89 + $0x4b8] sm:$0xff] %v392
          %v394 = vld [vmem:[%s88 + $0x4c0] sm:$0xff]
          %395 = vst [vmem:[%s89 + $0x4c0] sm:$0xff] %v394
          %v396 = vld [vmem:[%s88 + $0x4c8] sm:$0xff]
          %397 = vst [vmem:[%s89 + $0x4c8] sm:$0xff] %v396
          %v398 = vld [vmem:[%s88 + $0x4d0] sm:$0xff]
          %399 = vst [vmem:[%s89 + $0x4d0] sm:$0xff] %v398
          %v400 = vld [vmem:[%s88 + $0x4d8] sm:$0xff]
          %401 = vst [vmem:[%s89 + $0x4d8] sm:$0xff] %v400
          %v402 = vld [vmem:[%s88 + $0x4e0] sm:$0xff]
          %403 = vst [vmem:[%s89 + $0x4e0] sm:$0xff] %v402
          %v404 = vld [vmem:[%s88 + $0x4e8] sm:$0xff]
          %405 = vst [vmem:[%s89 + $0x4e8] sm:$0xff] %v404
          %v406 = vld [vmem:[%s88 + $0x4f0] sm:$0xff]
          %407 = vst [vmem:[%s89 + $0x4f0] sm:$0xff] %v406
          %v408 = vld [vmem:[%s88 + $0x4f8] sm:$0xff]
          %409 = vst [vmem:[%s89 + $0x4f8] sm:$0xff] %v408
          %v410 = vld [vmem:[%s88 + $0x500] sm:$0xff]
          %411 = vst [vmem:[%s89 + $0x500] sm:$0xff] %v410
          %v412 = vld [vmem:[%s88 + $0x508] sm:$0xff]
          %413 = vst [vmem:[%s89 + $0x508] sm:$0xff] %v412
          %v414 = vld [vmem:[%s88 + $0x510] sm:$0xff]
          %415 = vst [vmem:[%s89 + $0x510] sm:$0xff] %v414
          %v416 = vld [vmem:[%s88 + $0x518] sm:$0xff]
          %417 = vst [vmem:[%s89 + $0x518] sm:$0xff] %v416
          %v418 = vld [vmem:[%s88 + $0x520] sm:$0xff]
          %419 = vst [vmem:[%s89 + $0x520] sm:$0xff] %v418
          %v420 = vld [vmem:[%s88 + $0x528] sm:$0xff]
          %421 = vst [vmem:[%s89 + $0x528] sm:$0xff] %v420
          %v422 = vld [vmem:[%s88 + $0x530] sm:$0xff]
          %423 = vst [vmem:[%s89 + $0x530] sm:$0xff] %v422
          %v424 = vld [vmem:[%s88 + $0x538] sm:$0xff]
          %425 = vst [vmem:[%s89 + $0x538] sm:$0xff] %v424
          %v426 = vld [vmem:[%s88 + $0x540] sm:$0xff]
          %427 = vst [vmem:[%s89 + $0x540] sm:$0xff] %v426
          %v428 = vld [vmem:[%s88 + $0x548] sm:$0xff]
          %429 = vst [vmem:[%s89 + $0x548] sm:$0xff] %v428
          %v430 = vld [vmem:[%s88 + $0x550] sm:$0xff]
          %431 = vst [vmem:[%s89 + $0x550] sm:$0xff] %v430
          %v432 = vld [vmem:[%s88 + $0x558] sm:$0xff]
          %433 = vst [vmem:[%s89 + $0x558] sm:$0xff] %v432
          %v434 = vld [vmem:[%s88 + $0x560] sm:$0xff]
          %435 = vst [vmem:[%s89 + $0x560] sm:$0xff] %v434
          %v436 = vld [vmem:[%s88 + $0x568] sm:$0xff]
          %437 = vst [vmem:[%s89 + $0x568] sm:$0xff] %v436
          %v438 = vld [vmem:[%s88 + $0x570] sm:$0xff]
          %439 = vst [vmem:[%s89 + $0x570] sm:$0xff] %v438
          %v440 = vld [vmem:[%s88 + $0x578] sm:$0xff]
          %441 = vst [vmem:[%s89 + $0x578] sm:$0xff] %v440
          %v442 = vld [vmem:[%s88 + $0x580] sm:$0xff]
          %443 = vst [vmem:[%s89 + $0x580] sm:$0xff] %v442
          %v444 = vld [vmem:[%s88 + $0x588] sm:$0xff]
          %445 = vst [vmem:[%s89 + $0x588] sm:$0xff] %v444
          %v446 = vld [vmem:[%s88 + $0x590] sm:$0xff]
          %447 = vst [vmem:[%s89 + $0x590] sm:$0xff] %v446
          %v448 = vld [vmem:[%s88 + $0x598] sm:$0xff]
          %449 = vst [vmem:[%s89 + $0x598] sm:$0xff] %v448
          %v450 = vld [vmem:[%s88 + $0x5a0] sm:$0xff]
          %451 = vst [vmem:[%s89 + $0x5a0] sm:$0xff] %v450
          %v452 = vld [vmem:[%s88 + $0x5a8] sm:$0xff]
          %453 = vst [vmem:[%s89 + $0x5a8] sm:$0xff] %v452
          %v454 = vld [vmem:[%s88 + $0x5b0] sm:$0xff]
          %455 = vst [vmem:[%s89 + $0x5b0] sm:$0xff] %v454
          %v456 = vld [vmem:[%s88 + $0x5b8] sm:$0xff]
          %457 = vst [vmem:[%s89 + $0x5b8] sm:$0xff] %v456
          %v458 = vld [vmem:[%s88 + $0x5c0] sm:$0xff]
          %459 = vst [vmem:[%s89 + $0x5c0] sm:$0xff] %v458
          %v460 = vld [vmem:[%s88 + $0x5c8] sm:$0xff]
          %461 = vst [vmem:[%s89 + $0x5c8] sm:$0xff] %v460
          %v462 = vld [vmem:[%s88 + $0x5d0] sm:$0xff]
          %463 = vst [vmem:[%s89 + $0x5d0] sm:$0xff] %v462
          %v464 = vld [vmem:[%s88 + $0x5d8] sm:$0xff]
          %465 = vst [vmem:[%s89 + $0x5d8] sm:$0xff] %v464
          %v466 = vld [vmem:[%s88 + $0x5e0] sm:$0xff]
          %467 = vst [vmem:[%s89 + $0x5e0] sm:$0xff] %v466
          %v468 = vld [vmem:[%s88 + $0x5e8] sm:$0xff]
          %469 = vst [vmem:[%s89 + $0x5e8] sm:$0xff] %v468
          %v470 = vld [vmem:[%s88 + $0x5f0] sm:$0xff]
          %471 = vst [vmem:[%s89 + $0x5f0] sm:$0xff] %v470
          %v472 = vld [vmem:[%s88 + $0x5f8] sm:$0xff]
          %473 = vst [vmem:[%s89 + $0x5f8] sm:$0xff] %v472
          %v474 = vld [vmem:[%s88 + $0x600] sm:$0xff]
          %475 = vst [vmem:[%s89 + $0x600] sm:$0xff] %v474
          %v476 = vld [vmem:[%s88 + $0x608] sm:$0xff]
          %477 = vst [vmem:[%s89 + $0x608] sm:$0xff] %v476
          %v478 = vld [vmem:[%s88 + $0x610] sm:$0xff]
          %479 = vst [vmem:[%s89 + $0x610] sm:$0xff] %v478
          %v480 = vld [vmem:[%s88 + $0x618] sm:$0xff]
          %481 = vst [vmem:[%s89 + $0x618] sm:$0xff] %v480
          %v482 = vld [vmem:[%s88 + $0x620] sm:$0xff]
          %483 = vst [vmem:[%s89 + $0x620] sm:$0xff] %v482
          %v484 = vld [vmem:[%s88 + $0x628] sm:$0xff]
          %485 = vst [vmem:[%s89 + $0x628] sm:$0xff] %v484
          %v486 = vld [vmem:[%s88 + $0x630] sm:$0xff]
          %487 = vst [vmem:[%s89 + $0x630] sm:$0xff] %v486
          %v488 = vld [vmem:[%s88 + $0x638] sm:$0xff]
          %489 = vst [vmem:[%s89 + $0x638] sm:$0xff] %v488
          %v490 = vld [vmem:[%s88 + $0x640] sm:$0xff]
          %491 = vst [vmem:[%s89 + $0x640] sm:$0xff] %v490
          %v492 = vld [vmem:[%s88 + $0x648] sm:$0xff]
          %493 = vst [vmem:[%s89 + $0x648] sm:$0xff] %v492
          %v494 = vld [vmem:[%s88 + $0x650] sm:$0xff]
          %495 = vst [vmem:[%s89 + $0x650] sm:$0xff] %v494
          %v496 = vld [vmem:[%s88 + $0x658] sm:$0xff]
          %497 = vst [vmem:[%s89 + $0x658] sm:$0xff] %v496
          %v498 = vld [vmem:[%s88 + $0x660] sm:$0xff]
          %499 = vst [vmem:[%s89 + $0x660] sm:$0xff] %v498
          %v500 = vld [vmem:[%s88 + $0x668] sm:$0xff]
          %501 = vst [vmem:[%s89 + $0x668] sm:$0xff] %v500
          %v502 = vld [vmem:[%s88 + $0x670] sm:$0xff]
          %503 = vst [vmem:[%s89 + $0x670] sm:$0xff] %v502
          %v504 = vld [vmem:[%s88 + $0x678] sm:$0xff]
          %505 = vst [vmem:[%s89 + $0x678] sm:$0xff] %v504
          %v506 = vld [vmem:[%s88 + $0x680] sm:$0xff]
          %507 = vst [vmem:[%s89 + $0x680] sm:$0xff] %v506
          %v508 = vld [vmem:[%s88 + $0x688] sm:$0xff]
          %509 = vst [vmem:[%s89 + $0x688] sm:$0xff] %v508
          %v510 = vld [vmem:[%s88 + $0x690] sm:$0xff]
          %511 = vst [vmem:[%s89 + $0x690] sm:$0xff] %v510
          %v512 = vld [vmem:[%s88 + $0x698] sm:$0xff]
          %513 = vst [vmem:[%s89 + $0x698] sm:$0xff] %v512
          %v514 = vld [vmem:[%s88 + $0x6a0] sm:$0xff]
          %515 = vst [vmem:[%s89 + $0x6a0] sm:$0xff] %v514
          %v516 = vld [vmem:[%s88 + $0x6a8] sm:$0xff]
          %517 = vst [vmem:[%s89 + $0x6a8] sm:$0xff] %v516
          %v518 = vld [vmem:[%s88 + $0x6b0] sm:$0xff]
          %519 = vst [vmem:[%s89 + $0x6b0] sm:$0xff] %v518
          %v520 = vld [vmem:[%s88 + $0x6b8] sm:$0xff]
          %521 = vst [vmem:[%s89 + $0x6b8] sm:$0xff] %v520
          %v522 = vld [vmem:[%s88 + $0x6c0] sm:$0xff]
          %523 = vst [vmem:[%s89 + $0x6c0] sm:$0xff] %v522
          %v524 = vld [vmem:[%s88 + $0x6c8] sm:$0xff]
          %525 = vst [vmem:[%s89 + $0x6c8] sm:$0xff] %v524
          %v526 = vld [vmem:[%s88 + $0x6d0] sm:$0xff]
          %527 = vst [vmem:[%s89 + $0x6d0] sm:$0xff] %v526
          %v528 = vld [vmem:[%s88 + $0x6d8] sm:$0xff]
          %529 = vst [vmem:[%s89 + $0x6d8] sm:$0xff] %v528
          %v530 = vld [vmem:[%s88 + $0x6e0] sm:$0xff]
          %531 = vst [vmem:[%s89 + $0x6e0] sm:$0xff] %v530
          %v532 = vld [vmem:[%s88 + $0x6e8] sm:$0xff]
          %533 = vst [vmem:[%s89 + $0x6e8] sm:$0xff] %v532
          %v534 = vld [vmem:[%s88 + $0x6f0] sm:$0xff]
          %535 = vst [vmem:[%s89 + $0x6f0] sm:$0xff] %v534
          %v536 = vld [vmem:[%s88 + $0x6f8] sm:$0xff]
          %537 = vst [vmem:[%s89 + $0x6f8] sm:$0xff] %v536
          %v538 = vld [vmem:[%s88 + $0x700] sm:$0xff]
          %539 = vst [vmem:[%s89 + $0x700] sm:$0xff] %v538
          %v540 = vld [vmem:[%s88 + $0x708] sm:$0xff]
          %541 = vst [vmem:[%s89 + $0x708] sm:$0xff] %v540
          %v542 = vld [vmem:[%s88 + $0x710] sm:$0xff]
          %543 = vst [vmem:[%s89 + $0x710] sm:$0xff] %v542
          %v544 = vld [vmem:[%s88 + $0x718] sm:$0xff]
          %545 = vst [vmem:[%s89 + $0x718] sm:$0xff] %v544
          %v546 = vld [vmem:[%s88 + $0x720] sm:$0xff]
          %547 = vst [vmem:[%s89 + $0x720] sm:$0xff] %v546
          %v548 = vld [vmem:[%s88 + $0x728] sm:$0xff]
          %549 = vst [vmem:[%s89 + $0x728] sm:$0xff] %v548
          %v550 = vld [vmem:[%s88 + $0x730] sm:$0xff]
          %551 = vst [vmem:[%s89 + $0x730] sm:$0xff] %v550
          %v552 = vld [vmem:[%s88 + $0x738] sm:$0xff]
          %553 = vst [vmem:[%s89 + $0x738] sm:$0xff] %v552
          %v554 = vld [vmem:[%s88 + $0x740] sm:$0xff]
          %555 = vst [vmem:[%s89 + $0x740] sm:$0xff] %v554
          %v556 = vld [vmem:[%s88 + $0x748] sm:$0xff]
          %557 = vst [vmem:[%s89 + $0x748] sm:$0xff] %v556
          %v558 = vld [vmem:[%s88 + $0x750] sm:$0xff]
          %559 = vst [vmem:[%s89 + $0x750] sm:$0xff] %v558
          %v560 = vld [vmem:[%s88 + $0x758] sm:$0xff]
          %561 = vst [vmem:[%s89 + $0x758] sm:$0xff] %v560
          %v562 = vld [vmem:[%s88 + $0x760] sm:$0xff]
          %563 = vst [vmem:[%s89 + $0x760] sm:$0xff] %v562
          %v564 = vld [vmem:[%s88 + $0x768] sm:$0xff]
          %565 = vst [vmem:[%s89 + $0x768] sm:$0xff] %v564
          %v566 = vld [vmem:[%s88 + $0x770] sm:$0xff]
          %567 = vst [vmem:[%s89 + $0x770] sm:$0xff] %v566
          %v568 = vld [vmem:[%s88 + $0x778] sm:$0xff]
          %569 = vst [vmem:[%s89 + $0x778] sm:$0xff] %v568
          %v570 = vld [vmem:[%s88 + $0x780] sm:$0xff]
          %571 = vst [vmem:[%s89 + $0x780] sm:$0xff] %v570
          %v572 = vld [vmem:[%s88 + $0x788] sm:$0xff]
          %573 = vst [vmem:[%s89 + $0x788] sm:$0xff] %v572
          %v574 = vld [vmem:[%s88 + $0x790] sm:$0xff]
          %575 = vst [vmem:[%s89 + $0x790] sm:$0xff] %v574
          %v576 = vld [vmem:[%s88 + $0x798] sm:$0xff]
          %577 = vst [vmem:[%s89 + $0x798] sm:$0xff] %v576
          %v578 = vld [vmem:[%s88 + $0x7a0] sm:$0xff]
          %579 = vst [vmem:[%s89 + $0x7a0] sm:$0xff] %v578
          %v580 = vld [vmem:[%s88 + $0x7a8] sm:$0xff]
          %581 = vst [vmem:[%s89 + $0x7a8] sm:$0xff] %v580
          %v582 = vld [vmem:[%s88 + $0x7b0] sm:$0xff]
          %583 = vst [vmem:[%s89 + $0x7b0] sm:$0xff] %v582
          %v584 = vld [vmem:[%s88 + $0x7b8] sm:$0xff]
          %585 = vst [vmem:[%s89 + $0x7b8] sm:$0xff] %v584
          %v586 = vld [vmem:[%s88 + $0x7c0] sm:$0xff]
          %587 = vst [vmem:[%s89 + $0x7c0] sm:$0xff] %v586
          %v588 = vld [vmem:[%s88 + $0x7c8] sm:$0xff]
          %589 = vst [vmem:[%s89 + $0x7c8] sm:$0xff] %v588
          %v590 = vld [vmem:[%s88 + $0x7d0] sm:$0xff]
          %591 = vst [vmem:[%s89 + $0x7d0] sm:$0xff] %v590
          %v592 = vld [vmem:[%s88 + $0x7d8] sm:$0xff]
          %593 = vst [vmem:[%s89 + $0x7d8] sm:$0xff] %v592
          %v594 = vld [vmem:[%s88 + $0x7e0] sm:$0xff]
          %595 = vst [vmem:[%s89 + $0x7e0] sm:$0xff] %v594
          %v596 = vld [vmem:[%s88 + $0x7e8] sm:$0xff]
          %597 = vst [vmem:[%s89 + $0x7e8] sm:$0xff] %v596
          %v598 = vld [vmem:[%s88 + $0x7f0] sm:$0xff]
          %599 = vst [vmem:[%s89 + $0x7f0] sm:$0xff] %v598
          %v600 = vld [vmem:[%s88 + $0x7f8] sm:$0xff]
          %601 = vst [vmem:[%s89 + $0x7f8] sm:$0xff] %v600
        $region89: #{_lambda_.1} parent=83 // loop_footer
          %s87 = sadd.s32 1, %s83
        $region90: #{_lambda_.1} parent=83 // loop_footer_branch
          %82 = sbr.rel target = $region86
        $region91: #{_lambda_.1} parent=83 // loop_exit
          _
      $region84: #{_lambda_.1} parent=68 // pred_fallthru
        _
      %p602 = pneg %p78
      // Predicated region
      $region92: #{_lambda_.1} parent=68 // pred_check
        _
      $region93: #{_lambda_.1} parent=68 // pred_check_branch
        %604 = sbr.rel (%p78) target = $region95
      $region94: #{_lambda_.1} parent=68 // pred_region
        %s605 = sand.u32 2048, 7
      $region95: #{_lambda_.1} parent=68 // pred_fallthru
        _
    $region69: #{_lambda_.1} parent=1 // pred_fallthru
      _
    // Predicated region
    $region70: #{_lambda_.1} parent=1 // pred_check
      %p63 = pneg %p59
    $region71: #{_lambda_.1} parent=1 // pred_check_branch
      %65 = sbr.rel (%p63) target = $region73
    $region72: #{_lambda_.1} parent=1 // pred_region
      %s66 = sshllo.u32 0, 2048
      loop: start=0, step=1, limit=1
      $region74: #{_lambda_.1} parent=72 // loop_pre_header
        _
      $region75: #{_lambda_.1} parent=72 // loop_header
        %s68 = sphi 0, %s72
        %p69 = scmp.ge.s32.totalorder %s68, 1
        %s73 = sphi %s5, %s5
        %s74 = sphi [#allocation4], [#allocation4]
      $region76: #{_lambda_.1} parent=72 // loop_header_branch
        %71 = sbr.rel (%p69) target = $region80
      $region77: #{_lambda_.1} parent=72 // loop_body
        %v75 = vld [vmem:[%s73] sm:%s66]
        %76 = vst [vmem:[%s74] sm:%s66] %v75
      $region78: #{_lambda_.1} parent=72 // loop_footer
        %s72 = sadd.s32 1, %s68
      $region79: #{_lambda_.1} parent=72 // loop_footer_branch
        %67 = sbr.rel target = $region75
      $region80: #{_lambda_.1} parent=72 // loop_exit
        _
    $region73: #{_lambda_.1} parent=1 // pred_fallthru
      _
    // Predicated region
    $region96: #{_lambda_.1} parent=1 // pred_check
      _
    $region97: #{_lambda_.1} parent=1 // pred_check_branch
      %608 = sbr.rel (0) target = $region99
    $region98: #{_lambda_.1} parent=1 // pred_region
      %609 = vsyncadd [#allocation5], 32768
    $region99: #{_lambda_.1} parent=1 // pred_fallthru
      _
    %v610 = vld [vmem:[%s0] sm:$0xf]
    %v611 = vld [vmem:[%s0 + $0x4] sm:$0xf]
    %v612 = vld [vmem:[%s0 + $0x8] sm:$0xf]
    %v613 = vld [vmem:[%s0 + $0xc] sm:$0xf]
    %v614 = vld [vmem:[%s0 + $0x10] sm:$0xf]
    %v615 = vld [vmem:[%s0 + $0x14] sm:$0xf]
    %v616 = vld [vmem:[%s0 + $0x18] sm:$0xf]
    %v617 = vld [vmem:[%s0 + $0x1c] sm:$0xf]
    %v618 = vld [vmem:[%s0 + $0x20] sm:$0xf]
    %v619 = vld [vmem:[%s0 + $0x24] sm:$0xf]
    %v620 = vld [vmem:[%s0 + $0x28] sm:$0xf]
    %v621 = vld [vmem:[%s0 + $0x2c] sm:$0xf]
    %v622 = vld [vmem:[%s0 + $0x30] sm:$0xf]
    %v623 = vld [vmem:[%s0 + $0x34] sm:$0xf]
    %v624 = vld [vmem:[%s0 + $0x38] sm:$0xf]
    %v625 = vld [vmem:[%s0 + $0x3c] sm:$0xf]
    %v626 = vld [vmem:[%s0 + $0x40] sm:$0xf]
    %v627 = vld [vmem:[%s0 + $0x44] sm:$0xf]
    %v628 = vld [vmem:[%s0 + $0x48] sm:$0xf]
    %v629 = vld [vmem:[%s0 + $0x4c] sm:$0xf]
    %v630 = vld [vmem:[%s0 + $0x50] sm:$0xf]
    %v631 = vld [vmem:[%s0 + $0x54] sm:$0xf]
    %v632 = vld [vmem:[%s0 + $0x58] sm:$0xf]
    %v633 = vld [vmem:[%s0 + $0x5c] sm:$0xf]
    %v634 = vld [vmem:[%s0 + $0x60] sm:$0xf]
    %v635 = vld [vmem:[%s0 + $0x64] sm:$0xf]
    %v636 = vld [vmem:[%s0 + $0x68] sm:$0xf]
    %v637 = vld [vmem:[%s0 + $0x6c] sm:$0xf]
    %v638 = vld [vmem:[%s0 + $0x70] sm:$0xf]
    %v639 = vld [vmem:[%s0 + $0x74] sm:$0xf]
    %v640 = vld [vmem:[%s0 + $0x78] sm:$0xf]
    %v641 = vld [vmem:[%s0 + $0x7c] sm:$0xf]
    %v642 = vld [vmem:[%s0 + $0x80] sm:$0xf]
    %v643 = vld [vmem:[%s0 + $0x84] sm:$0xf]
    %v644 = vld [vmem:[%s0 + $0x88] sm:$0xf]
    %v645 = vld [vmem:[%s0 + $0x8c] sm:$0xf]
    %v646 = vld [vmem:[%s0 + $0x90] sm:$0xf]
    %v647 = vld [vmem:[%s0 + $0x94] sm:$0xf]
    %v648 = vld [vmem:[%s0 + $0x98] sm:$0xf]
    %v649 = vld [vmem:[%s0 + $0x9c] sm:$0xf]
    %v650 = vld [vmem:[%s0 + $0xa0] sm:$0xf]
    %v651 = vld [vmem:[%s0 + $0xa4] sm:$0xf]
    %v652 = vld [vmem:[%s0 + $0xa8] sm:$0xf]
    %v653 = vld [vmem:[%s0 + $0xac] sm:$0xf]
    %v654 = vld [vmem:[%s0 + $0xb0] sm:$0xf]
    %v655 = vld [vmem:[%s0 + $0xb4] sm:$0xf]
    %v656 = vld [vmem:[%s0 + $0xb8] sm:$0xf]
    %v657 = vld [vmem:[%s0 + $0xbc] sm:$0xf]
    %v658 = vld [vmem:[%s0 + $0xc0] sm:$0xf]
    %v659 = vld [vmem:[%s0 + $0xc4] sm:$0xf]
    %v660 = vld [vmem:[%s0 + $0xc8] sm:$0xf]
    %v661 = vld [vmem:[%s0 + $0xcc] sm:$0xf]
    %v662 = vld [vmem:[%s0 + $0xd0] sm:$0xf]
    %v663 = vld [vmem:[%s0 + $0xd4] sm:$0xf]
    %v664 = vld [vmem:[%s0 + $0xd8] sm:$0xf]
    %v665 = vld [vmem:[%s0 + $0xdc] sm:$0xf]
    %v666 = vld [vmem:[%s0 + $0xe0] sm:$0xf]
    %v667 = vld [vmem:[%s0 + $0xe4] sm:$0xf]
    %v668 = vld [vmem:[%s0 + $0xe8] sm:$0xf]
    %v669 = vld [vmem:[%s0 + $0xec] sm:$0xf]
    %v670 = vld [vmem:[%s0 + $0xf0] sm:$0xf]
    %v671 = vld [vmem:[%s0 + $0xf4] sm:$0xf]
    %v672 = vld [vmem:[%s0 + $0xf8] sm:$0xf]
    %v673 = vld [vmem:[%s0 + $0xfc] sm:$0xf]
    %v674 = vld [vmem:[%s0 + $0x100] sm:$0xf]
    %v675 = vld [vmem:[%s0 + $0x104] sm:$0xf]
    %v676 = vld [vmem:[%s0 + $0x108] sm:$0xf]
    %v677 = vld [vmem:[%s0 + $0x10c] sm:$0xf]
    %v678 = vld [vmem:[%s0 + $0x110] sm:$0xf]
    %v679 = vld [vmem:[%s0 + $0x114] sm:$0xf]
    %v680 = vld [vmem:[%s0 + $0x118] sm:$0xf]
    %v681 = vld [vmem:[%s0 + $0x11c] sm:$0xf]
    %v682 = vld [vmem:[%s0 + $0x120] sm:$0xf]
    %v683 = vld [vmem:[%s0 + $0x124] sm:$0xf]
    %v684 = vld [vmem:[%s0 + $0x128] sm:$0xf]
    %v685 = vld [vmem:[%s0 + $0x12c] sm:$0xf]
    %v686 = vld [vmem:[%s0 + $0x130] sm:$0xf]
    %v687 = vld [vmem:[%s0 + $0x134] sm:$0xf]
    %v688 = vld [vmem:[%s0 + $0x138] sm:$0xf]
    %v689 = vld [vmem:[%s0 + $0x13c] sm:$0xf]
    %v690 = vld [vmem:[%s0 + $0x140] sm:$0xf]
    %v691 = vld [vmem:[%s0 + $0x144] sm:$0xf]
    %v692 = vld [vmem:[%s0 + $0x148] sm:$0xf]
    %v693 = vld [vmem:[%s0 + $0x14c] sm:$0xf]
    %v694 = vld [vmem:[%s0 + $0x150] sm:$0xf]
    %v695 = vld [vmem:[%s0 + $0x154] sm:$0xf]
    %v696 = vld [vmem:[%s0 + $0x158] sm:$0xf]
    %v697 = vld [vmem:[%s0 + $0x15c] sm:$0xf]
    %v698 = vld [vmem:[%s0 + $0x160] sm:$0xf]
    %v699 = vld [vmem:[%s0 + $0x164] sm:$0xf]
    %v700 = vld [vmem:[%s0 + $0x168] sm:$0xf]
    %v701 = vld [vmem:[%s0 + $0x16c] sm:$0xf]
    %v702 = vld [vmem:[%s0 + $0x170] sm:$0xf]
    %v703 = vld [vmem:[%s0 + $0x174] sm:$0xf]
    %v704 = vld [vmem:[%s0 + $0x178] sm:$0xf]
    %v705 = vld [vmem:[%s0 + $0x17c] sm:$0xf]
    %v706 = vld [vmem:[%s0 + $0x180] sm:$0xf]
    %v707 = vld [vmem:[%s0 + $0x184] sm:$0xf]
    %v708 = vld [vmem:[%s0 + $0x188] sm:$0xf]
    %v709 = vld [vmem:[%s0 + $0x18c] sm:$0xf]
    %v710 = vld [vmem:[%s0 + $0x190] sm:$0xf]
    %v711 = vld [vmem:[%s0 + $0x194] sm:$0xf]
    %v712 = vld [vmem:[%s0 + $0x198] sm:$0xf]
    %v713 = vld [vmem:[%s0 + $0x19c] sm:$0xf]
    %v714 = vld [vmem:[%s0 + $0x1a0] sm:$0xf]
    %v715 = vld [vmem:[%s0 + $0x1a4] sm:$0xf]
    %v716 = vld [vmem:[%s0 + $0x1a8] sm:$0xf]
    %v717 = vld [vmem:[%s0 + $0x1ac] sm:$0xf]
    %v718 = vld [vmem:[%s0 + $0x1b0] sm:$0xf]
    %v719 = vld [vmem:[%s0 + $0x1b4] sm:$0xf]
    %v720 = vld [vmem:[%s0 + $0x1b8] sm:$0xf]
    %v721 = vld [vmem:[%s0 + $0x1bc] sm:$0xf]
    %v722 = vld [vmem:[%s0 + $0x1c0] sm:$0xf]
    %v723 = vld [vmem:[%s0 + $0x1c4] sm:$0xf]
    %v724 = vld [vmem:[%s0 + $0x1c8] sm:$0xf]
    %v725 = vld [vmem:[%s0 + $0x1cc] sm:$0xf]
    %v726 = vld [vmem:[%s0 + $0x1d0] sm:$0xf]
    %v727 = vld [vmem:[%s0 + $0x1d4] sm:$0xf]
    %v728 = vld [vmem:[%s0 + $0x1d8] sm:$0xf]
    %v729 = vld [vmem:[%s0 + $0x1dc] sm:$0xf]
    %v730 = vld [vmem:[%s0 + $0x1e0] sm:$0xf]
    %v731 = vld [vmem:[%s0 + $0x1e4] sm:$0xf]
    %v732 = vld [vmem:[%s0 + $0x1e8] sm:$0xf]
    %v733 = vld [vmem:[%s0 + $0x1ec] sm:$0xf]
    %v734 = vld [vmem:[%s0 + $0x1f0] sm:$0xf]
    %v735 = vld [vmem:[%s0 + $0x1f4] sm:$0xf]
    %v736 = vld [vmem:[%s0 + $0x1f8] sm:$0xf]
    %v737 = vld [vmem:[%s0 + $0x1fc] sm:$0xf]
    %v738 = vld [vmem:[%s1] sm:$0xff]
    %v739 = vld [vmem:[%s1 + $0x8] sm:$0xff]
    %v740 = vld [vmem:[%s1 + $0x10] sm:$0xff]
    %v741 = vld [vmem:[%s1 + $0x18] sm:$0xff]
    %v742 = vld [vmem:[%s1 + $0x20] sm:$0xff]
    %v743 = vld [vmem:[%s1 + $0x28] sm:$0xff]
    %v744 = vld [vmem:[%s1 + $0x30] sm:$0xff]
    %v745 = vld [vmem:[%s1 + $0x38] sm:$0xff]
    %v746 = vld [vmem:[%s1 + $0x40] sm:$0xff]
    %v747 = vld [vmem:[%s1 + $0x48] sm:$0x1]
    %v748 = vld [vmem:[%s1 + $0x50] sm:$0x1]
    %v749 = vld [vmem:[%s1 + $0x58] sm:$0x1]
    %v750 = vld [vmem:[%s2] sm:$0x7]
    %v752 = vlaneseq
    %v753 = vshrl.u32 %v752, 7
    %v754 = vsub.s32 0, %v753
    %v755 = vrot.slane %v750, %v754
    %v756 = vlaneseq
    %v757 = vshrl.u32 %v756, 7
    %v758 = vsub.s32 1, %v757
    %v759 = vrot.slane %v750, %v758
    %v760 = vlaneseq
    %v761 = vshrl.u32 %v760, 7
    %v762 = vsub.s32 2, %v761
    %v763 = vrot.slane %v750, %v762
    %v895 = vunpack.c.l.b16 %v610
    %v896 = vunpack.c.l.b16 %v611
    %v897 = vunpack.c.l.b16 %v612
    %v898 = vunpack.c.l.b16 %v613
    %v899 = vunpack.c.l.b16 %v614
    %v900 = vunpack.c.l.b16 %v615
    %v901 = vunpack.c.l.b16 %v616
    %v902 = vunpack.c.l.b16 %v617
    %v903 = vunpack.c.l.b16 %v618
    %v904 = vunpack.c.l.b16 %v619
    %v905 = vunpack.c.l.b16 %v620
    %v906 = vunpack.c.l.b16 %v621
    %v907 = vunpack.c.l.b16 %v622
    %v908 = vunpack.c.l.b16 %v623
    %v909 = vunpack.c.l.b16 %v624
    %v910 = vunpack.c.l.b16 %v625
    %v911 = vunpack.c.l.b16 %v626
    %v912 = vunpack.c.l.b16 %v627
    %v913 = vunpack.c.l.b16 %v628
    %v914 = vunpack.c.l.b16 %v629
    %v915 = vunpack.c.l.b16 %v630
    %v916 = vunpack.c.l.b16 %v631
    %v917 = vunpack.c.l.b16 %v632
    %v918 = vunpack.c.l.b16 %v633
    %v919 = vunpack.c.l.b16 %v634
    %v920 = vunpack.c.l.b16 %v635
    %v921 = vunpack.c.l.b16 %v636
    %v922 = vunpack.c.l.b16 %v637
    %v923 = vunpack.c.l.b16 %v638
    %v924 = vunpack.c.l.b16 %v639
    %v925 = vunpack.c.l.b16 %v640
    %v926 = vunpack.c.l.b16 %v641
    %v927 = vunpack.c.l.b16 %v642
    %v928 = vunpack.c.l.b16 %v643
    %v929 = vunpack.c.l.b16 %v644
    %v930 = vunpack.c.l.b16 %v645
    %v931 = vunpack.c.l.b16 %v646
    %v932 = vunpack.c.l.b16 %v647
    %v933 = vunpack.c.l.b16 %v648
    %v934 = vunpack.c.l.b16 %v649
    %v935 = vunpack.c.l.b16 %v650
    %v936 = vunpack.c.l.b16 %v651
    %v937 = vunpack.c.l.b16 %v652
    %v938 = vunpack.c.l.b16 %v653
    %v939 = vunpack.c.l.b16 %v654
    %v940 = vunpack.c.l.b16 %v655
    %v941 = vunpack.c.l.b16 %v656
    %v942 = vunpack.c.l.b16 %v657
    %v943 = vunpack.c.l.b16 %v658
    %v944 = vunpack.c.l.b16 %v659
    %v945 = vunpack.c.l.b16 %v660
    %v946 = vunpack.c.l.b16 %v661
    %v947 = vunpack.c.l.b16 %v662
    %v948 = vunpack.c.l.b16 %v663
    %v949 = vunpack.c.l.b16 %v664
    %v950 = vunpack.c.l.b16 %v665
    %v951 = vunpack.c.l.b16 %v666
    %v952 = vunpack.c.l.b16 %v667
    %v953 = vunpack.c.l.b16 %v668
    %v954 = vunpack.c.l.b16 %v669
    %v955 = vunpack.c.l.b16 %v670
    %v956 = vunpack.c.l.b16 %v671
    %v957 = vunpack.c.l.b16 %v672
    %v958 = vunpack.c.l.b16 %v673
    %v959 = vunpack.c.l.b16 %v674
    %v960 = vunpack.c.l.b16 %v675
    %v961 = vunpack.c.l.b16 %v676
    %v962 = vunpack.c.l.b16 %v677
    %v963 = vunpack.c.l.b16 %v678
    %v964 = vunpack.c.l.b16 %v679
    %v965 = vunpack.c.l.b16 %v680
    %v966 = vunpack.c.l.b16 %v681
    %v967 = vunpack.c.l.b16 %v682
    %v968 = vunpack.c.l.b16 %v683
    %v969 = vunpack.c.l.b16 %v684
    %v970 = vunpack.c.l.b16 %v685
    %v971 = vunpack.c.l.b16 %v686
    %v972 = vunpack.c.l.b16 %v687
    %v973 = vunpack.c.l.b16 %v688
    %v974 = vunpack.c.l.b16 %v689
    %v975 = vunpack.c.l.b16 %v690
    %v976 = vunpack.c.l.b16 %v691
    %v977 = vunpack.c.l.b16 %v692
    %v978 = vunpack.c.l.b16 %v693
    %v979 = vunpack.c.l.b16 %v694
    %v980 = vunpack.c.l.b16 %v695
    %v981 = vunpack.c.l.b16 %v696
    %v982 = vunpack.c.l.b16 %v697
    %v983 = vunpack.c.l.b16 %v698
    %v984 = vunpack.c.l.b16 %v699
    %v985 = vunpack.c.l.b16 %v700
    %v986 = vunpack.c.l.b16 %v701
    %v987 = vunpack.c.l.b16 %v702
    %v988 = vunpack.c.l.b16 %v703
    %v989 = vunpack.c.l.b16 %v704
    %v990 = vunpack.c.l.b16 %v705
    %v991 = vunpack.c.l.b16 %v706
    %v992 = vunpack.c.l.b16 %v707
    %v993 = vunpack.c.l.b16 %v708
    %v994 = vunpack.c.l.b16 %v709
    %v995 = vunpack.c.l.b16 %v710
    %v996 = vunpack.c.l.b16 %v711
    %v997 = vunpack.c.l.b16 %v712
    %v998 = vunpack.c.l.b16 %v713
    %v999 = vunpack.c.l.b16 %v714
    %v1000 = vunpack.c.l.b16 %v715
    %v1001 = vunpack.c.l.b16 %v716
    %v1002 = vunpack.c.l.b16 %v717
    %v1003 = vunpack.c.l.b16 %v718
    %v1004 = vunpack.c.l.b16 %v719
    %v1005 = vunpack.c.l.b16 %v720
    %v1006 = vunpack.c.l.b16 %v721
    %v1007 = vunpack.c.l.b16 %v722
    %v1008 = vunpack.c.l.b16 %v723
    %v1009 = vunpack.c.l.b16 %v724
    %v1010 = vunpack.c.l.b16 %v725
    %v1011 = vunpack.c.l.b16 %v726
    %v1012 = vunpack.c.l.b16 %v727
    %v1013 = vunpack.c.l.b16 %v728
    %v1014 = vunpack.c.l.b16 %v729
    %v1015 = vunpack.c.l.b16 %v730
    %v1016 = vunpack.c.l.b16 %v731
    %v1017 = vunpack.c.l.b16 %v732
    %v1018 = vunpack.c.l.b16 %v733
    %v1019 = vunpack.c.l.b16 %v734
    %v1020 = vunpack.c.l.b16 %v735
    %v1021 = vunpack.c.l.b16 %v736
    %v1022 = vunpack.c.l.b16 %v737
    %v1023 = vpack.c.b16 %v896, %v895
    %v1024 = vpack.c.b16 %v898, %v897
    %v1025 = vpack.c.b16 %v900, %v899
    %v1026 = vpack.c.b16 %v902, %v901
    %v1027 = vpack.c.b16 %v904, %v903
    %v1028 = vpack.c.b16 %v906, %v905
    %v1029 = vpack.c.b16 %v908, %v907
    %v1030 = vpack.c.b16 %v910, %v909
    %v1031 = vpack.c.b16 %v912, %v911
    %v1032 = vpack.c.b16 %v914, %v913
    %v1033 = vpack.c.b16 %v916, %v915
    %v1034 = vpack.c.b16 %v918, %v917
    %v1035 = vpack.c.b16 %v920, %v919
    %v1036 = vpack.c.b16 %v922, %v921
    %v1037 = vpack.c.b16 %v924, %v923
    %v1038 = vpack.c.b16 %v926, %v925
    %v1039 = vpack.c.b16 %v928, %v927
    %v1040 = vpack.c.b16 %v930, %v929
    %v1041 = vpack.c.b16 %v932, %v931
    %v1042 = vpack.c.b16 %v934, %v933
    %v1043 = vpack.c.b16 %v936, %v935
    %v1044 = vpack.c.b16 %v938, %v937
    %v1045 = vpack.c.b16 %v940, %v939
    %v1046 = vpack.c.b16 %v942, %v941
    %v1047 = vpack.c.b16 %v944, %v943
    %v1048 = vpack.c.b16 %v946, %v945
    %v1049 = vpack.c.b16 %v948, %v947
    %v1050 = vpack.c.b16 %v950, %v949
    %v1051 = vpack.c.b16 %v952, %v951
    %v1052 = vpack.c.b16 %v954, %v953
    %v1053 = vpack.c.b16 %v956, %v955
    %v1054 = vpack.c.b16 %v958, %v957
    %v1055 = vpack.c.b16 %v960, %v959
    %v1056 = vpack.c.b16 %v962, %v961
    %v1057 = vpack.c.b16 %v964, %v963
    %v1058 = vpack.c.b16 %v966, %v965
    %v1059 = vpack.c.b16 %v968, %v967
    %v1060 = vpack.c.b16 %v970, %v969
    %v1061 = vpack.c.b16 %v972, %v971
    %v1062 = vpack.c.b16 %v974, %v973
    %v1063 = vpack.c.b16 %v976, %v975
    %v1064 = vpack.c.b16 %v978, %v977
    %v1065 = vpack.c.b16 %v980, %v979
    %v1066 = vpack.c.b16 %v982, %v981
    %v1067 = vpack.c.b16 %v984, %v983
    %v1068 = vpack.c.b16 %v986, %v985
    %v1069 = vpack.c.b16 %v988, %v987
    %v1070 = vpack.c.b16 %v990, %v989
    %v1071 = vpack.c.b16 %v992, %v991
    %v1072 = vpack.c.b16 %v994, %v993
    %v1073 = vpack.c.b16 %v996, %v995
    %v1074 = vpack.c.b16 %v998, %v997
    %v1075 = vpack.c.b16 %v1000, %v999
    %v1076 = vpack.c.b16 %v1002, %v1001
    %v1077 = vpack.c.b16 %v1004, %v1003
    %v1078 = vpack.c.b16 %v1006, %v1005
    %v1079 = vpack.c.b16 %v1008, %v1007
    %v1080 = vpack.c.b16 %v1010, %v1009
    %v1081 = vpack.c.b16 %v1012, %v1011
    %v1082 = vpack.c.b16 %v1014, %v1013
    %v1083 = vpack.c.b16 %v1016, %v1015
    %v1084 = vpack.c.b16 %v1018, %v1017
    %v1085 = vpack.c.b16 %v1020, %v1019
    %v1086 = vpack.c.b16 %v1022, %v1021
    %vm1087 = vcmask 203776
    %v1089 = vsel %vm1087, %v1023, 0
    %v1092 = vsel %vm1087, %v1024, 0
    %v1095 = vsel %vm1087, %v1025, 0
    %v1098 = vsel %vm1087, %v1026, 0
    %v1101 = vsel %vm1087, %v1027, 0
    %v1104 = vsel %vm1087, %v1028, 0
    %v1107 = vsel %vm1087, %v1029, 0
    %v1110 = vsel %vm1087, %v1030, 0
    %v1113 = vsel %vm1087, %v1031, 0
    %v1116 = vsel %vm1087, %v1032, 0
    %v1119 = vsel %vm1087, %v1033, 0
    %v1122 = vsel %vm1087, %v1034, 0
    %v1125 = vsel %vm1087, %v1035, 0
    %v1128 = vsel %vm1087, %v1036, 0
    %v1131 = vsel %vm1087, %v1037, 0
    %v1134 = vsel %vm1087, %v1038, 0
    %v1137 = vsel %vm1087, %v1039, 0
    %v1140 = vsel %vm1087, %v1040, 0
    %v1143 = vsel %vm1087, %v1041, 0
    %v1146 = vsel %vm1087, %v1042, 0
    %v1149 = vsel %vm1087, %v1043, 0
    %v1152 = vsel %vm1087, %v1044, 0
    %v1155 = vsel %vm1087, %v1045, 0
    %v1158 = vsel %vm1087, %v1046, 0
    %v1161 = vsel %vm1087, %v1047, 0
    %v1164 = vsel %vm1087, %v1048, 0
    %v1167 = vsel %vm1087, %v1049, 0
    %v1170 = vsel %vm1087, %v1050, 0
    %v1173 = vsel %vm1087, %v1051, 0
    %v1176 = vsel %vm1087, %v1052, 0
    %v1179 = vsel %vm1087, %v1053, 0
    %v1182 = vsel %vm1087, %v1054, 0
    %v1185 = vsel %vm1087, %v1055, 0
    %v1188 = vsel %vm1087, %v1056, 0
    %v1191 = vsel %vm1087, %v1057, 0
    %v1194 = vsel %vm1087, %v1058, 0
    %v1197 = vsel %vm1087, %v1059, 0
    %v1200 = vsel %vm1087, %v1060, 0
    %v1203 = vsel %vm1087, %v1061, 0
    %v1206 = vsel %vm1087, %v1062, 0
    %v1209 = vsel %vm1087, %v1063, 0
    %v1212 = vsel %vm1087, %v1064, 0
    %v1215 = vsel %vm1087, %v1065, 0
    %v1218 = vsel %vm1087, %v1066, 0
    %v1221 = vsel %vm1087, %v1067, 0
    %v1224 = vsel %vm1087, %v1068, 0
    %v1227 = vsel %vm1087, %v1069, 0
    %v1230 = vsel %vm1087, %v1070, 0
    %v1233 = vsel %vm1087, %v1071, 0
    %v1236 = vsel %vm1087, %v1072, 0
    %v1239 = vsel %vm1087, %v1073, 0
    %v1242 = vsel %vm1087, %v1074, 0
    %v1245 = vsel %vm1087, %v1075, 0
    %v1248 = vsel %vm1087, %v1076, 0
    %v1251 = vsel %vm1087, %v1077, 0
    %v1254 = vsel %vm1087, %v1078, 0
    %v1257 = vsel %vm1087, %v1079, 0
    %v1260 = vsel %vm1087, %v1080, 0
    %v1263 = vsel %vm1087, %v1081, 0
    %v1266 = vsel %vm1087, %v1082, 0
    %v1269 = vsel %vm1087, %v1083, 0
    %v1272 = vsel %vm1087, %v1084, 0
    %v1275 = vsel %vm1087, %v1085, 0
    %v1278 = vsel %vm1087, %v1086, 0
    %vm1280 = vcmask 1040384
    %v1282 = vsel %vm1280, %v747, 0
    %v1285 = vsel %vm1280, %v748, 0
    %v1288 = vsel %vm1280, %v749, 0
    %1290 = vmatprep.subr.mxu0 %v739
    %1291 = vmatpush1.msra.mxu0 %v738
    %1292 = vmatprep.subr.mxu0 %v742
    %1293 = vmatpush1.msra.mxu0 %v741
    %1294 = vmatprep.subr.mxu0 %v745
    %1295 = vmatpush1.msra.mxu0 %v744
    %1296 = vmatprep.subr.mxu0 %v1285
    %1297 = vmatpush1.msra.mxu0 %v1282
    %1298 = vmatprep.subr.mxu0 0.0
    %1299 = vmatpush1.msra.mxu0 0.0
    %1300 = vmatprep.subr.mxu0 0.0
    %1301 = vmatpush1.msra.mxu0 0.0
    %1302 = vmatprep.subr.mxu0 0.0
    %1303 = vmatpush1.msra.mxu0 0.0
    %1304 = vmatprep.subr.mxu0 0.0
    %1305 = vmatpush1.msra.mxu0 0.0
    %1306 = vmatprep.subr.mxu0 0.0
    %1307 = vmatpush1.msra.mxu0 0.0
    %1308 = vmatprep.subr.mxu0 0.0
    %1309 = vmatpush1.msra.mxu0 0.0
    %1310 = vmatprep.subr.mxu0 0.0
    %1311 = vmatpush1.msra.mxu0 0.0
    %1312 = vmatprep.subr.mxu0 0.0
    %1313 = vmatpush1.msra.mxu0 0.0
    %1314 = vmatprep.subr.mxu0 0.0
    %1315 = vmatpush1.msra.mxu0 0.0
    %1316 = vmatprep.subr.mxu0 0.0
    %1317 = vmatpush1.msra.mxu0 0.0
    %1318 = vmatprep.subr.mxu0 0.0
    %1319 = vmatpush1.msra.mxu0 0.0
    %1320 = vmatprep.subr.mxu0 0.0
    %1321 = vmatpush1.msra.mxu0 0.0
    %1322 = vmatprep.subr.mxu0 0.0
    %1323 = vmatpush1.msra.mxu0 0.0
    %1324 = vmatprep.subr.mxu0 0.0
    %1325 = vmatpush1.msra.mxu0 0.0
    %1326 = vmatprep.subr.mxu0 0.0
    %1327 = vmatpush1.msra.mxu0 0.0
    %1328 = vmatprep.subr.mxu0 0.0
    %1329 = vmatpush1.msra.mxu0 0.0
    %1330 = vmatprep.subr.mxu0 0.0
    %1331 = vmatpush1.msra.mxu0 0.0
    %1332 = vmatprep.subr.mxu0 0.0
    %1333 = vmatpush1.msra.mxu0 0.0
    %1334 = vmatprep.subr.mxu0 0.0
    %1335 = vmatpush1.msra.mxu0 0.0
    %1336 = vmatprep.subr.mxu0 0.0
    %1337 = vmatpush1.msra.mxu0 0.0
    %1338 = vmatprep.subr.mxu0 0.0
    %1339 = vmatpush1.msra.mxu0 0.0
    %1340 = vmatprep.subr.mxu0 0.0
    %1341 = vmatpush1.msra.mxu0 0.0
    %1342 = vmatprep.subr.mxu0 0.0
    %1343 = vmatpush1.msra.mxu0 0.0
    %1344 = vmatprep.subr.mxu0 0.0
    %1345 = vmatpush1.msra.mxu0 0.0
    %1346 = vmatprep.subr.mxu0 0.0
    %1347 = vmatpush1.msra.mxu0 0.0
    %1348 = vmatprep.subr.mxu0 0.0
    %1349 = vmatpush1.msra.mxu0 0.0
    %1350 = vmatprep.subr.mxu0 0.0
    %1351 = vmatpush1.msra.mxu0 0.0
    %1352 = vmatprep.subr.mxu0 0.0
    %1353 = vmatpush1.msra.mxu0 0.0
    %1354 = vmatprep.mubr.bf16.mxu0 0
    %1355 = vmatmul.mubr.bf16.gmra.mrb[0].mxu0 %v1089
    %v1356 = vpop.f32.mrb[0].mxu0
    %v1357 = vadd.f32 %v755, %v1356
    %v1358 = vpop.f32.mrb[0].mxu0
    %v1359 = vadd.f32 %v759, %v1358
    %v1360 = vpop.f32.mrb[0].mxu0
    %v1361 = vadd.f32 %v755, %v1360
    %v1362 = vpop.f32.mrb[0].mxu0
    %v1363 = vadd.f32 %v759, %v1362
    %1364 = vmatprep.mubr.bf16.mxu0 0
    %1365 = vmatmul.mubr.bf16.gmra.mrb[0].mxu0 %v1092
    %v1366 = vpop.f32.mrb[0].mxu0
    %v1367 = vadd.f32 %v755, %v1366
    %v1368 = vpop.f32.mrb[0].mxu0
    %v1369 = vadd.f32 %v759, %v1368
    %v1370 = vpop.f32.mrb[0].mxu0
    %v1371 = vadd.f32 %v755, %v1370
    %v1372 = vpop.f32.mrb[0].mxu0
    %v1373 = vadd.f32 %v759, %v1372
    %1374 = vmatprep.mubr.bf16.mxu0 0
    %1375 = vmatmul.mubr.bf16.gmra.mrb[0].mxu0 %v1095
    %v1376 = vpop.f32.mrb[0].mxu0
    %v1377 = vadd.f32 %v755, %v1376
    %v1378 = vpop.f32.mrb[0].mxu0
    %v1379 = vadd.f32 %v759, %v1378
    %v1380 = vpop.f32.mrb[0].mxu0
    %v1381 = vadd.f32 %v755, %v1380
    %v1382 = vpop.f32.mrb[0].mxu0
    %v1383 = vadd.f32 %v759, %v1382
    %1384 = vmatprep.mubr.bf16.mxu0 0
    %1385 = vmatmul.mubr.bf16.gmra.mrb[0].mxu0 %v1098
    %v1386 = vpop.f32.mrb[0].mxu0
    %v1387 = vadd.f32 %v755, %v1386
    %v1388 = vpop.f32.mrb[0].mxu0
    %v1389 = vadd.f32 %v759, %v1388
    %v1390 = vpop.f32.mrb[0].mxu0
    %v1391 = vadd.f32 %v755, %v1390
    %v1392 = vpop.f32.mrb[0].mxu0
    %v1393 = vadd.f32 %v759, %v1392
    %1394 = vmatprep.mubr.bf16.mxu0 0
    %1395 = vmatmul.mubr.bf16.gmra.mrb[0].mxu0 %v1101
    %v1396 = vpop.f32.mrb[0].mxu0
    %v1397 = vadd.f32 %v755, %v1396
    %v1398 = vpop.f32.mrb[0].mxu0
    %v1399 = vadd.f32 %v759, %v1398
    %v1400 = vpop.f32.mrb[0].mxu0
    %v1401 = vadd.f32 %v755, %v1400
    %v1402 = vpop.f32.mrb[0].mxu0
    %v1403 = vadd.f32 %v759, %v1402
    %1404 = vmatprep.mubr.bf16.mxu0 0
    %1405 = vmatmul.mubr.bf16.gmra.mrb[0].mxu0 %v1104
    %v1406 = vpop.f32.mrb[0].mxu0
    %v1407 = vadd.f32 %v755, %v1406
    %v1408 = vpop.f32.mrb[0].mxu0
    %v1409 = vadd.f32 %v759, %v1408
    %v1410 = vpop.f32.mrb[0].mxu0
    %v1411 = vadd.f32 %v755, %v1410
    %v1412 = vpop.f32.mrb[0].mxu0
    %v1413 = vadd.f32 %v759, %v1412
    %1414 = vmatprep.mubr.bf16.mxu0 0
    %1415 = vmatmul.mubr.bf16.gmra.mrb[0].mxu0 %v1107
    %v1416 = vpop.f32.mrb[0].mxu0
    %v1417 = vadd.f32 %v755, %v1416
    %v1418 = vpop.f32.mrb[0].mxu0
    %v1419 = vadd.f32 %v759, %v1418
    %v1420 = vpop.f32.mrb[0].mxu0
    %v1421 = vadd.f32 %v755, %v1420
    %v1422 = vpop.f32.mrb[0].mxu0
    %v1423 = vadd.f32 %v759, %v1422
    %1424 = vmatprep.mubr.bf16.mxu0 0
    %1425 = vmatmul.mubr.bf16.gmra.mrb[0].mxu0 %v1110
    %v1426 = vpop.f32.mrb[0].mxu0
    %v1427 = vadd.f32 %v755, %v1426
    %v1428 = vpop.f32.mrb[0].mxu0
    %v1429 = vadd.f32 %v759, %v1428
    %v1430 = vpop.f32.mrb[0].mxu0
    %v1431 = vadd.f32 %v755, %v1430
    %v1432 = vpop.f32.mrb[0].mxu0
    %v1433 = vadd.f32 %v759, %v1432
    %1434 = vmatprep.mubr.bf16.mxu0 0
    %1435 = vmatmul.mubr.bf16.gmra.mrb[0].mxu0 %v1113
    %v1436 = vpop.f32.mrb[0].mxu0
    %v1437 = vadd.f32 %v755, %v1436
    %v1438 = vpop.f32.mrb[0].mxu0
    %v1439 = vadd.f32 %v759, %v1438
    %v1440 = vpop.f32.mrb[0].mxu0
    %v1441 = vadd.f32 %v755, %v1440
    %v1442 = vpop.f32.mrb[0].mxu0
    %v1443 = vadd.f32 %v759, %v1442
    %1444 = vmatprep.mubr.bf16.mxu0 0
    %1445 = vmatmul.mubr.bf16.gmra.mrb[0].mxu0 %v1116
    %v1446 = vpop.f32.mrb[0].mxu0
    %v1447 = vadd.f32 %v755, %v1446
    %v1448 = vpop.f32.mrb[0].mxu0
    %v1449 = vadd.f32 %v759, %v1448
    %v1450 = vpop.f32.mrb[0].mxu0
    %v1451 = vadd.f32 %v755, %v1450
    %v1452 = vpop.f32.mrb[0].mxu0
    %v1453 = vadd.f32 %v759, %v1452
    %1454 = vmatprep.mubr.bf16.mxu0 0
    %1455 = vmatmul.mubr.bf16.gmra.mrb[0].mxu0 %v1119
    %v1456 = vpop.f32.mrb[0].mxu0
    %v1457 = vadd.f32 %v755, %v1456
    %v1458 = vpop.f32.mrb[0].mxu0
    %v1459 = vadd.f32 %v759, %v1458
    %v1460 = vpop.f32.mrb[0].mxu0
    %v1461 = vadd.f32 %v755, %v1460
    %v1462 = vpop.f32.mrb[0].mxu0
    %v1463 = vadd.f32 %v759, %v1462
    %1464 = vmatprep.mubr.bf16.mxu0 0
    %1465 = vmatmul.mubr.bf16.gmra.mrb[0].mxu0 %v1122
    %v1466 = vpop.f32.mrb[0].mxu0
    %v1467 = vadd.f32 %v755, %v1466
    %v1468 = vpop.f32.mrb[0].mxu0
    %v1469 = vadd.f32 %v759, %v1468
    %v1470 = vpop.f32.mrb[0].mxu0
    %v1471 = vadd.f32 %v755, %v1470
    %v1472 = vpop.f32.mrb[0].mxu0
    %v1473 = vadd.f32 %v759, %v1472
    %1474 = vmatprep.mubr.bf16.mxu0 0
    %1475 = vmatmul.mubr.bf16.gmra.mrb[0].mxu0 %v1125
    %v1476 = vpop.f32.mrb[0].mxu0
    %v1477 = vadd.f32 %v755, %v1476
    %v1478 = vpop.f32.mrb[0].mxu0
    %v1479 = vadd.f32 %v759, %v1478
    %v1480 = vpop.f32.mrb[0].mxu0
    %v1481 = vadd.f32 %v755, %v1480
    %v1482 = vpop.f32.mrb[0].mxu0
    %v1483 = vadd.f32 %v759, %v1482
    %1484 = vmatprep.mubr.bf16.mxu0 0
    %1485 = vmatmul.mubr.bf16.gmra.mrb[0].mxu0 %v1128
    %v1486 = vpop.f32.mrb[0].mxu0
    %v1487 = vadd.f32 %v755, %v1486
    %v1488 = vpop.f32.mrb[0].mxu0
    %v1489 = vadd.f32 %v759, %v1488
    %v1490 = vpop.f32.mrb[0].mxu0
    %v1491 = vadd.f32 %v755, %v1490
    %v1492 = vpop.f32.mrb[0].mxu0
    %v1493 = vadd.f32 %v759, %v1492
    %1494 = vmatprep.mubr.bf16.mxu0 0
    %1495 = vmatmul.mubr.bf16.gmra.mrb[0].mxu0 %v1131
    %v1496 = vpop.f32.mrb[0].mxu0
    %v1497 = vadd.f32 %v755, %v1496
    %v1498 = vpop.f32.mrb[0].mxu0
    %v1499 = vadd.f32 %v759, %v1498
    %v1500 = vpop.f32.mrb[0].mxu0
    %v1501 = vadd.f32 %v755, %v1500
    %v1502 = vpop.f32.mrb[0].mxu0
    %v1503 = vadd.f32 %v759, %v1502
    %1504 = vmatprep.mubr.bf16.mxu0 0
    %1505 = vmatmul.mubr.bf16.gmra.mrb[0].mxu0 %v1134
    %v1506 = vpop.f32.mrb[0].mxu0
    %v1507 = vadd.f32 %v755, %v1506
    %v1508 = vpop.f32.mrb[0].mxu0
    %v1509 = vadd.f32 %v759, %v1508
    %v1510 = vpop.f32.mrb[0].mxu0
    %v1511 = vadd.f32 %v755, %v1510
    %v1512 = vpop.f32.mrb[0].mxu0
    %v1513 = vadd.f32 %v759, %v1512
    %1514 = vmatprep.mubr.bf16.mxu0 0
    %1515 = vmatmul.mubr.bf16.gmra.mrb[0].mxu0 %v1137
    %v1516 = vpop.f32.mrb[0].mxu0
    %v1517 = vadd.f32 %v755, %v1516
    %v1518 = vpop.f32.mrb[0].mxu0
    %v1519 = vadd.f32 %v759, %v1518
    %v1520 = vpop.f32.mrb[0].mxu0
    %v1521 = vadd.f32 %v755, %v1520
    %v1522 = vpop.f32.mrb[0].mxu0
    %v1523 = vadd.f32 %v759, %v1522
    %1524 = vmatprep.mubr.bf16.mxu0 0
    %1525 = vmatmul.mubr.bf16.gmra.mrb[0].mxu0 %v1140
    %v1526 = vpop.f32.mrb[0].mxu0
    %v1527 = vadd.f32 %v755, %v1526
    %v1528 = vpop.f32.mrb[0].mxu0
    %v1529 = vadd.f32 %v759, %v1528
    %v1530 = vpop.f32.mrb[0].mxu0
    %v1531 = vadd.f32 %v755, %v1530
    %v1532 = vpop.f32.mrb[0].mxu0
    %v1533 = vadd.f32 %v759, %v1532
    %1534 = vmatprep.mubr.bf16.mxu0 0
    %1535 = vmatmul.mubr.bf16.gmra.mrb[0].mxu0 %v1143
    %v1536 = vpop.f32.mrb[0].mxu0
    %v1537 = vadd.f32 %v755, %v1536
    %v1538 = vpop.f32.mrb[0].mxu0
    %v1539 = vadd.f32 %v759, %v1538
    %v1540 = vpop.f32.mrb[0].mxu0
    %v1541 = vadd.f32 %v755, %v1540
    %v1542 = vpop.f32.mrb[0].mxu0
    %v1543 = vadd.f32 %v759, %v1542
    %1544 = vmatprep.mubr.bf16.mxu0 0
    %1545 = vmatmul.mubr.bf16.gmra.mrb[0].mxu0 %v1146
    %v1546 = vpop.f32.mrb[0].mxu0
    %v1547 = vadd.f32 %v755, %v1546
    %v1548 = vpop.f32.mrb[0].mxu0
    %v1549 = vadd.f32 %v759, %v1548
    %v1550 = vpop.f32.mrb[0].mxu0
    %v1551 = vadd.f32 %v755, %v1550
    %v1552 = vpop.f32.mrb[0].mxu0
    %v1553 = vadd.f32 %v759, %v1552
    %1554 = vmatprep.mubr.bf16.mxu0 0
    %1555 = vmatmul.mubr.bf16.gmra.mrb[0].mxu0 %v1149
    %v1556 = vpop.f32.mrb[0].mxu0
    %v1557 = vadd.f32 %v755, %v1556
    %v1558 = vpop.f32.mrb[0].mxu0
    %v1559 = vadd.f32 %v759, %v1558
    %v1560 = vpop.f32.mrb[0].mxu0
    %v1561 = vadd.f32 %v755, %v1560
    %v1562 = vpop.f32.mrb[0].mxu0
    %v1563 = vadd.f32 %v759, %v1562
    %1564 = vmatprep.mubr.bf16.mxu0 0
    %1565 = vmatmul.mubr.bf16.gmra.mrb[0].mxu0 %v1152
    %v1566 = vpop.f32.mrb[0].mxu0
    %v1567 = vadd.f32 %v755, %v1566
    %v1568 = vpop.f32.mrb[0].mxu0
    %v1569 = vadd.f32 %v759, %v1568
    %v1570 = vpop.f32.mrb[0].mxu0
    %v1571 = vadd.f32 %v755, %v1570
    %v1572 = vpop.f32.mrb[0].mxu0
    %v1573 = vadd.f32 %v759, %v1572
    %1574 = vmatprep.mubr.bf16.mxu0 0
    %1575 = vmatmul.mubr.bf16.gmra.mrb[0].mxu0 %v1155
    %v1576 = vpop.f32.mrb[0].mxu0
    %v1577 = vadd.f32 %v755, %v1576
    %v1578 = vpop.f32.mrb[0].mxu0
    %v1579 = vadd.f32 %v759, %v1578
    %v1580 = vpop.f32.mrb[0].mxu0
    %v1581 = vadd.f32 %v755, %v1580
    %v1582 = vpop.f32.mrb[0].mxu0
    %v1583 = vadd.f32 %v759, %v1582
    %1584 = vmatprep.mubr.bf16.mxu0 0
    %1585 = vmatmul.mubr.bf16.gmra.mrb[0].mxu0 %v1158
    %v1586 = vpop.f32.mrb[0].mxu0
    %v1587 = vadd.f32 %v755, %v1586
    %v1588 = vpop.f32.mrb[0].mxu0
    %v1589 = vadd.f32 %v759, %v1588
    %v1590 = vpop.f32.mrb[0].mxu0
    %v1591 = vadd.f32 %v755, %v1590
    %v1592 = vpop.f32.mrb[0].mxu0
    %v1593 = vadd.f32 %v759, %v1592
    %1594 = vmatprep.mubr.bf16.mxu0 0
    %1595 = vmatmul.mubr.bf16.gmra.mrb[0].mxu0 %v1161
    %v1596 = vpop.f32.mrb[0].mxu0
    %v1597 = vadd.f32 %v755, %v1596
    %v1598 = vpop.f32.mrb[0].mxu0
    %v1599 = vadd.f32 %v759, %v1598
    %v1600 = vpop.f32.mrb[0].mxu0
    %v1601 = vadd.f32 %v755, %v1600
    %v1602 = vpop.f32.mrb[0].mxu0
    %v1603 = vadd.f32 %v759, %v1602
    %1604 = vmatprep.mubr.bf16.mxu0 0
    %1605 = vmatmul.mubr.bf16.gmra.mrb[0].mxu0 %v1164
    %v1606 = vpop.f32.mrb[0].mxu0
    %v1607 = vadd.f32 %v755, %v1606
    %v1608 = vpop.f32.mrb[0].mxu0
    %v1609 = vadd.f32 %v759, %v1608
    %v1610 = vpop.f32.mrb[0].mxu0
    %v1611 = vadd.f32 %v755, %v1610
    %v1612 = vpop.f32.mrb[0].mxu0
    %v1613 = vadd.f32 %v759, %v1612
    %1614 = vmatprep.mubr.bf16.mxu0 0
    %1615 = vmatmul.mubr.bf16.gmra.mrb[0].mxu0 %v1167
    %v1616 = vpop.f32.mrb[0].mxu0
    %v1617 = vadd.f32 %v755, %v1616
    %v1618 = vpop.f32.mrb[0].mxu0
    %v1619 = vadd.f32 %v759, %v1618
    %v1620 = vpop.f32.mrb[0].mxu0
    %v1621 = vadd.f32 %v755, %v1620
    %v1622 = vpop.f32.mrb[0].mxu0
    %v1623 = vadd.f32 %v759, %v1622
    %1624 = vmatprep.mubr.bf16.mxu0 0
    %1625 = vmatmul.mubr.bf16.gmra.mrb[0].mxu0 %v1170
    %v1626 = vpop.f32.mrb[0].mxu0
    %v1627 = vadd.f32 %v755, %v1626
    %v1628 = vpop.f32.mrb[0].mxu0
    %v1629 = vadd.f32 %v759, %v1628
    %v1630 = vpop.f32.mrb[0].mxu0
    %v1631 = vadd.f32 %v755, %v1630
    %v1632 = vpop.f32.mrb[0].mxu0
    %v1633 = vadd.f32 %v759, %v1632
    %1634 = vmatprep.mubr.bf16.mxu0 0
    %1635 = vmatmul.mubr.bf16.gmra.mrb[0].mxu0 %v1173
    %v1636 = vpop.f32.mrb[0].mxu0
    %v1637 = vadd.f32 %v755, %v1636
    %v1638 = vpop.f32.mrb[0].mxu0
    %v1639 = vadd.f32 %v759, %v1638
    %v1640 = vpop.f32.mrb[0].mxu0
    %v1641 = vadd.f32 %v755, %v1640
    %v1642 = vpop.f32.mrb[0].mxu0
    %v1643 = vadd.f32 %v759, %v1642
    %1644 = vmatprep.mubr.bf16.mxu0 0
    %1645 = vmatmul.mubr.bf16.gmra.mrb[0].mxu0 %v1176
    %v1646 = vpop.f32.mrb[0].mxu0
    %v1647 = vadd.f32 %v755, %v1646
    %v1648 = vpop.f32.mrb[0].mxu0
    %v1649 = vadd.f32 %v759, %v1648
    %v1650 = vpop.f32.mrb[0].mxu0
    %v1651 = vadd.f32 %v755, %v1650
    %v1652 = vpop.f32.mrb[0].mxu0
    %v1653 = vadd.f32 %v759, %v1652
    %1654 = vmatprep.mubr.bf16.mxu0 0
    %1655 = vmatmul.mubr.bf16.gmra.mrb[0].mxu0 %v1179
    %v1656 = vpop.f32.mrb[0].mxu0
    %v1657 = vadd.f32 %v755, %v1656
    %v1658 = vpop.f32.mrb[0].mxu0
    %v1659 = vadd.f32 %v759, %v1658
    %v1660 = vpop.f32.mrb[0].mxu0
    %v1661 = vadd.f32 %v755, %v1660
    %v1662 = vpop.f32.mrb[0].mxu0
    %v1663 = vadd.f32 %v759, %v1662
    %1664 = vmatprep.mubr.bf16.mxu0 0
    %1665 = vmatmul.mubr.bf16.gmra.mrb[0].mxu0 %v1182
    %v1666 = vpop.f32.mrb[0].mxu0
    %v1667 = vadd.f32 %v755, %v1666
    %v1668 = vpop.f32.mrb[0].mxu0
    %v1669 = vadd.f32 %v759, %v1668
    %v1670 = vpop.f32.mrb[0].mxu0
    %v1671 = vadd.f32 %v755, %v1670
    %v1672 = vpop.f32.mrb[0].mxu0
    %v1673 = vadd.f32 %v759, %v1672
    %1674 = vmatprep.mubr.bf16.mxu0 0
    %1675 = vmatmul.mubr.bf16.gmra.mrb[0].mxu0 %v1185
    %v1676 = vpop.f32.mrb[0].mxu0
    %v1677 = vadd.f32 %v755, %v1676
    %v1678 = vpop.f32.mrb[0].mxu0
    %v1679 = vadd.f32 %v759, %v1678
    %v1680 = vpop.f32.mrb[0].mxu0
    %v1681 = vadd.f32 %v755, %v1680
    %v1682 = vpop.f32.mrb[0].mxu0
    %v1683 = vadd.f32 %v759, %v1682
    %1684 = vmatprep.mubr.bf16.mxu0 0
    %1685 = vmatmul.mubr.bf16.gmra.mrb[0].mxu0 %v1188
    %v1686 = vpop.f32.mrb[0].mxu0
    %v1687 = vadd.f32 %v755, %v1686
    %v1688 = vpop.f32.mrb[0].mxu0
    %v1689 = vadd.f32 %v759, %v1688
    %v1690 = vpop.f32.mrb[0].mxu0
    %v1691 = vadd.f32 %v755, %v1690
    %v1692 = vpop.f32.mrb[0].mxu0
    %v1693 = vadd.f32 %v759, %v1692
    %1694 = vmatprep.mubr.bf16.mxu0 0
    %1695 = vmatmul.mubr.bf16.gmra.mrb[0].mxu0 %v1191
    %v1696 = vpop.f32.mrb[0].mxu0
    %v1697 = vadd.f32 %v755, %v1696
    %v1698 = vpop.f32.mrb[0].mxu0
    %v1699 = vadd.f32 %v759, %v1698
    %v1700 = vpop.f32.mrb[0].mxu0
    %v1701 = vadd.f32 %v755, %v1700
    %v1702 = vpop.f32.mrb[0].mxu0
    %v1703 = vadd.f32 %v759, %v1702
    %1704 = vmatprep.mubr.bf16.mxu0 0
    %1705 = vmatmul.mubr.bf16.gmra.mrb[0].mxu0 %v1194
    %v1706 = vpop.f32.mrb[0].mxu0
    %v1707 = vadd.f32 %v755, %v1706
    %v1708 = vpop.f32.mrb[0].mxu0
    %v1709 = vadd.f32 %v759, %v1708
    %v1710 = vpop.f32.mrb[0].mxu0
    %v1711 = vadd.f32 %v755, %v1710
    %v1712 = vpop.f32.mrb[0].mxu0
    %v1713 = vadd.f32 %v759, %v1712
    %1714 = vmatprep.mubr.bf16.mxu0 0
    %1715 = vmatmul.mubr.bf16.gmra.mrb[0].mxu0 %v1197
    %v1716 = vpop.f32.mrb[0].mxu0
    %v1717 = vadd.f32 %v755, %v1716
    %v1718 = vpop.f32.mrb[0].mxu0
    %v1719 = vadd.f32 %v759, %v1718
    %v1720 = vpop.f32.mrb[0].mxu0
    %v1721 = vadd.f32 %v755, %v1720
    %v1722 = vpop.f32.mrb[0].mxu0
    %v1723 = vadd.f32 %v759, %v1722
    %1724 = vmatprep.mubr.bf16.mxu0 0
    %1725 = vmatmul.mubr.bf16.gmra.mrb[0].mxu0 %v1200
    %v1726 = vpop.f32.mrb[0].mxu0
    %v1727 = vadd.f32 %v755, %v1726
    %v1728 = vpop.f32.mrb[0].mxu0
    %v1729 = vadd.f32 %v759, %v1728
    %v1730 = vpop.f32.mrb[0].mxu0
    %v1731 = vadd.f32 %v755, %v1730
    %v1732 = vpop.f32.mrb[0].mxu0
    %v1733 = vadd.f32 %v759, %v1732
    %1734 = vmatprep.mubr.bf16.mxu0 0
    %1735 = vmatmul.mubr.bf16.gmra.mrb[0].mxu0 %v1203
    %v1736 = vpop.f32.mrb[0].mxu0
    %v1737 = vadd.f32 %v755, %v1736
    %v1738 = vpop.f32.mrb[0].mxu0
    %v1739 = vadd.f32 %v759, %v1738
    %v1740 = vpop.f32.mrb[0].mxu0
    %v1741 = vadd.f32 %v755, %v1740
    %v1742 = vpop.f32.mrb[0].mxu0
    %v1743 = vadd.f32 %v759, %v1742
    %1744 = vmatprep.mubr.bf16.mxu0 0
    %1745 = vmatmul.mubr.bf16.gmra.mrb[0].mxu0 %v1206
    %v1746 = vpop.f32.mrb[0].mxu0
    %v1747 = vadd.f32 %v755, %v1746
    %v1748 = vpop.f32.mrb[0].mxu0
    %v1749 = vadd.f32 %v759, %v1748
    %v1750 = vpop.f32.mrb[0].mxu0
    %v1751 = vadd.f32 %v755, %v1750
    %v1752 = vpop.f32.mrb[0].mxu0
    %v1753 = vadd.f32 %v759, %v1752
    %1754 = vmatprep.mubr.bf16.mxu0 0
    %1755 = vmatmul.mubr.bf16.gmra.mrb[0].mxu0 %v1209
    %v1756 = vpop.f32.mrb[0].mxu0
    %v1757 = vadd.f32 %v755, %v1756
    %v1758 = vpop.f32.mrb[0].mxu0
    %v1759 = vadd.f32 %v759, %v1758
    %v1760 = vpop.f32.mrb[0].mxu0
    %v1761 = vadd.f32 %v755, %v1760
    %v1762 = vpop.f32.mrb[0].mxu0
    %v1763 = vadd.f32 %v759, %v1762
    %1764 = vmatprep.mubr.bf16.mxu0 0
    %1765 = vmatmul.mubr.bf16.gmra.mrb[0].mxu0 %v1212
    %v1766 = vpop.f32.mrb[0].mxu0
    %v1767 = vadd.f32 %v755, %v1766
    %v1768 = vpop.f32.mrb[0].mxu0
    %v1769 = vadd.f32 %v759, %v1768
    %v1770 = vpop.f32.mrb[0].mxu0
    %v1771 = vadd.f32 %v755, %v1770
    %v1772 = vpop.f32.mrb[0].mxu0
    %v1773 = vadd.f32 %v759, %v1772
    %1774 = vmatprep.mubr.bf16.mxu0 0
    %1775 = vmatmul.mubr.bf16.gmra.mrb[0].mxu0 %v1215
    %v1776 = vpop.f32.mrb[0].mxu0
    %v1777 = vadd.f32 %v755, %v1776
    %v1778 = vpop.f32.mrb[0].mxu0
    %v1779 = vadd.f32 %v759, %v1778
    %v1780 = vpop.f32.mrb[0].mxu0
    %v1781 = vadd.f32 %v755, %v1780
    %v1782 = vpop.f32.mrb[0].mxu0
    %v1783 = vadd.f32 %v759, %v1782
    %1784 = vmatprep.mubr.bf16.mxu0 0
    %1785 = vmatmul.mubr.bf16.gmra.mrb[0].mxu0 %v1218
    %v1786 = vpop.f32.mrb[0].mxu0
    %v1787 = vadd.f32 %v755, %v1786
    %v1788 = vpop.f32.mrb[0].mxu0
    %v1789 = vadd.f32 %v759, %v1788
    %v1790 = vpop.f32.mrb[0].mxu0
    %v1791 = vadd.f32 %v755, %v1790
    %v1792 = vpop.f32.mrb[0].mxu0
    %v1793 = vadd.f32 %v759, %v1792
    %1794 = vmatprep.mubr.bf16.mxu0 0
    %1795 = vmatmul.mubr.bf16.gmra.mrb[0].mxu0 %v1221
    %v1796 = vpop.f32.mrb[0].mxu0
    %v1797 = vadd.f32 %v755, %v1796
    %v1798 = vpop.f32.mrb[0].mxu0
    %v1799 = vadd.f32 %v759, %v1798
    %v1800 = vpop.f32.mrb[0].mxu0
    %v1801 = vadd.f32 %v755, %v1800
    %v1802 = vpop.f32.mrb[0].mxu0
    %v1803 = vadd.f32 %v759, %v1802
    %1804 = vmatprep.mubr.bf16.mxu0 0
    %1805 = vmatmul.mubr.bf16.gmra.mrb[0].mxu0 %v1224
    %v1806 = vpop.f32.mrb[0].mxu0
    %v1807 = vadd.f32 %v755, %v1806
    %v1808 = vpop.f32.mrb[0].mxu0
    %v1809 = vadd.f32 %v759, %v1808
    %v1810 = vpop.f32.mrb[0].mxu0
    %v1811 = vadd.f32 %v755, %v1810
    %v1812 = vpop.f32.mrb[0].mxu0
    %v1813 = vadd.f32 %v759, %v1812
    %1814 = vmatprep.mubr.bf16.mxu0 0
    %1815 = vmatmul.mubr.bf16.gmra.mrb[0].mxu0 %v1227
    %v1816 = vpop.f32.mrb[0].mxu0
    %v1817 = vadd.f32 %v755, %v1816
    %v1818 = vpop.f32.mrb[0].mxu0
    %v1819 = vadd.f32 %v759, %v1818
    %v1820 = vpop.f32.mrb[0].mxu0
    %v1821 = vadd.f32 %v755, %v1820
    %v1822 = vpop.f32.mrb[0].mxu0
    %v1823 = vadd.f32 %v759, %v1822
    %1824 = vmatprep.mubr.bf16.mxu0 0
    %1825 = vmatmul.mubr.bf16.gmra.mrb[0].mxu0 %v1230
    %v1826 = vpop.f32.mrb[0].mxu0
    %v1827 = vadd.f32 %v755, %v1826
    %v1828 = vpop.f32.mrb[0].mxu0
    %v1829 = vadd.f32 %v759, %v1828
    %v1830 = vpop.f32.mrb[0].mxu0
    %v1831 = vadd.f32 %v755, %v1830
    %v1832 = vpop.f32.mrb[0].mxu0
    %v1833 = vadd.f32 %v759, %v1832
    %1834 = vmatprep.mubr.bf16.mxu0 0
    %1835 = vmatmul.mubr.bf16.gmra.mrb[0].mxu0 %v1233
    %v1836 = vpop.f32.mrb[0].mxu0
    %v1837 = vadd.f32 %v755, %v1836
    %v1838 = vpop.f32.mrb[0].mxu0
    %v1839 = vadd.f32 %v759, %v1838
    %v1840 = vpop.f32.mrb[0].mxu0
    %v1841 = vadd.f32 %v755, %v1840
    %v1842 = vpop.f32.mrb[0].mxu0
    %v1843 = vadd.f32 %v759, %v1842
    %1844 = vmatprep.mubr.bf16.mxu0 0
    %1845 = vmatmul.mubr.bf16.gmra.mrb[0].mxu0 %v1236
    %v1846 = vpop.f32.mrb[0].mxu0
    %v1847 = vadd.f32 %v755, %v1846
    %v1848 = vpop.f32.mrb[0].mxu0
    %v1849 = vadd.f32 %v759, %v1848
    %v1850 = vpop.f32.mrb[0].mxu0
    %v1851 = vadd.f32 %v755, %v1850
    %v1852 = vpop.f32.mrb[0].mxu0
    %v1853 = vadd.f32 %v759, %v1852
    %1854 = vmatprep.mubr.bf16.mxu0 0
    %1855 = vmatmul.mubr.bf16.gmra.mrb[0].mxu0 %v1239
    %v1856 = vpop.f32.mrb[0].mxu0
    %v1857 = vadd.f32 %v755, %v1856
    %v1858 = vpop.f32.mrb[0].mxu0
    %v1859 = vadd.f32 %v759, %v1858
    %v1860 = vpop.f32.mrb[0].mxu0
    %v1861 = vadd.f32 %v755, %v1860
    %v1862 = vpop.f32.mrb[0].mxu0
    %v1863 = vadd.f32 %v759, %v1862
    %1864 = vmatprep.mubr.bf16.mxu0 0
    %1865 = vmatmul.mubr.bf16.gmra.mrb[0].mxu0 %v1242
    %v1866 = vpop.f32.mrb[0].mxu0
    %v1867 = vadd.f32 %v755, %v1866
    %v1868 = vpop.f32.mrb[0].mxu0
    %v1869 = vadd.f32 %v759, %v1868
    %v1870 = vpop.f32.mrb[0].mxu0
    %v1871 = vadd.f32 %v755, %v1870
    %v1872 = vpop.f32.mrb[0].mxu0
    %v1873 = vadd.f32 %v759, %v1872
    %1874 = vmatprep.mubr.bf16.mxu0 0
    %1875 = vmatmul.mubr.bf16.gmra.mrb[0].mxu0 %v1245
    %v1876 = vpop.f32.mrb[0].mxu0
    %v1877 = vadd.f32 %v755, %v1876
    %v1878 = vpop.f32.mrb[0].mxu0
    %v1879 = vadd.f32 %v759, %v1878
    %v1880 = vpop.f32.mrb[0].mxu0
    %v1881 = vadd.f32 %v755, %v1880
    %v1882 = vpop.f32.mrb[0].mxu0
    %v1883 = vadd.f32 %v759, %v1882
    %1884 = vmatprep.mubr.bf16.mxu0 0
    %1885 = vmatmul.mubr.bf16.gmra.mrb[0].mxu0 %v1248
    %v1886 = vpop.f32.mrb[0].mxu0
    %v1887 = vadd.f32 %v755, %v1886
    %v1888 = vpop.f32.mrb[0].mxu0
    %v1889 = vadd.f32 %v759, %v1888
    %v1890 = vpop.f32.mrb[0].mxu0
    %v1891 = vadd.f32 %v755, %v1890
    %v1892 = vpop.f32.mrb[0].mxu0
    %v1893 = vadd.f32 %v759, %v1892
    %1894 = vmatprep.mubr.bf16.mxu0 0
    %1895 = vmatmul.mubr.bf16.gmra.mrb[0].mxu0 %v1251
    %v1896 = vpop.f32.mrb[0].mxu0
    %v1897 = vadd.f32 %v755, %v1896
    %v1898 = vpop.f32.mrb[0].mxu0
    %v1899 = vadd.f32 %v759, %v1898
    %v1900 = vpop.f32.mrb[0].mxu0
    %v1901 = vadd.f32 %v755, %v1900
    %v1902 = vpop.f32.mrb[0].mxu0
    %v1903 = vadd.f32 %v759, %v1902
    %1904 = vmatprep.mubr.bf16.mxu0 0
    %1905 = vmatmul.mubr.bf16.gmra.mrb[0].mxu0 %v1254
    %v1906 = vpop.f32.mrb[0].mxu0
    %v1907 = vadd.f32 %v755, %v1906
    %v1908 = vpop.f32.mrb[0].mxu0
    %v1909 = vadd.f32 %v759, %v1908
    %v1910 = vpop.f32.mrb[0].mxu0
    %v1911 = vadd.f32 %v755, %v1910
    %v1912 = vpop.f32.mrb[0].mxu0
    %v1913 = vadd.f32 %v759, %v1912
    %1914 = vmatprep.mubr.bf16.mxu0 0
    %1915 = vmatmul.mubr.bf16.gmra.mrb[0].mxu0 %v1257
    %v1916 = vpop.f32.mrb[0].mxu0
    %v1917 = vadd.f32 %v755, %v1916
    %v1918 = vpop.f32.mrb[0].mxu0
    %v1919 = vadd.f32 %v759, %v1918
    %v1920 = vpop.f32.mrb[0].mxu0
    %v1921 = vadd.f32 %v755, %v1920
    %v1922 = vpop.f32.mrb[0].mxu0
    %v1923 = vadd.f32 %v759, %v1922
    %1924 = vmatprep.mubr.bf16.mxu0 0
    %1925 = vmatmul.mubr.bf16.gmra.mrb[0].mxu0 %v1260
    %v1926 = vpop.f32.mrb[0].mxu0
    %v1927 = vadd.f32 %v755, %v1926
    %v1928 = vpop.f32.mrb[0].mxu0
    %v1929 = vadd.f32 %v759, %v1928
    %v1930 = vpop.f32.mrb[0].mxu0
    %v1931 = vadd.f32 %v755, %v1930
    %v1932 = vpop.f32.mrb[0].mxu0
    %v1933 = vadd.f32 %v759, %v1932
    %1934 = vmatprep.mubr.bf16.mxu0 0
    %1935 = vmatmul.mubr.bf16.gmra.mrb[0].mxu0 %v1263
    %v1936 = vpop.f32.mrb[0].mxu0
    %v1937 = vadd.f32 %v755, %v1936
    %v1938 = vpop.f32.mrb[0].mxu0
    %v1939 = vadd.f32 %v759, %v1938
    %v1940 = vpop.f32.mrb[0].mxu0
    %v1941 = vadd.f32 %v755, %v1940
    %v1942 = vpop.f32.mrb[0].mxu0
    %v1943 = vadd.f32 %v759, %v1942
    %1944 = vmatprep.mubr.bf16.mxu0 0
    %1945 = vmatmul.mubr.bf16.gmra.mrb[0].mxu0 %v1266
    %v1946 = vpop.f32.mrb[0].mxu0
    %v1947 = vadd.f32 %v755, %v1946
    %v1948 = vpop.f32.mrb[0].mxu0
    %v1949 = vadd.f32 %v759, %v1948
    %v1950 = vpop.f32.mrb[0].mxu0
    %v1951 = vadd.f32 %v755, %v1950
    %v1952 = vpop.f32.mrb[0].mxu0
    %v1953 = vadd.f32 %v759, %v1952
    %1954 = vmatprep.mubr.bf16.mxu0 0
    %1955 = vmatmul.mubr.bf16.gmra.mrb[0].mxu0 %v1269
    %v1956 = vpop.f32.mrb[0].mxu0
    %v1957 = vadd.f32 %v755, %v1956
    %v1958 = vpop.f32.mrb[0].mxu0
    %v1959 = vadd.f32 %v759, %v1958
    %v1960 = vpop.f32.mrb[0].mxu0
    %v1961 = vadd.f32 %v755, %v1960
    %v1962 = vpop.f32.mrb[0].mxu0
    %v1963 = vadd.f32 %v759, %v1962
    %1964 = vmatprep.mubr.bf16.mxu0 0
    %1965 = vmatmul.mubr.bf16.gmra.mrb[0].mxu0 %v1272
    %v1966 = vpop.f32.mrb[0].mxu0
    %v1967 = vadd.f32 %v755, %v1966
    %v1968 = vpop.f32.mrb[0].mxu0
    %v1969 = vadd.f32 %v759, %v1968
    %v1970 = vpop.f32.mrb[0].mxu0
    %v1971 = vadd.f32 %v755, %v1970
    %v1972 = vpop.f32.mrb[0].mxu0
    %v1973 = vadd.f32 %v759, %v1972
    %1974 = vmatprep.mubr.bf16.mxu0 0
    %1975 = vmatmul.mubr.bf16.gmra.mrb[0].mxu0 %v1275
    %v1976 = vpop.f32.mrb[0].mxu0
    %v1977 = vadd.f32 %v755, %v1976
    %v1978 = vpop.f32.mrb[0].mxu0
    %v1979 = vadd.f32 %v759, %v1978
    %v1980 = vpop.f32.mrb[0].mxu0
    %v1981 = vadd.f32 %v755, %v1980
    %v1982 = vpop.f32.mrb[0].mxu0
    %v1983 = vadd.f32 %v759, %v1982
    %1984 = vmatprep.mubr.bf16.mxu0 0
    %1985 = vmatmul.mubr.bf16.gmra.mrb[0].mxu0 %v1278
    %v1986 = vpop.f32.mrb[0].mxu0
    %v1987 = vadd.f32 %v755, %v1986
    %v1988 = vpop.f32.mrb[0].mxu0
    %v1989 = vadd.f32 %v759, %v1988
    %v1990 = vpop.f32.mrb[0].mxu0
    %v1991 = vadd.f32 %v755, %v1990
    %v1992 = vpop.f32.mrb[0].mxu0
    %v1993 = vadd.f32 %v759, %v1992
    %1994 = vdwg.mxu0
    %1995 = vmatprep.subr.mxu0 0.0
    %1996 = vmatpush1.msra.mxu0 %v740
    %1997 = vmatprep.subr.mxu0 0.0
    %1998 = vmatpush1.msra.mxu0 %v743
    %1999 = vmatprep.subr.mxu0 0.0
    %2000 = vmatpush1.msra.mxu0 %v746
    %2001 = vmatprep.subr.mxu0 0.0
    %2002 = vmatpush1.msra.mxu0 %v1288
    %2003 = vmatprep.subr.mxu0 0.0
    %2004 = vmatpush1.msra.mxu0 0.0
    %2005 = vmatprep.subr.mxu0 0.0
    %2006 = vmatpush1.msra.mxu0 0.0
    %2007 = vmatprep.subr.mxu0 0.0
    %2008 = vmatpush1.msra.mxu0 0.0
    %2009 = vmatprep.subr.mxu0 0.0
    %2010 = vmatpush1.msra.mxu0 0.0
    %2011 = vmatprep.subr.mxu0 0.0
    %2012 = vmatpush1.msra.mxu0 0.0
    %2013 = vmatprep.subr.mxu0 0.0
    %2014 = vmatpush1.msra.mxu0 0.0
    %2015 = vmatprep.subr.mxu0 0.0
    %2016 = vmatpush1.msra.mxu0 0.0
    %2017 = vmatprep.subr.mxu0 0.0
    %2018 = vmatpush1.msra.mxu0 0.0
    %2019 = vmatprep.subr.mxu0 0.0
    %2020 = vmatpush1.msra.mxu0 0.0
    %2021 = vmatprep.subr.mxu0 0.0
    %2022 = vmatpush1.msra.mxu0 0.0
    %2023 = vmatprep.subr.mxu0 0.0
    %2024 = vmatpush1.msra.mxu0 0.0
    %2025 = vmatprep.subr.mxu0 0.0
    %2026 = vmatpush1.msra.mxu0 0.0
    %2027 = vmatprep.subr.mxu0 0.0
    %2028 = vmatpush1.msra.mxu0 0.0
    %2029 = vmatprep.subr.mxu0 0.0
    %2030 = vmatpush1.msra.mxu0 0.0
    %2031 = vmatprep.subr.mxu0 0.0
    %2032 = vmatpush1.msra.mxu0 0.0
    %2033 = vmatprep.subr.mxu0 0.0
    %2034 = vmatpush1.msra.mxu0 0.0
    %2035 = vmatprep.subr.mxu0 0.0
    %2036 = vmatpush1.msra.mxu0 0.0
    %2037 = vmatprep.subr.mxu0 0.0
    %2038 = vmatpush1.msra.mxu0 0.0
    %2039 = vmatprep.subr.mxu0 0.0
    %2040 = vmatpush1.msra.mxu0 0.0
    %2041 = vmatprep.subr.mxu0 0.0
    %2042 = vmatpush1.msra.mxu0 0.0
    %2043 = vmatprep.subr.mxu0 0.0
    %2044 = vmatpush1.msra.mxu0 0.0
    %2045 = vmatprep.subr.mxu0 0.0
    %2046 = vmatpush1.msra.mxu0 0.0
    %2047 = vmatprep.subr.mxu0 0.0
    %2048 = vmatpush1.msra.mxu0 0.0
    %2049 = vmatprep.subr.mxu0 0.0
    %2050 = vmatpush1.msra.mxu0 0.0
    %2051 = vmatprep.subr.mxu0 0.0
    %2052 = vmatpush1.msra.mxu0 0.0
    %2053 = vmatprep.subr.mxu0 0.0
    %2054 = vmatpush1.msra.mxu0 0.0
    %2055 = vmatprep.subr.mxu0 0.0
    %2056 = vmatpush1.msra.mxu0 0.0
    %2057 = vmatprep.subr.mxu0 0.0
    %2058 = vmatpush1.msra.mxu0 0.0
    %2059 = vmatprep.mubr.bf16.mxu0 0
    %2060 = vmatmul.mubr.bf16.gmra.mrb[0].mxu0 %v1089
    %v2061 = vpop.f32.mrb[0].mxu0
    %v2062 = vadd.f32 %v763, %v2061
    %v2063 = vpop.f32.mrb[0].mxu0
    %v2064 = vpop.f32.mrb[0].mxu0
    %v2065 = vadd.f32 %v763, %v2064
    %v2066 = vpop.f32.mrb[0].mxu0
    %2067 = vmatprep.mubr.bf16.mxu0 0
    %2068 = vmatmul.mubr.bf16.gmra.mrb[0].mxu0 %v1092
    %v2069 = vpop.f32.mrb[0].mxu0
    %v2070 = vadd.f32 %v763, %v2069
    %v2071 = vpop.f32.mrb[0].mxu0
    %v2072 = vpop.f32.mrb[0].mxu0
    %v2073 = vadd.f32 %v763, %v2072
    %v2074 = vpop.f32.mrb[0].mxu0
    %2075 = vmatprep.mubr.bf16.mxu0 0
    %2076 = vmatmul.mubr.bf16.gmra.mrb[0].mxu0 %v1095
    %v2077 = vpop.f32.mrb[0].mxu0
    %v2078 = vadd.f32 %v763, %v2077
    %v2079 = vpop.f32.mrb[0].mxu0
    %v2080 = vpop.f32.mrb[0].mxu0
    %v2081 = vadd.f32 %v763, %v2080
    %v2082 = vpop.f32.mrb[0].mxu0
    %2083 = vmatprep.mubr.bf16.mxu0 0
    %2084 = vmatmul.mubr.bf16.gmra.mrb[0].mxu0 %v1098
    %v2085 = vpop.f32.mrb[0].mxu0
    %v2086 = vadd.f32 %v763, %v2085
    %v2087 = vpop.f32.mrb[0].mxu0
    %v2088 = vpop.f32.mrb[0].mxu0
    %v2089 = vadd.f32 %v763, %v2088
    %v2090 = vpop.f32.mrb[0].mxu0
    %2091 = vmatprep.mubr.bf16.mxu0 0
    %2092 = vmatmul.mubr.bf16.gmra.mrb[0].mxu0 %v1101
    %v2093 = vpop.f32.mrb[0].mxu0
    %v2094 = vadd.f32 %v763, %v2093
    %v2095 = vpop.f32.mrb[0].mxu0
    %v2096 = vpop.f32.mrb[0].mxu0
    %v2097 = vadd.f32 %v763, %v2096
    %v2098 = vpop.f32.mrb[0].mxu0
    %2099 = vmatprep.mubr.bf16.mxu0 0
    %2100 = vmatmul.mubr.bf16.gmra.mrb[0].mxu0 %v1104
    %v2101 = vpop.f32.mrb[0].mxu0
    %v2102 = vadd.f32 %v763, %v2101
    %v2103 = vpop.f32.mrb[0].mxu0
    %v2104 = vpop.f32.mrb[0].mxu0
    %v2105 = vadd.f32 %v763, %v2104
    %v2106 = vpop.f32.mrb[0].mxu0
    %2107 = vmatprep.mubr.bf16.mxu0 0
    %2108 = vmatmul.mubr.bf16.gmra.mrb[0].mxu0 %v1107
    %v2109 = vpop.f32.mrb[0].mxu0
    %v2110 = vadd.f32 %v763, %v2109
    %v2111 = vpop.f32.mrb[0].mxu0
    %v2112 = vpop.f32.mrb[0].mxu0
    %v2113 = vadd.f32 %v763, %v2112
    %v2114 = vpop.f32.mrb[0].mxu0
    %2115 = vmatprep.mubr.bf16.mxu0 0
    %2116 = vmatmul.mubr.bf16.gmra.mrb[0].mxu0 %v1110
    %v2117 = vpop.f32.mrb[0].mxu0
    %v2118 = vadd.f32 %v763, %v2117
    %v2119 = vpop.f32.mrb[0].mxu0
    %v2120 = vpop.f32.mrb[0].mxu0
    %v2121 = vadd.f32 %v763, %v2120
    %v2122 = vpop.f32.mrb[0].mxu0
    %2123 = vmatprep.mubr.bf16.mxu0 0
    %2124 = vmatmul.mubr.bf16.gmra.mrb[0].mxu0 %v1113
    %v2125 = vpop.f32.mrb[0].mxu0
    %v2126 = vadd.f32 %v763, %v2125
    %v2127 = vpop.f32.mrb[0].mxu0
    %v2128 = vpop.f32.mrb[0].mxu0
    %v2129 = vadd.f32 %v763, %v2128
    %v2130 = vpop.f32.mrb[0].mxu0
    %2131 = vmatprep.mubr.bf16.mxu0 0
    %2132 = vmatmul.mubr.bf16.gmra.mrb[0].mxu0 %v1116
    %v2133 = vpop.f32.mrb[0].mxu0
    %v2134 = vadd.f32 %v763, %v2133
    %v2135 = vpop.f32.mrb[0].mxu0
    %v2136 = vpop.f32.mrb[0].mxu0
    %v2137 = vadd.f32 %v763, %v2136
    %v2138 = vpop.f32.mrb[0].mxu0
    %2139 = vmatprep.mubr.bf16.mxu0 0
    %2140 = vmatmul.mubr.bf16.gmra.mrb[0].mxu0 %v1119
    %v2141 = vpop.f32.mrb[0].mxu0
    %v2142 = vadd.f32 %v763, %v2141
    %v2143 = vpop.f32.mrb[0].mxu0
    %v2144 = vpop.f32.mrb[0].mxu0
    %v2145 = vadd.f32 %v763, %v2144
    %v2146 = vpop.f32.mrb[0].mxu0
    %2147 = vmatprep.mubr.bf16.mxu0 0
    %2148 = vmatmul.mubr.bf16.gmra.mrb[0].mxu0 %v1122
    %v2149 = vpop.f32.mrb[0].mxu0
    %v2150 = vadd.f32 %v763, %v2149
    %v2151 = vpop.f32.mrb[0].mxu0
    %v2152 = vpop.f32.mrb[0].mxu0
    %v2153 = vadd.f32 %v763, %v2152
    %v2154 = vpop.f32.mrb[0].mxu0
    %2155 = vmatprep.mubr.bf16.mxu0 0
    %2156 = vmatmul.mubr.bf16.gmra.mrb[0].mxu0 %v1125
    %v2157 = vpop.f32.mrb[0].mxu0
    %v2158 = vadd.f32 %v763, %v2157
    %v2159 = vpop.f32.mrb[0].mxu0
    %v2160 = vpop.f32.mrb[0].mxu0
    %v2161 = vadd.f32 %v763, %v2160
    %v2162 = vpop.f32.mrb[0].mxu0
    %2163 = vmatprep.mubr.bf16.mxu0 0
    %2164 = vmatmul.mubr.bf16.gmra.mrb[0].mxu0 %v1128
    %v2165 = vpop.f32.mrb[0].mxu0
    %v2166 = vadd.f32 %v763, %v2165
    %v2167 = vpop.f32.mrb[0].mxu0
    %v2168 = vpop.f32.mrb[0].mxu0
    %v2169 = vadd.f32 %v763, %v2168
    %v2170 = vpop.f32.mrb[0].mxu0
    %2171 = vmatprep.mubr.bf16.mxu0 0
    %2172 = vmatmul.mubr.bf16.gmra.mrb[0].mxu0 %v1131
    %v2173 = vpop.f32.mrb[0].mxu0
    %v2174 = vadd.f32 %v763, %v2173
    %v2175 = vpop.f32.mrb[0].mxu0
    %v2176 = vpop.f32.mrb[0].mxu0
    %v2177 = vadd.f32 %v763, %v2176
    %v2178 = vpop.f32.mrb[0].mxu0
    %2179 = vmatprep.mubr.bf16.mxu0 0
    %2180 = vmatmul.mubr.bf16.gmra.mrb[0].mxu0 %v1134
    %v2181 = vpop.f32.mrb[0].mxu0
    %v2182 = vadd.f32 %v763, %v2181
    %v2183 = vpop.f32.mrb[0].mxu0
    %v2184 = vpop.f32.mrb[0].mxu0
    %v2185 = vadd.f32 %v763, %v2184
    %v2186 = vpop.f32.mrb[0].mxu0
    %2187 = vmatprep.mubr.bf16.mxu0 0
    %2188 = vmatmul.mubr.bf16.gmra.mrb[0].mxu0 %v1137
    %v2189 = vpop.f32.mrb[0].mxu0
    %v2190 = vadd.f32 %v763, %v2189
    %v2191 = vpop.f32.mrb[0].mxu0
    %v2192 = vpop.f32.mrb[0].mxu0
    %v2193 = vadd.f32 %v763, %v2192
    %v2194 = vpop.f32.mrb[0].mxu0
    %2195 = vmatprep.mubr.bf16.mxu0 0
    %2196 = vmatmul.mubr.bf16.gmra.mrb[0].mxu0 %v1140
    %v2197 = vpop.f32.mrb[0].mxu0
    %v2198 = vadd.f32 %v763, %v2197
    %v2199 = vpop.f32.mrb[0].mxu0
    %v2200 = vpop.f32.mrb[0].mxu0
    %v2201 = vadd.f32 %v763, %v2200
    %v2202 = vpop.f32.mrb[0].mxu0
    %2203 = vmatprep.mubr.bf16.mxu0 0
    %2204 = vmatmul.mubr.bf16.gmra.mrb[0].mxu0 %v1143
    %v2205 = vpop.f32.mrb[0].mxu0
    %v2206 = vadd.f32 %v763, %v2205
    %v2207 = vpop.f32.mrb[0].mxu0
    %v2208 = vpop.f32.mrb[0].mxu0
    %v2209 = vadd.f32 %v763, %v2208
    %v2210 = vpop.f32.mrb[0].mxu0
    %2211 = vmatprep.mubr.bf16.mxu0 0
    %2212 = vmatmul.mubr.bf16.gmra.mrb[0].mxu0 %v1146
    %v2213 = vpop.f32.mrb[0].mxu0
    %v2214 = vadd.f32 %v763, %v2213
    %v2215 = vpop.f32.mrb[0].mxu0
    %v2216 = vpop.f32.mrb[0].mxu0
    %v2217 = vadd.f32 %v763, %v2216
    %v2218 = vpop.f32.mrb[0].mxu0
    %2219 = vmatprep.mubr.bf16.mxu0 0
    %2220 = vmatmul.mubr.bf16.gmra.mrb[0].mxu0 %v1149
    %v2221 = vpop.f32.mrb[0].mxu0
    %v2222 = vadd.f32 %v763, %v2221
    %v2223 = vpop.f32.mrb[0].mxu0
    %v2224 = vpop.f32.mrb[0].mxu0
    %v2225 = vadd.f32 %v763, %v2224
    %v2226 = vpop.f32.mrb[0].mxu0
    %2227 = vmatprep.mubr.bf16.mxu0 0
    %2228 = vmatmul.mubr.bf16.gmra.mrb[0].mxu0 %v1152
    %v2229 = vpop.f32.mrb[0].mxu0
    %v2230 = vadd.f32 %v763, %v2229
    %v2231 = vpop.f32.mrb[0].mxu0
    %v2232 = vpop.f32.mrb[0].mxu0
    %v2233 = vadd.f32 %v763, %v2232
    %v2234 = vpop.f32.mrb[0].mxu0
    %2235 = vmatprep.mubr.bf16.mxu0 0
    %2236 = vmatmul.mubr.bf16.gmra.mrb[0].mxu0 %v1155
    %v2237 = vpop.f32.mrb[0].mxu0
    %v2238 = vadd.f32 %v763, %v2237
    %v2239 = vpop.f32.mrb[0].mxu0
    %v2240 = vpop.f32.mrb[0].mxu0
    %v2241 = vadd.f32 %v763, %v2240
    %v2242 = vpop.f32.mrb[0].mxu0
    %2243 = vmatprep.mubr.bf16.mxu0 0
    %2244 = vmatmul.mubr.bf16.gmra.mrb[0].mxu0 %v1158
    %v2245 = vpop.f32.mrb[0].mxu0
    %v2246 = vadd.f32 %v763, %v2245
    %v2247 = vpop.f32.mrb[0].mxu0
    %v2248 = vpop.f32.mrb[0].mxu0
    %v2249 = vadd.f32 %v763, %v2248
    %v2250 = vpop.f32.mrb[0].mxu0
    %2251 = vmatprep.mubr.bf16.mxu0 0
    %2252 = vmatmul.mubr.bf16.gmra.mrb[0].mxu0 %v1161
    %v2253 = vpop.f32.mrb[0].mxu0
    %v2254 = vadd.f32 %v763, %v2253
    %v2255 = vpop.f32.mrb[0].mxu0
    %v2256 = vpop.f32.mrb[0].mxu0
    %v2257 = vadd.f32 %v763, %v2256
    %v2258 = vpop.f32.mrb[0].mxu0
    %2259 = vmatprep.mubr.bf16.mxu0 0
    %2260 = vmatmul.mubr.bf16.gmra.mrb[0].mxu0 %v1164
    %v2261 = vpop.f32.mrb[0].mxu0
    %v2262 = vadd.f32 %v763, %v2261
    %v2263 = vpop.f32.mrb[0].mxu0
    %v2264 = vpop.f32.mrb[0].mxu0
    %v2265 = vadd.f32 %v763, %v2264
    %v2266 = vpop.f32.mrb[0].mxu0
    %2267 = vmatprep.mubr.bf16.mxu0 0
    %2268 = vmatmul.mubr.bf16.gmra.mrb[0].mxu0 %v1167
    %v2269 = vpop.f32.mrb[0].mxu0
    %v2270 = vadd.f32 %v763, %v2269
    %v2271 = vpop.f32.mrb[0].mxu0
    %v2272 = vpop.f32.mrb[0].mxu0
    %v2273 = vadd.f32 %v763, %v2272
    %v2274 = vpop.f32.mrb[0].mxu0
    %2275 = vmatprep.mubr.bf16.mxu0 0
    %2276 = vmatmul.mubr.bf16.gmra.mrb[0].mxu0 %v1170
    %v2277 = vpop.f32.mrb[0].mxu0
    %v2278 = vadd.f32 %v763, %v2277
    %v2279 = vpop.f32.mrb[0].mxu0
    %v2280 = vpop.f32.mrb[0].mxu0
    %v2281 = vadd.f32 %v763, %v2280
    %v2282 = vpop.f32.mrb[0].mxu0
    %2283 = vmatprep.mubr.bf16.mxu0 0
    %2284 = vmatmul.mubr.bf16.gmra.mrb[0].mxu0 %v1173
    %v2285 = vpop.f32.mrb[0].mxu0
    %v2286 = vadd.f32 %v763, %v2285
    %v2287 = vpop.f32.mrb[0].mxu0
    %v2288 = vpop.f32.mrb[0].mxu0
    %v2289 = vadd.f32 %v763, %v2288
    %v2290 = vpop.f32.mrb[0].mxu0
    %2291 = vmatprep.mubr.bf16.mxu0 0
    %2292 = vmatmul.mubr.bf16.gmra.mrb[0].mxu0 %v1176
    %v2293 = vpop.f32.mrb[0].mxu0
    %v2294 = vadd.f32 %v763, %v2293
    %v2295 = vpop.f32.mrb[0].mxu0
    %v2296 = vpop.f32.mrb[0].mxu0
    %v2297 = vadd.f32 %v763, %v2296
    %v2298 = vpop.f32.mrb[0].mxu0
    %2299 = vmatprep.mubr.bf16.mxu0 0
    %2300 = vmatmul.mubr.bf16.gmra.mrb[0].mxu0 %v1179
    %v2301 = vpop.f32.mrb[0].mxu0
    %v2302 = vadd.f32 %v763, %v2301
    %v2303 = vpop.f32.mrb[0].mxu0
    %v2304 = vpop.f32.mrb[0].mxu0
    %v2305 = vadd.f32 %v763, %v2304
    %v2306 = vpop.f32.mrb[0].mxu0
    %2307 = vmatprep.mubr.bf16.mxu0 0
    %2308 = vmatmul.mubr.bf16.gmra.mrb[0].mxu0 %v1182
    %v2309 = vpop.f32.mrb[0].mxu0
    %v2310 = vadd.f32 %v763, %v2309
    %v2311 = vpop.f32.mrb[0].mxu0
    %v2312 = vpop.f32.mrb[0].mxu0
    %v2313 = vadd.f32 %v763, %v2312
    %v2314 = vpop.f32.mrb[0].mxu0
    %2315 = vmatprep.mubr.bf16.mxu0 0
    %2316 = vmatmul.mubr.bf16.gmra.mrb[0].mxu0 %v1185
    %v2317 = vpop.f32.mrb[0].mxu0
    %v2318 = vadd.f32 %v763, %v2317
    %v2319 = vpop.f32.mrb[0].mxu0
    %v2320 = vpop.f32.mrb[0].mxu0
    %v2321 = vadd.f32 %v763, %v2320
    %v2322 = vpop.f32.mrb[0].mxu0
    %2323 = vmatprep.mubr.bf16.mxu0 0
    %2324 = vmatmul.mubr.bf16.gmra.mrb[0].mxu0 %v1188
    %v2325 = vpop.f32.mrb[0].mxu0
    %v2326 = vadd.f32 %v763, %v2325
    %v2327 = vpop.f32.mrb[0].mxu0
    %v2328 = vpop.f32.mrb[0].mxu0
    %v2329 = vadd.f32 %v763, %v2328
    %v2330 = vpop.f32.mrb[0].mxu0
    %2331 = vmatprep.mubr.bf16.mxu0 0
    %2332 = vmatmul.mubr.bf16.gmra.mrb[0].mxu0 %v1191
    %v2333 = vpop.f32.mrb[0].mxu0
    %v2334 = vadd.f32 %v763, %v2333
    %v2335 = vpop.f32.mrb[0].mxu0
    %v2336 = vpop.f32.mrb[0].mxu0
    %v2337 = vadd.f32 %v763, %v2336
    %v2338 = vpop.f32.mrb[0].mxu0
    %2339 = vmatprep.mubr.bf16.mxu0 0
    %2340 = vmatmul.mubr.bf16.gmra.mrb[0].mxu0 %v1194
    %v2341 = vpop.f32.mrb[0].mxu0
    %v2342 = vadd.f32 %v763, %v2341
    %v2343 = vpop.f32.mrb[0].mxu0
    %v2344 = vpop.f32.mrb[0].mxu0
    %v2345 = vadd.f32 %v763, %v2344
    %v2346 = vpop.f32.mrb[0].mxu0
    %2347 = vmatprep.mubr.bf16.mxu0 0
    %2348 = vmatmul.mubr.bf16.gmra.mrb[0].mxu0 %v1197
    %v2349 = vpop.f32.mrb[0].mxu0
    %v2350 = vadd.f32 %v763, %v2349
    %v2351 = vpop.f32.mrb[0].mxu0
    %v2352 = vpop.f32.mrb[0].mxu0
    %v2353 = vadd.f32 %v763, %v2352
    %v2354 = vpop.f32.mrb[0].mxu0
    %2355 = vmatprep.mubr.bf16.mxu0 0
    %2356 = vmatmul.mubr.bf16.gmra.mrb[0].mxu0 %v1200
    %v2357 = vpop.f32.mrb[0].mxu0
    %v2358 = vadd.f32 %v763, %v2357
    %v2359 = vpop.f32.mrb[0].mxu0
    %v2360 = vpop.f32.mrb[0].mxu0
    %v2361 = vadd.f32 %v763, %v2360
    %v2362 = vpop.f32.mrb[0].mxu0
    %2363 = vmatprep.mubr.bf16.mxu0 0
    %2364 = vmatmul.mubr.bf16.gmra.mrb[0].mxu0 %v1203
    %v2365 = vpop.f32.mrb[0].mxu0
    %v2366 = vadd.f32 %v763, %v2365
    %v2367 = vpop.f32.mrb[0].mxu0
    %v2368 = vpop.f32.mrb[0].mxu0
    %v2369 = vadd.f32 %v763, %v2368
    %v2370 = vpop.f32.mrb[0].mxu0
    %2371 = vmatprep.mubr.bf16.mxu0 0
    %2372 = vmatmul.mubr.bf16.gmra.mrb[0].mxu0 %v1206
    %v2373 = vpop.f32.mrb[0].mxu0
    %v2374 = vadd.f32 %v763, %v2373
    %v2375 = vpop.f32.mrb[0].mxu0
    %v2376 = vpop.f32.mrb[0].mxu0
    %v2377 = vadd.f32 %v763, %v2376
    %v2378 = vpop.f32.mrb[0].mxu0
    %2379 = vmatprep.mubr.bf16.mxu0 0
    %2380 = vmatmul.mubr.bf16.gmra.mrb[0].mxu0 %v1209
    %v2381 = vpop.f32.mrb[0].mxu0
    %v2382 = vadd.f32 %v763, %v2381
    %v2383 = vpop.f32.mrb[0].mxu0
    %v2384 = vpop.f32.mrb[0].mxu0
    %v2385 = vadd.f32 %v763, %v2384
    %v2386 = vpop.f32.mrb[0].mxu0
    %2387 = vmatprep.mubr.bf16.mxu0 0
    %2388 = vmatmul.mubr.bf16.gmra.mrb[0].mxu0 %v1212
    %v2389 = vpop.f32.mrb[0].mxu0
    %v2390 = vadd.f32 %v763, %v2389
    %v2391 = vpop.f32.mrb[0].mxu0
    %v2392 = vpop.f32.mrb[0].mxu0
    %v2393 = vadd.f32 %v763, %v2392
    %v2394 = vpop.f32.mrb[0].mxu0
    %2395 = vmatprep.mubr.bf16.mxu0 0
    %2396 = vmatmul.mubr.bf16.gmra.mrb[0].mxu0 %v1215
    %v2397 = vpop.f32.mrb[0].mxu0
    %v2398 = vadd.f32 %v763, %v2397
    %v2399 = vpop.f32.mrb[0].mxu0
    %v2400 = vpop.f32.mrb[0].mxu0
    %v2401 = vadd.f32 %v763, %v2400
    %v2402 = vpop.f32.mrb[0].mxu0
    %2403 = vmatprep.mubr.bf16.mxu0 0
    %2404 = vmatmul.mubr.bf16.gmra.mrb[0].mxu0 %v1218
    %v2405 = vpop.f32.mrb[0].mxu0
    %v2406 = vadd.f32 %v763, %v2405
    %v2407 = vpop.f32.mrb[0].mxu0
    %v2408 = vpop.f32.mrb[0].mxu0
    %v2409 = vadd.f32 %v763, %v2408
    %v2410 = vpop.f32.mrb[0].mxu0
    %2411 = vmatprep.mubr.bf16.mxu0 0
    %2412 = vmatmul.mubr.bf16.gmra.mrb[0].mxu0 %v1221
    %v2413 = vpop.f32.mrb[0].mxu0
    %v2414 = vadd.f32 %v763, %v2413
    %v2415 = vpop.f32.mrb[0].mxu0
    %v2416 = vpop.f32.mrb[0].mxu0
    %v2417 = vadd.f32 %v763, %v2416
    %v2418 = vpop.f32.mrb[0].mxu0
    %2419 = vmatprep.mubr.bf16.mxu0 0
    %2420 = vmatmul.mubr.bf16.gmra.mrb[0].mxu0 %v1224
    %v2421 = vpop.f32.mrb[0].mxu0
    %v2422 = vadd.f32 %v763, %v2421
    %v2423 = vpop.f32.mrb[0].mxu0
    %v2424 = vpop.f32.mrb[0].mxu0
    %v2425 = vadd.f32 %v763, %v2424
    %v2426 = vpop.f32.mrb[0].mxu0
    %2427 = vmatprep.mubr.bf16.mxu0 0
    %2428 = vmatmul.mubr.bf16.gmra.mrb[0].mxu0 %v1227
    %v2429 = vpop.f32.mrb[0].mxu0
    %v2430 = vadd.f32 %v763, %v2429
    %v2431 = vpop.f32.mrb[0].mxu0
    %v2432 = vpop.f32.mrb[0].mxu0
    %v2433 = vadd.f32 %v763, %v2432
    %v2434 = vpop.f32.mrb[0].mxu0
    %2435 = vmatprep.mubr.bf16.mxu0 0
    %2436 = vmatmul.mubr.bf16.gmra.mrb[0].mxu0 %v1230
    %v2437 = vpop.f32.mrb[0].mxu0
    %v2438 = vadd.f32 %v763, %v2437
    %v2439 = vpop.f32.mrb[0].mxu0
    %v2440 = vpop.f32.mrb[0].mxu0
    %v2441 = vadd.f32 %v763, %v2440
    %v2442 = vpop.f32.mrb[0].mxu0
    %2443 = vmatprep.mubr.bf16.mxu0 0
    %2444 = vmatmul.mubr.bf16.gmra.mrb[0].mxu0 %v1233
    %v2445 = vpop.f32.mrb[0].mxu0
    %v2446 = vadd.f32 %v763, %v2445
    %v2447 = vpop.f32.mrb[0].mxu0
    %v2448 = vpop.f32.mrb[0].mxu0
    %v2449 = vadd.f32 %v763, %v2448
    %v2450 = vpop.f32.mrb[0].mxu0
    %2451 = vmatprep.mubr.bf16.mxu0 0
    %2452 = vmatmul.mubr.bf16.gmra.mrb[0].mxu0 %v1236
    %v2453 = vpop.f32.mrb[0].mxu0
    %v2454 = vadd.f32 %v763, %v2453
    %v2455 = vpop.f32.mrb[0].mxu0
    %v2456 = vpop.f32.mrb[0].mxu0
    %v2457 = vadd.f32 %v763, %v2456
    %v2458 = vpop.f32.mrb[0].mxu0
    %2459 = vmatprep.mubr.bf16.mxu0 0
    %2460 = vmatmul.mubr.bf16.gmra.mrb[0].mxu0 %v1239
    %v2461 = vpop.f32.mrb[0].mxu0
    %v2462 = vadd.f32 %v763, %v2461
    %v2463 = vpop.f32.mrb[0].mxu0
    %v2464 = vpop.f32.mrb[0].mxu0
    %v2465 = vadd.f32 %v763, %v2464
    %v2466 = vpop.f32.mrb[0].mxu0
    %2467 = vmatprep.mubr.bf16.mxu0 0
    %2468 = vmatmul.mubr.bf16.gmra.mrb[0].mxu0 %v1242
    %v2469 = vpop.f32.mrb[0].mxu0
    %v2470 = vadd.f32 %v763, %v2469
    %v2471 = vpop.f32.mrb[0].mxu0
    %v2472 = vpop.f32.mrb[0].mxu0
    %v2473 = vadd.f32 %v763, %v2472
    %v2474 = vpop.f32.mrb[0].mxu0
    %2475 = vmatprep.mubr.bf16.mxu0 0
    %2476 = vmatmul.mubr.bf16.gmra.mrb[0].mxu0 %v1245
    %v2477 = vpop.f32.mrb[0].mxu0
    %v2478 = vadd.f32 %v763, %v2477
    %v2479 = vpop.f32.mrb[0].mxu0
    %v2480 = vpop.f32.mrb[0].mxu0
    %v2481 = vadd.f32 %v763, %v2480
    %v2482 = vpop.f32.mrb[0].mxu0
    %2483 = vmatprep.mubr.bf16.mxu0 0
    %2484 = vmatmul.mubr.bf16.gmra.mrb[0].mxu0 %v1248
    %v2485 = vpop.f32.mrb[0].mxu0
    %v2486 = vadd.f32 %v763, %v2485
    %v2487 = vpop.f32.mrb[0].mxu0
    %v2488 = vpop.f32.mrb[0].mxu0
    %v2489 = vadd.f32 %v763, %v2488
    %v2490 = vpop.f32.mrb[0].mxu0
    %2491 = vmatprep.mubr.bf16.mxu0 0
    %2492 = vmatmul.mubr.bf16.gmra.mrb[0].mxu0 %v1251
    %v2493 = vpop.f32.mrb[0].mxu0
    %v2494 = vadd.f32 %v763, %v2493
    %v2495 = vpop.f32.mrb[0].mxu0
    %v2496 = vpop.f32.mrb[0].mxu0
    %v2497 = vadd.f32 %v763, %v2496
    %v2498 = vpop.f32.mrb[0].mxu0
    %2499 = vmatprep.mubr.bf16.mxu0 0
    %2500 = vmatmul.mubr.bf16.gmra.mrb[0].mxu0 %v1254
    %v2501 = vpop.f32.mrb[0].mxu0
    %v2502 = vadd.f32 %v763, %v2501
    %v2503 = vpop.f32.mrb[0].mxu0
    %v2504 = vpop.f32.mrb[0].mxu0
    %v2505 = vadd.f32 %v763, %v2504
    %v2506 = vpop.f32.mrb[0].mxu0
    %2507 = vmatprep.mubr.bf16.mxu0 0
    %2508 = vmatmul.mubr.bf16.gmra.mrb[0].mxu0 %v1257
    %v2509 = vpop.f32.mrb[0].mxu0
    %v2510 = vadd.f32 %v763, %v2509
    %v2511 = vpop.f32.mrb[0].mxu0
    %v2512 = vpop.f32.mrb[0].mxu0
    %v2513 = vadd.f32 %v763, %v2512
    %v2514 = vpop.f32.mrb[0].mxu0
    %2515 = vmatprep.mubr.bf16.mxu0 0
    %2516 = vmatmul.mubr.bf16.gmra.mrb[0].mxu0 %v1260
    %v2517 = vpop.f32.mrb[0].mxu0
    %v2518 = vadd.f32 %v763, %v2517
    %v2519 = vpop.f32.mrb[0].mxu0
    %v2520 = vpop.f32.mrb[0].mxu0
    %v2521 = vadd.f32 %v763, %v2520
    %v2522 = vpop.f32.mrb[0].mxu0
    %2523 = vmatprep.mubr.bf16.mxu0 0
    %2524 = vmatmul.mubr.bf16.gmra.mrb[0].mxu0 %v1263
    %v2525 = vpop.f32.mrb[0].mxu0
    %v2526 = vadd.f32 %v763, %v2525
    %v2527 = vpop.f32.mrb[0].mxu0
    %v2528 = vpop.f32.mrb[0].mxu0
    %v2529 = vadd.f32 %v763, %v2528
    %v2530 = vpop.f32.mrb[0].mxu0
    %2531 = vmatprep.mubr.bf16.mxu0 0
    %2532 = vmatmul.mubr.bf16.gmra.mrb[0].mxu0 %v1266
    %v2533 = vpop.f32.mrb[0].mxu0
    %v2534 = vadd.f32 %v763, %v2533
    %v2535 = vpop.f32.mrb[0].mxu0
    %v2536 = vpop.f32.mrb[0].mxu0
    %v2537 = vadd.f32 %v763, %v2536
    %v2538 = vpop.f32.mrb[0].mxu0
    %2539 = vmatprep.mubr.bf16.mxu0 0
    %2540 = vmatmul.mubr.bf16.gmra.mrb[0].mxu0 %v1269
    %v2541 = vpop.f32.mrb[0].mxu0
    %v2542 = vadd.f32 %v763, %v2541
    %v2543 = vpop.f32.mrb[0].mxu0
    %v2544 = vpop.f32.mrb[0].mxu0
    %v2545 = vadd.f32 %v763, %v2544
    %v2546 = vpop.f32.mrb[0].mxu0
    %2547 = vmatprep.mubr.bf16.mxu0 0
    %2548 = vmatmul.mubr.bf16.gmra.mrb[0].mxu0 %v1272
    %v2549 = vpop.f32.mrb[0].mxu0
    %v2550 = vadd.f32 %v763, %v2549
    %v2551 = vpop.f32.mrb[0].mxu0
    %v2552 = vpop.f32.mrb[0].mxu0
    %v2553 = vadd.f32 %v763, %v2552
    %v2554 = vpop.f32.mrb[0].mxu0
    %2555 = vmatprep.mubr.bf16.mxu0 0
    %2556 = vmatmul.mubr.bf16.gmra.mrb[0].mxu0 %v1275
    %v2557 = vpop.f32.mrb[0].mxu0
    %v2558 = vadd.f32 %v763, %v2557
    %v2559 = vpop.f32.mrb[0].mxu0
    %v2560 = vpop.f32.mrb[0].mxu0
    %v2561 = vadd.f32 %v763, %v2560
    %v2562 = vpop.f32.mrb[0].mxu0
    %2563 = vmatprep.mubr.bf16.mxu0 0
    %2564 = vmatmul.mubr.bf16.gmra.mrb[0].mxu0 %v1278
    %v2565 = vpop.f32.mrb[0].mxu0
    %v2566 = vadd.f32 %v763, %v2565
    %v2567 = vpop.f32.mrb[0].mxu0
    %v2568 = vpop.f32.mrb[0].mxu0
    %v2569 = vadd.f32 %v763, %v2568
    %v2570 = vpop.f32.mrb[0].mxu0
    %2571 = vdwg.mxu0
    %v2572 = vmax.f32 %v1357, 0.0
    %v2573 = vmax.f32 %v1359, 0.0
    %v2574 = vmax.f32 %v2062, 0.0
    %v2575 = vmax.f32 %v1361, 0.0
    %v2576 = vmax.f32 %v1363, 0.0
    %v2577 = vmax.f32 %v2065, 0.0
    %v2578 = vmax.f32 %v1367, 0.0
    %v2579 = vmax.f32 %v1369, 0.0
    %v2580 = vmax.f32 %v2070, 0.0
    %v2581 = vmax.f32 %v1371, 0.0
    %v2582 = vmax.f32 %v1373, 0.0
    %v2583 = vmax.f32 %v2073, 0.0
    %v2584 = vmax.f32 %v1377, 0.0
    %v2585 = vmax.f32 %v1379, 0.0
    %v2586 = vmax.f32 %v2078, 0.0
    %v2587 = vmax.f32 %v1381, 0.0
    %v2588 = vmax.f32 %v1383, 0.0
    %v2589 = vmax.f32 %v2081, 0.0
    %v2590 = vmax.f32 %v1387, 0.0
    %v2591 = vmax.f32 %v1389, 0.0
    %v2592 = vmax.f32 %v2086, 0.0
    %v2593 = vmax.f32 %v1391, 0.0
    %v2594 = vmax.f32 %v1393, 0.0
    %v2595 = vmax.f32 %v2089, 0.0
    %v2596 = vmax.f32 %v1397, 0.0
    %v2597 = vmax.f32 %v1399, 0.0
    %v2598 = vmax.f32 %v2094, 0.0
    %v2599 = vmax.f32 %v1401, 0.0
    %v2600 = vmax.f32 %v1403, 0.0
    %v2601 = vmax.f32 %v2097, 0.0
    %v2602 = vmax.f32 %v1407, 0.0
    %v2603 = vmax.f32 %v1409, 0.0
    %v2604 = vmax.f32 %v2102, 0.0
    %v2605 = vmax.f32 %v1411, 0.0
    %v2606 = vmax.f32 %v1413, 0.0
    %v2607 = vmax.f32 %v2105, 0.0
    %v2608 = vmax.f32 %v1417, 0.0
    %v2609 = vmax.f32 %v1419, 0.0
    %v2610 = vmax.f32 %v2110, 0.0
    %v2611 = vmax.f32 %v1421, 0.0
    %v2612 = vmax.f32 %v1423, 0.0
    %v2613 = vmax.f32 %v2113, 0.0
    %v2614 = vmax.f32 %v1427, 0.0
    %v2615 = vmax.f32 %v1429, 0.0
    %v2616 = vmax.f32 %v2118, 0.0
    %v2617 = vmax.f32 %v1431, 0.0
    %v2618 = vmax.f32 %v1433, 0.0
    %v2619 = vmax.f32 %v2121, 0.0
    %v2620 = vmax.f32 %v1437, 0.0
    %v2621 = vmax.f32 %v1439, 0.0
    %v2622 = vmax.f32 %v2126, 0.0
    %v2623 = vmax.f32 %v1441, 0.0
    %v2624 = vmax.f32 %v1443, 0.0
    %v2625 = vmax.f32 %v2129, 0.0
    %v2626 = vmax.f32 %v1447, 0.0
    %v2627 = vmax.f32 %v1449, 0.0
    %v2628 = vmax.f32 %v2134, 0.0
    %v2629 = vmax.f32 %v1451, 0.0
    %v2630 = vmax.f32 %v1453, 0.0
    %v2631 = vmax.f32 %v2137, 0.0
    %v2632 = vmax.f32 %v1457, 0.0
    %v2633 = vmax.f32 %v1459, 0.0
    %v2634 = vmax.f32 %v2142, 0.0
    %v2635 = vmax.f32 %v1461, 0.0
    %v2636 = vmax.f32 %v1463, 0.0
    %v2637 = vmax.f32 %v2145, 0.0
    %v2638 = vmax.f32 %v1467, 0.0
    %v2639 = vmax.f32 %v1469, 0.0
    %v2640 = vmax.f32 %v2150, 0.0
    %v2641 = vmax.f32 %v1471, 0.0
    %v2642 = vmax.f32 %v1473, 0.0
    %v2643 = vmax.f32 %v2153, 0.0
    %v2644 = vmax.f32 %v1477, 0.0
    %v2645 = vmax.f32 %v1479, 0.0
    %v2646 = vmax.f32 %v2158, 0.0
    %v2647 = vmax.f32 %v1481, 0.0
    %v2648 = vmax.f32 %v1483, 0.0
    %v2649 = vmax.f32 %v2161, 0.0
    %v2650 = vmax.f32 %v1487, 0.0
    %v2651 = vmax.f32 %v1489, 0.0
    %v2652 = vmax.f32 %v2166, 0.0
    %v2653 = vmax.f32 %v1491, 0.0
    %v2654 = vmax.f32 %v1493, 0.0
    %v2655 = vmax.f32 %v2169, 0.0
    %v2656 = vmax.f32 %v1497, 0.0
    %v2657 = vmax.f32 %v1499, 0.0
    %v2658 = vmax.f32 %v2174, 0.0
    %v2659 = vmax.f32 %v1501, 0.0
    %v2660 = vmax.f32 %v1503, 0.0
    %v2661 = vmax.f32 %v2177, 0.0
    %v2662 = vmax.f32 %v1507, 0.0
    %v2663 = vmax.f32 %v1509, 0.0
    %v2664 = vmax.f32 %v2182, 0.0
    %v2665 = vmax.f32 %v1511, 0.0
    %v2666 = vmax.f32 %v1513, 0.0
    %v2667 = vmax.f32 %v2185, 0.0
    %v2668 = vmax.f32 %v1517, 0.0
    %v2669 = vmax.f32 %v1519, 0.0
    %v2670 = vmax.f32 %v2190, 0.0
    %v2671 = vmax.f32 %v1521, 0.0
    %v2672 = vmax.f32 %v1523, 0.0
    %v2673 = vmax.f32 %v2193, 0.0
    %v2674 = vmax.f32 %v1527, 0.0
    %v2675 = vmax.f32 %v1529, 0.0
    %v2676 = vmax.f32 %v2198, 0.0
    %v2677 = vmax.f32 %v1531, 0.0
    %v2678 = vmax.f32 %v1533, 0.0
    %v2679 = vmax.f32 %v2201, 0.0
    %v2680 = vmax.f32 %v1537, 0.0
    %v2681 = vmax.f32 %v1539, 0.0
    %v2682 = vmax.f32 %v2206, 0.0
    %v2683 = vmax.f32 %v1541, 0.0
    %v2684 = vmax.f32 %v1543, 0.0
    %v2685 = vmax.f32 %v2209, 0.0
    %v2686 = vmax.f32 %v1547, 0.0
    %v2687 = vmax.f32 %v1549, 0.0
    %v2688 = vmax.f32 %v2214, 0.0
    %v2689 = vmax.f32 %v1551, 0.0
    %v2690 = vmax.f32 %v1553, 0.0
    %v2691 = vmax.f32 %v2217, 0.0
    %v2692 = vmax.f32 %v1557, 0.0
    %v2693 = vmax.f32 %v1559, 0.0
    %v2694 = vmax.f32 %v2222, 0.0
    %v2695 = vmax.f32 %v1561, 0.0
    %v2696 = vmax.f32 %v1563, 0.0
    %v2697 = vmax.f32 %v2225, 0.0
    %v2698 = vmax.f32 %v1567, 0.0
    %v2699 = vmax.f32 %v1569, 0.0
    %v2700 = vmax.f32 %v2230, 0.0
    %v2701 = vmax.f32 %v1571, 0.0
    %v2702 = vmax.f32 %v1573, 0.0
    %v2703 = vmax.f32 %v2233, 0.0
    %v2704 = vmax.f32 %v1577, 0.0
    %v2705 = vmax.f32 %v1579, 0.0
    %v2706 = vmax.f32 %v2238, 0.0
    %v2707 = vmax.f32 %v1581, 0.0
    %v2708 = vmax.f32 %v1583, 0.0
    %v2709 = vmax.f32 %v2241, 0.0
    %v2710 = vmax.f32 %v1587, 0.0
    %v2711 = vmax.f32 %v1589, 0.0
    %v2712 = vmax.f32 %v2246, 0.0
    %v2713 = vmax.f32 %v1591, 0.0
    %v2714 = vmax.f32 %v1593, 0.0
    %v2715 = vmax.f32 %v2249, 0.0
    %v2716 = vmax.f32 %v1597, 0.0
    %v2717 = vmax.f32 %v1599, 0.0
    %v2718 = vmax.f32 %v2254, 0.0
    %v2719 = vmax.f32 %v1601, 0.0
    %v2720 = vmax.f32 %v1603, 0.0
    %v2721 = vmax.f32 %v2257, 0.0
    %v2722 = vmax.f32 %v1607, 0.0
    %v2723 = vmax.f32 %v1609, 0.0
    %v2724 = vmax.f32 %v2262, 0.0
    %v2725 = vmax.f32 %v1611, 0.0
    %v2726 = vmax.f32 %v1613, 0.0
    %v2727 = vmax.f32 %v2265, 0.0
    %v2728 = vmax.f32 %v1617, 0.0
    %v2729 = vmax.f32 %v1619, 0.0
    %v2730 = vmax.f32 %v2270, 0.0
    %v2731 = vmax.f32 %v1621, 0.0
    %v2732 = vmax.f32 %v1623, 0.0
    %v2733 = vmax.f32 %v2273, 0.0
    %v2734 = vmax.f32 %v1627, 0.0
    %v2735 = vmax.f32 %v1629, 0.0
    %v2736 = vmax.f32 %v2278, 0.0
    %v2737 = vmax.f32 %v1631, 0.0
    %v2738 = vmax.f32 %v1633, 0.0
    %v2739 = vmax.f32 %v2281, 0.0
    %v2740 = vmax.f32 %v1637, 0.0
    %v2741 = vmax.f32 %v1639, 0.0
    %v2742 = vmax.f32 %v2286, 0.0
    %v2743 = vmax.f32 %v1641, 0.0
    %v2744 = vmax.f32 %v1643, 0.0
    %v2745 = vmax.f32 %v2289, 0.0
    %v2746 = vmax.f32 %v1647, 0.0
    %v2747 = vmax.f32 %v1649, 0.0
    %v2748 = vmax.f32 %v2294, 0.0
    %v2749 = vmax.f32 %v1651, 0.0
    %v2750 = vmax.f32 %v1653, 0.0
    %v2751 = vmax.f32 %v2297, 0.0
    %v2752 = vmax.f32 %v1657, 0.0
    %v2753 = vmax.f32 %v1659, 0.0
    %v2754 = vmax.f32 %v2302, 0.0
    %v2755 = vmax.f32 %v1661, 0.0
    %v2756 = vmax.f32 %v1663, 0.0
    %v2757 = vmax.f32 %v2305, 0.0
    %v2758 = vmax.f32 %v1667, 0.0
    %v2759 = vmax.f32 %v1669, 0.0
    %v2760 = vmax.f32 %v2310, 0.0
    %v2761 = vmax.f32 %v1671, 0.0
    %v2762 = vmax.f32 %v1673, 0.0
    %v2763 = vmax.f32 %v2313, 0.0
    %v2764 = vmax.f32 %v1677, 0.0
    %v2765 = vmax.f32 %v1679, 0.0
    %v2766 = vmax.f32 %v2318, 0.0
    %v2767 = vmax.f32 %v1681, 0.0
    %v2768 = vmax.f32 %v1683, 0.0
    %v2769 = vmax.f32 %v2321, 0.0
    %v2770 = vmax.f32 %v1687, 0.0
    %v2771 = vmax.f32 %v1689, 0.0
    %v2772 = vmax.f32 %v2326, 0.0
    %v2773 = vmax.f32 %v1691, 0.0
    %v2774 = vmax.f32 %v1693, 0.0
    %v2775 = vmax.f32 %v2329, 0.0
    %v2776 = vmax.f32 %v1697, 0.0
    %v2777 = vmax.f32 %v1699, 0.0
    %v2778 = vmax.f32 %v2334, 0.0
    %v2779 = vmax.f32 %v1701, 0.0
    %v2780 = vmax.f32 %v1703, 0.0
    %v2781 = vmax.f32 %v2337, 0.0
    %v2782 = vmax.f32 %v1707, 0.0
    %v2783 = vmax.f32 %v1709, 0.0
    %v2784 = vmax.f32 %v2342, 0.0
    %v2785 = vmax.f32 %v1711, 0.0
    %v2786 = vmax.f32 %v1713, 0.0
    %v2787 = vmax.f32 %v2345, 0.0
    %v2788 = vmax.f32 %v1717, 0.0
    %v2789 = vmax.f32 %v1719, 0.0
    %v2790 = vmax.f32 %v2350, 0.0
    %v2791 = vmax.f32 %v1721, 0.0
    %v2792 = vmax.f32 %v1723, 0.0
    %v2793 = vmax.f32 %v2353, 0.0
    %v2794 = vmax.f32 %v1727, 0.0
    %v2795 = vmax.f32 %v1729, 0.0
    %v2796 = vmax.f32 %v2358, 0.0
    %v2797 = vmax.f32 %v1731, 0.0
    %v2798 = vmax.f32 %v1733, 0.0
    %v2799 = vmax.f32 %v2361, 0.0
    %v2800 = vmax.f32 %v1737, 0.0
    %v2801 = vmax.f32 %v1739, 0.0
    %v2802 = vmax.f32 %v2366, 0.0
    %v2803 = vmax.f32 %v1741, 0.0
    %v2804 = vmax.f32 %v1743, 0.0
    %v2805 = vmax.f32 %v2369, 0.0
    %v2806 = vmax.f32 %v1747, 0.0
    %v2807 = vmax.f32 %v1749, 0.0
    %v2808 = vmax.f32 %v2374, 0.0
    %v2809 = vmax.f32 %v1751, 0.0
    %v2810 = vmax.f32 %v1753, 0.0
    %v2811 = vmax.f32 %v2377, 0.0
    %v2812 = vmax.f32 %v1757, 0.0
    %v2813 = vmax.f32 %v1759, 0.0
    %v2814 = vmax.f32 %v2382, 0.0
    %v2815 = vmax.f32 %v1761, 0.0
    %v2816 = vmax.f32 %v1763, 0.0
    %v2817 = vmax.f32 %v2385, 0.0
    %v2818 = vmax.f32 %v1767, 0.0
    %v2819 = vmax.f32 %v1769, 0.0
    %v2820 = vmax.f32 %v2390, 0.0
    %v2821 = vmax.f32 %v1771, 0.0
    %v2822 = vmax.f32 %v1773, 0.0
    %v2823 = vmax.f32 %v2393, 0.0
    %v2824 = vmax.f32 %v1777, 0.0
    %v2825 = vmax.f32 %v1779, 0.0
    %v2826 = vmax.f32 %v2398, 0.0
    %v2827 = vmax.f32 %v1781, 0.0
    %v2828 = vmax.f32 %v1783, 0.0
    %v2829 = vmax.f32 %v2401, 0.0
    %v2830 = vmax.f32 %v1787, 0.0
    %v2831 = vmax.f32 %v1789, 0.0
    %v2832 = vmax.f32 %v2406, 0.0
    %v2833 = vmax.f32 %v1791, 0.0
    %v2834 = vmax.f32 %v1793, 0.0
    %v2835 = vmax.f32 %v2409, 0.0
    %v2836 = vmax.f32 %v1797, 0.0
    %v2837 = vmax.f32 %v1799, 0.0
    %v2838 = vmax.f32 %v2414, 0.0
    %v2839 = vmax.f32 %v1801, 0.0
    %v2840 = vmax.f32 %v1803, 0.0
    %v2841 = vmax.f32 %v2417, 0.0
    %v2842 = vmax.f32 %v1807, 0.0
    %v2843 = vmax.f32 %v1809, 0.0
    %v2844 = vmax.f32 %v2422, 0.0
    %v2845 = vmax.f32 %v1811, 0.0
    %v2846 = vmax.f32 %v1813, 0.0
    %v2847 = vmax.f32 %v2425, 0.0
    %v2848 = vmax.f32 %v1817, 0.0
    %v2849 = vmax.f32 %v1819, 0.0
    %v2850 = vmax.f32 %v2430, 0.0
    %v2851 = vmax.f32 %v1821, 0.0
    %v2852 = vmax.f32 %v1823, 0.0
    %v2853 = vmax.f32 %v2433, 0.0
    %v2854 = vmax.f32 %v1827, 0.0
    %v2855 = vmax.f32 %v1829, 0.0
    %v2856 = vmax.f32 %v2438, 0.0
    %v2857 = vmax.f32 %v1831, 0.0
    %v2858 = vmax.f32 %v1833, 0.0
    %v2859 = vmax.f32 %v2441, 0.0
    %v2860 = vmax.f32 %v1837, 0.0
    %v2861 = vmax.f32 %v1839, 0.0
    %v2862 = vmax.f32 %v2446, 0.0
    %v2863 = vmax.f32 %v1841, 0.0
    %v2864 = vmax.f32 %v1843, 0.0
    %v2865 = vmax.f32 %v2449, 0.0
    %v2866 = vmax.f32 %v1847, 0.0
    %v2867 = vmax.f32 %v1849, 0.0
    %v2868 = vmax.f32 %v2454, 0.0
    %v2869 = vmax.f32 %v1851, 0.0
    %v2870 = vmax.f32 %v1853, 0.0
    %v2871 = vmax.f32 %v2457, 0.0
    %v2872 = vmax.f32 %v1857, 0.0
    %v2873 = vmax.f32 %v1859, 0.0
    %v2874 = vmax.f32 %v2462, 0.0
    %v2875 = vmax.f32 %v1861, 0.0
    %v2876 = vmax.f32 %v1863, 0.0
    %v2877 = vmax.f32 %v2465, 0.0
    %v2878 = vmax.f32 %v1867, 0.0
    %v2879 = vmax.f32 %v1869, 0.0
    %v2880 = vmax.f32 %v2470, 0.0
    %v2881 = vmax.f32 %v1871, 0.0
    %v2882 = vmax.f32 %v1873, 0.0
    %v2883 = vmax.f32 %v2473, 0.0
    %v2884 = vmax.f32 %v1877, 0.0
    %v2885 = vmax.f32 %v1879, 0.0
    %v2886 = vmax.f32 %v2478, 0.0
    %v2887 = vmax.f32 %v1881, 0.0
    %v2888 = vmax.f32 %v1883, 0.0
    %v2889 = vmax.f32 %v2481, 0.0
    %v2890 = vmax.f32 %v1887, 0.0
    %v2891 = vmax.f32 %v1889, 0.0
    %v2892 = vmax.f32 %v2486, 0.0
    %v2893 = vmax.f32 %v1891, 0.0
    %v2894 = vmax.f32 %v1893, 0.0
    %v2895 = vmax.f32 %v2489, 0.0
    %v2896 = vmax.f32 %v1897, 0.0
    %v2897 = vmax.f32 %v1899, 0.0
    %v2898 = vmax.f32 %v2494, 0.0
    %v2899 = vmax.f32 %v1901, 0.0
    %v2900 = vmax.f32 %v1903, 0.0
    %v2901 = vmax.f32 %v2497, 0.0
    %v2902 = vmax.f32 %v1907, 0.0
    %v2903 = vmax.f32 %v1909, 0.0
    %v2904 = vmax.f32 %v2502, 0.0
    %v2905 = vmax.f32 %v1911, 0.0
    %v2906 = vmax.f32 %v1913, 0.0
    %v2907 = vmax.f32 %v2505, 0.0
    %v2908 = vmax.f32 %v1917, 0.0
    %v2909 = vmax.f32 %v1919, 0.0
    %v2910 = vmax.f32 %v2510, 0.0
    %v2911 = vmax.f32 %v1921, 0.0
    %v2912 = vmax.f32 %v1923, 0.0
    %v2913 = vmax.f32 %v2513, 0.0
    %v2914 = vmax.f32 %v1927, 0.0
    %v2915 = vmax.f32 %v1929, 0.0
    %v2916 = vmax.f32 %v2518, 0.0
    %v2917 = vmax.f32 %v1931, 0.0
    %v2918 = vmax.f32 %v1933, 0.0
    %v2919 = vmax.f32 %v2521, 0.0
    %v2920 = vmax.f32 %v1937, 0.0
    %v2921 = vmax.f32 %v1939, 0.0
    %v2922 = vmax.f32 %v2526, 0.0
    %v2923 = vmax.f32 %v1941, 0.0
    %v2924 = vmax.f32 %v1943, 0.0
    %v2925 = vmax.f32 %v2529, 0.0
    %v2926 = vmax.f32 %v1947, 0.0
    %v2927 = vmax.f32 %v1949, 0.0
    %v2928 = vmax.f32 %v2534, 0.0
    %v2929 = vmax.f32 %v1951, 0.0
    %v2930 = vmax.f32 %v1953, 0.0
    %v2931 = vmax.f32 %v2537, 0.0
    %v2932 = vmax.f32 %v1957, 0.0
    %v2933 = vmax.f32 %v1959, 0.0
    %v2934 = vmax.f32 %v2542, 0.0
    %v2935 = vmax.f32 %v1961, 0.0
    %v2936 = vmax.f32 %v1963, 0.0
    %v2937 = vmax.f32 %v2545, 0.0
    %v2938 = vmax.f32 %v1967, 0.0
    %v2939 = vmax.f32 %v1969, 0.0
    %v2940 = vmax.f32 %v2550, 0.0
    %v2941 = vmax.f32 %v1971, 0.0
    %v2942 = vmax.f32 %v1973, 0.0
    %v2943 = vmax.f32 %v2553, 0.0
    %v2944 = vmax.f32 %v1977, 0.0
    %v2945 = vmax.f32 %v1979, 0.0
    %v2946 = vmax.f32 %v2558, 0.0
    %v2947 = vmax.f32 %v1981, 0.0
    %v2948 = vmax.f32 %v1983, 0.0
    %v2949 = vmax.f32 %v2561, 0.0
    %v2950 = vmax.f32 %v1987, 0.0
    %v2951 = vmax.f32 %v1989, 0.0
    %v2952 = vmax.f32 %v2566, 0.0
    %v2953 = vmax.f32 %v1991, 0.0
    %v2954 = vmax.f32 %v1993, 0.0
    %v2955 = vmax.f32 %v2569, 0.0
    %v2956 = vld [vmem:[%s3] sm:$0xff]
    %v2957 = vld [vmem:[%s3 + $0x8] sm:$0xff]
    %v2958 = vld [vmem:[%s3 + $0x10] sm:$0xff]
    %v2959 = vld [vmem:[%s3 + $0x18] sm:$0xff]
    %v2960 = vld [vmem:[%s3 + $0x20] sm:$0xff]
    %v2961 = vld [vmem:[%s3 + $0x28] sm:$0xff]
    %v2962 = vld [vmem:[%s3 + $0x30] sm:$0xff]
    %v2963 = vld [vmem:[%s3 + $0x38] sm:$0xff]
    %v2964 = vld [vmem:[%s3 + $0x40] sm:$0xff]
    %v2965 = vld [vmem:[%s3 + $0x48] sm:$0xff]
    %v2966 = vld [vmem:[%s3 + $0x50] sm:$0xff]
    %v2967 = vld [vmem:[%s3 + $0x58] sm:$0xff]
    %v2968 = vld [vmem:[%s3 + $0x60] sm:$0xff]
    %v2969 = vld [vmem:[%s3 + $0x68] sm:$0xff]
    %v2970 = vld [vmem:[%s3 + $0x70] sm:$0xff]
    %v2971 = vld [vmem:[%s3 + $0x78] sm:$0xff]
    %v2972 = vld [vmem:[%s3 + $0x80] sm:$0xff]
    %v2973 = vld [vmem:[%s3 + $0x88] sm:$0xff]
    %v2974 = vld [vmem:[%s3 + $0x90] sm:$0xff]
    %v2975 = vld [vmem:[%s3 + $0x98] sm:$0xff]
    %v2976 = vld [vmem:[%s3 + $0xa0] sm:$0xff]
    %v2977 = vld [vmem:[%s3 + $0xa8] sm:$0xff]
    %v2978 = vld [vmem:[%s3 + $0xb0] sm:$0xff]
    %v2979 = vld [vmem:[%s3 + $0xb8] sm:$0xff]
    %v2980 = vld [vmem:[%s3 + $0xc0] sm:$0xff]
    %v2981 = vld [vmem:[%s3 + $0xc8] sm:$0xff]
    %v2982 = vld [vmem:[%s3 + $0xd0] sm:$0xff]
    %v2983 = vld [vmem:[%s3 + $0xd8] sm:$0xff]
    %v2984 = vld [vmem:[%s3 + $0xe0] sm:$0xff]
    %v2985 = vld [vmem:[%s3 + $0xe8] sm:$0xff]
    %v2986 = vld [vmem:[%s3 + $0xf0] sm:$0xff]
    %v2987 = vld [vmem:[%s3 + $0xf8] sm:$0xff]
    %v2988 = vld [vmem:[%s3 + $0x100] sm:$0xff]
    %v2989 = vld [vmem:[%s3 + $0x108] sm:$0xff]
    %v2990 = vld [vmem:[%s3 + $0x110] sm:$0xff]
    %v2991 = vld [vmem:[%s3 + $0x118] sm:$0xff]
    %v2992 = vld [vmem:[%s4] sm:$0x1]
    %v2994 = vlaneseq
    %v2995 = vshrl.u32 %v2994, 7
    %v2996 = vsub.s32 0, %v2995
    %v2997 = vrot.slane %v2992, %v2996
    %vm2999 = vcmask 261120
    %v3001 = vsel %vm2999, %v2574, 0
    %v3004 = vsel %vm2999, %v2577, 0
    %v3007 = vsel %vm2999, %v2580, 0
    %v3010 = vsel %vm2999, %v2583, 0
    %v3013 = vsel %vm2999, %v2586, 0
    %v3016 = vsel %vm2999, %v2589, 0
    %v3019 = vsel %vm2999, %v2592, 0
    %v3022 = vsel %vm2999, %v2595, 0
    %v3025 = vsel %vm2999, %v2598, 0
    %v3028 = vsel %vm2999, %v2601, 0
    %v3031 = vsel %vm2999, %v2604, 0
    %v3034 = vsel %vm2999, %v2607, 0
    %v3037 = vsel %vm2999, %v2610, 0
    %v3040 = vsel %vm2999, %v2613, 0
    %v3043 = vsel %vm2999, %v2616, 0
    %v3046 = vsel %vm2999, %v2619, 0
    %v3049 = vsel %vm2999, %v2622, 0
    %v3052 = vsel %vm2999, %v2625, 0
    %v3055 = vsel %vm2999, %v2628, 0
    %v3058 = vsel %vm2999, %v2631, 0
    %v3061 = vsel %vm2999, %v2634, 0
    %v3064 = vsel %vm2999, %v2637, 0
    %v3067 = vsel %vm2999, %v2640, 0
    %v3070 = vsel %vm2999, %v2643, 0
    %v3073 = vsel %vm2999, %v2646, 0
    %v3076 = vsel %vm2999, %v2649, 0
    %v3079 = vsel %vm2999, %v2652, 0
    %v3082 = vsel %vm2999, %v2655, 0
    %v3085 = vsel %vm2999, %v2658, 0
    %v3088 = vsel %vm2999, %v2661, 0
    %v3091 = vsel %vm2999, %v2664, 0
    %v3094 = vsel %vm2999, %v2667, 0
    %v3097 = vsel %vm2999, %v2670, 0
    %v3100 = vsel %vm2999, %v2673, 0
    %v3103 = vsel %vm2999, %v2676, 0
    %v3106 = vsel %vm2999, %v2679, 0
    %v3109 = vsel %vm2999, %v2682, 0
    %v3112 = vsel %vm2999, %v2685, 0
    %v3115 = vsel %vm2999, %v2688, 0
    %v3118 = vsel %vm2999, %v2691, 0
    %v3121 = vsel %vm2999, %v2694, 0
    %v3124 = vsel %vm2999, %v2697, 0
    %v3127 = vsel %vm2999, %v2700, 0
    %v3130 = vsel %vm2999, %v2703, 0
    %v3133 = vsel %vm2999, %v2706, 0
    %v3136 = vsel %vm2999, %v2709, 0
    %v3139 = vsel %vm2999, %v2712, 0
    %v3142 = vsel %vm2999, %v2715, 0
    %v3145 = vsel %vm2999, %v2718, 0
    %v3148 = vsel %vm2999, %v2721, 0
    %v3151 = vsel %vm2999, %v2724, 0
    %v3154 = vsel %vm2999, %v2727, 0
    %v3157 = vsel %vm2999, %v2730, 0
    %v3160 = vsel %vm2999, %v2733, 0
    %v3163 = vsel %vm2999, %v2736, 0
    %v3166 = vsel %vm2999, %v2739, 0
    %v3169 = vsel %vm2999, %v2742, 0
    %v3172 = vsel %vm2999, %v2745, 0
    %v3175 = vsel %vm2999, %v2748, 0
    %v3178 = vsel %vm2999, %v2751, 0
    %v3181 = vsel %vm2999, %v2754, 0
    %v3184 = vsel %vm2999, %v2757, 0
    %v3187 = vsel %vm2999, %v2760, 0
    %v3190 = vsel %vm2999, %v2763, 0
    %v3193 = vsel %vm2999, %v2766, 0
    %v3196 = vsel %vm2999, %v2769, 0
    %v3199 = vsel %vm2999, %v2772, 0
    %v3202 = vsel %vm2999, %v2775, 0
    %v3205 = vsel %vm2999, %v2778, 0
    %v3208 = vsel %vm2999, %v2781, 0
    %v3211 = vsel %vm2999, %v2784, 0
    %v3214 = vsel %vm2999, %v2787, 0
    %v3217 = vsel %vm2999, %v2790, 0
    %v3220 = vsel %vm2999, %v2793, 0
    %v3223 = vsel %vm2999, %v2796, 0
    %v3226 = vsel %vm2999, %v2799, 0
    %v3229 = vsel %vm2999, %v2802, 0
    %v3232 = vsel %vm2999, %v2805, 0
    %v3235 = vsel %vm2999, %v2808, 0
    %v3238 = vsel %vm2999, %v2811, 0
    %v3241 = vsel %vm2999, %v2814, 0
    %v3244 = vsel %vm2999, %v2817, 0
    %v3247 = vsel %vm2999, %v2820, 0
    %v3250 = vsel %vm2999, %v2823, 0
    %v3253 = vsel %vm2999, %v2826, 0
    %v3256 = vsel %vm2999, %v2829, 0
    %v3259 = vsel %vm2999, %v2832, 0
    %v3262 = vsel %vm2999, %v2835, 0
    %v3265 = vsel %vm2999, %v2838, 0
    %v3268 = vsel %vm2999, %v2841, 0
    %v3271 = vsel %vm2999, %v2844, 0
    %v3274 = vsel %vm2999, %v2847, 0
    %v3277 = vsel %vm2999, %v2850, 0
    %v3280 = vsel %vm2999, %v2853, 0
    %v3283 = vsel %vm2999, %v2856, 0
    %v3286 = vsel %vm2999, %v2859, 0
    %v3289 = vsel %vm2999, %v2862, 0
    %v3292 = vsel %vm2999, %v2865, 0
    %v3295 = vsel %vm2999, %v2868, 0
    %v3298 = vsel %vm2999, %v2871, 0
    %v3301 = vsel %vm2999, %v2874, 0
    %v3304 = vsel %vm2999, %v2877, 0
    %v3307 = vsel %vm2999, %v2880, 0
    %v3310 = vsel %vm2999, %v2883, 0
    %v3313 = vsel %vm2999, %v2886, 0
    %v3316 = vsel %vm2999, %v2889, 0
    %v3319 = vsel %vm2999, %v2892, 0
    %v3322 = vsel %vm2999, %v2895, 0
    %v3325 = vsel %vm2999, %v2898, 0
    %v3328 = vsel %vm2999, %v2901, 0
    %v3331 = vsel %vm2999, %v2904, 0
    %v3334 = vsel %vm2999, %v2907, 0
    %v3337 = vsel %vm2999, %v2910, 0
    %v3340 = vsel %vm2999, %v2913, 0
    %v3343 = vsel %vm2999, %v2916, 0
    %v3346 = vsel %vm2999, %v2919, 0
    %v3349 = vsel %vm2999, %v2922, 0
    %v3352 = vsel %vm2999, %v2925, 0
    %v3355 = vsel %vm2999, %v2928, 0
    %v3358 = vsel %vm2999, %v2931, 0
    %v3361 = vsel %vm2999, %v2934, 0
    %v3364 = vsel %vm2999, %v2937, 0
    %v3367 = vsel %vm2999, %v2940, 0
    %v3370 = vsel %vm2999, %v2943, 0
    %v3373 = vsel %vm2999, %v2946, 0
    %v3376 = vsel %vm2999, %v2949, 0
    %v3379 = vsel %vm2999, %v2952, 0
    %v3382 = vsel %vm2999, %v2955, 0
    %3384 = vmatprep.subr.mxu0 0.0
    %3385 = vmatpush1.msra.mxu0 %v2956
    %3386 = vmatprep.subr.mxu0 0.0
    %3387 = vmatpush1.msra.mxu0 %v2957
    %3388 = vmatprep.subr.mxu0 0.0
    %3389 = vmatpush1.msra.mxu0 %v2958
    %3390 = vmatprep.subr.mxu0 0.0
    %3391 = vmatpush1.msra.mxu0 %v2959
    %3392 = vmatprep.subr.mxu0 0.0
    %3393 = vmatpush1.msra.mxu0 %v2960
    %3394 = vmatprep.subr.mxu0 0.0
    %3395 = vmatpush1.msra.mxu0 %v2961
    %3396 = vmatprep.subr.mxu0 0.0
    %3397 = vmatpush1.msra.mxu0 %v2962
    %3398 = vmatprep.subr.mxu0 0.0
    %3399 = vmatpush1.msra.mxu0 %v2963
    %3400 = vmatprep.subr.mxu0 0.0
    %3401 = vmatpush1.msra.mxu0 %v2964
    %3402 = vmatprep.subr.mxu0 0.0
    %3403 = vmatpush1.msra.mxu0 %v2965
    %3404 = vmatprep.subr.mxu0 0.0
    %3405 = vmatpush1.msra.mxu0 %v2966
    %3406 = vmatprep.subr.mxu0 0.0
    %3407 = vmatpush1.msra.mxu0 %v2967
    %3408 = vmatprep.subr.mxu0 0.0
    %3409 = vmatpush1.msra.mxu0 %v2968
    %3410 = vmatprep.subr.mxu0 0.0
    %3411 = vmatpush1.msra.mxu0 %v2969
    %3412 = vmatprep.subr.mxu0 0.0
    %3413 = vmatpush1.msra.mxu0 %v2970
    %3414 = vmatprep.subr.mxu0 0.0
    %3415 = vmatpush1.msra.mxu0 %v2971
    %3416 = vmatprep.subr.mxu0 0.0
    %3417 = vmatpush1.msra.mxu0 %v2972
    %3418 = vmatprep.subr.mxu0 0.0
    %3419 = vmatpush1.msra.mxu0 %v2973
    %3420 = vmatprep.subr.mxu0 0.0
    %3421 = vmatpush1.msra.mxu0 %v2974
    %3422 = vmatprep.subr.mxu0 0.0
    %3423 = vmatpush1.msra.mxu0 %v2975
    %3424 = vmatprep.subr.mxu0 0.0
    %3425 = vmatpush1.msra.mxu0 %v2976
    %3426 = vmatprep.subr.mxu0 0.0
    %3427 = vmatpush1.msra.mxu0 %v2977
    %3428 = vmatprep.subr.mxu0 0.0
    %3429 = vmatpush1.msra.mxu0 %v2978
    %3430 = vmatprep.subr.mxu0 0.0
    %3431 = vmatpush1.msra.mxu0 %v2979
    %3432 = vmatprep.subr.mxu0 0.0
    %3433 = vmatpush1.msra.mxu0 %v2980
    %3434 = vmatprep.subr.mxu0 0.0
    %3435 = vmatpush1.msra.mxu0 %v2981
    %3436 = vmatprep.subr.mxu0 0.0
    %3437 = vmatpush1.msra.mxu0 %v2982
    %3438 = vmatprep.subr.mxu0 0.0
    %3439 = vmatpush1.msra.mxu0 %v2983
    %3440 = vmatprep.subr.mxu0 0.0
    %3441 = vmatpush1.msra.mxu0 %v2984
    %3442 = vmatprep.subr.mxu0 0.0
    %3443 = vmatpush1.msra.mxu0 %v2985
    %3444 = vmatprep.subr.mxu0 0.0
    %3445 = vmatpush1.msra.mxu0 %v2986
    %3446 = vmatprep.subr.mxu0 0.0
    %3447 = vmatpush1.msra.mxu0 %v2987
    %3448 = vmatprep.mubr.f32.mxu0 %v2573
    %3449 = vmatmul.mubr.f32.gmra.mrb[0].mxu0 %v2572
    %v3450 = vpop.f32.mrb[0].mxu0
    %v3451 = vadd.f32 %v2997, %v3450
    %v3452 = vpop.f32.mrb[0].mxu0
    %3453 = vmatprep.mubr.f32.mxu0 %v2576
    %3454 = vmatmul.mubr.f32.gmra.mrb[0].mxu0 %v2575
    %v3455 = vpop.f32.mrb[0].mxu0
    %v3456 = vadd.f32 %v2997, %v3455
    %v3457 = vpop.f32.mrb[0].mxu0
    %3458 = vmatprep.mubr.f32.mxu0 %v2579
    %3459 = vmatmul.mubr.f32.gmra.mrb[0].mxu0 %v2578
    %v3460 = vpop.f32.mrb[0].mxu0
    %v3461 = vadd.f32 %v2997, %v3460
    %v3462 = vpop.f32.mrb[0].mxu0
    %3463 = vmatprep.mubr.f32.mxu0 %v2582
    %3464 = vmatmul.mubr.f32.gmra.mrb[0].mxu0 %v2581
    %v3465 = vpop.f32.mrb[0].mxu0
    %v3466 = vadd.f32 %v2997, %v3465
    %v3467 = vpop.f32.mrb[0].mxu0
    %3468 = vmatprep.mubr.f32.mxu0 %v2585
    %3469 = vmatmul.mubr.f32.gmra.mrb[0].mxu0 %v2584
    %v3470 = vpop.f32.mrb[0].mxu0
    %v3471 = vadd.f32 %v2997, %v3470
    %v3472 = vpop.f32.mrb[0].mxu0
    %3473 = vmatprep.mubr.f32.mxu0 %v2588
    %3474 = vmatmul.mubr.f32.gmra.mrb[0].mxu0 %v2587
    %v3475 = vpop.f32.mrb[0].mxu0
    %v3476 = vadd.f32 %v2997, %v3475
    %v3477 = vpop.f32.mrb[0].mxu0
    %3478 = vmatprep.mubr.f32.mxu0 %v2591
    %3479 = vmatmul.mubr.f32.gmra.mrb[0].mxu0 %v2590
    %v3480 = vpop.f32.mrb[0].mxu0
    %v3481 = vadd.f32 %v2997, %v3480
    %v3482 = vpop.f32.mrb[0].mxu0
    %3483 = vmatprep.mubr.f32.mxu0 %v2594
    %3484 = vmatmul.mubr.f32.gmra.mrb[0].mxu0 %v2593
    %v3485 = vpop.f32.mrb[0].mxu0
    %v3486 = vadd.f32 %v2997, %v3485
    %v3487 = vpop.f32.mrb[0].mxu0
    %3488 = vmatprep.mubr.f32.mxu0 %v2597
    %3489 = vmatmul.mubr.f32.gmra.mrb[0].mxu0 %v2596
    %v3490 = vpop.f32.mrb[0].mxu0
    %v3491 = vadd.f32 %v2997, %v3490
    %v3492 = vpop.f32.mrb[0].mxu0
    %3493 = vmatprep.mubr.f32.mxu0 %v2600
    %3494 = vmatmul.mubr.f32.gmra.mrb[0].mxu0 %v2599
    %v3495 = vpop.f32.mrb[0].mxu0
    %v3496 = vadd.f32 %v2997, %v3495
    %v3497 = vpop.f32.mrb[0].mxu0
    %3498 = vmatprep.mubr.f32.mxu0 %v2603
    %3499 = vmatmul.mubr.f32.gmra.mrb[0].mxu0 %v2602
    %v3500 = vpop.f32.mrb[0].mxu0
    %v3501 = vadd.f32 %v2997, %v3500
    %v3502 = vpop.f32.mrb[0].mxu0
    %3503 = vmatprep.mubr.f32.mxu0 %v2606
    %3504 = vmatmul.mubr.f32.gmra.mrb[0].mxu0 %v2605
    %v3505 = vpop.f32.mrb[0].mxu0
    %v3506 = vadd.f32 %v2997, %v3505
    %v3507 = vpop.f32.mrb[0].mxu0
    %3508 = vmatprep.mubr.f32.mxu0 %v2609
    %3509 = vmatmul.mubr.f32.gmra.mrb[0].mxu0 %v2608
    %v3510 = vpop.f32.mrb[0].mxu0
    %v3511 = vadd.f32 %v2997, %v3510
    %v3512 = vpop.f32.mrb[0].mxu0
    %3513 = vmatprep.mubr.f32.mxu0 %v2612
    %3514 = vmatmul.mubr.f32.gmra.mrb[0].mxu0 %v2611
    %v3515 = vpop.f32.mrb[0].mxu0
    %v3516 = vadd.f32 %v2997, %v3515
    %v3517 = vpop.f32.mrb[0].mxu0
    %3518 = vmatprep.mubr.f32.mxu0 %v2615
    %3519 = vmatmul.mubr.f32.gmra.mrb[0].mxu0 %v2614
    %v3520 = vpop.f32.mrb[0].mxu0
    %v3521 = vadd.f32 %v2997, %v3520
    %v3522 = vpop.f32.mrb[0].mxu0
    %3523 = vmatprep.mubr.f32.mxu0 %v2618
    %3524 = vmatmul.mubr.f32.gmra.mrb[0].mxu0 %v2617
    %v3525 = vpop.f32.mrb[0].mxu0
    %v3526 = vadd.f32 %v2997, %v3525
    %v3527 = vpop.f32.mrb[0].mxu0
    %3528 = vmatprep.mubr.f32.mxu0 %v2621
    %3529 = vmatmul.mubr.f32.gmra.mrb[0].mxu0 %v2620
    %v3530 = vpop.f32.mrb[0].mxu0
    %v3531 = vadd.f32 %v2997, %v3530
    %v3532 = vpop.f32.mrb[0].mxu0
    %3533 = vmatprep.mubr.f32.mxu0 %v2624
    %3534 = vmatmul.mubr.f32.gmra.mrb[0].mxu0 %v2623
    %v3535 = vpop.f32.mrb[0].mxu0
    %v3536 = vadd.f32 %v2997, %v3535
    %v3537 = vpop.f32.mrb[0].mxu0
    %3538 = vmatprep.mubr.f32.mxu0 %v2627
    %3539 = vmatmul.mubr.f32.gmra.mrb[0].mxu0 %v2626
    %v3540 = vpop.f32.mrb[0].mxu0
    %v3541 = vadd.f32 %v2997, %v3540
    %v3542 = vpop.f32.mrb[0].mxu0
    %3543 = vmatprep.mubr.f32.mxu0 %v2630
    %3544 = vmatmul.mubr.f32.gmra.mrb[0].mxu0 %v2629
    %v3545 = vpop.f32.mrb[0].mxu0
    %v3546 = vadd.f32 %v2997, %v3545
    %v3547 = vpop.f32.mrb[0].mxu0
    %3548 = vmatprep.mubr.f32.mxu0 %v2633
    %3549 = vmatmul.mubr.f32.gmra.mrb[0].mxu0 %v2632
    %v3550 = vpop.f32.mrb[0].mxu0
    %v3551 = vadd.f32 %v2997, %v3550
    %v3552 = vpop.f32.mrb[0].mxu0
    %3553 = vmatprep.mubr.f32.mxu0 %v2636
    %3554 = vmatmul.mubr.f32.gmra.mrb[0].mxu0 %v2635
    %v3555 = vpop.f32.mrb[0].mxu0
    %v3556 = vadd.f32 %v2997, %v3555
    %v3557 = vpop.f32.mrb[0].mxu0
    %3558 = vmatprep.mubr.f32.mxu0 %v2639
    %3559 = vmatmul.mubr.f32.gmra.mrb[0].mxu0 %v2638
    %v3560 = vpop.f32.mrb[0].mxu0
    %v3561 = vadd.f32 %v2997, %v3560
    %v3562 = vpop.f32.mrb[0].mxu0
    %3563 = vmatprep.mubr.f32.mxu0 %v2642
    %3564 = vmatmul.mubr.f32.gmra.mrb[0].mxu0 %v2641
    %v3565 = vpop.f32.mrb[0].mxu0
    %v3566 = vadd.f32 %v2997, %v3565
    %v3567 = vpop.f32.mrb[0].mxu0
    %3568 = vmatprep.mubr.f32.mxu0 %v2645
    %3569 = vmatmul.mubr.f32.gmra.mrb[0].mxu0 %v2644
    %v3570 = vpop.f32.mrb[0].mxu0
    %v3571 = vadd.f32 %v2997, %v3570
    %v3572 = vpop.f32.mrb[0].mxu0
    %3573 = vmatprep.mubr.f32.mxu0 %v2648
    %3574 = vmatmul.mubr.f32.gmra.mrb[0].mxu0 %v2647
    %v3575 = vpop.f32.mrb[0].mxu0
    %v3576 = vadd.f32 %v2997, %v3575
    %v3577 = vpop.f32.mrb[0].mxu0
    %3578 = vmatprep.mubr.f32.mxu0 %v2651
    %3579 = vmatmul.mubr.f32.gmra.mrb[0].mxu0 %v2650
    %v3580 = vpop.f32.mrb[0].mxu0
    %v3581 = vadd.f32 %v2997, %v3580
    %v3582 = vpop.f32.mrb[0].mxu0
    %3583 = vmatprep.mubr.f32.mxu0 %v2654
    %3584 = vmatmul.mubr.f32.gmra.mrb[0].mxu0 %v2653
    %v3585 = vpop.f32.mrb[0].mxu0
    %v3586 = vadd.f32 %v2997, %v3585
    %v3587 = vpop.f32.mrb[0].mxu0
    %3588 = vmatprep.mubr.f32.mxu0 %v2657
    %3589 = vmatmul.mubr.f32.gmra.mrb[0].mxu0 %v2656
    %v3590 = vpop.f32.mrb[0].mxu0
    %v3591 = vadd.f32 %v2997, %v3590
    %v3592 = vpop.f32.mrb[0].mxu0
    %3593 = vmatprep.mubr.f32.mxu0 %v2660
    %3594 = vmatmul.mubr.f32.gmra.mrb[0].mxu0 %v2659
    %v3595 = vpop.f32.mrb[0].mxu0
    %v3596 = vadd.f32 %v2997, %v3595
    %v3597 = vpop.f32.mrb[0].mxu0
    %3598 = vmatprep.mubr.f32.mxu0 %v2663
    %3599 = vmatmul.mubr.f32.gmra.mrb[0].mxu0 %v2662
    %v3600 = vpop.f32.mrb[0].mxu0
    %v3601 = vadd.f32 %v2997, %v3600
    %v3602 = vpop.f32.mrb[0].mxu0
    %3603 = vmatprep.mubr.f32.mxu0 %v2666
    %3604 = vmatmul.mubr.f32.gmra.mrb[0].mxu0 %v2665
    %v3605 = vpop.f32.mrb[0].mxu0
    %v3606 = vadd.f32 %v2997, %v3605
    %v3607 = vpop.f32.mrb[0].mxu0
    %3608 = vmatprep.mubr.f32.mxu0 %v2669
    %3609 = vmatmul.mubr.f32.gmra.mrb[0].mxu0 %v2668
    %v3610 = vpop.f32.mrb[0].mxu0
    %v3611 = vadd.f32 %v2997, %v3610
    %v3612 = vpop.f32.mrb[0].mxu0
    %3613 = vmatprep.mubr.f32.mxu0 %v2672
    %3614 = vmatmul.mubr.f32.gmra.mrb[0].mxu0 %v2671
    %v3615 = vpop.f32.mrb[0].mxu0
    %v3616 = vadd.f32 %v2997, %v3615
    %v3617 = vpop.f32.mrb[0].mxu0
    %3618 = vmatprep.mubr.f32.mxu0 %v2675
    %3619 = vmatmul.mubr.f32.gmra.mrb[0].mxu0 %v2674
    %v3620 = vpop.f32.mrb[0].mxu0
    %v3621 = vadd.f32 %v2997, %v3620
    %v3622 = vpop.f32.mrb[0].mxu0
    %3623 = vmatprep.mubr.f32.mxu0 %v2678
    %3624 = vmatmul.mubr.f32.gmra.mrb[0].mxu0 %v2677
    %v3625 = vpop.f32.mrb[0].mxu0
    %v3626 = vadd.f32 %v2997, %v3625
    %v3627 = vpop.f32.mrb[0].mxu0
    %3628 = vmatprep.mubr.f32.mxu0 %v2681
    %3629 = vmatmul.mubr.f32.gmra.mrb[0].mxu0 %v2680
    %v3630 = vpop.f32.mrb[0].mxu0
    %v3631 = vadd.f32 %v2997, %v3630
    %v3632 = vpop.f32.mrb[0].mxu0
    %3633 = vmatprep.mubr.f32.mxu0 %v2684
    %3634 = vmatmul.mubr.f32.gmra.mrb[0].mxu0 %v2683
    %v3635 = vpop.f32.mrb[0].mxu0
    %v3636 = vadd.f32 %v2997, %v3635
    %v3637 = vpop.f32.mrb[0].mxu0
    %3638 = vmatprep.mubr.f32.mxu0 %v2687
    %3639 = vmatmul.mubr.f32.gmra.mrb[0].mxu0 %v2686
    %v3640 = vpop.f32.mrb[0].mxu0
    %v3641 = vadd.f32 %v2997, %v3640
    %v3642 = vpop.f32.mrb[0].mxu0
    %3643 = vmatprep.mubr.f32.mxu0 %v2690
    %3644 = vmatmul.mubr.f32.gmra.mrb[0].mxu0 %v2689
    %v3645 = vpop.f32.mrb[0].mxu0
    %v3646 = vadd.f32 %v2997, %v3645
    %v3647 = vpop.f32.mrb[0].mxu0
    %3648 = vmatprep.mubr.f32.mxu0 %v2693
    %3649 = vmatmul.mubr.f32.gmra.mrb[0].mxu0 %v2692
    %v3650 = vpop.f32.mrb[0].mxu0
    %v3651 = vadd.f32 %v2997, %v3650
    %v3652 = vpop.f32.mrb[0].mxu0
    %3653 = vmatprep.mubr.f32.mxu0 %v2696
    %3654 = vmatmul.mubr.f32.gmra.mrb[0].mxu0 %v2695
    %v3655 = vpop.f32.mrb[0].mxu0
    %v3656 = vadd.f32 %v2997, %v3655
    %v3657 = vpop.f32.mrb[0].mxu0
    %3658 = vmatprep.mubr.f32.mxu0 %v2699
    %3659 = vmatmul.mubr.f32.gmra.mrb[0].mxu0 %v2698
    %v3660 = vpop.f32.mrb[0].mxu0
    %v3661 = vadd.f32 %v2997, %v3660
    %v3662 = vpop.f32.mrb[0].mxu0
    %3663 = vmatprep.mubr.f32.mxu0 %v2702
    %3664 = vmatmul.mubr.f32.gmra.mrb[0].mxu0 %v2701
    %v3665 = vpop.f32.mrb[0].mxu0
    %v3666 = vadd.f32 %v2997, %v3665
    %v3667 = vpop.f32.mrb[0].mxu0
    %3668 = vmatprep.mubr.f32.mxu0 %v2705
    %3669 = vmatmul.mubr.f32.gmra.mrb[0].mxu0 %v2704
    %v3670 = vpop.f32.mrb[0].mxu0
    %v3671 = vadd.f32 %v2997, %v3670
    %v3672 = vpop.f32.mrb[0].mxu0
    %3673 = vmatprep.mubr.f32.mxu0 %v2708
    %3674 = vmatmul.mubr.f32.gmra.mrb[0].mxu0 %v2707
    %v3675 = vpop.f32.mrb[0].mxu0
    %v3676 = vadd.f32 %v2997, %v3675
    %v3677 = vpop.f32.mrb[0].mxu0
    %3678 = vmatprep.mubr.f32.mxu0 %v2711
    %3679 = vmatmul.mubr.f32.gmra.mrb[0].mxu0 %v2710
    %v3680 = vpop.f32.mrb[0].mxu0
    %v3681 = vadd.f32 %v2997, %v3680
    %v3682 = vpop.f32.mrb[0].mxu0
    %3683 = vmatprep.mubr.f32.mxu0 %v2714
    %3684 = vmatmul.mubr.f32.gmra.mrb[0].mxu0 %v2713
    %v3685 = vpop.f32.mrb[0].mxu0
    %v3686 = vadd.f32 %v2997, %v3685
    %v3687 = vpop.f32.mrb[0].mxu0
    %3688 = vmatprep.mubr.f32.mxu0 %v2717
    %3689 = vmatmul.mubr.f32.gmra.mrb[0].mxu0 %v2716
    %v3690 = vpop.f32.mrb[0].mxu0
    %v3691 = vadd.f32 %v2997, %v3690
    %v3692 = vpop.f32.mrb[0].mxu0
    %3693 = vmatprep.mubr.f32.mxu0 %v2720
    %3694 = vmatmul.mubr.f32.gmra.mrb[0].mxu0 %v2719
    %v3695 = vpop.f32.mrb[0].mxu0
    %v3696 = vadd.f32 %v2997, %v3695
    %v3697 = vpop.f32.mrb[0].mxu0
    %3698 = vmatprep.mubr.f32.mxu0 %v2723
    %3699 = vmatmul.mubr.f32.gmra.mrb[0].mxu0 %v2722
    %v3700 = vpop.f32.mrb[0].mxu0
    %v3701 = vadd.f32 %v2997, %v3700
    %v3702 = vpop.f32.mrb[0].mxu0
    %3703 = vmatprep.mubr.f32.mxu0 %v2726
    %3704 = vmatmul.mubr.f32.gmra.mrb[0].mxu0 %v2725
    %v3705 = vpop.f32.mrb[0].mxu0
    %v3706 = vadd.f32 %v2997, %v3705
    %v3707 = vpop.f32.mrb[0].mxu0
    %3708 = vmatprep.mubr.f32.mxu0 %v2729
    %3709 = vmatmul.mubr.f32.gmra.mrb[0].mxu0 %v2728
    %v3710 = vpop.f32.mrb[0].mxu0
    %v3711 = vadd.f32 %v2997, %v3710
    %v3712 = vpop.f32.mrb[0].mxu0
    %3713 = vmatprep.mubr.f32.mxu0 %v2732
    %3714 = vmatmul.mubr.f32.gmra.mrb[0].mxu0 %v2731
    %v3715 = vpop.f32.mrb[0].mxu0
    %v3716 = vadd.f32 %v2997, %v3715
    %v3717 = vpop.f32.mrb[0].mxu0
    %3718 = vmatprep.mubr.f32.mxu0 %v2735
    %3719 = vmatmul.mubr.f32.gmra.mrb[0].mxu0 %v2734
    %v3720 = vpop.f32.mrb[0].mxu0
    %v3721 = vadd.f32 %v2997, %v3720
    %v3722 = vpop.f32.mrb[0].mxu0
    %3723 = vmatprep.mubr.f32.mxu0 %v2738
    %3724 = vmatmul.mubr.f32.gmra.mrb[0].mxu0 %v2737
    %v3725 = vpop.f32.mrb[0].mxu0
    %v3726 = vadd.f32 %v2997, %v3725
    %v3727 = vpop.f32.mrb[0].mxu0
    %3728 = vmatprep.mubr.f32.mxu0 %v2741
    %3729 = vmatmul.mubr.f32.gmra.mrb[0].mxu0 %v2740
    %v3730 = vpop.f32.mrb[0].mxu0
    %v3731 = vadd.f32 %v2997, %v3730
    %v3732 = vpop.f32.mrb[0].mxu0
    %3733 = vmatprep.mubr.f32.mxu0 %v2744
    %3734 = vmatmul.mubr.f32.gmra.mrb[0].mxu0 %v2743
    %v3735 = vpop.f32.mrb[0].mxu0
    %v3736 = vadd.f32 %v2997, %v3735
    %v3737 = vpop.f32.mrb[0].mxu0
    %3738 = vmatprep.mubr.f32.mxu0 %v2747
    %3739 = vmatmul.mubr.f32.gmra.mrb[0].mxu0 %v2746
    %v3740 = vpop.f32.mrb[0].mxu0
    %v3741 = vadd.f32 %v2997, %v3740
    %v3742 = vpop.f32.mrb[0].mxu0
    %3743 = vmatprep.mubr.f32.mxu0 %v2750
    %3744 = vmatmul.mubr.f32.gmra.mrb[0].mxu0 %v2749
    %v3745 = vpop.f32.mrb[0].mxu0
    %v3746 = vadd.f32 %v2997, %v3745
    %v3747 = vpop.f32.mrb[0].mxu0
    %3748 = vmatprep.mubr.f32.mxu0 %v2753
    %3749 = vmatmul.mubr.f32.gmra.mrb[0].mxu0 %v2752
    %v3750 = vpop.f32.mrb[0].mxu0
    %v3751 = vadd.f32 %v2997, %v3750
    %v3752 = vpop.f32.mrb[0].mxu0
    %3753 = vmatprep.mubr.f32.mxu0 %v2756
    %3754 = vmatmul.mubr.f32.gmra.mrb[0].mxu0 %v2755
    %v3755 = vpop.f32.mrb[0].mxu0
    %v3756 = vadd.f32 %v2997, %v3755
    %v3757 = vpop.f32.mrb[0].mxu0
    %3758 = vmatprep.mubr.f32.mxu0 %v2759
    %3759 = vmatmul.mubr.f32.gmra.mrb[0].mxu0 %v2758
    %v3760 = vpop.f32.mrb[0].mxu0
    %v3761 = vadd.f32 %v2997, %v3760
    %v3762 = vpop.f32.mrb[0].mxu0
    %3763 = vmatprep.mubr.f32.mxu0 %v2762
    %3764 = vmatmul.mubr.f32.gmra.mrb[0].mxu0 %v2761
    %v3765 = vpop.f32.mrb[0].mxu0
    %v3766 = vadd.f32 %v2997, %v3765
    %v3767 = vpop.f32.mrb[0].mxu0
    %3768 = vmatprep.mubr.f32.mxu0 %v2765
    %3769 = vmatmul.mubr.f32.gmra.mrb[0].mxu0 %v2764
    %v3770 = vpop.f32.mrb[0].mxu0
    %v3771 = vadd.f32 %v2997, %v3770
    %v3772 = vpop.f32.mrb[0].mxu0
    %3773 = vmatprep.mubr.f32.mxu0 %v2768
    %3774 = vmatmul.mubr.f32.gmra.mrb[0].mxu0 %v2767
    %v3775 = vpop.f32.mrb[0].mxu0
    %v3776 = vadd.f32 %v2997, %v3775
    %v3777 = vpop.f32.mrb[0].mxu0
    %3778 = vmatprep.mubr.f32.mxu0 %v2771
    %3779 = vmatmul.mubr.f32.gmra.mrb[0].mxu0 %v2770
    %v3780 = vpop.f32.mrb[0].mxu0
    %v3781 = vadd.f32 %v2997, %v3780
    %v3782 = vpop.f32.mrb[0].mxu0
    %3783 = vmatprep.mubr.f32.mxu0 %v2774
    %3784 = vmatmul.mubr.f32.gmra.mrb[0].mxu0 %v2773
    %v3785 = vpop.f32.mrb[0].mxu0
    %v3786 = vadd.f32 %v2997, %v3785
    %v3787 = vpop.f32.mrb[0].mxu0
    %3788 = vmatprep.mubr.f32.mxu0 %v2777
    %3789 = vmatmul.mubr.f32.gmra.mrb[0].mxu0 %v2776
    %v3790 = vpop.f32.mrb[0].mxu0
    %v3791 = vadd.f32 %v2997, %v3790
    %v3792 = vpop.f32.mrb[0].mxu0
    %3793 = vmatprep.mubr.f32.mxu0 %v2780
    %3794 = vmatmul.mubr.f32.gmra.mrb[0].mxu0 %v2779
    %v3795 = vpop.f32.mrb[0].mxu0
    %v3796 = vadd.f32 %v2997, %v3795
    %v3797 = vpop.f32.mrb[0].mxu0
    %3798 = vmatprep.mubr.f32.mxu0 %v2783
    %3799 = vmatmul.mubr.f32.gmra.mrb[0].mxu0 %v2782
    %v3800 = vpop.f32.mrb[0].mxu0
    %v3801 = vadd.f32 %v2997, %v3800
    %v3802 = vpop.f32.mrb[0].mxu0
    %3803 = vmatprep.mubr.f32.mxu0 %v2786
    %3804 = vmatmul.mubr.f32.gmra.mrb[0].mxu0 %v2785
    %v3805 = vpop.f32.mrb[0].mxu0
    %v3806 = vadd.f32 %v2997, %v3805
    %v3807 = vpop.f32.mrb[0].mxu0
    %3808 = vmatprep.mubr.f32.mxu0 %v2789
    %3809 = vmatmul.mubr.f32.gmra.mrb[0].mxu0 %v2788
    %v3810 = vpop.f32.mrb[0].mxu0
    %v3811 = vadd.f32 %v2997, %v3810
    %v3812 = vpop.f32.mrb[0].mxu0
    %3813 = vmatprep.mubr.f32.mxu0 %v2792
    %3814 = vmatmul.mubr.f32.gmra.mrb[0].mxu0 %v2791
    %v3815 = vpop.f32.mrb[0].mxu0
    %v3816 = vadd.f32 %v2997, %v3815
    %v3817 = vpop.f32.mrb[0].mxu0
    %3818 = vmatprep.mubr.f32.mxu0 %v2795
    %3819 = vmatmul.mubr.f32.gmra.mrb[0].mxu0 %v2794
    %v3820 = vpop.f32.mrb[0].mxu0
    %v3821 = vadd.f32 %v2997, %v3820
    %v3822 = vpop.f32.mrb[0].mxu0
    %3823 = vmatprep.mubr.f32.mxu0 %v2798
    %3824 = vmatmul.mubr.f32.gmra.mrb[0].mxu0 %v2797
    %v3825 = vpop.f32.mrb[0].mxu0
    %v3826 = vadd.f32 %v2997, %v3825
    %v3827 = vpop.f32.mrb[0].mxu0
    %3828 = vmatprep.mubr.f32.mxu0 %v2801
    %3829 = vmatmul.mubr.f32.gmra.mrb[0].mxu0 %v2800
    %v3830 = vpop.f32.mrb[0].mxu0
    %v3831 = vadd.f32 %v2997, %v3830
    %v3832 = vpop.f32.mrb[0].mxu0
    %3833 = vmatprep.mubr.f32.mxu0 %v2804
    %3834 = vmatmul.mubr.f32.gmra.mrb[0].mxu0 %v2803
    %v3835 = vpop.f32.mrb[0].mxu0
    %v3836 = vadd.f32 %v2997, %v3835
    %v3837 = vpop.f32.mrb[0].mxu0
    %3838 = vmatprep.mubr.f32.mxu0 %v2807
    %3839 = vmatmul.mubr.f32.gmra.mrb[0].mxu0 %v2806
    %v3840 = vpop.f32.mrb[0].mxu0
    %v3841 = vadd.f32 %v2997, %v3840
    %v3842 = vpop.f32.mrb[0].mxu0
    %3843 = vmatprep.mubr.f32.mxu0 %v2810
    %3844 = vmatmul.mubr.f32.gmra.mrb[0].mxu0 %v2809
    %v3845 = vpop.f32.mrb[0].mxu0
    %v3846 = vadd.f32 %v2997, %v3845
    %v3847 = vpop.f32.mrb[0].mxu0
    %3848 = vmatprep.mubr.f32.mxu0 %v2813
    %3849 = vmatmul.mubr.f32.gmra.mrb[0].mxu0 %v2812
    %v3850 = vpop.f32.mrb[0].mxu0
    %v3851 = vadd.f32 %v2997, %v3850
    %v3852 = vpop.f32.mrb[0].mxu0
    %3853 = vmatprep.mubr.f32.mxu0 %v2816
    %3854 = vmatmul.mubr.f32.gmra.mrb[0].mxu0 %v2815
    %v3855 = vpop.f32.mrb[0].mxu0
    %v3856 = vadd.f32 %v2997, %v3855
    %v3857 = vpop.f32.mrb[0].mxu0
    %3858 = vmatprep.mubr.f32.mxu0 %v2819
    %3859 = vmatmul.mubr.f32.gmra.mrb[0].mxu0 %v2818
    %v3860 = vpop.f32.mrb[0].mxu0
    %v3861 = vadd.f32 %v2997, %v3860
    %v3862 = vpop.f32.mrb[0].mxu0
    %3863 = vmatprep.mubr.f32.mxu0 %v2822
    %3864 = vmatmul.mubr.f32.gmra.mrb[0].mxu0 %v2821
    %v3865 = vpop.f32.mrb[0].mxu0
    %v3866 = vadd.f32 %v2997, %v3865
    %v3867 = vpop.f32.mrb[0].mxu0
    %3868 = vmatprep.mubr.f32.mxu0 %v2825
    %3869 = vmatmul.mubr.f32.gmra.mrb[0].mxu0 %v2824
    %v3870 = vpop.f32.mrb[0].mxu0
    %v3871 = vadd.f32 %v2997, %v3870
    %v3872 = vpop.f32.mrb[0].mxu0
    %3873 = vmatprep.mubr.f32.mxu0 %v2828
    %3874 = vmatmul.mubr.f32.gmra.mrb[0].mxu0 %v2827
    %v3875 = vpop.f32.mrb[0].mxu0
    %v3876 = vadd.f32 %v2997, %v3875
    %v3877 = vpop.f32.mrb[0].mxu0
    %3878 = vmatprep.mubr.f32.mxu0 %v2831
    %3879 = vmatmul.mubr.f32.gmra.mrb[0].mxu0 %v2830
    %v3880 = vpop.f32.mrb[0].mxu0
    %v3881 = vadd.f32 %v2997, %v3880
    %v3882 = vpop.f32.mrb[0].mxu0
    %3883 = vmatprep.mubr.f32.mxu0 %v2834
    %3884 = vmatmul.mubr.f32.gmra.mrb[0].mxu0 %v2833
    %v3885 = vpop.f32.mrb[0].mxu0
    %v3886 = vadd.f32 %v2997, %v3885
    %v3887 = vpop.f32.mrb[0].mxu0
    %3888 = vmatprep.mubr.f32.mxu0 %v2837
    %3889 = vmatmul.mubr.f32.gmra.mrb[0].mxu0 %v2836
    %v3890 = vpop.f32.mrb[0].mxu0
    %v3891 = vadd.f32 %v2997, %v3890
    %v3892 = vpop.f32.mrb[0].mxu0
    %3893 = vmatprep.mubr.f32.mxu0 %v2840
    %3894 = vmatmul.mubr.f32.gmra.mrb[0].mxu0 %v2839
    %v3895 = vpop.f32.mrb[0].mxu0
    %v3896 = vadd.f32 %v2997, %v3895
    %v3897 = vpop.f32.mrb[0].mxu0
    %3898 = vmatprep.mubr.f32.mxu0 %v2843
    %3899 = vmatmul.mubr.f32.gmra.mrb[0].mxu0 %v2842
    %v3900 = vpop.f32.mrb[0].mxu0
    %v3901 = vadd.f32 %v2997, %v3900
    %v3902 = vpop.f32.mrb[0].mxu0
    %3903 = vmatprep.mubr.f32.mxu0 %v2846
    %3904 = vmatmul.mubr.f32.gmra.mrb[0].mxu0 %v2845
    %v3905 = vpop.f32.mrb[0].mxu0
    %v3906 = vadd.f32 %v2997, %v3905
    %v3907 = vpop.f32.mrb[0].mxu0
    %3908 = vmatprep.mubr.f32.mxu0 %v2849
    %3909 = vmatmul.mubr.f32.gmra.mrb[0].mxu0 %v2848
    %v3910 = vpop.f32.mrb[0].mxu0
    %v3911 = vadd.f32 %v2997, %v3910
    %v3912 = vpop.f32.mrb[0].mxu0
    %3913 = vmatprep.mubr.f32.mxu0 %v2852
    %3914 = vmatmul.mubr.f32.gmra.mrb[0].mxu0 %v2851
    %v3915 = vpop.f32.mrb[0].mxu0
    %v3916 = vadd.f32 %v2997, %v3915
    %v3917 = vpop.f32.mrb[0].mxu0
    %3918 = vmatprep.mubr.f32.mxu0 %v2855
    %3919 = vmatmul.mubr.f32.gmra.mrb[0].mxu0 %v2854
    %v3920 = vpop.f32.mrb[0].mxu0
    %v3921 = vadd.f32 %v2997, %v3920
    %v3922 = vpop.f32.mrb[0].mxu0
    %3923 = vmatprep.mubr.f32.mxu0 %v2858
    %3924 = vmatmul.mubr.f32.gmra.mrb[0].mxu0 %v2857
    %v3925 = vpop.f32.mrb[0].mxu0
    %v3926 = vadd.f32 %v2997, %v3925
    %v3927 = vpop.f32.mrb[0].mxu0
    %3928 = vmatprep.mubr.f32.mxu0 %v2861
    %3929 = vmatmul.mubr.f32.gmra.mrb[0].mxu0 %v2860
    %v3930 = vpop.f32.mrb[0].mxu0
    %v3931 = vadd.f32 %v2997, %v3930
    %v3932 = vpop.f32.mrb[0].mxu0
    %3933 = vmatprep.mubr.f32.mxu0 %v2864
    %3934 = vmatmul.mubr.f32.gmra.mrb[0].mxu0 %v2863
    %v3935 = vpop.f32.mrb[0].mxu0
    %v3936 = vadd.f32 %v2997, %v3935
    %v3937 = vpop.f32.mrb[0].mxu0
    %3938 = vmatprep.mubr.f32.mxu0 %v2867
    %3939 = vmatmul.mubr.f32.gmra.mrb[0].mxu0 %v2866
    %v3940 = vpop.f32.mrb[0].mxu0
    %v3941 = vadd.f32 %v2997, %v3940
    %v3942 = vpop.f32.mrb[0].mxu0
    %3943 = vmatprep.mubr.f32.mxu0 %v2870
    %3944 = vmatmul.mubr.f32.gmra.mrb[0].mxu0 %v2869
    %v3945 = vpop.f32.mrb[0].mxu0
    %v3946 = vadd.f32 %v2997, %v3945
    %v3947 = vpop.f32.mrb[0].mxu0
    %3948 = vmatprep.mubr.f32.mxu0 %v2873
    %3949 = vmatmul.mubr.f32.gmra.mrb[0].mxu0 %v2872
    %v3950 = vpop.f32.mrb[0].mxu0
    %v3951 = vadd.f32 %v2997, %v3950
    %v3952 = vpop.f32.mrb[0].mxu0
    %3953 = vmatprep.mubr.f32.mxu0 %v2876
    %3954 = vmatmul.mubr.f32.gmra.mrb[0].mxu0 %v2875
    %v3955 = vpop.f32.mrb[0].mxu0
    %v3956 = vadd.f32 %v2997, %v3955
    %v3957 = vpop.f32.mrb[0].mxu0
    %3958 = vmatprep.mubr.f32.mxu0 %v2879
    %3959 = vmatmul.mubr.f32.gmra.mrb[0].mxu0 %v2878
    %v3960 = vpop.f32.mrb[0].mxu0
    %v3961 = vadd.f32 %v2997, %v3960
    %v3962 = vpop.f32.mrb[0].mxu0
    %3963 = vmatprep.mubr.f32.mxu0 %v2882
    %3964 = vmatmul.mubr.f32.gmra.mrb[0].mxu0 %v2881
    %v3965 = vpop.f32.mrb[0].mxu0
    %v3966 = vadd.f32 %v2997, %v3965
    %v3967 = vpop.f32.mrb[0].mxu0
    %3968 = vmatprep.mubr.f32.mxu0 %v2885
    %3969 = vmatmul.mubr.f32.gmra.mrb[0].mxu0 %v2884
    %v3970 = vpop.f32.mrb[0].mxu0
    %v3971 = vadd.f32 %v2997, %v3970
    %v3972 = vpop.f32.mrb[0].mxu0
    %3973 = vmatprep.mubr.f32.mxu0 %v2888
    %3974 = vmatmul.mubr.f32.gmra.mrb[0].mxu0 %v2887
    %v3975 = vpop.f32.mrb[0].mxu0
    %v3976 = vadd.f32 %v2997, %v3975
    %v3977 = vpop.f32.mrb[0].mxu0
    %3978 = vmatprep.mubr.f32.mxu0 %v2891
    %3979 = vmatmul.mubr.f32.gmra.mrb[0].mxu0 %v2890
    %v3980 = vpop.f32.mrb[0].mxu0
    %v3981 = vadd.f32 %v2997, %v3980
    %v3982 = vpop.f32.mrb[0].mxu0
    %3983 = vmatprep.mubr.f32.mxu0 %v2894
    %3984 = vmatmul.mubr.f32.gmra.mrb[0].mxu0 %v2893
    %v3985 = vpop.f32.mrb[0].mxu0
    %v3986 = vadd.f32 %v2997, %v3985
    %v3987 = vpop.f32.mrb[0].mxu0
    %3988 = vmatprep.mubr.f32.mxu0 %v2897
    %3989 = vmatmul.mubr.f32.gmra.mrb[0].mxu0 %v2896
    %v3990 = vpop.f32.mrb[0].mxu0
    %v3991 = vadd.f32 %v2997, %v3990
    %v3992 = vpop.f32.mrb[0].mxu0
    %3993 = vmatprep.mubr.f32.mxu0 %v2900
    %3994 = vmatmul.mubr.f32.gmra.mrb[0].mxu0 %v2899
    %v3995 = vpop.f32.mrb[0].mxu0
    %v3996 = vadd.f32 %v2997, %v3995
    %v3997 = vpop.f32.mrb[0].mxu0
    %3998 = vmatprep.mubr.f32.mxu0 %v2903
    %3999 = vmatmul.mubr.f32.gmra.mrb[0].mxu0 %v2902
    %v4000 = vpop.f32.mrb[0].mxu0
    %v4001 = vadd.f32 %v2997, %v4000
    %v4002 = vpop.f32.mrb[0].mxu0
    %4003 = vmatprep.mubr.f32.mxu0 %v2906
    %4004 = vmatmul.mubr.f32.gmra.mrb[0].mxu0 %v2905
    %v4005 = vpop.f32.mrb[0].mxu0
    %v4006 = vadd.f32 %v2997, %v4005
    %v4007 = vpop.f32.mrb[0].mxu0
    %4008 = vmatprep.mubr.f32.mxu0 %v2909
    %4009 = vmatmul.mubr.f32.gmra.mrb[0].mxu0 %v2908
    %v4010 = vpop.f32.mrb[0].mxu0
    %v4011 = vadd.f32 %v2997, %v4010
    %v4012 = vpop.f32.mrb[0].mxu0
    %4013 = vmatprep.mubr.f32.mxu0 %v2912
    %4014 = vmatmul.mubr.f32.gmra.mrb[0].mxu0 %v2911
    %v4015 = vpop.f32.mrb[0].mxu0
    %v4016 = vadd.f32 %v2997, %v4015
    %v4017 = vpop.f32.mrb[0].mxu0
    %4018 = vmatprep.mubr.f32.mxu0 %v2915
    %4019 = vmatmul.mubr.f32.gmra.mrb[0].mxu0 %v2914
    %v4020 = vpop.f32.mrb[0].mxu0
    %v4021 = vadd.f32 %v2997, %v4020
    %v4022 = vpop.f32.mrb[0].mxu0
    %4023 = vmatprep.mubr.f32.mxu0 %v2918
    %4024 = vmatmul.mubr.f32.gmra.mrb[0].mxu0 %v2917
    %v4025 = vpop.f32.mrb[0].mxu0
    %v4026 = vadd.f32 %v2997, %v4025
    %v4027 = vpop.f32.mrb[0].mxu0
    %4028 = vmatprep.mubr.f32.mxu0 %v2921
    %4029 = vmatmul.mubr.f32.gmra.mrb[0].mxu0 %v2920
    %v4030 = vpop.f32.mrb[0].mxu0
    %v4031 = vadd.f32 %v2997, %v4030
    %v4032 = vpop.f32.mrb[0].mxu0
    %4033 = vmatprep.mubr.f32.mxu0 %v2924
    %4034 = vmatmul.mubr.f32.gmra.mrb[0].mxu0 %v2923
    %v4035 = vpop.f32.mrb[0].mxu0
    %v4036 = vadd.f32 %v2997, %v4035
    %v4037 = vpop.f32.mrb[0].mxu0
    %4038 = vmatprep.mubr.f32.mxu0 %v2927
    %4039 = vmatmul.mubr.f32.gmra.mrb[0].mxu0 %v2926
    %v4040 = vpop.f32.mrb[0].mxu0
    %v4041 = vadd.f32 %v2997, %v4040
    %v4042 = vpop.f32.mrb[0].mxu0
    %4043 = vmatprep.mubr.f32.mxu0 %v2930
    %4044 = vmatmul.mubr.f32.gmra.mrb[0].mxu0 %v2929
    %v4045 = vpop.f32.mrb[0].mxu0
    %v4046 = vadd.f32 %v2997, %v4045
    %v4047 = vpop.f32.mrb[0].mxu0
    %4048 = vmatprep.mubr.f32.mxu0 %v2933
    %4049 = vmatmul.mubr.f32.gmra.mrb[0].mxu0 %v2932
    %v4050 = vpop.f32.mrb[0].mxu0
    %v4051 = vadd.f32 %v2997, %v4050
    %v4052 = vpop.f32.mrb[0].mxu0
    %4053 = vmatprep.mubr.f32.mxu0 %v2936
    %4054 = vmatmul.mubr.f32.gmra.mrb[0].mxu0 %v2935
    %v4055 = vpop.f32.mrb[0].mxu0
    %v4056 = vadd.f32 %v2997, %v4055
    %v4057 = vpop.f32.mrb[0].mxu0
    %4058 = vmatprep.mubr.f32.mxu0 %v2939
    %4059 = vmatmul.mubr.f32.gmra.mrb[0].mxu0 %v2938
    %v4060 = vpop.f32.mrb[0].mxu0
    %v4061 = vadd.f32 %v2997, %v4060
    %v4062 = vpop.f32.mrb[0].mxu0
    %4063 = vmatprep.mubr.f32.mxu0 %v2942
    %4064 = vmatmul.mubr.f32.gmra.mrb[0].mxu0 %v2941
    %v4065 = vpop.f32.mrb[0].mxu0
    %v4066 = vadd.f32 %v2997, %v4065
    %v4067 = vpop.f32.mrb[0].mxu0
    %4068 = vmatprep.mubr.f32.mxu0 %v2945
    %4069 = vmatmul.mubr.f32.gmra.mrb[0].mxu0 %v2944
    %v4070 = vpop.f32.mrb[0].mxu0
    %v4071 = vadd.f32 %v2997, %v4070
    %v4072 = vpop.f32.mrb[0].mxu0
    %4073 = vmatprep.mubr.f32.mxu0 %v2948
    %4074 = vmatmul.mubr.f32.gmra.mrb[0].mxu0 %v2947
    %v4075 = vpop.f32.mrb[0].mxu0
    %v4076 = vadd.f32 %v2997, %v4075
    %v4077 = vpop.f32.mrb[0].mxu0
    %4078 = vmatprep.mubr.f32.mxu0 %v2951
    %4079 = vmatmul.mubr.f32.gmra.mrb[0].mxu0 %v2950
    %v4080 = vpop.f32.mrb[0].mxu0
    %v4081 = vadd.f32 %v2997, %v4080
    %v4082 = vpop.f32.mrb[0].mxu0
    %4083 = vmatprep.mubr.f32.mxu0 %v2954
    %4084 = vmatmul.mubr.f32.gmra.mrb[0].mxu0 %v2953
    %v4085 = vpop.f32.mrb[0].mxu0
    %v4086 = vadd.f32 %v2997, %v4085
    %v4087 = vpop.f32.mrb[0].mxu0
    %4088 = vdwg.mxu0
    %4089 = vmatprep.subr.mxu0 0.0
    %4090 = vmatpush1.msra.mxu0 %v2988
    %4091 = vmatprep.subr.mxu0 0.0
    %4092 = vmatpush1.msra.mxu0 %v2989
    %4093 = vmatprep.subr.mxu0 0.0
    %4094 = vmatpush1.msra.mxu0 %v2990
    %4095 = vmatprep.subr.mxu0 0.0
    %4096 = vmatpush1.msra.mxu0 %v2991
    %4097 = vmatprep.subr.mxu0 0.0
    %4098 = vmatpush1.msra.mxu0 0.0
    %4099 = vmatprep.subr.mxu0 0.0
    %4100 = vmatpush1.msra.mxu0 0.0
    %4101 = vmatprep.subr.mxu0 0.0
    %4102 = vmatpush1.msra.mxu0 0.0
    %4103 = vmatprep.subr.mxu0 0.0
    %4104 = vmatpush1.msra.mxu0 0.0
    %4105 = vmatprep.subr.mxu0 0.0
    %4106 = vmatpush1.msra.mxu0 0.0
    %4107 = vmatprep.subr.mxu0 0.0
    %4108 = vmatpush1.msra.mxu0 0.0
    %4109 = vmatprep.subr.mxu0 0.0
    %4110 = vmatpush1.msra.mxu0 0.0
    %4111 = vmatprep.subr.mxu0 0.0
    %4112 = vmatpush1.msra.mxu0 0.0
    %4113 = vmatprep.subr.mxu0 0.0
    %4114 = vmatpush1.msra.mxu0 0.0
    %4115 = vmatprep.subr.mxu0 0.0
    %4116 = vmatpush1.msra.mxu0 0.0
    %4117 = vmatprep.subr.mxu0 0.0
    %4118 = vmatpush1.msra.mxu0 0.0
    %4119 = vmatprep.subr.mxu0 0.0
    %4120 = vmatpush1.msra.mxu0 0.0
    %4121 = vmatprep.subr.mxu0 0.0
    %4122 = vmatpush1.msra.mxu0 0.0
    %4123 = vmatprep.subr.mxu0 0.0
    %4124 = vmatpush1.msra.mxu0 0.0
    %4125 = vmatprep.subr.mxu0 0.0
    %4126 = vmatpush1.msra.mxu0 0.0
    %4127 = vmatprep.subr.mxu0 0.0
    %4128 = vmatpush1.msra.mxu0 0.0
    %4129 = vmatprep.subr.mxu0 0.0
    %4130 = vmatpush1.msra.mxu0 0.0
    %4131 = vmatprep.subr.mxu0 0.0
    %4132 = vmatpush1.msra.mxu0 0.0
    %4133 = vmatprep.subr.mxu0 0.0
    %4134 = vmatpush1.msra.mxu0 0.0
    %4135 = vmatprep.subr.mxu0 0.0
    %4136 = vmatpush1.msra.mxu0 0.0
    %4137 = vmatprep.subr.mxu0 0.0
    %4138 = vmatpush1.msra.mxu0 0.0
    %4139 = vmatprep.subr.mxu0 0.0
    %4140 = vmatpush1.msra.mxu0 0.0
    %4141 = vmatprep.subr.mxu0 0.0
    %4142 = vmatpush1.msra.mxu0 0.0
    %4143 = vmatprep.subr.mxu0 0.0
    %4144 = vmatpush1.msra.mxu0 0.0
    %4145 = vmatprep.subr.mxu0 0.0
    %4146 = vmatpush1.msra.mxu0 0.0
    %4147 = vmatprep.subr.mxu0 0.0
    %4148 = vmatpush1.msra.mxu0 0.0
    %4149 = vmatprep.subr.mxu0 0.0
    %4150 = vmatpush1.msra.mxu0 0.0
    %4151 = vmatprep.subr.mxu0 0.0
    %4152 = vmatpush1.msra.mxu0 0.0
    %4153 = vmatprep.mubr.f32.mxu0 0.0
    %4154 = vmatmul.mubr.f32.gmra.mrb[0].mxu0 %v3001
    %v4155 = vpop.f32.mrb[0].mxu0
    %v4156 = vadd.f32 %v3451, %v4155
    %v4157 = vpop.f32.mrb[0].mxu0
    %4158 = vmatprep.mubr.f32.mxu0 0.0
    %4159 = vmatmul.mubr.f32.gmra.mrb[0].mxu0 %v3004
    %v4160 = vpop.f32.mrb[0].mxu0
    %v4161 = vadd.f32 %v3456, %v4160
    %v4162 = vpop.f32.mrb[0].mxu0
    %4163 = vmatprep.mubr.f32.mxu0 0.0
    %4164 = vmatmul.mubr.f32.gmra.mrb[0].mxu0 %v3007
    %v4165 = vpop.f32.mrb[0].mxu0
    %v4166 = vadd.f32 %v3461, %v4165
    %v4167 = vpop.f32.mrb[0].mxu0
    %4168 = vmatprep.mubr.f32.mxu0 0.0
    %4169 = vmatmul.mubr.f32.gmra.mrb[0].mxu0 %v3010
    %v4170 = vpop.f32.mrb[0].mxu0
    %v4171 = vadd.f32 %v3466, %v4170
    %v4172 = vpop.f32.mrb[0].mxu0
    %4173 = vmatprep.mubr.f32.mxu0 0.0
    %4174 = vmatmul.mubr.f32.gmra.mrb[0].mxu0 %v3013
    %v4175 = vpop.f32.mrb[0].mxu0
    %v4176 = vadd.f32 %v3471, %v4175
    %v4177 = vpop.f32.mrb[0].mxu0
    %4178 = vmatprep.mubr.f32.mxu0 0.0
    %4179 = vmatmul.mubr.f32.gmra.mrb[0].mxu0 %v3016
    %v4180 = vpop.f32.mrb[0].mxu0
    %v4181 = vadd.f32 %v3476, %v4180
    %v4182 = vpop.f32.mrb[0].mxu0
    %4183 = vmatprep.mubr.f32.mxu0 0.0
    %4184 = vmatmul.mubr.f32.gmra.mrb[0].mxu0 %v3019
    %v4185 = vpop.f32.mrb[0].mxu0
    %v4186 = vadd.f32 %v3481, %v4185
    %v4187 = vpop.f32.mrb[0].mxu0
    %4188 = vmatprep.mubr.f32.mxu0 0.0
    %4189 = vmatmul.mubr.f32.gmra.mrb[0].mxu0 %v3022
    %v4190 = vpop.f32.mrb[0].mxu0
    %v4191 = vadd.f32 %v3486, %v4190
    %v4192 = vpop.f32.mrb[0].mxu0
    %4193 = vmatprep.mubr.f32.mxu0 0.0
    %4194 = vmatmul.mubr.f32.gmra.mrb[0].mxu0 %v3025
    %v4195 = vpop.f32.mrb[0].mxu0
    %v4196 = vadd.f32 %v3491, %v4195
    %v4197 = vpop.f32.mrb[0].mxu0
    %4198 = vmatprep.mubr.f32.mxu0 0.0
    %4199 = vmatmul.mubr.f32.gmra.mrb[0].mxu0 %v3028
    %v4200 = vpop.f32.mrb[0].mxu0
    %v4201 = vadd.f32 %v3496, %v4200
    %v4202 = vpop.f32.mrb[0].mxu0
    %4203 = vmatprep.mubr.f32.mxu0 0.0
    %4204 = vmatmul.mubr.f32.gmra.mrb[0].mxu0 %v3031
    %v4205 = vpop.f32.mrb[0].mxu0
    %v4206 = vadd.f32 %v3501, %v4205
    %v4207 = vpop.f32.mrb[0].mxu0
    %4208 = vmatprep.mubr.f32.mxu0 0.0
    %4209 = vmatmul.mubr.f32.gmra.mrb[0].mxu0 %v3034
    %v4210 = vpop.f32.mrb[0].mxu0
    %v4211 = vadd.f32 %v3506, %v4210
    %v4212 = vpop.f32.mrb[0].mxu0
    %4213 = vmatprep.mubr.f32.mxu0 0.0
    %4214 = vmatmul.mubr.f32.gmra.mrb[0].mxu0 %v3037
    %v4215 = vpop.f32.mrb[0].mxu0
    %v4216 = vadd.f32 %v3511, %v4215
    %v4217 = vpop.f32.mrb[0].mxu0
    %4218 = vmatprep.mubr.f32.mxu0 0.0
    %4219 = vmatmul.mubr.f32.gmra.mrb[0].mxu0 %v3040
    %v4220 = vpop.f32.mrb[0].mxu0
    %v4221 = vadd.f32 %v3516, %v4220
    %v4222 = vpop.f32.mrb[0].mxu0
    %4223 = vmatprep.mubr.f32.mxu0 0.0
    %4224 = vmatmul.mubr.f32.gmra.mrb[0].mxu0 %v3043
    %v4225 = vpop.f32.mrb[0].mxu0
    %v4226 = vadd.f32 %v3521, %v4225
    %v4227 = vpop.f32.mrb[0].mxu0
    %4228 = vmatprep.mubr.f32.mxu0 0.0
    %4229 = vmatmul.mubr.f32.gmra.mrb[0].mxu0 %v3046
    %v4230 = vpop.f32.mrb[0].mxu0
    %v4231 = vadd.f32 %v3526, %v4230
    %v4232 = vpop.f32.mrb[0].mxu0
    %4233 = vmatprep.mubr.f32.mxu0 0.0
    %4234 = vmatmul.mubr.f32.gmra.mrb[0].mxu0 %v3049
    %v4235 = vpop.f32.mrb[0].mxu0
    %v4236 = vadd.f32 %v3531, %v4235
    %v4237 = vpop.f32.mrb[0].mxu0
    %4238 = vmatprep.mubr.f32.mxu0 0.0
    %4239 = vmatmul.mubr.f32.gmra.mrb[0].mxu0 %v3052
    %v4240 = vpop.f32.mrb[0].mxu0
    %v4241 = vadd.f32 %v3536, %v4240
    %v4242 = vpop.f32.mrb[0].mxu0
    %4243 = vmatprep.mubr.f32.mxu0 0.0
    %4244 = vmatmul.mubr.f32.gmra.mrb[0].mxu0 %v3055
    %v4245 = vpop.f32.mrb[0].mxu0
    %v4246 = vadd.f32 %v3541, %v4245
    %v4247 = vpop.f32.mrb[0].mxu0
    %4248 = vmatprep.mubr.f32.mxu0 0.0
    %4249 = vmatmul.mubr.f32.gmra.mrb[0].mxu0 %v3058
    %v4250 = vpop.f32.mrb[0].mxu0
    %v4251 = vadd.f32 %v3546, %v4250
    %v4252 = vpop.f32.mrb[0].mxu0
    %4253 = vmatprep.mubr.f32.mxu0 0.0
    %4254 = vmatmul.mubr.f32.gmra.mrb[0].mxu0 %v3061
    %v4255 = vpop.f32.mrb[0].mxu0
    %v4256 = vadd.f32 %v3551, %v4255
    %v4257 = vpop.f32.mrb[0].mxu0
    %4258 = vmatprep.mubr.f32.mxu0 0.0
    %4259 = vmatmul.mubr.f32.gmra.mrb[0].mxu0 %v3064
    %v4260 = vpop.f32.mrb[0].mxu0
    %v4261 = vadd.f32 %v3556, %v4260
    %v4262 = vpop.f32.mrb[0].mxu0
    %4263 = vmatprep.mubr.f32.mxu0 0.0
    %4264 = vmatmul.mubr.f32.gmra.mrb[0].mxu0 %v3067
    %v4265 = vpop.f32.mrb[0].mxu0
    %v4266 = vadd.f32 %v3561, %v4265
    %v4267 = vpop.f32.mrb[0].mxu0
    %4268 = vmatprep.mubr.f32.mxu0 0.0
    %4269 = vmatmul.mubr.f32.gmra.mrb[0].mxu0 %v3070
    %v4270 = vpop.f32.mrb[0].mxu0
    %v4271 = vadd.f32 %v3566, %v4270
    %v4272 = vpop.f32.mrb[0].mxu0
    %4273 = vmatprep.mubr.f32.mxu0 0.0
    %4274 = vmatmul.mubr.f32.gmra.mrb[0].mxu0 %v3073
    %v4275 = vpop.f32.mrb[0].mxu0
    %v4276 = vadd.f32 %v3571, %v4275
    %v4277 = vpop.f32.mrb[0].mxu0
    %4278 = vmatprep.mubr.f32.mxu0 0.0
    %4279 = vmatmul.mubr.f32.gmra.mrb[0].mxu0 %v3076
    %v4280 = vpop.f32.mrb[0].mxu0
    %v4281 = vadd.f32 %v3576, %v4280
    %v4282 = vpop.f32.mrb[0].mxu0
    %4283 = vmatprep.mubr.f32.mxu0 0.0
    %4284 = vmatmul.mubr.f32.gmra.mrb[0].mxu0 %v3079
    %v4285 = vpop.f32.mrb[0].mxu0
    %v4286 = vadd.f32 %v3581, %v4285
    %v4287 = vpop.f32.mrb[0].mxu0
    %4288 = vmatprep.mubr.f32.mxu0 0.0
    %4289 = vmatmul.mubr.f32.gmra.mrb[0].mxu0 %v3082
    %v4290 = vpop.f32.mrb[0].mxu0
    %v4291 = vadd.f32 %v3586, %v4290
    %v4292 = vpop.f32.mrb[0].mxu0
    %4293 = vmatprep.mubr.f32.mxu0 0.0
    %4294 = vmatmul.mubr.f32.gmra.mrb[0].mxu0 %v3085
    %v4295 = vpop.f32.mrb[0].mxu0
    %v4296 = vadd.f32 %v3591, %v4295
    %v4297 = vpop.f32.mrb[0].mxu0
    %4298 = vmatprep.mubr.f32.mxu0 0.0
    %4299 = vmatmul.mubr.f32.gmra.mrb[0].mxu0 %v3088
    %v4300 = vpop.f32.mrb[0].mxu0
    %v4301 = vadd.f32 %v3596, %v4300
    %v4302 = vpop.f32.mrb[0].mxu0
    %4303 = vmatprep.mubr.f32.mxu0 0.0
    %4304 = vmatmul.mubr.f32.gmra.mrb[0].mxu0 %v3091
    %v4305 = vpop.f32.mrb[0].mxu0
    %v4306 = vadd.f32 %v3601, %v4305
    %v4307 = vpop.f32.mrb[0].mxu0
    %4308 = vmatprep.mubr.f32.mxu0 0.0
    %4309 = vmatmul.mubr.f32.gmra.mrb[0].mxu0 %v3094
    %v4310 = vpop.f32.mrb[0].mxu0
    %v4311 = vadd.f32 %v3606, %v4310
    %v4312 = vpop.f32.mrb[0].mxu0
    %4313 = vmatprep.mubr.f32.mxu0 0.0
    %4314 = vmatmul.mubr.f32.gmra.mrb[0].mxu0 %v3097
    %v4315 = vpop.f32.mrb[0].mxu0
    %v4316 = vadd.f32 %v3611, %v4315
    %v4317 = vpop.f32.mrb[0].mxu0
    %4318 = vmatprep.mubr.f32.mxu0 0.0
    %4319 = vmatmul.mubr.f32.gmra.mrb[0].mxu0 %v3100
    %v4320 = vpop.f32.mrb[0].mxu0
    %v4321 = vadd.f32 %v3616, %v4320
    %v4322 = vpop.f32.mrb[0].mxu0
    %4323 = vmatprep.mubr.f32.mxu0 0.0
    %4324 = vmatmul.mubr.f32.gmra.mrb[0].mxu0 %v3103
    %v4325 = vpop.f32.mrb[0].mxu0
    %v4326 = vadd.f32 %v3621, %v4325
    %v4327 = vpop.f32.mrb[0].mxu0
    %4328 = vmatprep.mubr.f32.mxu0 0.0
    %4329 = vmatmul.mubr.f32.gmra.mrb[0].mxu0 %v3106
    %v4330 = vpop.f32.mrb[0].mxu0
    %v4331 = vadd.f32 %v3626, %v4330
    %v4332 = vpop.f32.mrb[0].mxu0
    %4333 = vmatprep.mubr.f32.mxu0 0.0
    %4334 = vmatmul.mubr.f32.gmra.mrb[0].mxu0 %v3109
    %v4335 = vpop.f32.mrb[0].mxu0
    %v4336 = vadd.f32 %v3631, %v4335
    %v4337 = vpop.f32.mrb[0].mxu0
    %4338 = vmatprep.mubr.f32.mxu0 0.0
    %4339 = vmatmul.mubr.f32.gmra.mrb[0].mxu0 %v3112
    %v4340 = vpop.f32.mrb[0].mxu0
    %v4341 = vadd.f32 %v3636, %v4340
    %v4342 = vpop.f32.mrb[0].mxu0
    %4343 = vmatprep.mubr.f32.mxu0 0.0
    %4344 = vmatmul.mubr.f32.gmra.mrb[0].mxu0 %v3115
    %v4345 = vpop.f32.mrb[0].mxu0
    %v4346 = vadd.f32 %v3641, %v4345
    %v4347 = vpop.f32.mrb[0].mxu0
    %4348 = vmatprep.mubr.f32.mxu0 0.0
    %4349 = vmatmul.mubr.f32.gmra.mrb[0].mxu0 %v3118
    %v4350 = vpop.f32.mrb[0].mxu0
    %v4351 = vadd.f32 %v3646, %v4350
    %v4352 = vpop.f32.mrb[0].mxu0
    %4353 = vmatprep.mubr.f32.mxu0 0.0
    %4354 = vmatmul.mubr.f32.gmra.mrb[0].mxu0 %v3121
    %v4355 = vpop.f32.mrb[0].mxu0
    %v4356 = vadd.f32 %v3651, %v4355
    %v4357 = vpop.f32.mrb[0].mxu0
    %4358 = vmatprep.mubr.f32.mxu0 0.0
    %4359 = vmatmul.mubr.f32.gmra.mrb[0].mxu0 %v3124
    %v4360 = vpop.f32.mrb[0].mxu0
    %v4361 = vadd.f32 %v3656, %v4360
    %v4362 = vpop.f32.mrb[0].mxu0
    %4363 = vmatprep.mubr.f32.mxu0 0.0
    %4364 = vmatmul.mubr.f32.gmra.mrb[0].mxu0 %v3127
    %v4365 = vpop.f32.mrb[0].mxu0
    %v4366 = vadd.f32 %v3661, %v4365
    %v4367 = vpop.f32.mrb[0].mxu0
    %4368 = vmatprep.mubr.f32.mxu0 0.0
    %4369 = vmatmul.mubr.f32.gmra.mrb[0].mxu0 %v3130
    %v4370 = vpop.f32.mrb[0].mxu0
    %v4371 = vadd.f32 %v3666, %v4370
    %v4372 = vpop.f32.mrb[0].mxu0
    %4373 = vmatprep.mubr.f32.mxu0 0.0
    %4374 = vmatmul.mubr.f32.gmra.mrb[0].mxu0 %v3133
    %v4375 = vpop.f32.mrb[0].mxu0
    %v4376 = vadd.f32 %v3671, %v4375
    %v4377 = vpop.f32.mrb[0].mxu0
    %4378 = vmatprep.mubr.f32.mxu0 0.0
    %4379 = vmatmul.mubr.f32.gmra.mrb[0].mxu0 %v3136
    %v4380 = vpop.f32.mrb[0].mxu0
    %v4381 = vadd.f32 %v3676, %v4380
    %v4382 = vpop.f32.mrb[0].mxu0
    %4383 = vmatprep.mubr.f32.mxu0 0.0
    %4384 = vmatmul.mubr.f32.gmra.mrb[0].mxu0 %v3139
    %v4385 = vpop.f32.mrb[0].mxu0
    %v4386 = vadd.f32 %v3681, %v4385
    %v4387 = vpop.f32.mrb[0].mxu0
    %4388 = vmatprep.mubr.f32.mxu0 0.0
    %4389 = vmatmul.mubr.f32.gmra.mrb[0].mxu0 %v3142
    %v4390 = vpop.f32.mrb[0].mxu0
    %v4391 = vadd.f32 %v3686, %v4390
    %v4392 = vpop.f32.mrb[0].mxu0
    %4393 = vmatprep.mubr.f32.mxu0 0.0
    %4394 = vmatmul.mubr.f32.gmra.mrb[0].mxu0 %v3145
    %v4395 = vpop.f32.mrb[0].mxu0
    %v4396 = vadd.f32 %v3691, %v4395
    %v4397 = vpop.f32.mrb[0].mxu0
    %4398 = vmatprep.mubr.f32.mxu0 0.0
    %4399 = vmatmul.mubr.f32.gmra.mrb[0].mxu0 %v3148
    %v4400 = vpop.f32.mrb[0].mxu0
    %v4401 = vadd.f32 %v3696, %v4400
    %v4402 = vpop.f32.mrb[0].mxu0
    %4403 = vmatprep.mubr.f32.mxu0 0.0
    %4404 = vmatmul.mubr.f32.gmra.mrb[0].mxu0 %v3151
    %v4405 = vpop.f32.mrb[0].mxu0
    %v4406 = vadd.f32 %v3701, %v4405
    %v4407 = vpop.f32.mrb[0].mxu0
    %4408 = vmatprep.mubr.f32.mxu0 0.0
    %4409 = vmatmul.mubr.f32.gmra.mrb[0].mxu0 %v3154
    %v4410 = vpop.f32.mrb[0].mxu0
    %v4411 = vadd.f32 %v3706, %v4410
    %v4412 = vpop.f32.mrb[0].mxu0
    %4413 = vmatprep.mubr.f32.mxu0 0.0
    %4414 = vmatmul.mubr.f32.gmra.mrb[0].mxu0 %v3157
    %v4415 = vpop.f32.mrb[0].mxu0
    %v4416 = vadd.f32 %v3711, %v4415
    %v4417 = vpop.f32.mrb[0].mxu0
    %4418 = vmatprep.mubr.f32.mxu0 0.0
    %4419 = vmatmul.mubr.f32.gmra.mrb[0].mxu0 %v3160
    %v4420 = vpop.f32.mrb[0].mxu0
    %v4421 = vadd.f32 %v3716, %v4420
    %v4422 = vpop.f32.mrb[0].mxu0
    %4423 = vmatprep.mubr.f32.mxu0 0.0
    %4424 = vmatmul.mubr.f32.gmra.mrb[0].mxu0 %v3163
    %v4425 = vpop.f32.mrb[0].mxu0
    %v4426 = vadd.f32 %v3721, %v4425
    %v4427 = vpop.f32.mrb[0].mxu0
    %4428 = vmatprep.mubr.f32.mxu0 0.0
    %4429 = vmatmul.mubr.f32.gmra.mrb[0].mxu0 %v3166
    %v4430 = vpop.f32.mrb[0].mxu0
    %v4431 = vadd.f32 %v3726, %v4430
    %v4432 = vpop.f32.mrb[0].mxu0
    %4433 = vmatprep.mubr.f32.mxu0 0.0
    %4434 = vmatmul.mubr.f32.gmra.mrb[0].mxu0 %v3169
    %v4435 = vpop.f32.mrb[0].mxu0
    %v4436 = vadd.f32 %v3731, %v4435
    %v4437 = vpop.f32.mrb[0].mxu0
    %4438 = vmatprep.mubr.f32.mxu0 0.0
    %4439 = vmatmul.mubr.f32.gmra.mrb[0].mxu0 %v3172
    %v4440 = vpop.f32.mrb[0].mxu0
    %v4441 = vadd.f32 %v3736, %v4440
    %v4442 = vpop.f32.mrb[0].mxu0
    %4443 = vmatprep.mubr.f32.mxu0 0.0
    %4444 = vmatmul.mubr.f32.gmra.mrb[0].mxu0 %v3175
    %v4445 = vpop.f32.mrb[0].mxu0
    %v4446 = vadd.f32 %v3741, %v4445
    %v4447 = vpop.f32.mrb[0].mxu0
    %4448 = vmatprep.mubr.f32.mxu0 0.0
    %4449 = vmatmul.mubr.f32.gmra.mrb[0].mxu0 %v3178
    %v4450 = vpop.f32.mrb[0].mxu0
    %v4451 = vadd.f32 %v3746, %v4450
    %v4452 = vpop.f32.mrb[0].mxu0
    %4453 = vmatprep.mubr.f32.mxu0 0.0
    %4454 = vmatmul.mubr.f32.gmra.mrb[0].mxu0 %v3181
    %v4455 = vpop.f32.mrb[0].mxu0
    %v4456 = vadd.f32 %v3751, %v4455
    %v4457 = vpop.f32.mrb[0].mxu0
    %4458 = vmatprep.mubr.f32.mxu0 0.0
    %4459 = vmatmul.mubr.f32.gmra.mrb[0].mxu0 %v3184
    %v4460 = vpop.f32.mrb[0].mxu0
    %v4461 = vadd.f32 %v3756, %v4460
    %v4462 = vpop.f32.mrb[0].mxu0
    %4463 = vmatprep.mubr.f32.mxu0 0.0
    %4464 = vmatmul.mubr.f32.gmra.mrb[0].mxu0 %v3187
    %v4465 = vpop.f32.mrb[0].mxu0
    %v4466 = vadd.f32 %v3761, %v4465
    %v4467 = vpop.f32.mrb[0].mxu0
    %4468 = vmatprep.mubr.f32.mxu0 0.0
    %4469 = vmatmul.mubr.f32.gmra.mrb[0].mxu0 %v3190
    %v4470 = vpop.f32.mrb[0].mxu0
    %v4471 = vadd.f32 %v3766, %v4470
    %v4472 = vpop.f32.mrb[0].mxu0
    %4473 = vmatprep.mubr.f32.mxu0 0.0
    %4474 = vmatmul.mubr.f32.gmra.mrb[0].mxu0 %v3193
    %v4475 = vpop.f32.mrb[0].mxu0
    %v4476 = vadd.f32 %v3771, %v4475
    %v4477 = vpop.f32.mrb[0].mxu0
    %4478 = vmatprep.mubr.f32.mxu0 0.0
    %4479 = vmatmul.mubr.f32.gmra.mrb[0].mxu0 %v3196
    %v4480 = vpop.f32.mrb[0].mxu0
    %v4481 = vadd.f32 %v3776, %v4480
    %v4482 = vpop.f32.mrb[0].mxu0
    %4483 = vmatprep.mubr.f32.mxu0 0.0
    %4484 = vmatmul.mubr.f32.gmra.mrb[0].mxu0 %v3199
    %v4485 = vpop.f32.mrb[0].mxu0
    %v4486 = vadd.f32 %v3781, %v4485
    %v4487 = vpop.f32.mrb[0].mxu0
    %4488 = vmatprep.mubr.f32.mxu0 0.0
    %4489 = vmatmul.mubr.f32.gmra.mrb[0].mxu0 %v3202
    %v4490 = vpop.f32.mrb[0].mxu0
    %v4491 = vadd.f32 %v3786, %v4490
    %v4492 = vpop.f32.mrb[0].mxu0
    %4493 = vmatprep.mubr.f32.mxu0 0.0
    %4494 = vmatmul.mubr.f32.gmra.mrb[0].mxu0 %v3205
    %v4495 = vpop.f32.mrb[0].mxu0
    %v4496 = vadd.f32 %v3791, %v4495
    %v4497 = vpop.f32.mrb[0].mxu0
    %4498 = vmatprep.mubr.f32.mxu0 0.0
    %4499 = vmatmul.mubr.f32.gmra.mrb[0].mxu0 %v3208
    %v4500 = vpop.f32.mrb[0].mxu0
    %v4501 = vadd.f32 %v3796, %v4500
    %v4502 = vpop.f32.mrb[0].mxu0
    %4503 = vmatprep.mubr.f32.mxu0 0.0
    %4504 = vmatmul.mubr.f32.gmra.mrb[0].mxu0 %v3211
    %v4505 = vpop.f32.mrb[0].mxu0
    %v4506 = vadd.f32 %v3801, %v4505
    %v4507 = vpop.f32.mrb[0].mxu0
    %4508 = vmatprep.mubr.f32.mxu0 0.0
    %4509 = vmatmul.mubr.f32.gmra.mrb[0].mxu0 %v3214
    %v4510 = vpop.f32.mrb[0].mxu0
    %v4511 = vadd.f32 %v3806, %v4510
    %v4512 = vpop.f32.mrb[0].mxu0
    %4513 = vmatprep.mubr.f32.mxu0 0.0
    %4514 = vmatmul.mubr.f32.gmra.mrb[0].mxu0 %v3217
    %v4515 = vpop.f32.mrb[0].mxu0
    %v4516 = vadd.f32 %v3811, %v4515
    %v4517 = vpop.f32.mrb[0].mxu0
    %4518 = vmatprep.mubr.f32.mxu0 0.0
    %4519 = vmatmul.mubr.f32.gmra.mrb[0].mxu0 %v3220
    %v4520 = vpop.f32.mrb[0].mxu0
    %v4521 = vadd.f32 %v3816, %v4520
    %v4522 = vpop.f32.mrb[0].mxu0
    %4523 = vmatprep.mubr.f32.mxu0 0.0
    %4524 = vmatmul.mubr.f32.gmra.mrb[0].mxu0 %v3223
    %v4525 = vpop.f32.mrb[0].mxu0
    %v4526 = vadd.f32 %v3821, %v4525
    %v4527 = vpop.f32.mrb[0].mxu0
    %4528 = vmatprep.mubr.f32.mxu0 0.0
    %4529 = vmatmul.mubr.f32.gmra.mrb[0].mxu0 %v3226
    %v4530 = vpop.f32.mrb[0].mxu0
    %v4531 = vadd.f32 %v3826, %v4530
    %v4532 = vpop.f32.mrb[0].mxu0
    %4533 = vmatprep.mubr.f32.mxu0 0.0
    %4534 = vmatmul.mubr.f32.gmra.mrb[0].mxu0 %v3229
    %v4535 = vpop.f32.mrb[0].mxu0
    %v4536 = vadd.f32 %v3831, %v4535
    %v4537 = vpop.f32.mrb[0].mxu0
    %4538 = vmatprep.mubr.f32.mxu0 0.0
    %4539 = vmatmul.mubr.f32.gmra.mrb[0].mxu0 %v3232
    %v4540 = vpop.f32.mrb[0].mxu0
    %v4541 = vadd.f32 %v3836, %v4540
    %v4542 = vpop.f32.mrb[0].mxu0
    %4543 = vmatprep.mubr.f32.mxu0 0.0
    %4544 = vmatmul.mubr.f32.gmra.mrb[0].mxu0 %v3235
    %v4545 = vpop.f32.mrb[0].mxu0
    %v4546 = vadd.f32 %v3841, %v4545
    %v4547 = vpop.f32.mrb[0].mxu0
    %4548 = vmatprep.mubr.f32.mxu0 0.0
    %4549 = vmatmul.mubr.f32.gmra.mrb[0].mxu0 %v3238
    %v4550 = vpop.f32.mrb[0].mxu0
    %v4551 = vadd.f32 %v3846, %v4550
    %v4552 = vpop.f32.mrb[0].mxu0
    %4553 = vmatprep.mubr.f32.mxu0 0.0
    %4554 = vmatmul.mubr.f32.gmra.mrb[0].mxu0 %v3241
    %v4555 = vpop.f32.mrb[0].mxu0
    %v4556 = vadd.f32 %v3851, %v4555
    %v4557 = vpop.f32.mrb[0].mxu0
    %4558 = vmatprep.mubr.f32.mxu0 0.0
    %4559 = vmatmul.mubr.f32.gmra.mrb[0].mxu0 %v3244
    %v4560 = vpop.f32.mrb[0].mxu0
    %v4561 = vadd.f32 %v3856, %v4560
    %v4562 = vpop.f32.mrb[0].mxu0
    %4563 = vmatprep.mubr.f32.mxu0 0.0
    %4564 = vmatmul.mubr.f32.gmra.mrb[0].mxu0 %v3247
    %v4565 = vpop.f32.mrb[0].mxu0
    %v4566 = vadd.f32 %v3861, %v4565
    %v4567 = vpop.f32.mrb[0].mxu0
    %4568 = vmatprep.mubr.f32.mxu0 0.0
    %4569 = vmatmul.mubr.f32.gmra.mrb[0].mxu0 %v3250
    %v4570 = vpop.f32.mrb[0].mxu0
    %v4571 = vadd.f32 %v3866, %v4570
    %v4572 = vpop.f32.mrb[0].mxu0
    %4573 = vmatprep.mubr.f32.mxu0 0.0
    %4574 = vmatmul.mubr.f32.gmra.mrb[0].mxu0 %v3253
    %v4575 = vpop.f32.mrb[0].mxu0
    %v4576 = vadd.f32 %v3871, %v4575
    %v4577 = vpop.f32.mrb[0].mxu0
    %4578 = vmatprep.mubr.f32.mxu0 0.0
    %4579 = vmatmul.mubr.f32.gmra.mrb[0].mxu0 %v3256
    %v4580 = vpop.f32.mrb[0].mxu0
    %v4581 = vadd.f32 %v3876, %v4580
    %v4582 = vpop.f32.mrb[0].mxu0
    %4583 = vmatprep.mubr.f32.mxu0 0.0
    %4584 = vmatmul.mubr.f32.gmra.mrb[0].mxu0 %v3259
    %v4585 = vpop.f32.mrb[0].mxu0
    %v4586 = vadd.f32 %v3881, %v4585
    %v4587 = vpop.f32.mrb[0].mxu0
    %4588 = vmatprep.mubr.f32.mxu0 0.0
    %4589 = vmatmul.mubr.f32.gmra.mrb[0].mxu0 %v3262
    %v4590 = vpop.f32.mrb[0].mxu0
    %v4591 = vadd.f32 %v3886, %v4590
    %v4592 = vpop.f32.mrb[0].mxu0
    %4593 = vmatprep.mubr.f32.mxu0 0.0
    %4594 = vmatmul.mubr.f32.gmra.mrb[0].mxu0 %v3265
    %v4595 = vpop.f32.mrb[0].mxu0
    %v4596 = vadd.f32 %v3891, %v4595
    %v4597 = vpop.f32.mrb[0].mxu0
    %4598 = vmatprep.mubr.f32.mxu0 0.0
    %4599 = vmatmul.mubr.f32.gmra.mrb[0].mxu0 %v3268
    %v4600 = vpop.f32.mrb[0].mxu0
    %v4601 = vadd.f32 %v3896, %v4600
    %v4602 = vpop.f32.mrb[0].mxu0
    %4603 = vmatprep.mubr.f32.mxu0 0.0
    %4604 = vmatmul.mubr.f32.gmra.mrb[0].mxu0 %v3271
    %v4605 = vpop.f32.mrb[0].mxu0
    %v4606 = vadd.f32 %v3901, %v4605
    %v4607 = vpop.f32.mrb[0].mxu0
    %4608 = vmatprep.mubr.f32.mxu0 0.0
    %4609 = vmatmul.mubr.f32.gmra.mrb[0].mxu0 %v3274
    %v4610 = vpop.f32.mrb[0].mxu0
    %v4611 = vadd.f32 %v3906, %v4610
    %v4612 = vpop.f32.mrb[0].mxu0
    %4613 = vmatprep.mubr.f32.mxu0 0.0
    %4614 = vmatmul.mubr.f32.gmra.mrb[0].mxu0 %v3277
    %v4615 = vpop.f32.mrb[0].mxu0
    %v4616 = vadd.f32 %v3911, %v4615
    %v4617 = vpop.f32.mrb[0].mxu0
    %4618 = vmatprep.mubr.f32.mxu0 0.0
    %4619 = vmatmul.mubr.f32.gmra.mrb[0].mxu0 %v3280
    %v4620 = vpop.f32.mrb[0].mxu0
    %v4621 = vadd.f32 %v3916, %v4620
    %v4622 = vpop.f32.mrb[0].mxu0
    %4623 = vmatprep.mubr.f32.mxu0 0.0
    %4624 = vmatmul.mubr.f32.gmra.mrb[0].mxu0 %v3283
    %v4625 = vpop.f32.mrb[0].mxu0
    %v4626 = vadd.f32 %v3921, %v4625
    %v4627 = vpop.f32.mrb[0].mxu0
    %4628 = vmatprep.mubr.f32.mxu0 0.0
    %4629 = vmatmul.mubr.f32.gmra.mrb[0].mxu0 %v3286
    %v4630 = vpop.f32.mrb[0].mxu0
    %v4631 = vadd.f32 %v3926, %v4630
    %v4632 = vpop.f32.mrb[0].mxu0
    %4633 = vmatprep.mubr.f32.mxu0 0.0
    %4634 = vmatmul.mubr.f32.gmra.mrb[0].mxu0 %v3289
    %v4635 = vpop.f32.mrb[0].mxu0
    %v4636 = vadd.f32 %v3931, %v4635
    %v4637 = vpop.f32.mrb[0].mxu0
    %4638 = vmatprep.mubr.f32.mxu0 0.0
    %4639 = vmatmul.mubr.f32.gmra.mrb[0].mxu0 %v3292
    %v4640 = vpop.f32.mrb[0].mxu0
    %v4641 = vadd.f32 %v3936, %v4640
    %v4642 = vpop.f32.mrb[0].mxu0
    %4643 = vmatprep.mubr.f32.mxu0 0.0
    %4644 = vmatmul.mubr.f32.gmra.mrb[0].mxu0 %v3295
    %v4645 = vpop.f32.mrb[0].mxu0
    %v4646 = vadd.f32 %v3941, %v4645
    %v4647 = vpop.f32.mrb[0].mxu0
    %4648 = vmatprep.mubr.f32.mxu0 0.0
    %4649 = vmatmul.mubr.f32.gmra.mrb[0].mxu0 %v3298
    %v4650 = vpop.f32.mrb[0].mxu0
    %v4651 = vadd.f32 %v3946, %v4650
    %v4652 = vpop.f32.mrb[0].mxu0
    %4653 = vmatprep.mubr.f32.mxu0 0.0
    %4654 = vmatmul.mubr.f32.gmra.mrb[0].mxu0 %v3301
    %v4655 = vpop.f32.mrb[0].mxu0
    %v4656 = vadd.f32 %v3951, %v4655
    %v4657 = vpop.f32.mrb[0].mxu0
    %4658 = vmatprep.mubr.f32.mxu0 0.0
    %4659 = vmatmul.mubr.f32.gmra.mrb[0].mxu0 %v3304
    %v4660 = vpop.f32.mrb[0].mxu0
    %v4661 = vadd.f32 %v3956, %v4660
    %v4662 = vpop.f32.mrb[0].mxu0
    %4663 = vmatprep.mubr.f32.mxu0 0.0
    %4664 = vmatmul.mubr.f32.gmra.mrb[0].mxu0 %v3307
    %v4665 = vpop.f32.mrb[0].mxu0
    %v4666 = vadd.f32 %v3961, %v4665
    %v4667 = vpop.f32.mrb[0].mxu0
    %4668 = vmatprep.mubr.f32.mxu0 0.0
    %4669 = vmatmul.mubr.f32.gmra.mrb[0].mxu0 %v3310
    %v4670 = vpop.f32.mrb[0].mxu0
    %v4671 = vadd.f32 %v3966, %v4670
    %v4672 = vpop.f32.mrb[0].mxu0
    %4673 = vmatprep.mubr.f32.mxu0 0.0
    %4674 = vmatmul.mubr.f32.gmra.mrb[0].mxu0 %v3313
    %v4675 = vpop.f32.mrb[0].mxu0
    %v4676 = vadd.f32 %v3971, %v4675
    %v4677 = vpop.f32.mrb[0].mxu0
    %4678 = vmatprep.mubr.f32.mxu0 0.0
    %4679 = vmatmul.mubr.f32.gmra.mrb[0].mxu0 %v3316
    %v4680 = vpop.f32.mrb[0].mxu0
    %v4681 = vadd.f32 %v3976, %v4680
    %v4682 = vpop.f32.mrb[0].mxu0
    %4683 = vmatprep.mubr.f32.mxu0 0.0
    %4684 = vmatmul.mubr.f32.gmra.mrb[0].mxu0 %v3319
    %v4685 = vpop.f32.mrb[0].mxu0
    %v4686 = vadd.f32 %v3981, %v4685
    %v4687 = vpop.f32.mrb[0].mxu0
    %4688 = vmatprep.mubr.f32.mxu0 0.0
    %4689 = vmatmul.mubr.f32.gmra.mrb[0].mxu0 %v3322
    %v4690 = vpop.f32.mrb[0].mxu0
    %v4691 = vadd.f32 %v3986, %v4690
    %v4692 = vpop.f32.mrb[0].mxu0
    %4693 = vmatprep.mubr.f32.mxu0 0.0
    %4694 = vmatmul.mubr.f32.gmra.mrb[0].mxu0 %v3325
    %v4695 = vpop.f32.mrb[0].mxu0
    %v4696 = vadd.f32 %v3991, %v4695
    %v4697 = vpop.f32.mrb[0].mxu0
    %4698 = vmatprep.mubr.f32.mxu0 0.0
    %4699 = vmatmul.mubr.f32.gmra.mrb[0].mxu0 %v3328
    %v4700 = vpop.f32.mrb[0].mxu0
    %v4701 = vadd.f32 %v3996, %v4700
    %v4702 = vpop.f32.mrb[0].mxu0
    %4703 = vmatprep.mubr.f32.mxu0 0.0
    %4704 = vmatmul.mubr.f32.gmra.mrb[0].mxu0 %v3331
    %v4705 = vpop.f32.mrb[0].mxu0
    %v4706 = vadd.f32 %v4001, %v4705
    %v4707 = vpop.f32.mrb[0].mxu0
    %4708 = vmatprep.mubr.f32.mxu0 0.0
    %4709 = vmatmul.mubr.f32.gmra.mrb[0].mxu0 %v3334
    %v4710 = vpop.f32.mrb[0].mxu0
    %v4711 = vadd.f32 %v4006, %v4710
    %v4712 = vpop.f32.mrb[0].mxu0
    %4713 = vmatprep.mubr.f32.mxu0 0.0
    %4714 = vmatmul.mubr.f32.gmra.mrb[0].mxu0 %v3337
    %v4715 = vpop.f32.mrb[0].mxu0
    %v4716 = vadd.f32 %v4011, %v4715
    %v4717 = vpop.f32.mrb[0].mxu0
    %4718 = vmatprep.mubr.f32.mxu0 0.0
    %4719 = vmatmul.mubr.f32.gmra.mrb[0].mxu0 %v3340
    %v4720 = vpop.f32.mrb[0].mxu0
    %v4721 = vadd.f32 %v4016, %v4720
    %v4722 = vpop.f32.mrb[0].mxu0
    %4723 = vmatprep.mubr.f32.mxu0 0.0
    %4724 = vmatmul.mubr.f32.gmra.mrb[0].mxu0 %v3343
    %v4725 = vpop.f32.mrb[0].mxu0
    %v4726 = vadd.f32 %v4021, %v4725
    %v4727 = vpop.f32.mrb[0].mxu0
    %4728 = vmatprep.mubr.f32.mxu0 0.0
    %4729 = vmatmul.mubr.f32.gmra.mrb[0].mxu0 %v3346
    %v4730 = vpop.f32.mrb[0].mxu0
    %v4731 = vadd.f32 %v4026, %v4730
    %v4732 = vpop.f32.mrb[0].mxu0
    %4733 = vmatprep.mubr.f32.mxu0 0.0
    %4734 = vmatmul.mubr.f32.gmra.mrb[0].mxu0 %v3349
    %v4735 = vpop.f32.mrb[0].mxu0
    %v4736 = vadd.f32 %v4031, %v4735
    %v4737 = vpop.f32.mrb[0].mxu0
    %4738 = vmatprep.mubr.f32.mxu0 0.0
    %4739 = vmatmul.mubr.f32.gmra.mrb[0].mxu0 %v3352
    %v4740 = vpop.f32.mrb[0].mxu0
    %v4741 = vadd.f32 %v4036, %v4740
    %v4742 = vpop.f32.mrb[0].mxu0
    %4743 = vmatprep.mubr.f32.mxu0 0.0
    %4744 = vmatmul.mubr.f32.gmra.mrb[0].mxu0 %v3355
    %v4745 = vpop.f32.mrb[0].mxu0
    %v4746 = vadd.f32 %v4041, %v4745
    %v4747 = vpop.f32.mrb[0].mxu0
    %4748 = vmatprep.mubr.f32.mxu0 0.0
    %4749 = vmatmul.mubr.f32.gmra.mrb[0].mxu0 %v3358
    %v4750 = vpop.f32.mrb[0].mxu0
    %v4751 = vadd.f32 %v4046, %v4750
    %v4752 = vpop.f32.mrb[0].mxu0
    %4753 = vmatprep.mubr.f32.mxu0 0.0
    %4754 = vmatmul.mubr.f32.gmra.mrb[0].mxu0 %v3361
    %v4755 = vpop.f32.mrb[0].mxu0
    %v4756 = vadd.f32 %v4051, %v4755
    %v4757 = vpop.f32.mrb[0].mxu0
    %4758 = vmatprep.mubr.f32.mxu0 0.0
    %4759 = vmatmul.mubr.f32.gmra.mrb[0].mxu0 %v3364
    %v4760 = vpop.f32.mrb[0].mxu0
    %v4761 = vadd.f32 %v4056, %v4760
    %v4762 = vpop.f32.mrb[0].mxu0
    %4763 = vmatprep.mubr.f32.mxu0 0.0
    %4764 = vmatmul.mubr.f32.gmra.mrb[0].mxu0 %v3367
    %v4765 = vpop.f32.mrb[0].mxu0
    %v4766 = vadd.f32 %v4061, %v4765
    %v4767 = vpop.f32.mrb[0].mxu0
    %4768 = vmatprep.mubr.f32.mxu0 0.0
    %4769 = vmatmul.mubr.f32.gmra.mrb[0].mxu0 %v3370
    %v4770 = vpop.f32.mrb[0].mxu0
    %v4771 = vadd.f32 %v4066, %v4770
    %v4772 = vpop.f32.mrb[0].mxu0
    %4773 = vmatprep.mubr.f32.mxu0 0.0
    %4774 = vmatmul.mubr.f32.gmra.mrb[0].mxu0 %v3373
    %v4775 = vpop.f32.mrb[0].mxu0
    %v4776 = vadd.f32 %v4071, %v4775
    %v4777 = vpop.f32.mrb[0].mxu0
    %4778 = vmatprep.mubr.f32.mxu0 0.0
    %4779 = vmatmul.mubr.f32.gmra.mrb[0].mxu0 %v3376
    %v4780 = vpop.f32.mrb[0].mxu0
    %v4781 = vadd.f32 %v4076, %v4780
    %v4782 = vpop.f32.mrb[0].mxu0
    %4783 = vmatprep.mubr.f32.mxu0 0.0
    %4784 = vmatmul.mubr.f32.gmra.mrb[0].mxu0 %v3379
    %v4785 = vpop.f32.mrb[0].mxu0
    %v4786 = vadd.f32 %v4081, %v4785
    %v4787 = vpop.f32.mrb[0].mxu0
    %4788 = vmatprep.mubr.f32.mxu0 0.0
    %4789 = vmatmul.mubr.f32.gmra.mrb[0].mxu0 %v3382
    %v4790 = vpop.f32.mrb[0].mxu0
    %v4791 = vadd.f32 %v4086, %v4790
    %v4792 = vpop.f32.mrb[0].mxu0
    %4793 = vdwg.mxu0
    %v4794 = vmax.f32 %v4156, 0.0
    %v4795 = vmax.f32 %v4161, 0.0
    %v4796 = vmax.f32 %v4166, 0.0
    %v4797 = vmax.f32 %v4171, 0.0
    %v4798 = vmax.f32 %v4176, 0.0
    %v4799 = vmax.f32 %v4181, 0.0
    %v4800 = vmax.f32 %v4186, 0.0
    %v4801 = vmax.f32 %v4191, 0.0
    %v4802 = vmax.f32 %v4196, 0.0
    %v4803 = vmax.f32 %v4201, 0.0
    %v4804 = vmax.f32 %v4206, 0.0
    %v4805 = vmax.f32 %v4211, 0.0
    %v4806 = vmax.f32 %v4216, 0.0
    %v4807 = vmax.f32 %v4221, 0.0
    %v4808 = vmax.f32 %v4226, 0.0
    %v4809 = vmax.f32 %v4231, 0.0
    %v4810 = vmax.f32 %v4236, 0.0
    %v4811 = vmax.f32 %v4241, 0.0
    %v4812 = vmax.f32 %v4246, 0.0
    %v4813 = vmax.f32 %v4251, 0.0
    %v4814 = vmax.f32 %v4256, 0.0
    %v4815 = vmax.f32 %v4261, 0.0
    %v4816 = vmax.f32 %v4266, 0.0
    %v4817 = vmax.f32 %v4271, 0.0
    %v4818 = vmax.f32 %v4276, 0.0
    %v4819 = vmax.f32 %v4281, 0.0
    %v4820 = vmax.f32 %v4286, 0.0
    %v4821 = vmax.f32 %v4291, 0.0
    %v4822 = vmax.f32 %v4296, 0.0
    %v4823 = vmax.f32 %v4301, 0.0
    %v4824 = vmax.f32 %v4306, 0.0
    %v4825 = vmax.f32 %v4311, 0.0
    %v4826 = vmax.f32 %v4316, 0.0
    %v4827 = vmax.f32 %v4321, 0.0
    %v4828 = vmax.f32 %v4326, 0.0
    %v4829 = vmax.f32 %v4331, 0.0
    %v4830 = vmax.f32 %v4336, 0.0
    %v4831 = vmax.f32 %v4341, 0.0
    %v4832 = vmax.f32 %v4346, 0.0
    %v4833 = vmax.f32 %v4351, 0.0
    %v4834 = vmax.f32 %v4356, 0.0
    %v4835 = vmax.f32 %v4361, 0.0
    %v4836 = vmax.f32 %v4366, 0.0
    %v4837 = vmax.f32 %v4371, 0.0
    %v4838 = vmax.f32 %v4376, 0.0
    %v4839 = vmax.f32 %v4381, 0.0
    %v4840 = vmax.f32 %v4386, 0.0
    %v4841 = vmax.f32 %v4391, 0.0
    %v4842 = vmax.f32 %v4396, 0.0
    %v4843 = vmax.f32 %v4401, 0.0
    %v4844 = vmax.f32 %v4406, 0.0
    %v4845 = vmax.f32 %v4411, 0.0
    %v4846 = vmax.f32 %v4416, 0.0
    %v4847 = vmax.f32 %v4421, 0.0
    %v4848 = vmax.f32 %v4426, 0.0
    %v4849 = vmax.f32 %v4431, 0.0
    %v4850 = vmax.f32 %v4436, 0.0
    %v4851 = vmax.f32 %v4441, 0.0
    %v4852 = vmax.f32 %v4446, 0.0
    %v4853 = vmax.f32 %v4451, 0.0
    %v4854 = vmax.f32 %v4456, 0.0
    %v4855 = vmax.f32 %v4461, 0.0
    %v4856 = vmax.f32 %v4466, 0.0
    %v4857 = vmax.f32 %v4471, 0.0
    %v4858 = vmax.f32 %v4476, 0.0
    %v4859 = vmax.f32 %v4481, 0.0
    %v4860 = vmax.f32 %v4486, 0.0
    %v4861 = vmax.f32 %v4491, 0.0
    %v4862 = vmax.f32 %v4496, 0.0
    %v4863 = vmax.f32 %v4501, 0.0
    %v4864 = vmax.f32 %v4506, 0.0
    %v4865 = vmax.f32 %v4511, 0.0
    %v4866 = vmax.f32 %v4516, 0.0
    %v4867 = vmax.f32 %v4521, 0.0
    %v4868 = vmax.f32 %v4526, 0.0
    %v4869 = vmax.f32 %v4531, 0.0
    %v4870 = vmax.f32 %v4536, 0.0
    %v4871 = vmax.f32 %v4541, 0.0
    %v4872 = vmax.f32 %v4546, 0.0
    %v4873 = vmax.f32 %v4551, 0.0
    %v4874 = vmax.f32 %v4556, 0.0
    %v4875 = vmax.f32 %v4561, 0.0
    %v4876 = vmax.f32 %v4566, 0.0
    %v4877 = vmax.f32 %v4571, 0.0
    %v4878 = vmax.f32 %v4576, 0.0
    %v4879 = vmax.f32 %v4581, 0.0
    %v4880 = vmax.f32 %v4586, 0.0
    %v4881 = vmax.f32 %v4591, 0.0
    %v4882 = vmax.f32 %v4596, 0.0
    %v4883 = vmax.f32 %v4601, 0.0
    %v4884 = vmax.f32 %v4606, 0.0
    %v4885 = vmax.f32 %v4611, 0.0
    %v4886 = vmax.f32 %v4616, 0.0
    %v4887 = vmax.f32 %v4621, 0.0
    %v4888 = vmax.f32 %v4626, 0.0
    %v4889 = vmax.f32 %v4631, 0.0
    %v4890 = vmax.f32 %v4636, 0.0
    %v4891 = vmax.f32 %v4641, 0.0
    %v4892 = vmax.f32 %v4646, 0.0
    %v4893 = vmax.f32 %v4651, 0.0
    %v4894 = vmax.f32 %v4656, 0.0
    %v4895 = vmax.f32 %v4661, 0.0
    %v4896 = vmax.f32 %v4666, 0.0
    %v4897 = vmax.f32 %v4671, 0.0
    %v4898 = vmax.f32 %v4676, 0.0
    %v4899 = vmax.f32 %v4681, 0.0
    %v4900 = vmax.f32 %v4686, 0.0
    %v4901 = vmax.f32 %v4691, 0.0
    %v4902 = vmax.f32 %v4696, 0.0
    %v4903 = vmax.f32 %v4701, 0.0
    %v4904 = vmax.f32 %v4706, 0.0
    %v4905 = vmax.f32 %v4711, 0.0
    %v4906 = vmax.f32 %v4716, 0.0
    %v4907 = vmax.f32 %v4721, 0.0
    %v4908 = vmax.f32 %v4726, 0.0
    %v4909 = vmax.f32 %v4731, 0.0
    %v4910 = vmax.f32 %v4736, 0.0
    %v4911 = vmax.f32 %v4741, 0.0
    %v4912 = vmax.f32 %v4746, 0.0
    %v4913 = vmax.f32 %v4751, 0.0
    %v4914 = vmax.f32 %v4756, 0.0
    %v4915 = vmax.f32 %v4761, 0.0
    %v4916 = vmax.f32 %v4766, 0.0
    %v4917 = vmax.f32 %v4771, 0.0
    %v4918 = vmax.f32 %v4776, 0.0
    %v4919 = vmax.f32 %v4781, 0.0
    %v4920 = vmax.f32 %v4786, 0.0
    %v4921 = vmax.f32 %v4791, 0.0
    %v4922 = vpack.c.bf16 %v4795, %v4794
    %v4923 = vpack.c.bf16 %v4797, %v4796
    %v4924 = vpack.c.bf16 %v4799, %v4798
    %v4925 = vpack.c.bf16 %v4801, %v4800
    %v4926 = vpack.c.bf16 %v4803, %v4802
    %v4927 = vpack.c.bf16 %v4805, %v4804
    %v4928 = vpack.c.bf16 %v4807, %v4806
    %v4929 = vpack.c.bf16 %v4809, %v4808
    %v4930 = vpack.c.bf16 %v4811, %v4810
    %v4931 = vpack.c.bf16 %v4813, %v4812
    %v4932 = vpack.c.bf16 %v4815, %v4814
    %v4933 = vpack.c.bf16 %v4817, %v4816
    %v4934 = vpack.c.bf16 %v4819, %v4818
    %v4935 = vpack.c.bf16 %v4821, %v4820
    %v4936 = vpack.c.bf16 %v4823, %v4822
    %v4937 = vpack.c.bf16 %v4825, %v4824
    %v4938 = vpack.c.bf16 %v4827, %v4826
    %v4939 = vpack.c.bf16 %v4829, %v4828
    %v4940 = vpack.c.bf16 %v4831, %v4830
    %v4941 = vpack.c.bf16 %v4833, %v4832
    %v4942 = vpack.c.bf16 %v4835, %v4834
    %v4943 = vpack.c.bf16 %v4837, %v4836
    %v4944 = vpack.c.bf16 %v4839, %v4838
    %v4945 = vpack.c.bf16 %v4841, %v4840
    %v4946 = vpack.c.bf16 %v4843, %v4842
    %v4947 = vpack.c.bf16 %v4845, %v4844
    %v4948 = vpack.c.bf16 %v4847, %v4846
    %v4949 = vpack.c.bf16 %v4849, %v4848
    %v4950 = vpack.c.bf16 %v4851, %v4850
    %v4951 = vpack.c.bf16 %v4853, %v4852
    %v4952 = vpack.c.bf16 %v4855, %v4854
    %v4953 = vpack.c.bf16 %v4857, %v4856
    %v4954 = vpack.c.bf16 %v4859, %v4858
    %v4955 = vpack.c.bf16 %v4861, %v4860
    %v4956 = vpack.c.bf16 %v4863, %v4862
    %v4957 = vpack.c.bf16 %v4865, %v4864
    %v4958 = vpack.c.bf16 %v4867, %v4866
    %v4959 = vpack.c.bf16 %v4869, %v4868
    %v4960 = vpack.c.bf16 %v4871, %v4870
    %v4961 = vpack.c.bf16 %v4873, %v4872
    %v4962 = vpack.c.bf16 %v4875, %v4874
    %v4963 = vpack.c.bf16 %v4877, %v4876
    %v4964 = vpack.c.bf16 %v4879, %v4878
    %v4965 = vpack.c.bf16 %v4881, %v4880
    %v4966 = vpack.c.bf16 %v4883, %v4882
    %v4967 = vpack.c.bf16 %v4885, %v4884
    %v4968 = vpack.c.bf16 %v4887, %v4886
    %v4969 = vpack.c.bf16 %v4889, %v4888
    %v4970 = vpack.c.bf16 %v4891, %v4890
    %v4971 = vpack.c.bf16 %v4893, %v4892
    %v4972 = vpack.c.bf16 %v4895, %v4894
    %v4973 = vpack.c.bf16 %v4897, %v4896
    %v4974 = vpack.c.bf16 %v4899, %v4898
    %v4975 = vpack.c.bf16 %v4901, %v4900
    %v4976 = vpack.c.bf16 %v4903, %v4902
    %v4977 = vpack.c.bf16 %v4905, %v4904
    %v4978 = vpack.c.bf16 %v4907, %v4906
    %v4979 = vpack.c.bf16 %v4909, %v4908
    %v4980 = vpack.c.bf16 %v4911, %v4910
    %v4981 = vpack.c.bf16 %v4913, %v4912
    %v4982 = vpack.c.bf16 %v4915, %v4914
    %v4983 = vpack.c.bf16 %v4917, %v4916
    %v4984 = vpack.c.bf16 %v4919, %v4918
    %v4985 = vpack.c.bf16 %v4921, %v4920
    %vm4986 = vcmask 523264
    %4987 = vst.msk [vmem:[#allocation2] sm:$0xff] %vm4986, %v4922
    %4988 = vst.msk [vmem:[#allocation2 + $0x8] sm:$0xff] %vm4986, %v4923
    %4989 = vst.msk [vmem:[#allocation2 + $0x10] sm:$0xff] %vm4986, %v4924
    %4990 = vst.msk [vmem:[#allocation2 + $0x18] sm:$0xff] %vm4986, %v4925
    %4991 = vst.msk [vmem:[#allocation2 + $0x20] sm:$0xff] %vm4986, %v4926
    %4992 = vst.msk [vmem:[#allocation2 + $0x28] sm:$0xff] %vm4986, %v4927
    %4993 = vst.msk [vmem:[#allocation2 + $0x30] sm:$0xff] %vm4986, %v4928
    %4994 = vst.msk [vmem:[#allocation2 + $0x38] sm:$0xff] %vm4986, %v4929
    %4995 = vst.msk [vmem:[#allocation2 + $0x40] sm:$0xff] %vm4986, %v4930
    %4996 = vst.msk [vmem:[#allocation2 + $0x48] sm:$0xff] %vm4986, %v4931
    %4997 = vst.msk [vmem:[#allocation2 + $0x50] sm:$0xff] %vm4986, %v4932
    %4998 = vst.msk [vmem:[#allocation2 + $0x58] sm:$0xff] %vm4986, %v4933
    %4999 = vst.msk [vmem:[#allocation2 + $0x60] sm:$0xff] %vm4986, %v4934
    %5000 = vst.msk [vmem:[#allocation2 + $0x68] sm:$0xff] %vm4986, %v4935
    %5001 = vst.msk [vmem:[#allocation2 + $0x70] sm:$0xff] %vm4986, %v4936
    %5002 = vst.msk [vmem:[#allocation2 + $0x78] sm:$0xff] %vm4986, %v4937
    %5003 = vst.msk [vmem:[#allocation2 + $0x80] sm:$0xff] %vm4986, %v4938
    %5004 = vst.msk [vmem:[#allocation2 + $0x88] sm:$0xff] %vm4986, %v4939
    %5005 = vst.msk [vmem:[#allocation2 + $0x90] sm:$0xff] %vm4986, %v4940
    %5006 = vst.msk [vmem:[#allocation2 + $0x98] sm:$0xff] %vm4986, %v4941
    %5007 = vst.msk [vmem:[#allocation2 + $0xa0] sm:$0xff] %vm4986, %v4942
    %5008 = vst.msk [vmem:[#allocation2 + $0xa8] sm:$0xff] %vm4986, %v4943
    %5009 = vst.msk [vmem:[#allocation2 + $0xb0] sm:$0xff] %vm4986, %v4944
    %5010 = vst.msk [vmem:[#allocation2 + $0xb8] sm:$0xff] %vm4986, %v4945
    %5011 = vst.msk [vmem:[#allocation2 + $0xc0] sm:$0xff] %vm4986, %v4946
    %5012 = vst.msk [vmem:[#allocation2 + $0xc8] sm:$0xff] %vm4986, %v4947
    %5013 = vst.msk [vmem:[#allocation2 + $0xd0] sm:$0xff] %vm4986, %v4948
    %5014 = vst.msk [vmem:[#allocation2 + $0xd8] sm:$0xff] %vm4986, %v4949
    %5015 = vst.msk [vmem:[#allocation2 + $0xe0] sm:$0xff] %vm4986, %v4950
    %5016 = vst.msk [vmem:[#allocation2 + $0xe8] sm:$0xff] %vm4986, %v4951
    %5017 = vst.msk [vmem:[#allocation2 + $0xf0] sm:$0xff] %vm4986, %v4952
    %5018 = vst.msk [vmem:[#allocation2 + $0xf8] sm:$0xff] %vm4986, %v4953
    %5019 = vst.msk [vmem:[#allocation2 + $0x100] sm:$0xff] %vm4986, %v4954
    %5020 = vst.msk [vmem:[#allocation2 + $0x108] sm:$0xff] %vm4986, %v4955
    %5021 = vst.msk [vmem:[#allocation2 + $0x110] sm:$0xff] %vm4986, %v4956
    %5022 = vst.msk [vmem:[#allocation2 + $0x118] sm:$0xff] %vm4986, %v4957
    %5023 = vst.msk [vmem:[#allocation2 + $0x120] sm:$0xff] %vm4986, %v4958
    %5024 = vst.msk [vmem:[#allocation2 + $0x128] sm:$0xff] %vm4986, %v4959
    %5025 = vst.msk [vmem:[#allocation2 + $0x130] sm:$0xff] %vm4986, %v4960
    %5026 = vst.msk [vmem:[#allocation2 + $0x138] sm:$0xff] %vm4986, %v4961
    %5027 = vst.msk [vmem:[#allocation2 + $0x140] sm:$0xff] %vm4986, %v4962
    %5028 = vst.msk [vmem:[#allocation2 + $0x148] sm:$0xff] %vm4986, %v4963
    %5029 = vst.msk [vmem:[#allocation2 + $0x150] sm:$0xff] %vm4986, %v4964
    %5030 = vst.msk [vmem:[#allocation2 + $0x158] sm:$0xff] %vm4986, %v4965
    %5031 = vst.msk [vmem:[#allocation2 + $0x160] sm:$0xff] %vm4986, %v4966
    %5032 = vst.msk [vmem:[#allocation2 + $0x168] sm:$0xff] %vm4986, %v4967
    %5033 = vst.msk [vmem:[#allocation2 + $0x170] sm:$0xff] %vm4986, %v4968
    %5034 = vst.msk [vmem:[#allocation2 + $0x178] sm:$0xff] %vm4986, %v4969
    %5035 = vst.msk [vmem:[#allocation2 + $0x180] sm:$0xff] %vm4986, %v4970
    %5036 = vst.msk [vmem:[#allocation2 + $0x188] sm:$0xff] %vm4986, %v4971
    %5037 = vst.msk [vmem:[#allocation2 + $0x190] sm:$0xff] %vm4986, %v4972
    %5038 = vst.msk [vmem:[#allocation2 + $0x198] sm:$0xff] %vm4986, %v4973
    %5039 = vst.msk [vmem:[#allocation2 + $0x1a0] sm:$0xff] %vm4986, %v4974
    %5040 = vst.msk [vmem:[#allocation2 + $0x1a8] sm:$0xff] %vm4986, %v4975
    %5041 = vst.msk [vmem:[#allocation2 + $0x1b0] sm:$0xff] %vm4986, %v4976
    %5042 = vst.msk [vmem:[#allocation2 + $0x1b8] sm:$0xff] %vm4986, %v4977
    %5043 = vst.msk [vmem:[#allocation2 + $0x1c0] sm:$0xff] %vm4986, %v4978
    %5044 = vst.msk [vmem:[#allocation2 + $0x1c8] sm:$0xff] %vm4986, %v4979
    %5045 = vst.msk [vmem:[#allocation2 + $0x1d0] sm:$0xff] %vm4986, %v4980
    %5046 = vst.msk [vmem:[#allocation2 + $0x1d8] sm:$0xff] %vm4986, %v4981
    %5047 = vst.msk [vmem:[#allocation2 + $0x1e0] sm:$0xff] %vm4986, %v4982
    %5048 = vst.msk [vmem:[#allocation2 + $0x1e8] sm:$0xff] %vm4986, %v4983
    %5049 = vst.msk [vmem:[#allocation2 + $0x1f0] sm:$0xff] %vm4986, %v4984
    %5050 = vst.msk [vmem:[#allocation2 + $0x1f8] sm:$0xff] %vm4986, %v4985
    %v5051 = vld [vmem:[#allocation2] sm:$0xff]
    %5052 = vst.msk [vmem:[#allocation3] sm:$0xff] %vm4986, %v5051
    %v5053 = vld [vmem:[#allocation2 + $0x8] sm:$0xff]
    %5055 = vrot.lane.b32.xlu0 %v5053, 64
    %v5056 = vpop.permute.xlu0 %5055
    %vm5058 = vcmask 1048064
    %5059 = vst.msk [vmem:[#allocation3] sm:$0xff] %vm5058, %v5056
    %v5060 = vld [vmem:[#allocation2 + $0x10] sm:$0xff]
    %5061 = vst.msk [vmem:[#allocation3 + $0x8] sm:$0xff] %vm4986, %v5060
    %v5062 = vld [vmem:[#allocation2 + $0x18] sm:$0xff]
    %5064 = vrot.lane.b32.xlu0 %v5062, 64
    %v5065 = vpop.permute.xlu0 %5064
    %5067 = vst.msk [vmem:[#allocation3 + $0x8] sm:$0xff] %vm5058, %v5065
    %v5068 = vld [vmem:[#allocation2 + $0x20] sm:$0xff]
    %5069 = vst.msk [vmem:[#allocation3 + $0x10] sm:$0xff] %vm4986, %v5068
    %v5070 = vld [vmem:[#allocation2 + $0x28] sm:$0xff]
    %5072 = vrot.lane.b32.xlu0 %v5070, 64
    %v5073 = vpop.permute.xlu0 %5072
    %5075 = vst.msk [vmem:[#allocation3 + $0x10] sm:$0xff] %vm5058, %v5073
    %v5076 = vld [vmem:[#allocation2 + $0x30] sm:$0xff]
    %5077 = vst.msk [vmem:[#allocation3 + $0x18] sm:$0xff] %vm4986, %v5076
    %v5078 = vld [vmem:[#allocation2 + $0x38] sm:$0xff]
    %5080 = vrot.lane.b32.xlu0 %v5078, 64
    %v5081 = vpop.permute.xlu0 %5080
    %5083 = vst.msk [vmem:[#allocation3 + $0x18] sm:$0xff] %vm5058, %v5081
    %v5084 = vld [vmem:[#allocation2 + $0x40] sm:$0xff]
    %5085 = vst.msk [vmem:[#allocation3 + $0x20] sm:$0xff] %vm4986, %v5084
    %v5086 = vld [vmem:[#allocation2 + $0x48] sm:$0xff]
    %5088 = vrot.lane.b32.xlu0 %v5086, 64
    %v5089 = vpop.permute.xlu0 %5088
    %5091 = vst.msk [vmem:[#allocation3 + $0x20] sm:$0xff] %vm5058, %v5089
    %v5092 = vld [vmem:[#allocation2 + $0x50] sm:$0xff]
    %5093 = vst.msk [vmem:[#allocation3 + $0x28] sm:$0xff] %vm4986, %v5092
    %v5094 = vld [vmem:[#allocation2 + $0x58] sm:$0xff]
    %5096 = vrot.lane.b32.xlu0 %v5094, 64
    %v5097 = vpop.permute.xlu0 %5096
    %5099 = vst.msk [vmem:[#allocation3 + $0x28] sm:$0xff] %vm5058, %v5097
    %v5100 = vld [vmem:[#allocation2 + $0x60] sm:$0xff]
    %5101 = vst.msk [vmem:[#allocation3 + $0x30] sm:$0xff] %vm4986, %v5100
    %v5102 = vld [vmem:[#allocation2 + $0x68] sm:$0xff]
    %5104 = vrot.lane.b32.xlu0 %v5102, 64
    %v5105 = vpop.permute.xlu0 %5104
    %5107 = vst.msk [vmem:[#allocation3 + $0x30] sm:$0xff] %vm5058, %v5105
    %v5108 = vld [vmem:[#allocation2 + $0x70] sm:$0xff]
    %5109 = vst.msk [vmem:[#allocation3 + $0x38] sm:$0xff] %vm4986, %v5108
    %v5110 = vld [vmem:[#allocation2 + $0x78] sm:$0xff]
    %5112 = vrot.lane.b32.xlu0 %v5110, 64
    %v5113 = vpop.permute.xlu0 %5112
    %5115 = vst.msk [vmem:[#allocation3 + $0x38] sm:$0xff] %vm5058, %v5113
    %v5116 = vld [vmem:[#allocation2 + $0x80] sm:$0xff]
    %5117 = vst.msk [vmem:[#allocation3 + $0x40] sm:$0xff] %vm4986, %v5116
    %v5118 = vld [vmem:[#allocation2 + $0x88] sm:$0xff]
    %5120 = vrot.lane.b32.xlu0 %v5118, 64
    %v5121 = vpop.permute.xlu0 %5120
    %5123 = vst.msk [vmem:[#allocation3 + $0x40] sm:$0xff] %vm5058, %v5121
    %v5124 = vld [vmem:[#allocation2 + $0x90] sm:$0xff]
    %5125 = vst.msk [vmem:[#allocation3 + $0x48] sm:$0xff] %vm4986, %v5124
    %v5126 = vld [vmem:[#allocation2 + $0x98] sm:$0xff]
    %5128 = vrot.lane.b32.xlu0 %v5126, 64
    %v5129 = vpop.permute.xlu0 %5128
    %5131 = vst.msk [vmem:[#allocation3 + $0x48] sm:$0xff] %vm5058, %v5129
    %v5132 = vld [vmem:[#allocation2 + $0xa0] sm:$0xff]
    %5133 = vst.msk [vmem:[#allocation3 + $0x50] sm:$0xff] %vm4986, %v5132
    %v5134 = vld [vmem:[#allocation2 + $0xa8] sm:$0xff]
    %5136 = vrot.lane.b32.xlu0 %v5134, 64
    %v5137 = vpop.permute.xlu0 %5136
    %5139 = vst.msk [vmem:[#allocation3 + $0x50] sm:$0xff] %vm5058, %v5137
    %v5140 = vld [vmem:[#allocation2 + $0xb0] sm:$0xff]
    %5141 = vst.msk [vmem:[#allocation3 + $0x58] sm:$0xff] %vm4986, %v5140
    %v5142 = vld [vmem:[#allocation2 + $0xb8] sm:$0xff]
    %5144 = vrot.lane.b32.xlu0 %v5142, 64
    %v5145 = vpop.permute.xlu0 %5144
    %5147 = vst.msk [vmem:[#allocation3 + $0x58] sm:$0xff] %vm5058, %v5145
    %v5148 = vld [vmem:[#allocation2 + $0xc0] sm:$0xff]
    %5149 = vst.msk [vmem:[#allocation3 + $0x60] sm:$0xff] %vm4986, %v5148
    %v5150 = vld [vmem:[#allocation2 + $0xc8] sm:$0xff]
    %5152 = vrot.lane.b32.xlu0 %v5150, 64
    %v5153 = vpop.permute.xlu0 %5152
    %5155 = vst.msk [vmem:[#allocation3 + $0x60] sm:$0xff] %vm5058, %v5153
    %v5156 = vld [vmem:[#allocation2 + $0xd0] sm:$0xff]
    %5157 = vst.msk [vmem:[#allocation3 + $0x68] sm:$0xff] %vm4986, %v5156
    %v5158 = vld [vmem:[#allocation2 + $0xd8] sm:$0xff]
    %5160 = vrot.lane.b32.xlu0 %v5158, 64
    %v5161 = vpop.permute.xlu0 %5160
    %5163 = vst.msk [vmem:[#allocation3 + $0x68] sm:$0xff] %vm5058, %v5161
    %v5164 = vld [vmem:[#allocation2 + $0xe0] sm:$0xff]
    %5165 = vst.msk [vmem:[#allocation3 + $0x70] sm:$0xff] %vm4986, %v5164
    %v5166 = vld [vmem:[#allocation2 + $0xe8] sm:$0xff]
    %5168 = vrot.lane.b32.xlu0 %v5166, 64
    %v5169 = vpop.permute.xlu0 %5168
    %5171 = vst.msk [vmem:[#allocation3 + $0x70] sm:$0xff] %vm5058, %v5169
    %v5172 = vld [vmem:[#allocation2 + $0xf0] sm:$0xff]
    %5173 = vst.msk [vmem:[#allocation3 + $0x78] sm:$0xff] %vm4986, %v5172
    %v5174 = vld [vmem:[#allocation2 + $0xf8] sm:$0xff]
    %5176 = vrot.lane.b32.xlu0 %v5174, 64
    %v5177 = vpop.permute.xlu0 %5176
    %5179 = vst.msk [vmem:[#allocation3 + $0x78] sm:$0xff] %vm5058, %v5177
    %v5180 = vld [vmem:[#allocation2 + $0x100] sm:$0xff]
    %5181 = vst.msk [vmem:[#allocation3 + $0x80] sm:$0xff] %vm4986, %v5180
    %v5182 = vld [vmem:[#allocation2 + $0x108] sm:$0xff]
    %5184 = vrot.lane.b32.xlu0 %v5182, 64
    %v5185 = vpop.permute.xlu0 %5184
    %5187 = vst.msk [vmem:[#allocation3 + $0x80] sm:$0xff] %vm5058, %v5185
    %v5188 = vld [vmem:[#allocation2 + $0x110] sm:$0xff]
    %5189 = vst.msk [vmem:[#allocation3 + $0x88] sm:$0xff] %vm4986, %v5188
    %v5190 = vld [vmem:[#allocation2 + $0x118] sm:$0xff]
    %5192 = vrot.lane.b32.xlu0 %v5190, 64
    %v5193 = vpop.permute.xlu0 %5192
    %5195 = vst.msk [vmem:[#allocation3 + $0x88] sm:$0xff] %vm5058, %v5193
    %v5196 = vld [vmem:[#allocation2 + $0x120] sm:$0xff]
    %5197 = vst.msk [vmem:[#allocation3 + $0x90] sm:$0xff] %vm4986, %v5196
    %v5198 = vld [vmem:[#allocation2 + $0x128] sm:$0xff]
    %5200 = vrot.lane.b32.xlu0 %v5198, 64
    %v5201 = vpop.permute.xlu0 %5200
    %5203 = vst.msk [vmem:[#allocation3 + $0x90] sm:$0xff] %vm5058, %v5201
    %v5204 = vld [vmem:[#allocation2 + $0x130] sm:$0xff]
    %5205 = vst.msk [vmem:[#allocation3 + $0x98] sm:$0xff] %vm4986, %v5204
    %v5206 = vld [vmem:[#allocation2 + $0x138] sm:$0xff]
    %5208 = vrot.lane.b32.xlu0 %v5206, 64
    %v5209 = vpop.permute.xlu0 %5208
    %5211 = vst.msk [vmem:[#allocation3 + $0x98] sm:$0xff] %vm5058, %v5209
    %v5212 = vld [vmem:[#allocation2 + $0x140] sm:$0xff]
    %5213 = vst.msk [vmem:[#allocation3 + $0xa0] sm:$0xff] %vm4986, %v5212
    %v5214 = vld [vmem:[#allocation2 + $0x148] sm:$0xff]
    %5216 = vrot.lane.b32.xlu0 %v5214, 64
    %v5217 = vpop.permute.xlu0 %5216
    %5219 = vst.msk [vmem:[#allocation3 + $0xa0] sm:$0xff] %vm5058, %v5217
    %v5220 = vld [vmem:[#allocation2 + $0x150] sm:$0xff]
    %5221 = vst.msk [vmem:[#allocation3 + $0xa8] sm:$0xff] %vm4986, %v5220
    %v5222 = vld [vmem:[#allocation2 + $0x158] sm:$0xff]
    %5224 = vrot.lane.b32.xlu0 %v5222, 64
    %v5225 = vpop.permute.xlu0 %5224
    %5227 = vst.msk [vmem:[#allocation3 + $0xa8] sm:$0xff] %vm5058, %v5225
    %v5228 = vld [vmem:[#allocation2 + $0x160] sm:$0xff]
    %5229 = vst.msk [vmem:[#allocation3 + $0xb0] sm:$0xff] %vm4986, %v5228
    %v5230 = vld [vmem:[#allocation2 + $0x168] sm:$0xff]
    %5232 = vrot.lane.b32.xlu0 %v5230, 64
    %v5233 = vpop.permute.xlu0 %5232
    %5235 = vst.msk [vmem:[#allocation3 + $0xb0] sm:$0xff] %vm5058, %v5233
    %v5236 = vld [vmem:[#allocation2 + $0x170] sm:$0xff]
    %5237 = vst.msk [vmem:[#allocation3 + $0xb8] sm:$0xff] %vm4986, %v5236
    %v5238 = vld [vmem:[#allocation2 + $0x178] sm:$0xff]
    %5240 = vrot.lane.b32.xlu0 %v5238, 64
    %v5241 = vpop.permute.xlu0 %5240
    %5243 = vst.msk [vmem:[#allocation3 + $0xb8] sm:$0xff] %vm5058, %v5241
    %v5244 = vld [vmem:[#allocation2 + $0x180] sm:$0xff]
    %5245 = vst.msk [vmem:[#allocation3 + $0xc0] sm:$0xff] %vm4986, %v5244
    %v5246 = vld [vmem:[#allocation2 + $0x188] sm:$0xff]
    %5248 = vrot.lane.b32.xlu0 %v5246, 64
    %v5249 = vpop.permute.xlu0 %5248
    %5251 = vst.msk [vmem:[#allocation3 + $0xc0] sm:$0xff] %vm5058, %v5249
    %v5252 = vld [vmem:[#allocation2 + $0x190] sm:$0xff]
    %5253 = vst.msk [vmem:[#allocation3 + $0xc8] sm:$0xff] %vm4986, %v5252
    %v5254 = vld [vmem:[#allocation2 + $0x198] sm:$0xff]
    %5256 = vrot.lane.b32.xlu0 %v5254, 64
    %v5257 = vpop.permute.xlu0 %5256
    %5259 = vst.msk [vmem:[#allocation3 + $0xc8] sm:$0xff] %vm5058, %v5257
    %v5260 = vld [vmem:[#allocation2 + $0x1a0] sm:$0xff]
    %5261 = vst.msk [vmem:[#allocation3 + $0xd0] sm:$0xff] %vm4986, %v5260
    %v5262 = vld [vmem:[#allocation2 + $0x1a8] sm:$0xff]
    %5264 = vrot.lane.b32.xlu0 %v5262, 64
    %v5265 = vpop.permute.xlu0 %5264
    %5267 = vst.msk [vmem:[#allocation3 + $0xd0] sm:$0xff] %vm5058, %v5265
    %v5268 = vld [vmem:[#allocation2 + $0x1b0] sm:$0xff]
    %5269 = vst.msk [vmem:[#allocation3 + $0xd8] sm:$0xff] %vm4986, %v5268
    %v5270 = vld [vmem:[#allocation2 + $0x1b8] sm:$0xff]
    %5272 = vrot.lane.b32.xlu0 %v5270, 64
    %v5273 = vpop.permute.xlu0 %5272
    %5275 = vst.msk [vmem:[#allocation3 + $0xd8] sm:$0xff] %vm5058, %v5273
    %v5276 = vld [vmem:[#allocation2 + $0x1c0] sm:$0xff]
    %5277 = vst.msk [vmem:[#allocation3 + $0xe0] sm:$0xff] %vm4986, %v5276
    %v5278 = vld [vmem:[#allocation2 + $0x1c8] sm:$0xff]
    %5280 = vrot.lane.b32.xlu0 %v5278, 64
    %v5281 = vpop.permute.xlu0 %5280
    %5283 = vst.msk [vmem:[#allocation3 + $0xe0] sm:$0xff] %vm5058, %v5281
    %v5284 = vld [vmem:[#allocation2 + $0x1d0] sm:$0xff]
    %5285 = vst.msk [vmem:[#allocation3 + $0xe8] sm:$0xff] %vm4986, %v5284
    %v5286 = vld [vmem:[#allocation2 + $0x1d8] sm:$0xff]
    %5288 = vrot.lane.b32.xlu0 %v5286, 64
    %v5289 = vpop.permute.xlu0 %5288
    %5291 = vst.msk [vmem:[#allocation3 + $0xe8] sm:$0xff] %vm5058, %v5289
    %v5292 = vld [vmem:[#allocation2 + $0x1e0] sm:$0xff]
    %5293 = vst.msk [vmem:[#allocation3 + $0xf0] sm:$0xff] %vm4986, %v5292
    %v5294 = vld [vmem:[#allocation2 + $0x1e8] sm:$0xff]
    %5296 = vrot.lane.b32.xlu0 %v5294, 64
    %v5297 = vpop.permute.xlu0 %5296
    %5299 = vst.msk [vmem:[#allocation3 + $0xf0] sm:$0xff] %vm5058, %v5297
    %v5300 = vld [vmem:[#allocation2 + $0x1f0] sm:$0xff]
    %5301 = vst.msk [vmem:[#allocation3 + $0xf8] sm:$0xff] %vm4986, %v5300
    %v5302 = vld [vmem:[#allocation2 + $0x1f8] sm:$0xff]
    %5304 = vrot.lane.b32.xlu0 %v5302, 64
    %v5305 = vpop.permute.xlu0 %5304
    %5307 = vst.msk [vmem:[#allocation3 + $0xf8] sm:$0xff] %vm5058, %v5305
    %s5308 = smul.u32 4, 512
    %s5309 = smul.u32 %s5308, 1
    %s5310 = sshll.u32 %s5309, 4
    %5311 = dma.done [#allocation5], %s5310
    %v5312 = vld [vmem:[#allocation3] sm:$0xff]
    %v5313 = vld [vmem:[#allocation3 + $0x8] sm:$0xff]
    %v5314 = vld [vmem:[#allocation3 + $0x10] sm:$0xff]
    %v5315 = vld [vmem:[#allocation3 + $0x18] sm:$0xff]
    %v5316 = vld [vmem:[#allocation3 + $0x20] sm:$0xff]
    %v5317 = vld [vmem:[#allocation3 + $0x28] sm:$0xff]
    %v5318 = vld [vmem:[#allocation3 + $0x30] sm:$0xff]
    %v5319 = vld [vmem:[#allocation3 + $0x38] sm:$0xff]
    %v5320 = vld [vmem:[#allocation3 + $0x40] sm:$0xff]
    %v5321 = vld [vmem:[#allocation3 + $0x48] sm:$0xff]
    %v5322 = vld [vmem:[#allocation3 + $0x50] sm:$0xff]
    %v5323 = vld [vmem:[#allocation3 + $0x58] sm:$0xff]
    %v5324 = vld [vmem:[#allocation3 + $0x60] sm:$0xff]
    %v5325 = vld [vmem:[#allocation3 + $0x68] sm:$0xff]
    %v5326 = vld [vmem:[#allocation3 + $0x70] sm:$0xff]
    %v5327 = vld [vmem:[#allocation3 + $0x78] sm:$0xff]
    %v5328 = vld [vmem:[#allocation3 + $0x80] sm:$0xff]
    %v5329 = vld [vmem:[#allocation3 + $0x88] sm:$0xff]
    %v5330 = vld [vmem:[#allocation3 + $0x90] sm:$0xff]
    %v5331 = vld [vmem:[#allocation3 + $0x98] sm:$0xff]
    %v5332 = vld [vmem:[#allocation3 + $0xa0] sm:$0xff]
    %v5333 = vld [vmem:[#allocation3 + $0xa8] sm:$0xff]
    %v5334 = vld [vmem:[#allocation3 + $0xb0] sm:$0xff]
    %v5335 = vld [vmem:[#allocation3 + $0xb8] sm:$0xff]
    %v5336 = vld [vmem:[#allocation3 + $0xc0] sm:$0xff]
    %v5337 = vld [vmem:[#allocation3 + $0xc8] sm:$0xff]
    %v5338 = vld [vmem:[#allocation3 + $0xd0] sm:$0xff]
    %v5339 = vld [vmem:[#allocation3 + $0xd8] sm:$0xff]
    %v5340 = vld [vmem:[#allocation3 + $0xe0] sm:$0xff]
    %v5341 = vld [vmem:[#allocation3 + $0xe8] sm:$0xff]
    %v5342 = vld [vmem:[#allocation3 + $0xf0] sm:$0xff]
    %v5343 = vld [vmem:[#allocation3 + $0xf8] sm:$0xff]
    %v5344 = vld [vmem:[#allocation4] sm:$0xff]
    %v5345 = vld [vmem:[#allocation4 + $0x8] sm:$0xff]
    %v5346 = vld [vmem:[#allocation4 + $0x10] sm:$0xff]
    %v5347 = vld [vmem:[#allocation4 + $0x18] sm:$0xff]
    %v5348 = vld [vmem:[#allocation4 + $0x20] sm:$0xff]
    %v5349 = vld [vmem:[#allocation4 + $0x28] sm:$0xff]
    %v5350 = vld [vmem:[#allocation4 + $0x30] sm:$0xff]
    %v5351 = vld [vmem:[#allocation4 + $0x38] sm:$0xff]
    %v5352 = vld [vmem:[#allocation4 + $0x40] sm:$0xff]
    %v5353 = vld [vmem:[#allocation4 + $0x48] sm:$0xff]
    %v5354 = vld [vmem:[#allocation4 + $0x50] sm:$0xff]
    %v5355 = vld [vmem:[#allocation4 + $0x58] sm:$0xff]
    %v5356 = vld [vmem:[#allocation4 + $0x60] sm:$0xff]
    %v5357 = vld [vmem:[#allocation4 + $0x68] sm:$0xff]
    %v5358 = vld [vmem:[#allocation4 + $0x70] sm:$0xff]
    %v5359 = vld [vmem:[#allocation4 + $0x78] sm:$0xff]
    %v5360 = vld [vmem:[#allocation4 + $0x80] sm:$0xff]
    %v5361 = vld [vmem:[#allocation4 + $0x88] sm:$0xff]
    %v5362 = vld [vmem:[#allocation4 + $0x90] sm:$0xff]
    %v5363 = vld [vmem:[#allocation4 + $0x98] sm:$0xff]
    %v5364 = vld [vmem:[#allocation4 + $0xa0] sm:$0xff]
    %v5365 = vld [vmem:[#allocation4 + $0xa8] sm:$0xff]
    %v5366 = vld [vmem:[#allocation4 + $0xb0] sm:$0xff]
    %v5367 = vld [vmem:[#allocation4 + $0xb8] sm:$0xff]
    %v5368 = vld [vmem:[#allocation4 + $0xc0] sm:$0xff]
    %v5369 = vld [vmem:[#allocation4 + $0xc8] sm:$0xff]
    %v5370 = vld [vmem:[#allocation4 + $0xd0] sm:$0xff]
    %v5371 = vld [vmem:[#allocation4 + $0xd8] sm:$0xff]
    %v5372 = vld [vmem:[#allocation4 + $0xe0] sm:$0xff]
    %v5373 = vld [vmem:[#allocation4 + $0xe8] sm:$0xff]
    %v5374 = vld [vmem:[#allocation4 + $0xf0] sm:$0xff]
    %v5375 = vld [vmem:[#allocation4 + $0xf8] sm:$0xff]
    %v5376 = vld [vmem:[#allocation4 + $0x100] sm:$0xff]
    %v5377 = vld [vmem:[#allocation4 + $0x108] sm:$0xff]
    %v5378 = vld [vmem:[#allocation4 + $0x110] sm:$0xff]
    %v5379 = vld [vmem:[#allocation4 + $0x118] sm:$0xff]
    %v5380 = vld [vmem:[#allocation4 + $0x120] sm:$0xff]
    %v5381 = vld [vmem:[#allocation4 + $0x128] sm:$0xff]
    %v5382 = vld [vmem:[#allocation4 + $0x130] sm:$0xff]
    %v5383 = vld [vmem:[#allocation4 + $0x138] sm:$0xff]
    %v5384 = vld [vmem:[#allocation4 + $0x140] sm:$0xff]
    %v5385 = vld [vmem:[#allocation4 + $0x148] sm:$0xff]
    %v5386 = vld [vmem:[#allocation4 + $0x150] sm:$0xff]
    %v5387 = vld [vmem:[#allocation4 + $0x158] sm:$0xff]
    %v5388 = vld [vmem:[#allocation4 + $0x160] sm:$0xff]
    %v5389 = vld [vmem:[#allocation4 + $0x168] sm:$0xff]
    %v5390 = vld [vmem:[#allocation4 + $0x170] sm:$0xff]
    %v5391 = vld [vmem:[#allocation4 + $0x178] sm:$0xff]
    %v5392 = vld [vmem:[#allocation4 + $0x180] sm:$0xff]
    %v5393 = vld [vmem:[#allocation4 + $0x188] sm:$0xff]
    %v5394 = vld [vmem:[#allocation4 + $0x190] sm:$0xff]
    %v5395 = vld [vmem:[#allocation4 + $0x198] sm:$0xff]
    %v5396 = vld [vmem:[#allocation4 + $0x1a0] sm:$0xff]
    %v5397 = vld [vmem:[#allocation4 + $0x1a8] sm:$0xff]
    %v5398 = vld [vmem:[#allocation4 + $0x1b0] sm:$0xff]
    %v5399 = vld [vmem:[#allocation4 + $0x1b8] sm:$0xff]
    %v5400 = vld [vmem:[#allocation4 + $0x1c0] sm:$0xff]
    %v5401 = vld [vmem:[#allocation4 + $0x1c8] sm:$0xff]
    %v5402 = vld [vmem:[#allocation4 + $0x1d0] sm:$0xff]
    %v5403 = vld [vmem:[#allocation4 + $0x1d8] sm:$0xff]
    %v5404 = vld [vmem:[#allocation4 + $0x1e0] sm:$0xff]
    %v5405 = vld [vmem:[#allocation4 + $0x1e8] sm:$0xff]
    %v5406 = vld [vmem:[#allocation4 + $0x1f0] sm:$0xff]
    %v5407 = vld [vmem:[#allocation4 + $0x1f8] sm:$0xff]
    %v5408 = vld [vmem:[#allocation4 + $0x200] sm:$0xff]
    %v5409 = vld [vmem:[#allocation4 + $0x208] sm:$0xff]
    %v5410 = vld [vmem:[#allocation4 + $0x210] sm:$0xff]
    %v5411 = vld [vmem:[#allocation4 + $0x218] sm:$0xff]
    %v5412 = vld [vmem:[#allocation4 + $0x220] sm:$0xff]
    %v5413 = vld [vmem:[#allocation4 + $0x228] sm:$0xff]
    %v5414 = vld [vmem:[#allocation4 + $0x230] sm:$0xff]
    %v5415 = vld [vmem:[#allocation4 + $0x238] sm:$0xff]
    %v5416 = vld [vmem:[#allocation4 + $0x240] sm:$0xff]
    %v5417 = vld [vmem:[#allocation4 + $0x248] sm:$0xff]
    %v5418 = vld [vmem:[#allocation4 + $0x250] sm:$0xff]
    %v5419 = vld [vmem:[#allocation4 + $0x258] sm:$0xff]
    %v5420 = vld [vmem:[#allocation4 + $0x260] sm:$0xff]
    %v5421 = vld [vmem:[#allocation4 + $0x268] sm:$0xff]
    %v5422 = vld [vmem:[#allocation4 + $0x270] sm:$0xff]
    %v5423 = vld [vmem:[#allocation4 + $0x278] sm:$0xff]
    %v5424 = vld [vmem:[#allocation4 + $0x280] sm:$0xff]
    %v5425 = vld [vmem:[#allocation4 + $0x288] sm:$0xff]
    %v5426 = vld [vmem:[#allocation4 + $0x290] sm:$0xff]
    %v5427 = vld [vmem:[#allocation4 + $0x298] sm:$0xff]
    %v5428 = vld [vmem:[#allocation4 + $0x2a0] sm:$0xff]
    %v5429 = vld [vmem:[#allocation4 + $0x2a8] sm:$0xff]
    %v5430 = vld [vmem:[#allocation4 + $0x2b0] sm:$0xff]
    %v5431 = vld [vmem:[#allocation4 + $0x2b8] sm:$0xff]
    %v5432 = vld [vmem:[#allocation4 + $0x2c0] sm:$0xff]
    %v5433 = vld [vmem:[#allocation4 + $0x2c8] sm:$0xff]
    %v5434 = vld [vmem:[#allocation4 + $0x2d0] sm:$0xff]
    %v5435 = vld [vmem:[#allocation4 + $0x2d8] sm:$0xff]
    %v5436 = vld [vmem:[#allocation4 + $0x2e0] sm:$0xff]
    %v5437 = vld [vmem:[#allocation4 + $0x2e8] sm:$0xff]
    %v5438 = vld [vmem:[#allocation4 + $0x2f0] sm:$0xff]
    %v5439 = vld [vmem:[#allocation4 + $0x2f8] sm:$0xff]
    %v5440 = vld [vmem:[#allocation4 + $0x300] sm:$0xff]
    %v5441 = vld [vmem:[#allocation4 + $0x308] sm:$0xff]
    %v5442 = vld [vmem:[#allocation4 + $0x310] sm:$0xff]
    %v5443 = vld [vmem:[#allocation4 + $0x318] sm:$0xff]
    %v5444 = vld [vmem:[#allocation4 + $0x320] sm:$0xff]
    %v5445 = vld [vmem:[#allocation4 + $0x328] sm:$0xff]
    %v5446 = vld [vmem:[#allocation4 + $0x330] sm:$0xff]
    %v5447 = vld [vmem:[#allocation4 + $0x338] sm:$0xff]
    %v5448 = vld [vmem:[#allocation4 + $0x340] sm:$0xff]
    %v5449 = vld [vmem:[#allocation4 + $0x348] sm:$0xff]
    %v5450 = vld [vmem:[#allocation4 + $0x350] sm:$0xff]
    %v5451 = vld [vmem:[#allocation4 + $0x358] sm:$0xff]
    %v5452 = vld [vmem:[#allocation4 + $0x360] sm:$0xff]
    %v5453 = vld [vmem:[#allocation4 + $0x368] sm:$0xff]
    %v5454 = vld [vmem:[#allocation4 + $0x370] sm:$0xff]
    %v5455 = vld [vmem:[#allocation4 + $0x378] sm:$0xff]
    %v5456 = vld [vmem:[#allocation4 + $0x380] sm:$0xff]
    %v5457 = vld [vmem:[#allocation4 + $0x388] sm:$0xff]
    %v5458 = vld [vmem:[#allocation4 + $0x390] sm:$0xff]
    %v5459 = vld [vmem:[#allocation4 + $0x398] sm:$0xff]
    %v5460 = vld [vmem:[#allocation4 + $0x3a0] sm:$0xff]
    %v5461 = vld [vmem:[#allocation4 + $0x3a8] sm:$0xff]
    %v5462 = vld [vmem:[#allocation4 + $0x3b0] sm:$0xff]
    %v5463 = vld [vmem:[#allocation4 + $0x3b8] sm:$0xff]
    %v5464 = vld [vmem:[#allocation4 + $0x3c0] sm:$0xff]
    %v5465 = vld [vmem:[#allocation4 + $0x3c8] sm:$0xff]
    %v5466 = vld [vmem:[#allocation4 + $0x3d0] sm:$0xff]
    %v5467 = vld [vmem:[#allocation4 + $0x3d8] sm:$0xff]
    %v5468 = vld [vmem:[#allocation4 + $0x3e0] sm:$0xff]
    %v5469 = vld [vmem:[#allocation4 + $0x3e8] sm:$0xff]
    %v5470 = vld [vmem:[#allocation4 + $0x3f0] sm:$0xff]
    %v5471 = vld [vmem:[#allocation4 + $0x3f8] sm:$0xff]
    %v5472 = vld [vmem:[#allocation4 + $0x400] sm:$0xff]
    %v5473 = vld [vmem:[#allocation4 + $0x408] sm:$0xff]
    %v5474 = vld [vmem:[#allocation4 + $0x410] sm:$0xff]
    %v5475 = vld [vmem:[#allocation4 + $0x418] sm:$0xff]
    %v5476 = vld [vmem:[#allocation4 + $0x420] sm:$0xff]
    %v5477 = vld [vmem:[#allocation4 + $0x428] sm:$0xff]
    %v5478 = vld [vmem:[#allocation4 + $0x430] sm:$0xff]
    %v5479 = vld [vmem:[#allocation4 + $0x438] sm:$0xff]
    %v5480 = vld [vmem:[#allocation4 + $0x440] sm:$0xff]
    %v5481 = vld [vmem:[#allocation4 + $0x448] sm:$0xff]
    %v5482 = vld [vmem:[#allocation4 + $0x450] sm:$0xff]
    %v5483 = vld [vmem:[#allocation4 + $0x458] sm:$0xff]
    %v5484 = vld [vmem:[#allocation4 + $0x460] sm:$0xff]
    %v5485 = vld [vmem:[#allocation4 + $0x468] sm:$0xff]
    %v5486 = vld [vmem:[#allocation4 + $0x470] sm:$0xff]
    %v5487 = vld [vmem:[#allocation4 + $0x478] sm:$0xff]
    %v5488 = vld [vmem:[#allocation4 + $0x480] sm:$0xff]
    %v5489 = vld [vmem:[#allocation4 + $0x488] sm:$0xff]
    %v5490 = vld [vmem:[#allocation4 + $0x490] sm:$0xff]
    %v5491 = vld [vmem:[#allocation4 + $0x498] sm:$0xff]
    %v5492 = vld [vmem:[#allocation4 + $0x4a0] sm:$0xff]
    %v5493 = vld [vmem:[#allocation4 + $0x4a8] sm:$0xff]
    %v5494 = vld [vmem:[#allocation4 + $0x4b0] sm:$0xff]
    %v5495 = vld [vmem:[#allocation4 + $0x4b8] sm:$0xff]
    %v5496 = vld [vmem:[#allocation4 + $0x4c0] sm:$0xff]
    %v5497 = vld [vmem:[#allocation4 + $0x4c8] sm:$0xff]
    %v5498 = vld [vmem:[#allocation4 + $0x4d0] sm:$0xff]
    %v5499 = vld [vmem:[#allocation4 + $0x4d8] sm:$0xff]
    %v5500 = vld [vmem:[#allocation4 + $0x4e0] sm:$0xff]
    %v5501 = vld [vmem:[#allocation4 + $0x4e8] sm:$0xff]
    %v5502 = vld [vmem:[#allocation4 + $0x4f0] sm:$0xff]
    %v5503 = vld [vmem:[#allocation4 + $0x4f8] sm:$0xff]
    %v5504 = vld [vmem:[#allocation4 + $0x500] sm:$0xff]
    %v5505 = vld [vmem:[#allocation4 + $0x508] sm:$0xff]
    %v5506 = vld [vmem:[#allocation4 + $0x510] sm:$0xff]
    %v5507 = vld [vmem:[#allocation4 + $0x518] sm:$0xff]
    %v5508 = vld [vmem:[#allocation4 + $0x520] sm:$0xff]
    %v5509 = vld [vmem:[#allocation4 + $0x528] sm:$0xff]
    %v5510 = vld [vmem:[#allocation4 + $0x530] sm:$0xff]
    %v5511 = vld [vmem:[#allocation4 + $0x538] sm:$0xff]
    %v5512 = vld [vmem:[#allocation4 + $0x540] sm:$0xff]
    %v5513 = vld [vmem:[#allocation4 + $0x548] sm:$0xff]
    %v5514 = vld [vmem:[#allocation4 + $0x550] sm:$0xff]
    %v5515 = vld [vmem:[#allocation4 + $0x558] sm:$0xff]
    %v5516 = vld [vmem:[#allocation4 + $0x560] sm:$0xff]
    %v5517 = vld [vmem:[#allocation4 + $0x568] sm:$0xff]
    %v5518 = vld [vmem:[#allocation4 + $0x570] sm:$0xff]
    %v5519 = vld [vmem:[#allocation4 + $0x578] sm:$0xff]
    %v5520 = vld [vmem:[#allocation4 + $0x580] sm:$0xff]
    %v5521 = vld [vmem:[#allocation4 + $0x588] sm:$0xff]
    %v5522 = vld [vmem:[#allocation4 + $0x590] sm:$0xff]
    %v5523 = vld [vmem:[#allocation4 + $0x598] sm:$0xff]
    %v5524 = vld [vmem:[#allocation4 + $0x5a0] sm:$0xff]
    %v5525 = vld [vmem:[#allocation4 + $0x5a8] sm:$0xff]
    %v5526 = vld [vmem:[#allocation4 + $0x5b0] sm:$0xff]
    %v5527 = vld [vmem:[#allocation4 + $0x5b8] sm:$0xff]
    %v5528 = vld [vmem:[#allocation4 + $0x5c0] sm:$0xff]
    %v5529 = vld [vmem:[#allocation4 + $0x5c8] sm:$0xff]
    %v5530 = vld [vmem:[#allocation4 + $0x5d0] sm:$0xff]
    %v5531 = vld [vmem:[#allocation4 + $0x5d8] sm:$0xff]
    %v5532 = vld [vmem:[#allocation4 + $0x5e0] sm:$0xff]
    %v5533 = vld [vmem:[#allocation4 + $0x5e8] sm:$0xff]
    %v5534 = vld [vmem:[#allocation4 + $0x5f0] sm:$0xff]
    %v5535 = vld [vmem:[#allocation4 + $0x5f8] sm:$0xff]
    %v5536 = vld [vmem:[#allocation4 + $0x600] sm:$0xff]
    %v5537 = vld [vmem:[#allocation4 + $0x608] sm:$0xff]
    %v5538 = vld [vmem:[#allocation4 + $0x610] sm:$0xff]
    %v5539 = vld [vmem:[#allocation4 + $0x618] sm:$0xff]
    %v5540 = vld [vmem:[#allocation4 + $0x620] sm:$0xff]
    %v5541 = vld [vmem:[#allocation4 + $0x628] sm:$0xff]
    %v5542 = vld [vmem:[#allocation4 + $0x630] sm:$0xff]
    %v5543 = vld [vmem:[#allocation4 + $0x638] sm:$0xff]
    %v5544 = vld [vmem:[#allocation4 + $0x640] sm:$0xff]
    %v5545 = vld [vmem:[#allocation4 + $0x648] sm:$0xff]
    %v5546 = vld [vmem:[#allocation4 + $0x650] sm:$0xff]
    %v5547 = vld [vmem:[#allocation4 + $0x658] sm:$0xff]
    %v5548 = vld [vmem:[#allocation4 + $0x660] sm:$0xff]
    %v5549 = vld [vmem:[#allocation4 + $0x668] sm:$0xff]
    %v5550 = vld [vmem:[#allocation4 + $0x670] sm:$0xff]
    %v5551 = vld [vmem:[#allocation4 + $0x678] sm:$0xff]
    %v5552 = vld [vmem:[#allocation4 + $0x680] sm:$0xff]
    %v5553 = vld [vmem:[#allocation4 + $0x688] sm:$0xff]
    %v5554 = vld [vmem:[#allocation4 + $0x690] sm:$0xff]
    %v5555 = vld [vmem:[#allocation4 + $0x698] sm:$0xff]
    %v5556 = vld [vmem:[#allocation4 + $0x6a0] sm:$0xff]
    %v5557 = vld [vmem:[#allocation4 + $0x6a8] sm:$0xff]
    %v5558 = vld [vmem:[#allocation4 + $0x6b0] sm:$0xff]
    %v5559 = vld [vmem:[#allocation4 + $0x6b8] sm:$0xff]
    %v5560 = vld [vmem:[#allocation4 + $0x6c0] sm:$0xff]
    %v5561 = vld [vmem:[#allocation4 + $0x6c8] sm:$0xff]
    %v5562 = vld [vmem:[#allocation4 + $0x6d0] sm:$0xff]
    %v5563 = vld [vmem:[#allocation4 + $0x6d8] sm:$0xff]
    %v5564 = vld [vmem:[#allocation4 + $0x6e0] sm:$0xff]
    %v5565 = vld [vmem:[#allocation4 + $0x6e8] sm:$0xff]
    %v5566 = vld [vmem:[#allocation4 + $0x6f0] sm:$0xff]
    %v5567 = vld [vmem:[#allocation4 + $0x6f8] sm:$0xff]
    %v5568 = vld [vmem:[#allocation4 + $0x700] sm:$0xff]
    %v5569 = vld [vmem:[#allocation4 + $0x708] sm:$0xff]
    %v5570 = vld [vmem:[#allocation4 + $0x710] sm:$0xff]
    %v5571 = vld [vmem:[#allocation4 + $0x718] sm:$0xff]
    %v5572 = vld [vmem:[#allocation4 + $0x720] sm:$0xff]
    %v5573 = vld [vmem:[#allocation4 + $0x728] sm:$0xff]
    %v5574 = vld [vmem:[#allocation4 + $0x730] sm:$0xff]
    %v5575 = vld [vmem:[#allocation4 + $0x738] sm:$0xff]
    %v5576 = vld [vmem:[#allocation4 + $0x740] sm:$0xff]
    %v5577 = vld [vmem:[#allocation4 + $0x748] sm:$0xff]
    %v5578 = vld [vmem:[#allocation4 + $0x750] sm:$0xff]
    %v5579 = vld [vmem:[#allocation4 + $0x758] sm:$0xff]
    %v5580 = vld [vmem:[#allocation4 + $0x760] sm:$0xff]
    %v5581 = vld [vmem:[#allocation4 + $0x768] sm:$0xff]
    %v5582 = vld [vmem:[#allocation4 + $0x770] sm:$0xff]
    %v5583 = vld [vmem:[#allocation4 + $0x778] sm:$0xff]
    %v5584 = vld [vmem:[#allocation4 + $0x780] sm:$0xff]
    %v5585 = vld [vmem:[#allocation4 + $0x788] sm:$0xff]
    %v5586 = vld [vmem:[#allocation4 + $0x790] sm:$0xff]
    %v5587 = vld [vmem:[#allocation4 + $0x798] sm:$0xff]
    %v5588 = vld [vmem:[#allocation4 + $0x7a0] sm:$0xff]
    %v5589 = vld [vmem:[#allocation4 + $0x7a8] sm:$0xff]
    %v5590 = vld [vmem:[#allocation4 + $0x7b0] sm:$0xff]
    %v5591 = vld [vmem:[#allocation4 + $0x7b8] sm:$0xff]
    %v5592 = vld [vmem:[#allocation4 + $0x7c0] sm:$0xff]
    %v5593 = vld [vmem:[#allocation4 + $0x7c8] sm:$0xff]
    %v5594 = vld [vmem:[#allocation4 + $0x7d0] sm:$0xff]
    %v5595 = vld [vmem:[#allocation4 + $0x7d8] sm:$0xff]
    %v5596 = vld [vmem:[#allocation4 + $0x7e0] sm:$0xff]
    %v5597 = vld [vmem:[#allocation4 + $0x7e8] sm:$0xff]
    %v5598 = vld [vmem:[#allocation4 + $0x7f0] sm:$0xff]
    %v5599 = vld [vmem:[#allocation4 + $0x7f8] sm:$0xff]
    %v5600 = vld [vmem:[%s6] sm:$0x1]
    %v5602 = vlaneseq
    %v5603 = vshrl.u32 %v5602, 7
    %v5604 = vsub.s32 0, %v5603
    %v5605 = vrot.slane %v5600, %v5604
    %5607 = vmatprep.subr.bf16.mxu0 0
    %5608 = vmatpush1.bf16.msra.mxu0 %v5344
    %5609 = vmatprep.subr.bf16.mxu0 0
    %5610 = vmatpush1.bf16.msra.mxu0 %v5345
    %5611 = vmatprep.subr.bf16.mxu0 0
    %5612 = vmatpush1.bf16.msra.mxu0 %v5346
    %5613 = vmatprep.subr.bf16.mxu0 0
    %5614 = vmatpush1.bf16.msra.mxu0 %v5347
    %5615 = vmatprep.subr.bf16.mxu0 0
    %5616 = vmatpush1.bf16.msra.mxu0 %v5348
    %5617 = vmatprep.subr.bf16.mxu0 0
    %5618 = vmatpush1.bf16.msra.mxu0 %v5349
    %5619 = vmatprep.subr.bf16.mxu0 0
    %5620 = vmatpush1.bf16.msra.mxu0 %v5350
    %5621 = vmatprep.subr.bf16.mxu0 0
    %5622 = vmatpush1.bf16.msra.mxu0 %v5351
    %5623 = vmatprep.subr.bf16.mxu0 0
    %5624 = vmatpush1.bf16.msra.mxu0 %v5352
    %5625 = vmatprep.subr.bf16.mxu0 0
    %5626 = vmatpush1.bf16.msra.mxu0 %v5353
    %5627 = vmatprep.subr.bf16.mxu0 0
    %5628 = vmatpush1.bf16.msra.mxu0 %v5354
    %5629 = vmatprep.subr.bf16.mxu0 0
    %5630 = vmatpush1.bf16.msra.mxu0 %v5355
    %5631 = vmatprep.subr.bf16.mxu0 0
    %5632 = vmatpush1.bf16.msra.mxu0 %v5356
    %5633 = vmatprep.subr.bf16.mxu0 0
    %5634 = vmatpush1.bf16.msra.mxu0 %v5357
    %5635 = vmatprep.subr.bf16.mxu0 0
    %5636 = vmatpush1.bf16.msra.mxu0 %v5358
    %5637 = vmatprep.subr.bf16.mxu0 0
    %5638 = vmatpush1.bf16.msra.mxu0 %v5359
    %5639 = vmatprep.mubr.bf16.mxu0 %v5313
    %5640 = vmatmul.mubr.bf16.gmra.mrb[0].mxu0 %v5312
    %v5641 = vpop.f32.mrb[0].mxu0
    %v5642 = vadd.f32 %v5605, %v5641
    %v5643 = vpop.f32.mrb[0].mxu0
    %v5644 = vpop.f32.mrb[0].mxu0
    %v5645 = vadd.f32 %v5605, %v5644
    %v5646 = vpop.f32.mrb[0].mxu0
    %5647 = vdwg.mxu0
    %5648 = vmatprep.subr.bf16.mxu0 0
    %5649 = vmatpush1.bf16.msra.mxu0 %v5360
    %5650 = vmatprep.subr.bf16.mxu0 0
    %5651 = vmatpush1.bf16.msra.mxu0 %v5361
    %5652 = vmatprep.subr.bf16.mxu0 0
    %5653 = vmatpush1.bf16.msra.mxu0 %v5362
    %5654 = vmatprep.subr.bf16.mxu0 0
    %5655 = vmatpush1.bf16.msra.mxu0 %v5363
    %5656 = vmatprep.subr.bf16.mxu0 0
    %5657 = vmatpush1.bf16.msra.mxu0 %v5364
    %5658 = vmatprep.subr.bf16.mxu0 0
    %5659 = vmatpush1.bf16.msra.mxu0 %v5365
    %5660 = vmatprep.subr.bf16.mxu0 0
    %5661 = vmatpush1.bf16.msra.mxu0 %v5366
    %5662 = vmatprep.subr.bf16.mxu0 0
    %5663 = vmatpush1.bf16.msra.mxu0 %v5367
    %5664 = vmatprep.subr.bf16.mxu0 0
    %5665 = vmatpush1.bf16.msra.mxu0 %v5368
    %5666 = vmatprep.subr.bf16.mxu0 0
    %5667 = vmatpush1.bf16.msra.mxu0 %v5369
    %5668 = vmatprep.subr.bf16.mxu0 0
    %5669 = vmatpush1.bf16.msra.mxu0 %v5370
    %5670 = vmatprep.subr.bf16.mxu0 0
    %5671 = vmatpush1.bf16.msra.mxu0 %v5371
    %5672 = vmatprep.subr.bf16.mxu0 0
    %5673 = vmatpush1.bf16.msra.mxu0 %v5372
    %5674 = vmatprep.subr.bf16.mxu0 0
    %5675 = vmatpush1.bf16.msra.mxu0 %v5373
    %5676 = vmatprep.subr.bf16.mxu0 0
    %5677 = vmatpush1.bf16.msra.mxu0 %v5374
    %5678 = vmatprep.subr.bf16.mxu0 0
    %5679 = vmatpush1.bf16.msra.mxu0 %v5375
    %5680 = vmatprep.mubr.bf16.mxu0 %v5315
    %5681 = vmatmul.mubr.bf16.gmra.mrb[0].mxu0 %v5314
    %v5682 = vpop.f32.mrb[0].mxu0
    %v5683 = vadd.f32 %v5642, %v5682
    %v5684 = vpop.f32.mrb[0].mxu0
    %v5685 = vpop.f32.mrb[0].mxu0
    %v5686 = vadd.f32 %v5645, %v5685
    %v5687 = vpop.f32.mrb[0].mxu0
    %5688 = vdwg.mxu0
    %5689 = vmatprep.subr.bf16.mxu0 0
    %5690 = vmatpush1.bf16.msra.mxu0 %v5376
    %5691 = vmatprep.subr.bf16.mxu0 0
    %5692 = vmatpush1.bf16.msra.mxu0 %v5377
    %5693 = vmatprep.subr.bf16.mxu0 0
    %5694 = vmatpush1.bf16.msra.mxu0 %v5378
    %5695 = vmatprep.subr.bf16.mxu0 0
    %5696 = vmatpush1.bf16.msra.mxu0 %v5379
    %5697 = vmatprep.subr.bf16.mxu0 0
    %5698 = vmatpush1.bf16.msra.mxu0 %v5380
    %5699 = vmatprep.subr.bf16.mxu0 0
    %5700 = vmatpush1.bf16.msra.mxu0 %v5381
    %5701 = vmatprep.subr.bf16.mxu0 0
    %5702 = vmatpush1.bf16.msra.mxu0 %v5382
    %5703 = vmatprep.subr.bf16.mxu0 0
    %5704 = vmatpush1.bf16.msra.mxu0 %v5383
    %5705 = vmatprep.subr.bf16.mxu0 0
    %5706 = vmatpush1.bf16.msra.mxu0 %v5384
    %5707 = vmatprep.subr.bf16.mxu0 0
    %5708 = vmatpush1.bf16.msra.mxu0 %v5385
    %5709 = vmatprep.subr.bf16.mxu0 0
    %5710 = vmatpush1.bf16.msra.mxu0 %v5386
    %5711 = vmatprep.subr.bf16.mxu0 0
    %5712 = vmatpush1.bf16.msra.mxu0 %v5387
    %5713 = vmatprep.subr.bf16.mxu0 0
    %5714 = vmatpush1.bf16.msra.mxu0 %v5388
    %5715 = vmatprep.subr.bf16.mxu0 0
    %5716 = vmatpush1.bf16.msra.mxu0 %v5389
    %5717 = vmatprep.subr.bf16.mxu0 0
    %5718 = vmatpush1.bf16.msra.mxu0 %v5390
    %5719 = vmatprep.subr.bf16.mxu0 0
    %5720 = vmatpush1.bf16.msra.mxu0 %v5391
    %5721 = vmatprep.mubr.bf16.mxu0 %v5317
    %5722 = vmatmul.mubr.bf16.gmra.mrb[0].mxu0 %v5316
    %v5723 = vpop.f32.mrb[0].mxu0
    %v5724 = vadd.f32 %v5683, %v5723
    %v5725 = vpop.f32.mrb[0].mxu0
    %v5726 = vpop.f32.mrb[0].mxu0
    %v5727 = vadd.f32 %v5686, %v5726
    %v5728 = vpop.f32.mrb[0].mxu0
    %5729 = vdwg.mxu0
    %5730 = vmatprep.subr.bf16.mxu0 0
    %5731 = vmatpush1.bf16.msra.mxu0 %v5392
    %5732 = vmatprep.subr.bf16.mxu0 0
    %5733 = vmatpush1.bf16.msra.mxu0 %v5393
    %5734 = vmatprep.subr.bf16.mxu0 0
    %5735 = vmatpush1.bf16.msra.mxu0 %v5394
    %5736 = vmatprep.subr.bf16.mxu0 0
    %5737 = vmatpush1.bf16.msra.mxu0 %v5395
    %5738 = vmatprep.subr.bf16.mxu0 0
    %5739 = vmatpush1.bf16.msra.mxu0 %v5396
    %5740 = vmatprep.subr.bf16.mxu0 0
    %5741 = vmatpush1.bf16.msra.mxu0 %v5397
    %5742 = vmatprep.subr.bf16.mxu0 0
    %5743 = vmatpush1.bf16.msra.mxu0 %v5398
    %5744 = vmatprep.subr.bf16.mxu0 0
    %5745 = vmatpush1.bf16.msra.mxu0 %v5399
    %5746 = vmatprep.subr.bf16.mxu0 0
    %5747 = vmatpush1.bf16.msra.mxu0 %v5400
    %5748 = vmatprep.subr.bf16.mxu0 0
    %5749 = vmatpush1.bf16.msra.mxu0 %v5401
    %5750 = vmatprep.subr.bf16.mxu0 0
    %5751 = vmatpush1.bf16.msra.mxu0 %v5402
    %5752 = vmatprep.subr.bf16.mxu0 0
    %5753 = vmatpush1.bf16.msra.mxu0 %v5403
    %5754 = vmatprep.subr.bf16.mxu0 0
    %5755 = vmatpush1.bf16.msra.mxu0 %v5404
    %5756 = vmatprep.subr.bf16.mxu0 0
    %5757 = vmatpush1.bf16.msra.mxu0 %v5405
    %5758 = vmatprep.subr.bf16.mxu0 0
    %5759 = vmatpush1.bf16.msra.mxu0 %v5406
    %5760 = vmatprep.subr.bf16.mxu0 0
    %5761 = vmatpush1.bf16.msra.mxu0 %v5407
    %5762 = vmatprep.mubr.bf16.mxu0 %v5319
    %5763 = vmatmul.mubr.bf16.gmra.mrb[0].mxu0 %v5318
    %v5764 = vpop.f32.mrb[0].mxu0
    %v5765 = vadd.f32 %v5724, %v5764
    %v5766 = vpop.f32.mrb[0].mxu0
    %v5767 = vpop.f32.mrb[0].mxu0
    %v5768 = vadd.f32 %v5727, %v5767
    %v5769 = vpop.f32.mrb[0].mxu0
    %5770 = vdwg.mxu0
    %5771 = vmatprep.subr.bf16.mxu0 0
    %5772 = vmatpush1.bf16.msra.mxu0 %v5408
    %5773 = vmatprep.subr.bf16.mxu0 0
    %5774 = vmatpush1.bf16.msra.mxu0 %v5409
    %5775 = vmatprep.subr.bf16.mxu0 0
    %5776 = vmatpush1.bf16.msra.mxu0 %v5410
    %5777 = vmatprep.subr.bf16.mxu0 0
    %5778 = vmatpush1.bf16.msra.mxu0 %v5411
    %5779 = vmatprep.subr.bf16.mxu0 0
    %5780 = vmatpush1.bf16.msra.mxu0 %v5412
    %5781 = vmatprep.subr.bf16.mxu0 0
    %5782 = vmatpush1.bf16.msra.mxu0 %v5413
    %5783 = vmatprep.subr.bf16.mxu0 0
    %5784 = vmatpush1.bf16.msra.mxu0 %v5414
    %5785 = vmatprep.subr.bf16.mxu0 0
    %5786 = vmatpush1.bf16.msra.mxu0 %v5415
    %5787 = vmatprep.subr.bf16.mxu0 0
    %5788 = vmatpush1.bf16.msra.mxu0 %v5416
    %5789 = vmatprep.subr.bf16.mxu0 0
    %5790 = vmatpush1.bf16.msra.mxu0 %v5417
    %5791 = vmatprep.subr.bf16.mxu0 0
    %5792 = vmatpush1.bf16.msra.mxu0 %v5418
    %5793 = vmatprep.subr.bf16.mxu0 0
    %5794 = vmatpush1.bf16.msra.mxu0 %v5419
    %5795 = vmatprep.subr.bf16.mxu0 0
    %5796 = vmatpush1.bf16.msra.mxu0 %v5420
    %5797 = vmatprep.subr.bf16.mxu0 0
    %5798 = vmatpush1.bf16.msra.mxu0 %v5421
    %5799 = vmatprep.subr.bf16.mxu0 0
    %5800 = vmatpush1.bf16.msra.mxu0 %v5422
    %5801 = vmatprep.subr.bf16.mxu0 0
    %5802 = vmatpush1.bf16.msra.mxu0 %v5423
    %5803 = vmatprep.mubr.bf16.mxu0 %v5321
    %5804 = vmatmul.mubr.bf16.gmra.mrb[0].mxu0 %v5320
    %v5805 = vpop.f32.mrb[0].mxu0
    %v5806 = vadd.f32 %v5765, %v5805
    %v5807 = vpop.f32.mrb[0].mxu0
    %v5808 = vpop.f32.mrb[0].mxu0
    %v5809 = vadd.f32 %v5768, %v5808
    %v5810 = vpop.f32.mrb[0].mxu0
    %5811 = vdwg.mxu0
    %5812 = vmatprep.subr.bf16.mxu0 0
    %5813 = vmatpush1.bf16.msra.mxu0 %v5424
    %5814 = vmatprep.subr.bf16.mxu0 0
    %5815 = vmatpush1.bf16.msra.mxu0 %v5425
    %5816 = vmatprep.subr.bf16.mxu0 0
    %5817 = vmatpush1.bf16.msra.mxu0 %v5426
    %5818 = vmatprep.subr.bf16.mxu0 0
    %5819 = vmatpush1.bf16.msra.mxu0 %v5427
    %5820 = vmatprep.subr.bf16.mxu0 0
    %5821 = vmatpush1.bf16.msra.mxu0 %v5428
    %5822 = vmatprep.subr.bf16.mxu0 0
    %5823 = vmatpush1.bf16.msra.mxu0 %v5429
    %5824 = vmatprep.subr.bf16.mxu0 0
    %5825 = vmatpush1.bf16.msra.mxu0 %v5430
    %5826 = vmatprep.subr.bf16.mxu0 0
    %5827 = vmatpush1.bf16.msra.mxu0 %v5431
    %5828 = vmatprep.subr.bf16.mxu0 0
    %5829 = vmatpush1.bf16.msra.mxu0 %v5432
    %5830 = vmatprep.subr.bf16.mxu0 0
    %5831 = vmatpush1.bf16.msra.mxu0 %v5433
    %5832 = vmatprep.subr.bf16.mxu0 0
    %5833 = vmatpush1.bf16.msra.mxu0 %v5434
    %5834 = vmatprep.subr.bf16.mxu0 0
    %5835 = vmatpush1.bf16.msra.mxu0 %v5435
    %5836 = vmatprep.subr.bf16.mxu0 0
    %5837 = vmatpush1.bf16.msra.mxu0 %v5436
    %5838 = vmatprep.subr.bf16.mxu0 0
    %5839 = vmatpush1.bf16.msra.mxu0 %v5437
    %5840 = vmatprep.subr.bf16.mxu0 0
    %5841 = vmatpush1.bf16.msra.mxu0 %v5438
    %5842 = vmatprep.subr.bf16.mxu0 0
    %5843 = vmatpush1.bf16.msra.mxu0 %v5439
    %5844 = vmatprep.mubr.bf16.mxu0 %v5323
    %5845 = vmatmul.mubr.bf16.gmra.mrb[0].mxu0 %v5322
    %v5846 = vpop.f32.mrb[0].mxu0
    %v5847 = vadd.f32 %v5806, %v5846
    %v5848 = vpop.f32.mrb[0].mxu0
    %v5849 = vpop.f32.mrb[0].mxu0
    %v5850 = vadd.f32 %v5809, %v5849
    %v5851 = vpop.f32.mrb[0].mxu0
    %5852 = vdwg.mxu0
    %5853 = vmatprep.subr.bf16.mxu0 0
    %5854 = vmatpush1.bf16.msra.mxu0 %v5440
    %5855 = vmatprep.subr.bf16.mxu0 0
    %5856 = vmatpush1.bf16.msra.mxu0 %v5441
    %5857 = vmatprep.subr.bf16.mxu0 0
    %5858 = vmatpush1.bf16.msra.mxu0 %v5442
    %5859 = vmatprep.subr.bf16.mxu0 0
    %5860 = vmatpush1.bf16.msra.mxu0 %v5443
    %5861 = vmatprep.subr.bf16.mxu0 0
    %5862 = vmatpush1.bf16.msra.mxu0 %v5444
    %5863 = vmatprep.subr.bf16.mxu0 0
    %5864 = vmatpush1.bf16.msra.mxu0 %v5445
    %5865 = vmatprep.subr.bf16.mxu0 0
    %5866 = vmatpush1.bf16.msra.mxu0 %v5446
    %5867 = vmatprep.subr.bf16.mxu0 0
    %5868 = vmatpush1.bf16.msra.mxu0 %v5447
    %5869 = vmatprep.subr.bf16.mxu0 0
    %5870 = vmatpush1.bf16.msra.mxu0 %v5448
    %5871 = vmatprep.subr.bf16.mxu0 0
    %5872 = vmatpush1.bf16.msra.mxu0 %v5449
    %5873 = vmatprep.subr.bf16.mxu0 0
    %5874 = vmatpush1.bf16.msra.mxu0 %v5450
    %5875 = vmatprep.subr.bf16.mxu0 0
    %5876 = vmatpush1.bf16.msra.mxu0 %v5451
    %5877 = vmatprep.subr.bf16.mxu0 0
    %5878 = vmatpush1.bf16.msra.mxu0 %v5452
    %5879 = vmatprep.subr.bf16.mxu0 0
    %5880 = vmatpush1.bf16.msra.mxu0 %v5453
    %5881 = vmatprep.subr.bf16.mxu0 0
    %5882 = vmatpush1.bf16.msra.mxu0 %v5454
    %5883 = vmatprep.subr.bf16.mxu0 0
    %5884 = vmatpush1.bf16.msra.mxu0 %v5455
    %5885 = vmatprep.mubr.bf16.mxu0 %v5325
    %5886 = vmatmul.mubr.bf16.gmra.mrb[0].mxu0 %v5324
    %v5887 = vpop.f32.mrb[0].mxu0
    %v5888 = vadd.f32 %v5847, %v5887
    %v5889 = vpop.f32.mrb[0].mxu0
    %v5890 = vpop.f32.mrb[0].mxu0
    %v5891 = vadd.f32 %v5850, %v5890
    %v5892 = vpop.f32.mrb[0].mxu0
    %5893 = vdwg.mxu0
    %5894 = vmatprep.subr.bf16.mxu0 0
    %5895 = vmatpush1.bf16.msra.mxu0 %v5456
    %5896 = vmatprep.subr.bf16.mxu0 0
    %5897 = vmatpush1.bf16.msra.mxu0 %v5457
    %5898 = vmatprep.subr.bf16.mxu0 0
    %5899 = vmatpush1.bf16.msra.mxu0 %v5458
    %5900 = vmatprep.subr.bf16.mxu0 0
    %5901 = vmatpush1.bf16.msra.mxu0 %v5459
    %5902 = vmatprep.subr.bf16.mxu0 0
    %5903 = vmatpush1.bf16.msra.mxu0 %v5460
    %5904 = vmatprep.subr.bf16.mxu0 0
    %5905 = vmatpush1.bf16.msra.mxu0 %v5461
    %5906 = vmatprep.subr.bf16.mxu0 0
    %5907 = vmatpush1.bf16.msra.mxu0 %v5462
    %5908 = vmatprep.subr.bf16.mxu0 0
    %5909 = vmatpush1.bf16.msra.mxu0 %v5463
    %5910 = vmatprep.subr.bf16.mxu0 0
    %5911 = vmatpush1.bf16.msra.mxu0 %v5464
    %5912 = vmatprep.subr.bf16.mxu0 0
    %5913 = vmatpush1.bf16.msra.mxu0 %v5465
    %5914 = vmatprep.subr.bf16.mxu0 0
    %5915 = vmatpush1.bf16.msra.mxu0 %v5466
    %5916 = vmatprep.subr.bf16.mxu0 0
    %5917 = vmatpush1.bf16.msra.mxu0 %v5467
    %5918 = vmatprep.subr.bf16.mxu0 0
    %5919 = vmatpush1.bf16.msra.mxu0 %v5468
    %5920 = vmatprep.subr.bf16.mxu0 0
    %5921 = vmatpush1.bf16.msra.mxu0 %v5469
    %5922 = vmatprep.subr.bf16.mxu0 0
    %5923 = vmatpush1.bf16.msra.mxu0 %v5470
    %5924 = vmatprep.subr.bf16.mxu0 0
    %5925 = vmatpush1.bf16.msra.mxu0 %v5471
    %5926 = vmatprep.mubr.bf16.mxu0 %v5327
    %5927 = vmatmul.mubr.bf16.gmra.mrb[0].mxu0 %v5326
    %v5928 = vpop.f32.mrb[0].mxu0
    %v5929 = vadd.f32 %v5888, %v5928
    %v5930 = vpop.f32.mrb[0].mxu0
    %v5931 = vpop.f32.mrb[0].mxu0
    %v5932 = vadd.f32 %v5891, %v5931
    %v5933 = vpop.f32.mrb[0].mxu0
    %5934 = vdwg.mxu0
    %5935 = vmatprep.subr.bf16.mxu0 0
    %5936 = vmatpush1.bf16.msra.mxu0 %v5472
    %5937 = vmatprep.subr.bf16.mxu0 0
    %5938 = vmatpush1.bf16.msra.mxu0 %v5473
    %5939 = vmatprep.subr.bf16.mxu0 0
    %5940 = vmatpush1.bf16.msra.mxu0 %v5474
    %5941 = vmatprep.subr.bf16.mxu0 0
    %5942 = vmatpush1.bf16.msra.mxu0 %v5475
    %5943 = vmatprep.subr.bf16.mxu0 0
    %5944 = vmatpush1.bf16.msra.mxu0 %v5476
    %5945 = vmatprep.subr.bf16.mxu0 0
    %5946 = vmatpush1.bf16.msra.mxu0 %v5477
    %5947 = vmatprep.subr.bf16.mxu0 0
    %5948 = vmatpush1.bf16.msra.mxu0 %v5478
    %5949 = vmatprep.subr.bf16.mxu0 0
    %5950 = vmatpush1.bf16.msra.mxu0 %v5479
    %5951 = vmatprep.subr.bf16.mxu0 0
    %5952 = vmatpush1.bf16.msra.mxu0 %v5480
    %5953 = vmatprep.subr.bf16.mxu0 0
    %5954 = vmatpush1.bf16.msra.mxu0 %v5481
    %5955 = vmatprep.subr.bf16.mxu0 0
    %5956 = vmatpush1.bf16.msra.mxu0 %v5482
    %5957 = vmatprep.subr.bf16.mxu0 0
    %5958 = vmatpush1.bf16.msra.mxu0 %v5483
    %5959 = vmatprep.subr.bf16.mxu0 0
    %5960 = vmatpush1.bf16.msra.mxu0 %v5484
    %5961 = vmatprep.subr.bf16.mxu0 0
    %5962 = vmatpush1.bf16.msra.mxu0 %v5485
    %5963 = vmatprep.subr.bf16.mxu0 0
    %5964 = vmatpush1.bf16.msra.mxu0 %v5486
    %5965 = vmatprep.subr.bf16.mxu0 0
    %5966 = vmatpush1.bf16.msra.mxu0 %v5487
    %5967 = vmatprep.mubr.bf16.mxu0 %v5329
    %5968 = vmatmul.mubr.bf16.gmra.mrb[0].mxu0 %v5328
    %v5969 = vpop.f32.mrb[0].mxu0
    %v5970 = vadd.f32 %v5929, %v5969
    %v5971 = vpop.f32.mrb[0].mxu0
    %v5972 = vpop.f32.mrb[0].mxu0
    %v5973 = vadd.f32 %v5932, %v5972
    %v5974 = vpop.f32.mrb[0].mxu0
    %5975 = vdwg.mxu0
    %5976 = vmatprep.subr.bf16.mxu0 0
    %5977 = vmatpush1.bf16.msra.mxu0 %v5488
    %5978 = vmatprep.subr.bf16.mxu0 0
    %5979 = vmatpush1.bf16.msra.mxu0 %v5489
    %5980 = vmatprep.subr.bf16.mxu0 0
    %5981 = vmatpush1.bf16.msra.mxu0 %v5490
    %5982 = vmatprep.subr.bf16.mxu0 0
    %5983 = vmatpush1.bf16.msra.mxu0 %v5491
    %5984 = vmatprep.subr.bf16.mxu0 0
    %5985 = vmatpush1.bf16.msra.mxu0 %v5492
    %5986 = vmatprep.subr.bf16.mxu0 0
    %5987 = vmatpush1.bf16.msra.mxu0 %v5493
    %5988 = vmatprep.subr.bf16.mxu0 0
    %5989 = vmatpush1.bf16.msra.mxu0 %v5494
    %5990 = vmatprep.subr.bf16.mxu0 0
    %5991 = vmatpush1.bf16.msra.mxu0 %v5495
    %5992 = vmatprep.subr.bf16.mxu0 0
    %5993 = vmatpush1.bf16.msra.mxu0 %v5496
    %5994 = vmatprep.subr.bf16.mxu0 0
    %5995 = vmatpush1.bf16.msra.mxu0 %v5497
    %5996 = vmatprep.subr.bf16.mxu0 0
    %5997 = vmatpush1.bf16.msra.mxu0 %v5498
    %5998 = vmatprep.subr.bf16.mxu0 0
    %5999 = vmatpush1.bf16.msra.mxu0 %v5499
    %6000 = vmatprep.subr.bf16.mxu0 0
    %6001 = vmatpush1.bf16.msra.mxu0 %v5500
    %6002 = vmatprep.subr.bf16.mxu0 0
    %6003 = vmatpush1.bf16.msra.mxu0 %v5501
    %6004 = vmatprep.subr.bf16.mxu0 0
    %6005 = vmatpush1.bf16.msra.mxu0 %v5502
    %6006 = vmatprep.subr.bf16.mxu0 0
    %6007 = vmatpush1.bf16.msra.mxu0 %v5503
    %6008 = vmatprep.mubr.bf16.mxu0 %v5331
    %6009 = vmatmul.mubr.bf16.gmra.mrb[0].mxu0 %v5330
    %v6010 = vpop.f32.mrb[0].mxu0
    %v6011 = vadd.f32 %v5970, %v6010
    %v6012 = vpop.f32.mrb[0].mxu0
    %v6013 = vpop.f32.mrb[0].mxu0
    %v6014 = vadd.f32 %v5973, %v6013
    %v6015 = vpop.f32.mrb[0].mxu0
    %6016 = vdwg.mxu0
    %6017 = vmatprep.subr.bf16.mxu0 0
    %6018 = vmatpush1.bf16.msra.mxu0 %v5504
    %6019 = vmatprep.subr.bf16.mxu0 0
    %6020 = vmatpush1.bf16.msra.mxu0 %v5505
    %6021 = vmatprep.subr.bf16.mxu0 0
    %6022 = vmatpush1.bf16.msra.mxu0 %v5506
    %6023 = vmatprep.subr.bf16.mxu0 0
    %6024 = vmatpush1.bf16.msra.mxu0 %v5507
    %6025 = vmatprep.subr.bf16.mxu0 0
    %6026 = vmatpush1.bf16.msra.mxu0 %v5508
    %6027 = vmatprep.subr.bf16.mxu0 0
    %6028 = vmatpush1.bf16.msra.mxu0 %v5509
    %6029 = vmatprep.subr.bf16.mxu0 0
    %6030 = vmatpush1.bf16.msra.mxu0 %v5510
    %6031 = vmatprep.subr.bf16.mxu0 0
    %6032 = vmatpush1.bf16.msra.mxu0 %v5511
    %6033 = vmatprep.subr.bf16.mxu0 0
    %6034 = vmatpush1.bf16.msra.mxu0 %v5512
    %6035 = vmatprep.subr.bf16.mxu0 0
    %6036 = vmatpush1.bf16.msra.mxu0 %v5513
    %6037 = vmatprep.subr.bf16.mxu0 0
    %6038 = vmatpush1.bf16.msra.mxu0 %v5514
    %6039 = vmatprep.subr.bf16.mxu0 0
    %6040 = vmatpush1.bf16.msra.mxu0 %v5515
    %6041 = vmatprep.subr.bf16.mxu0 0
    %6042 = vmatpush1.bf16.msra.mxu0 %v5516
    %6043 = vmatprep.subr.bf16.mxu0 0
    %6044 = vmatpush1.bf16.msra.mxu0 %v5517
    %6045 = vmatprep.subr.bf16.mxu0 0
    %6046 = vmatpush1.bf16.msra.mxu0 %v5518
    %6047 = vmatprep.subr.bf16.mxu0 0
    %6048 = vmatpush1.bf16.msra.mxu0 %v5519
    %6049 = vmatprep.mubr.bf16.mxu0 %v5333
    %6050 = vmatmul.mubr.bf16.gmra.mrb[0].mxu0 %v5332
    %v6051 = vpop.f32.mrb[0].mxu0
    %v6052 = vadd.f32 %v6011, %v6051
    %v6053 = vpop.f32.mrb[0].mxu0
    %v6054 = vpop.f32.mrb[0].mxu0
    %v6055 = vadd.f32 %v6014, %v6054
    %v6056 = vpop.f32.mrb[0].mxu0
    %6057 = vdwg.mxu0
    %6058 = vmatprep.subr.bf16.mxu0 0
    %6059 = vmatpush1.bf16.msra.mxu0 %v5520
    %6060 = vmatprep.subr.bf16.mxu0 0
    %6061 = vmatpush1.bf16.msra.mxu0 %v5521
    %6062 = vmatprep.subr.bf16.mxu0 0
    %6063 = vmatpush1.bf16.msra.mxu0 %v5522
    %6064 = vmatprep.subr.bf16.mxu0 0
    %6065 = vmatpush1.bf16.msra.mxu0 %v5523
    %6066 = vmatprep.subr.bf16.mxu0 0
    %6067 = vmatpush1.bf16.msra.mxu0 %v5524
    %6068 = vmatprep.subr.bf16.mxu0 0
    %6069 = vmatpush1.bf16.msra.mxu0 %v5525
    %6070 = vmatprep.subr.bf16.mxu0 0
    %6071 = vmatpush1.bf16.msra.mxu0 %v5526
    %6072 = vmatprep.subr.bf16.mxu0 0
    %6073 = vmatpush1.bf16.msra.mxu0 %v5527
    %6074 = vmatprep.subr.bf16.mxu0 0
    %6075 = vmatpush1.bf16.msra.mxu0 %v5528
    %6076 = vmatprep.subr.bf16.mxu0 0
    %6077 = vmatpush1.bf16.msra.mxu0 %v5529
    %6078 = vmatprep.subr.bf16.mxu0 0
    %6079 = vmatpush1.bf16.msra.mxu0 %v5530
    %6080 = vmatprep.subr.bf16.mxu0 0
    %6081 = vmatpush1.bf16.msra.mxu0 %v5531
    %6082 = vmatprep.subr.bf16.mxu0 0
    %6083 = vmatpush1.bf16.msra.mxu0 %v5532
    %6084 = vmatprep.subr.bf16.mxu0 0
    %6085 = vmatpush1.bf16.msra.mxu0 %v5533
    %6086 = vmatprep.subr.bf16.mxu0 0
    %6087 = vmatpush1.bf16.msra.mxu0 %v5534
    %6088 = vmatprep.subr.bf16.mxu0 0
    %6089 = vmatpush1.bf16.msra.mxu0 %v5535
    %6090 = vmatprep.mubr.bf16.mxu0 %v5335
    %6091 = vmatmul.mubr.bf16.gmra.mrb[0].mxu0 %v5334
    %v6092 = vpop.f32.mrb[0].mxu0
    %v6093 = vadd.f32 %v6052, %v6092
    %v6094 = vpop.f32.mrb[0].mxu0
    %v6095 = vpop.f32.mrb[0].mxu0
    %v6096 = vadd.f32 %v6055, %v6095
    %v6097 = vpop.f32.mrb[0].mxu0
    %6098 = vdwg.mxu0
    %6099 = vmatprep.subr.bf16.mxu0 0
    %6100 = vmatpush1.bf16.msra.mxu0 %v5536
    %6101 = vmatprep.subr.bf16.mxu0 0
    %6102 = vmatpush1.bf16.msra.mxu0 %v5537
    %6103 = vmatprep.subr.bf16.mxu0 0
    %6104 = vmatpush1.bf16.msra.mxu0 %v5538
    %6105 = vmatprep.subr.bf16.mxu0 0
    %6106 = vmatpush1.bf16.msra.mxu0 %v5539
    %6107 = vmatprep.subr.bf16.mxu0 0
    %6108 = vmatpush1.bf16.msra.mxu0 %v5540
    %6109 = vmatprep.subr.bf16.mxu0 0
    %6110 = vmatpush1.bf16.msra.mxu0 %v5541
    %6111 = vmatprep.subr.bf16.mxu0 0
    %6112 = vmatpush1.bf16.msra.mxu0 %v5542
    %6113 = vmatprep.subr.bf16.mxu0 0
    %6114 = vmatpush1.bf16.msra.mxu0 %v5543
    %6115 = vmatprep.subr.bf16.mxu0 0
    %6116 = vmatpush1.bf16.msra.mxu0 %v5544
    %6117 = vmatprep.subr.bf16.mxu0 0
    %6118 = vmatpush1.bf16.msra.mxu0 %v5545
    %6119 = vmatprep.subr.bf16.mxu0 0
    %6120 = vmatpush1.bf16.msra.mxu0 %v5546
    %6121 = vmatprep.subr.bf16.mxu0 0
    %6122 = vmatpush1.bf16.msra.mxu0 %v5547
    %6123 = vmatprep.subr.bf16.mxu0 0
    %6124 = vmatpush1.bf16.msra.mxu0 %v5548
    %6125 = vmatprep.subr.bf16.mxu0 0
    %6126 = vmatpush1.bf16.msra.mxu0 %v5549
    %6127 = vmatprep.subr.bf16.mxu0 0
    %6128 = vmatpush1.bf16.msra.mxu0 %v5550
    %6129 = vmatprep.subr.bf16.mxu0 0
    %6130 = vmatpush1.bf16.msra.mxu0 %v5551
    %6131 = vmatprep.mubr.bf16.mxu0 %v5337
    %6132 = vmatmul.mubr.bf16.gmra.mrb[0].mxu0 %v5336
    %v6133 = vpop.f32.mrb[0].mxu0
    %v6134 = vadd.f32 %v6093, %v6133
    %v6135 = vpop.f32.mrb[0].mxu0
    %v6136 = vpop.f32.mrb[0].mxu0
    %v6137 = vadd.f32 %v6096, %v6136
    %v6138 = vpop.f32.mrb[0].mxu0
    %6139 = vdwg.mxu0
    %6140 = vmatprep.subr.bf16.mxu0 0
    %6141 = vmatpush1.bf16.msra.mxu0 %v5552
    %6142 = vmatprep.subr.bf16.mxu0 0
    %6143 = vmatpush1.bf16.msra.mxu0 %v5553
    %6144 = vmatprep.subr.bf16.mxu0 0
    %6145 = vmatpush1.bf16.msra.mxu0 %v5554
    %6146 = vmatprep.subr.bf16.mxu0 0
    %6147 = vmatpush1.bf16.msra.mxu0 %v5555
    %6148 = vmatprep.subr.bf16.mxu0 0
    %6149 = vmatpush1.bf16.msra.mxu0 %v5556
    %6150 = vmatprep.subr.bf16.mxu0 0
    %6151 = vmatpush1.bf16.msra.mxu0 %v5557
    %6152 = vmatprep.subr.bf16.mxu0 0
    %6153 = vmatpush1.bf16.msra.mxu0 %v5558
    %6154 = vmatprep.subr.bf16.mxu0 0
    %6155 = vmatpush1.bf16.msra.mxu0 %v5559
    %6156 = vmatprep.subr.bf16.mxu0 0
    %6157 = vmatpush1.bf16.msra.mxu0 %v5560
    %6158 = vmatprep.subr.bf16.mxu0 0
    %6159 = vmatpush1.bf16.msra.mxu0 %v5561
    %6160 = vmatprep.subr.bf16.mxu0 0
    %6161 = vmatpush1.bf16.msra.mxu0 %v5562
    %6162 = vmatprep.subr.bf16.mxu0 0
    %6163 = vmatpush1.bf16.msra.mxu0 %v5563
    %6164 = vmatprep.subr.bf16.mxu0 0
    %6165 = vmatpush1.bf16.msra.mxu0 %v5564
    %6166 = vmatprep.subr.bf16.mxu0 0
    %6167 = vmatpush1.bf16.msra.mxu0 %v5565
    %6168 = vmatprep.subr.bf16.mxu0 0
    %6169 = vmatpush1.bf16.msra.mxu0 %v5566
    %6170 = vmatprep.subr.bf16.mxu0 0
    %6171 = vmatpush1.bf16.msra.mxu0 %v5567
    %6172 = vmatprep.mubr.bf16.mxu0 %v5339
    %6173 = vmatmul.mubr.bf16.gmra.mrb[0].mxu0 %v5338
    %v6174 = vpop.f32.mrb[0].mxu0
    %v6175 = vadd.f32 %v6134, %v6174
    %v6176 = vpop.f32.mrb[0].mxu0
    %v6177 = vpop.f32.mrb[0].mxu0
    %v6178 = vadd.f32 %v6137, %v6177
    %v6179 = vpop.f32.mrb[0].mxu0
    %6180 = vdwg.mxu0
    %6181 = vmatprep.subr.bf16.mxu0 0
    %6182 = vmatpush1.bf16.msra.mxu0 %v5568
    %6183 = vmatprep.subr.bf16.mxu0 0
    %6184 = vmatpush1.bf16.msra.mxu0 %v5569
    %6185 = vmatprep.subr.bf16.mxu0 0
    %6186 = vmatpush1.bf16.msra.mxu0 %v5570
    %6187 = vmatprep.subr.bf16.mxu0 0
    %6188 = vmatpush1.bf16.msra.mxu0 %v5571
    %6189 = vmatprep.subr.bf16.mxu0 0
    %6190 = vmatpush1.bf16.msra.mxu0 %v5572
    %6191 = vmatprep.subr.bf16.mxu0 0
    %6192 = vmatpush1.bf16.msra.mxu0 %v5573
    %6193 = vmatprep.subr.bf16.mxu0 0
    %6194 = vmatpush1.bf16.msra.mxu0 %v5574
    %6195 = vmatprep.subr.bf16.mxu0 0
    %6196 = vmatpush1.bf16.msra.mxu0 %v5575
    %6197 = vmatprep.subr.bf16.mxu0 0
    %6198 = vmatpush1.bf16.msra.mxu0 %v5576
    %6199 = vmatprep.subr.bf16.mxu0 0
    %6200 = vmatpush1.bf16.msra.mxu0 %v5577
    %6201 = vmatprep.subr.bf16.mxu0 0
    %6202 = vmatpush1.bf16.msra.mxu0 %v5578
    %6203 = vmatprep.subr.bf16.mxu0 0
    %6204 = vmatpush1.bf16.msra.mxu0 %v5579
    %6205 = vmatprep.subr.bf16.mxu0 0
    %6206 = vmatpush1.bf16.msra.mxu0 %v5580
    %6207 = vmatprep.subr.bf16.mxu0 0
    %6208 = vmatpush1.bf16.msra.mxu0 %v5581
    %6209 = vmatprep.subr.bf16.mxu0 0
    %6210 = vmatpush1.bf16.msra.mxu0 %v5582
    %6211 = vmatprep.subr.bf16.mxu0 0
    %6212 = vmatpush1.bf16.msra.mxu0 %v5583
    %6213 = vmatprep.mubr.bf16.mxu0 %v5341
    %6214 = vmatmul.mubr.bf16.gmra.mrb[0].mxu0 %v5340
    %v6215 = vpop.f32.mrb[0].mxu0
    %v6216 = vadd.f32 %v6175, %v6215
    %v6217 = vpop.f32.mrb[0].mxu0
    %v6218 = vpop.f32.mrb[0].mxu0
    %v6219 = vadd.f32 %v6178, %v6218
    %v6220 = vpop.f32.mrb[0].mxu0
    %6221 = vdwg.mxu0
    %6222 = vmatprep.subr.bf16.mxu0 0
    %6223 = vmatpush1.bf16.msra.mxu0 %v5584
    %6224 = vmatprep.subr.bf16.mxu0 0
    %6225 = vmatpush1.bf16.msra.mxu0 %v5585
    %6226 = vmatprep.subr.bf16.mxu0 0
    %6227 = vmatpush1.bf16.msra.mxu0 %v5586
    %6228 = vmatprep.subr.bf16.mxu0 0
    %6229 = vmatpush1.bf16.msra.mxu0 %v5587
    %6230 = vmatprep.subr.bf16.mxu0 0
    %6231 = vmatpush1.bf16.msra.mxu0 %v5588
    %6232 = vmatprep.subr.bf16.mxu0 0
    %6233 = vmatpush1.bf16.msra.mxu0 %v5589
    %6234 = vmatprep.subr.bf16.mxu0 0
    %6235 = vmatpush1.bf16.msra.mxu0 %v5590
    %6236 = vmatprep.subr.bf16.mxu0 0
    %6237 = vmatpush1.bf16.msra.mxu0 %v5591
    %6238 = vmatprep.subr.bf16.mxu0 0
    %6239 = vmatpush1.bf16.msra.mxu0 %v5592
    %6240 = vmatprep.subr.bf16.mxu0 0
    %6241 = vmatpush1.bf16.msra.mxu0 %v5593
    %6242 = vmatprep.subr.bf16.mxu0 0
    %6243 = vmatpush1.bf16.msra.mxu0 %v5594
    %6244 = vmatprep.subr.bf16.mxu0 0
    %6245 = vmatpush1.bf16.msra.mxu0 %v5595
    %6246 = vmatprep.subr.bf16.mxu0 0
    %6247 = vmatpush1.bf16.msra.mxu0 %v5596
    %6248 = vmatprep.subr.bf16.mxu0 0
    %6249 = vmatpush1.bf16.msra.mxu0 %v5597
    %6250 = vmatprep.subr.bf16.mxu0 0
    %6251 = vmatpush1.bf16.msra.mxu0 %v5598
    %6252 = vmatprep.subr.bf16.mxu0 0
    %6253 = vmatpush1.bf16.msra.mxu0 %v5599
    %6254 = vmatprep.mubr.bf16.mxu0 %v5343
    %6255 = vmatmul.mubr.bf16.gmra.mrb[0].mxu0 %v5342
    %v6256 = vpop.f32.mrb[0].mxu0
    %v6257 = vadd.f32 %v6216, %v6256
    %v6258 = vpop.f32.mrb[0].mxu0
    %v6259 = vpop.f32.mrb[0].mxu0
    %v6260 = vadd.f32 %v6219, %v6259
    %v6261 = vpop.f32.mrb[0].mxu0
    %6262 = vdwg.mxu0
    %v6263 = vmax.f32 %v6257, 0.0
    %v6264 = vmax.f32 %v6260, 0.0
    %v6265 = vld [vmem:[%s7] sm:$0xff]
    %v6266 = vld [vmem:[%s7 + $0x8] sm:$0xff]
    %v6267 = vld [vmem:[%s7 + $0x10] sm:$0xff]
    %v6268 = vld [vmem:[%s7 + $0x18] sm:$0xff]
    %v6269 = vld [vmem:[%s7 + $0x20] sm:$0xff]
    %v6270 = vld [vmem:[%s7 + $0x28] sm:$0xff]
    %v6271 = vld [vmem:[%s7 + $0x30] sm:$0xff]
    %v6272 = vld [vmem:[%s7 + $0x38] sm:$0xff]
    %v6273 = vld [vmem:[%s7 + $0x40] sm:$0xff]
    %v6274 = vld [vmem:[%s7 + $0x48] sm:$0xff]
    %v6275 = vld [vmem:[%s7 + $0x50] sm:$0xff]
    %v6276 = vld [vmem:[%s7 + $0x58] sm:$0xff]
    %v6277 = vld [vmem:[%s7 + $0x60] sm:$0xff]
    %v6278 = vld [vmem:[%s7 + $0x68] sm:$0xff]
    %v6279 = vld [vmem:[%s7 + $0x70] sm:$0xff]
    %v6280 = vld [vmem:[%s7 + $0x78] sm:$0xff]
    %v6281 = vld [vmem:[%s8] sm:$0x1]
    %v6283 = vlaneseq
    %v6284 = vshrl.u32 %v6283, 7
    %v6285 = vsub.s32 0, %v6284
    %v6286 = vrot.slane %v6281, %v6285
    %6288 = vmatprep.subr.mxu0 0.0
    %6289 = vmatpush1.msra.mxu0 %v6265
    %6290 = vmatprep.subr.mxu0 0.0
    %6291 = vmatpush1.msra.mxu0 %v6266
    %6292 = vmatprep.subr.mxu0 0.0
    %6293 = vmatpush1.msra.mxu0 %v6267
    %6294 = vmatprep.subr.mxu0 0.0
    %6295 = vmatpush1.msra.mxu0 %v6268
    %6296 = vmatprep.subr.mxu0 0.0
    %6297 = vmatpush1.msra.mxu0 %v6269
    %6298 = vmatprep.subr.mxu0 0.0
    %6299 = vmatpush1.msra.mxu0 %v6270
    %6300 = vmatprep.subr.mxu0 0.0
    %6301 = vmatpush1.msra.mxu0 %v6271
    %6302 = vmatprep.subr.mxu0 0.0
    %6303 = vmatpush1.msra.mxu0 %v6272
    %6304 = vmatprep.subr.mxu0 0.0
    %6305 = vmatpush1.msra.mxu0 %v6273
    %6306 = vmatprep.subr.mxu0 0.0
    %6307 = vmatpush1.msra.mxu0 %v6274
    %6308 = vmatprep.subr.mxu0 0.0
    %6309 = vmatpush1.msra.mxu0 %v6275
    %6310 = vmatprep.subr.mxu0 0.0
    %6311 = vmatpush1.msra.mxu0 %v6276
    %6312 = vmatprep.subr.mxu0 0.0
    %6313 = vmatpush1.msra.mxu0 %v6277
    %6314 = vmatprep.subr.mxu0 0.0
    %6315 = vmatpush1.msra.mxu0 %v6278
    %6316 = vmatprep.subr.mxu0 0.0
    %6317 = vmatpush1.msra.mxu0 %v6279
    %6318 = vmatprep.subr.mxu0 0.0
    %6319 = vmatpush1.msra.mxu0 %v6280
    %6320 = vmatprep.subr.mxu0 0.0
    %6321 = vmatpush1.msra.mxu0 0.0
    %6322 = vmatprep.subr.mxu0 0.0
    %6323 = vmatpush1.msra.mxu0 0.0
    %6324 = vmatprep.subr.mxu0 0.0
    %6325 = vmatpush1.msra.mxu0 0.0
    %6326 = vmatprep.subr.mxu0 0.0
    %6327 = vmatpush1.msra.mxu0 0.0
    %6328 = vmatprep.subr.mxu0 0.0
    %6329 = vmatpush1.msra.mxu0 0.0
    %6330 = vmatprep.subr.mxu0 0.0
    %6331 = vmatpush1.msra.mxu0 0.0
    %6332 = vmatprep.subr.mxu0 0.0
    %6333 = vmatpush1.msra.mxu0 0.0
    %6334 = vmatprep.subr.mxu0 0.0
    %6335 = vmatpush1.msra.mxu0 0.0
    %6336 = vmatprep.subr.mxu0 0.0
    %6337 = vmatpush1.msra.mxu0 0.0
    %6338 = vmatprep.subr.mxu0 0.0
    %6339 = vmatpush1.msra.mxu0 0.0
    %6340 = vmatprep.subr.mxu0 0.0
    %6341 = vmatpush1.msra.mxu0 0.0
    %6342 = vmatprep.subr.mxu0 0.0
    %6343 = vmatpush1.msra.mxu0 0.0
    %6344 = vmatprep.subr.mxu0 0.0
    %6345 = vmatpush1.msra.mxu0 0.0
    %6346 = vmatprep.subr.mxu0 0.0
    %6347 = vmatpush1.msra.mxu0 0.0
    %6348 = vmatprep.subr.mxu0 0.0
    %6349 = vmatpush1.msra.mxu0 0.0
    %6350 = vmatprep.subr.mxu0 0.0
    %6351 = vmatpush1.msra.mxu0 0.0
    %6352 = vmatprep.mubr.f32.mxu0 0.0
    %6353 = vmatmul.mubr.f32.gmra.mrb[0].mxu0 %v6263
    %v6354 = vpop.f32.mrb[0].mxu0
    %v6355 = vadd.f32 %v6286, %v6354
    %v6356 = vpop.f32.mrb[0].mxu0
    %6357 = vmatprep.mubr.f32.mxu0 0.0
    %6358 = vmatmul.mubr.f32.gmra.mrb[0].mxu0 %v6264
    %v6359 = vpop.f32.mrb[0].mxu0
    %v6360 = vadd.f32 %v6286, %v6359
    %v6361 = vpop.f32.mrb[0].mxu0
    %6362 = vdwg.mxu0
    %v6363 = vmax.f32 %v6355, 0.0
    %v6364 = vmax.f32 %v6360, 0.0
    %v6365 = vld [vmem:[%s9] sm:$0xff]
    %v6366 = vld [vmem:[%s9 + $0x8] sm:$0x3]
    %v6367 = vld [vmem:[%s11] sm:$0x1]
    %v6369 = vlaneseq
    %v6370 = vshrl.u32 %v6369, 7
    %v6371 = vsub.s32 0, %v6370
    %v6372 = vrot.slane %v6367, %v6371
    %vm6374 = vcmask 80896
    %v6376 = vsel %vm6374, %v6363, 0
    %vm6378 = vcmask 1041408
    %v6380 = vsel %vm6378, %v6366, 0
    %6382 = vmatprep.subr.mxu0 0.0
    %6383 = vmatpush1.msra.mxu0 %v6365
    %6384 = vmatprep.subr.mxu0 0.0
    %6385 = vmatpush1.msra.mxu0 %v6380
    %6386 = vmatprep.subr.mxu0 0.0
    %6387 = vmatpush1.msra.mxu0 0.0
    %6388 = vmatprep.subr.mxu0 0.0
    %6389 = vmatpush1.msra.mxu0 0.0
    %6390 = vmatprep.subr.mxu0 0.0
    %6391 = vmatpush1.msra.mxu0 0.0
    %6392 = vmatprep.subr.mxu0 0.0
    %6393 = vmatpush1.msra.mxu0 0.0
    %6394 = vmatprep.subr.mxu0 0.0
    %6395 = vmatpush1.msra.mxu0 0.0
    %6396 = vmatprep.subr.mxu0 0.0
    %6397 = vmatpush1.msra.mxu0 0.0
    %6398 = vmatprep.subr.mxu0 0.0
    %6399 = vmatpush1.msra.mxu0 0.0
    %6400 = vmatprep.subr.mxu0 0.0
    %6401 = vmatpush1.msra.mxu0 0.0
    %6402 = vmatprep.subr.mxu0 0.0
    %6403 = vmatpush1.msra.mxu0 0.0
    %6404 = vmatprep.subr.mxu0 0.0
    %6405 = vmatpush1.msra.mxu0 0.0
    %6406 = vmatprep.subr.mxu0 0.0
    %6407 = vmatpush1.msra.mxu0 0.0
    %6408 = vmatprep.subr.mxu0 0.0
    %6409 = vmatpush1.msra.mxu0 0.0
    %6410 = vmatprep.subr.mxu0 0.0
    %6411 = vmatpush1.msra.mxu0 0.0
    %6412 = vmatprep.subr.mxu0 0.0
    %6413 = vmatpush1.msra.mxu0 0.0
    %6414 = vmatprep.subr.mxu0 0.0
    %6415 = vmatpush1.msra.mxu0 0.0
    %6416 = vmatprep.subr.mxu0 0.0
    %6417 = vmatpush1.msra.mxu0 0.0
    %6418 = vmatprep.subr.mxu0 0.0
    %6419 = vmatpush1.msra.mxu0 0.0
    %6420 = vmatprep.subr.mxu0 0.0
    %6421 = vmatpush1.msra.mxu0 0.0
    %6422 = vmatprep.subr.mxu0 0.0
    %6423 = vmatpush1.msra.mxu0 0.0
    %6424 = vmatprep.subr.mxu0 0.0
    %6425 = vmatpush1.msra.mxu0 0.0
    %6426 = vmatprep.subr.mxu0 0.0
    %6427 = vmatpush1.msra.mxu0 0.0
    %6428 = vmatprep.subr.mxu0 0.0
    %6429 = vmatpush1.msra.mxu0 0.0
    %6430 = vmatprep.subr.mxu0 0.0
    %6431 = vmatpush1.msra.mxu0 0.0
    %6432 = vmatprep.subr.mxu0 0.0
    %6433 = vmatpush1.msra.mxu0 0.0
    %6434 = vmatprep.subr.mxu0 0.0
    %6435 = vmatpush1.msra.mxu0 0.0
    %6436 = vmatprep.subr.mxu0 0.0
    %6437 = vmatpush1.msra.mxu0 0.0
    %6438 = vmatprep.subr.mxu0 0.0
    %6439 = vmatpush1.msra.mxu0 0.0
    %6440 = vmatprep.subr.mxu0 0.0
    %6441 = vmatpush1.msra.mxu0 0.0
    %6442 = vmatprep.subr.mxu0 0.0
    %6443 = vmatpush1.msra.mxu0 0.0
    %6444 = vmatprep.subr.mxu0 0.0
    %6445 = vmatpush1.msra.mxu0 0.0
    %6446 = vmatprep.mubr.f32.mxu0 0.0
    %6447 = vmatmul.mubr.f32.gmra.mrb[0].mxu0 %v6376
    %v6448 = vpop.f32.mrb[0].mxu0
    %v6449 = vadd.f32 %v6372, %v6448
    %v6450 = vpop.f32.mrb[0].mxu0
    %6451 = vdwg.mxu0
    %v6452 = vld [vmem:[%s10] sm:$0xff]
    %v6453 = vld [vmem:[%s10 + $0x8] sm:$0x3]
    %v6455 = vsel %vm6374, 0.0, 0
    %v6458 = vsel %vm6378, %v6453, 0
    %6460 = vmatprep.subr.mxu0 0.0
    %6461 = vmatpush1.msra.mxu0 %v6452
    %6462 = vmatprep.subr.mxu0 0.0
    %6463 = vmatpush1.msra.mxu0 %v6458
    %6464 = vmatprep.subr.mxu0 0.0
    %6465 = vmatpush1.msra.mxu0 0.0
    %6466 = vmatprep.subr.mxu0 0.0
    %6467 = vmatpush1.msra.mxu0 0.0
    %6468 = vmatprep.subr.mxu0 0.0
    %6469 = vmatpush1.msra.mxu0 0.0
    %6470 = vmatprep.subr.mxu0 0.0
    %6471 = vmatpush1.msra.mxu0 0.0
    %6472 = vmatprep.subr.mxu0 0.0
    %6473 = vmatpush1.msra.mxu0 0.0
    %6474 = vmatprep.subr.mxu0 0.0
    %6475 = vmatpush1.msra.mxu0 0.0
    %6476 = vmatprep.subr.mxu0 0.0
    %6477 = vmatpush1.msra.mxu0 0.0
    %6478 = vmatprep.subr.mxu0 0.0
    %6479 = vmatpush1.msra.mxu0 0.0
    %6480 = vmatprep.subr.mxu0 0.0
    %6481 = vmatpush1.msra.mxu0 0.0
    %6482 = vmatprep.subr.mxu0 0.0
    %6483 = vmatpush1.msra.mxu0 0.0
    %6484 = vmatprep.subr.mxu0 0.0
    %6485 = vmatpush1.msra.mxu0 0.0
    %6486 = vmatprep.subr.mxu0 0.0
    %6487 = vmatpush1.msra.mxu0 0.0
    %6488 = vmatprep.subr.mxu0 0.0
    %6489 = vmatpush1.msra.mxu0 0.0
    %6490 = vmatprep.subr.mxu0 0.0
    %6491 = vmatpush1.msra.mxu0 0.0
    %6492 = vmatprep.subr.mxu0 0.0
    %6493 = vmatpush1.msra.mxu0 0.0
    %6494 = vmatprep.subr.mxu0 0.0
    %6495 = vmatpush1.msra.mxu0 0.0
    %6496 = vmatprep.subr.mxu0 0.0
    %6497 = vmatpush1.msra.mxu0 0.0
    %6498 = vmatprep.subr.mxu0 0.0
    %6499 = vmatpush1.msra.mxu0 0.0
    %6500 = vmatprep.subr.mxu0 0.0
    %6501 = vmatpush1.msra.mxu0 0.0
    %6502 = vmatprep.subr.mxu0 0.0
    %6503 = vmatpush1.msra.mxu0 0.0
    %6504 = vmatprep.subr.mxu0 0.0
    %6505 = vmatpush1.msra.mxu0 0.0
    %6506 = vmatprep.subr.mxu0 0.0
    %6507 = vmatpush1.msra.mxu0 0.0
    %6508 = vmatprep.subr.mxu0 0.0
    %6509 = vmatpush1.msra.mxu0 0.0
    %6510 = vmatprep.subr.mxu0 0.0
    %6511 = vmatpush1.msra.mxu0 0.0
    %6512 = vmatprep.subr.mxu0 0.0
    %6513 = vmatpush1.msra.mxu0 0.0
    %6514 = vmatprep.subr.mxu0 0.0
    %6515 = vmatpush1.msra.mxu0 0.0
    %6516 = vmatprep.subr.mxu0 0.0
    %6517 = vmatpush1.msra.mxu0 0.0
    %6518 = vmatprep.subr.mxu0 0.0
    %6519 = vmatpush1.msra.mxu0 0.0
    %6520 = vmatprep.subr.mxu0 0.0
    %6521 = vmatpush1.msra.mxu0 0.0
    %6522 = vmatprep.subr.mxu0 0.0
    %6523 = vmatpush1.msra.mxu0 0.0
    %6524 = vmatprep.mubr.f32.mxu0 0.0
    %6525 = vmatmul.mubr.f32.gmra.mrb[0].mxu0 %v6455
    %v6526 = vpop.f32.mrb[0].mxu0
    %v6527 = vadd.f32 0.0, %v6526
    %v6528 = vpop.f32.mrb[0].mxu0
    %6529 = vdwg.mxu0
    %v6530 = vadd.f32 %v6449, %v6527
    %v6531 = vxor.u32 %v6530, 2147483648
    %v6532 = vmul.f32 %v6531, 1.442695
    %v6533 = vpow.pop %v6532
    %v6534 = vadd.f32 %v6533, 1.0
    %v6535 = vrcp.pop %v6534
    %v6536 = vmul.f32 1.0, %v6535
    %v6537 = vtanh.pop %v6530
    %v6538 = vmul.f32 %v6536, 0.0
    %6540 = vrot.lane.b32.xlu0 %v6537, 108
    %v6541 = vpop.permute.xlu0 %6540
    %v6543 = vmul.f32 %v6536, %v6541
    %6545 = vrot.lane.b32.xlu0 %v6543, 10
    %v6546 = vpop.permute.xlu0 %6545
    %v6548 = vadd.f32 %v6538, %v6546
    %v6549 = vtanh.pop %v6548
    %6551 = vrot.lane.b32.xlu0 %v6549, 20
    %v6552 = vpop.permute.xlu0 %6551
    %v6554 = vmul.f32 %v6536, %v6552
    %6556 = vrot.lane.b32.xlu0 %v6554, 98
    %v6557 = vpop.permute.xlu0 %6556
    %v6558 = vsel %vm6374, %v6557, 0
    %6560 = vmatprep.subr.mxu0 0.0
    %6561 = vmatpush1.msra.mxu0 %v6452
    %6562 = vmatprep.subr.mxu0 0.0
    %6563 = vmatpush1.msra.mxu0 %v6458
    %6564 = vmatprep.subr.mxu0 0.0
    %6565 = vmatpush1.msra.mxu0 0.0
    %6566 = vmatprep.subr.mxu0 0.0
    %6567 = vmatpush1.msra.mxu0 0.0
    %6568 = vmatprep.subr.mxu0 0.0
    %6569 = vmatpush1.msra.mxu0 0.0
    %6570 = vmatprep.subr.mxu0 0.0
    %6571 = vmatpush1.msra.mxu0 0.0
    %6572 = vmatprep.subr.mxu0 0.0
    %6573 = vmatpush1.msra.mxu0 0.0
    %6574 = vmatprep.subr.mxu0 0.0
    %6575 = vmatpush1.msra.mxu0 0.0
    %6576 = vmatprep.subr.mxu0 0.0
    %6577 = vmatpush1.msra.mxu0 0.0
    %6578 = vmatprep.subr.mxu0 0.0
    %6579 = vmatpush1.msra.mxu0 0.0
    %6580 = vmatprep.subr.mxu0 0.0
    %6581 = vmatpush1.msra.mxu0 0.0
    %6582 = vmatprep.subr.mxu0 0.0
    %6583 = vmatpush1.msra.mxu0 0.0
    %6584 = vmatprep.subr.mxu0 0.0
    %6585 = vmatpush1.msra.mxu0 0.0
    %6586 = vmatprep.subr.mxu0 0.0
    %6587 = vmatpush1.msra.mxu0 0.0
    %6588 = vmatprep.subr.mxu0 0.0
    %6589 = vmatpush1.msra.mxu0 0.0
    %6590 = vmatprep.subr.mxu0 0.0
    %6591 = vmatpush1.msra.mxu0 0.0
    %6592 = vmatprep.subr.mxu0 0.0
    %6593 = vmatpush1.msra.mxu0 0.0
    %6594 = vmatprep.subr.mxu0 0.0
    %6595 = vmatpush1.msra.mxu0 0.0
    %6596 = vmatprep.subr.mxu0 0.0
    %6597 = vmatpush1.msra.mxu0 0.0
    %6598 = vmatprep.subr.mxu0 0.0
    %6599 = vmatpush1.msra.mxu0 0.0
    %6600 = vmatprep.subr.mxu0 0.0
    %6601 = vmatpush1.msra.mxu0 0.0
    %6602 = vmatprep.subr.mxu0 0.0
    %6603 = vmatpush1.msra.mxu0 0.0
    %6604 = vmatprep.subr.mxu0 0.0
    %6605 = vmatpush1.msra.mxu0 0.0
    %6606 = vmatprep.subr.mxu0 0.0
    %6607 = vmatpush1.msra.mxu0 0.0
    %6608 = vmatprep.subr.mxu0 0.0
    %6609 = vmatpush1.msra.mxu0 0.0
    %6610 = vmatprep.subr.mxu0 0.0
    %6611 = vmatpush1.msra.mxu0 0.0
    %6612 = vmatprep.subr.mxu0 0.0
    %6613 = vmatpush1.msra.mxu0 0.0
    %6614 = vmatprep.subr.mxu0 0.0
    %6615 = vmatpush1.msra.mxu0 0.0
    %6616 = vmatprep.subr.mxu0 0.0
    %6617 = vmatpush1.msra.mxu0 0.0
    %6618 = vmatprep.subr.mxu0 0.0
    %6619 = vmatpush1.msra.mxu0 0.0
    %6620 = vmatprep.subr.mxu0 0.0
    %6621 = vmatpush1.msra.mxu0 0.0
    %6622 = vmatprep.subr.mxu0 0.0
    %6623 = vmatpush1.msra.mxu0 0.0
    %6624 = vmatprep.mubr.f32.mxu0 0.0
    %6625 = vmatmul.mubr.f32.gmra.mrb[0].mxu0 %v6558
    %v6626 = vpop.f32.mrb[0].mxu0
    %v6627 = vadd.f32 0.0, %v6626
    %v6628 = vpop.f32.mrb[0].mxu0
    %6629 = vdwg.mxu0
    %v6631 = vrot.slane %v6627, 6
    %v6633 = vadd.f32 %v6449, %v6631
    %v6634 = vxor.u32 %v6633, 2147483648
    %v6635 = vmul.f32 %v6634, 1.442695
    %v6636 = vpow.pop %v6635
    %v6637 = vadd.f32 %v6636, 1.0
    %v6638 = vrcp.pop %v6637
    %v6639 = vmul.f32 1.0, %v6638
    %v6640 = vtanh.pop %v6633
    %v6642 = vrot.slane %v6548, 6
    %v6644 = vmul.f32 %v6639, %v6642
    %6646 = vrot.lane.b32.xlu0 %v6640, 108
    %v6647 = vpop.permute.xlu0 %6646
    %v6649 = vmul.f32 %v6639, %v6647
    %6651 = vrot.lane.b32.xlu0 %v6649, 10
    %v6652 = vpop.permute.xlu0 %6651
    %v6654 = vadd.f32 %v6644, %v6652
    %v6655 = vtanh.pop %v6654
    %6657 = vrot.lane.b32.xlu0 %v6655, 20
    %v6658 = vpop.permute.xlu0 %6657
    %v6660 = vmul.f32 %v6639, %v6658
    %v6662 = vrot.slane %v6660, 2
    %6663 = vrot.lane.b32.xlu0 %v6662, 98
    %v6664 = vpop.permute.xlu0 %6663
    %v6665 = vsel %vm6374, %v6664, 0
    %6667 = vmatprep.subr.mxu0 0.0
    %6668 = vmatpush1.msra.mxu0 %v6452
    %6669 = vmatprep.subr.mxu0 0.0
    %6670 = vmatpush1.msra.mxu0 %v6458
    %6671 = vmatprep.subr.mxu0 0.0
    %6672 = vmatpush1.msra.mxu0 0.0
    %6673 = vmatprep.subr.mxu0 0.0
    %6674 = vmatpush1.msra.mxu0 0.0
    %6675 = vmatprep.subr.mxu0 0.0
    %6676 = vmatpush1.msra.mxu0 0.0
    %6677 = vmatprep.subr.mxu0 0.0
    %6678 = vmatpush1.msra.mxu0 0.0
    %6679 = vmatprep.subr.mxu0 0.0
    %6680 = vmatpush1.msra.mxu0 0.0
    %6681 = vmatprep.subr.mxu0 0.0
    %6682 = vmatpush1.msra.mxu0 0.0
    %6683 = vmatprep.subr.mxu0 0.0
    %6684 = vmatpush1.msra.mxu0 0.0
    %6685 = vmatprep.subr.mxu0 0.0
    %6686 = vmatpush1.msra.mxu0 0.0
    %6687 = vmatprep.subr.mxu0 0.0
    %6688 = vmatpush1.msra.mxu0 0.0
    %6689 = vmatprep.subr.mxu0 0.0
    %6690 = vmatpush1.msra.mxu0 0.0
    %6691 = vmatprep.subr.mxu0 0.0
    %6692 = vmatpush1.msra.mxu0 0.0
    %6693 = vmatprep.subr.mxu0 0.0
    %6694 = vmatpush1.msra.mxu0 0.0
    %6695 = vmatprep.subr.mxu0 0.0
    %6696 = vmatpush1.msra.mxu0 0.0
    %6697 = vmatprep.subr.mxu0 0.0
    %6698 = vmatpush1.msra.mxu0 0.0
    %6699 = vmatprep.subr.mxu0 0.0
    %6700 = vmatpush1.msra.mxu0 0.0
    %6701 = vmatprep.subr.mxu0 0.0
    %6702 = vmatpush1.msra.mxu0 0.0
    %6703 = vmatprep.subr.mxu0 0.0
    %6704 = vmatpush1.msra.mxu0 0.0
    %6705 = vmatprep.subr.mxu0 0.0
    %6706 = vmatpush1.msra.mxu0 0.0
    %6707 = vmatprep.subr.mxu0 0.0
    %6708 = vmatpush1.msra.mxu0 0.0
    %6709 = vmatprep.subr.mxu0 0.0
    %6710 = vmatpush1.msra.mxu0 0.0
    %6711 = vmatprep.subr.mxu0 0.0
    %6712 = vmatpush1.msra.mxu0 0.0
    %6713 = vmatprep.subr.mxu0 0.0
    %6714 = vmatpush1.msra.mxu0 0.0
    %6715 = vmatprep.subr.mxu0 0.0
    %6716 = vmatpush1.msra.mxu0 0.0
    %6717 = vmatprep.subr.mxu0 0.0
    %6718 = vmatpush1.msra.mxu0 0.0
    %6719 = vmatprep.subr.mxu0 0.0
    %6720 = vmatpush1.msra.mxu0 0.0
    %6721 = vmatprep.subr.mxu0 0.0
    %6722 = vmatpush1.msra.mxu0 0.0
    %6723 = vmatprep.subr.mxu0 0.0
    %6724 = vmatpush1.msra.mxu0 0.0
    %6725 = vmatprep.subr.mxu0 0.0
    %6726 = vmatpush1.msra.mxu0 0.0
    %6727 = vmatprep.subr.mxu0 0.0
    %6728 = vmatpush1.msra.mxu0 0.0
    %6729 = vmatprep.subr.mxu0 0.0
    %6730 = vmatpush1.msra.mxu0 0.0
    %6731 = vmatprep.mubr.f32.mxu0 0.0
    %6732 = vmatmul.mubr.f32.gmra.mrb[0].mxu0 %v6665
    %v6733 = vpop.f32.mrb[0].mxu0
    %v6734 = vadd.f32 0.0, %v6733
    %v6735 = vpop.f32.mrb[0].mxu0
    %6736 = vdwg.mxu0
    %v6738 = vrot.slane %v6734, 4
    %v6740 = vadd.f32 %v6449, %v6738
    %v6741 = vxor.u32 %v6740, 2147483648
    %v6742 = vmul.f32 %v6741, 1.442695
    %v6743 = vpow.pop %v6742
    %v6744 = vadd.f32 %v6743, 1.0
    %v6745 = vrcp.pop %v6744
    %v6746 = vmul.f32 1.0, %v6745
    %v6747 = vtanh.pop %v6740
    %v6749 = vrot.slane %v6654, 6
    %v6751 = vmul.f32 %v6746, %v6749
    %6753 = vrot.lane.b32.xlu0 %v6747, 108
    %v6754 = vpop.permute.xlu0 %6753
    %v6756 = vmul.f32 %v6746, %v6754
    %6758 = vrot.lane.b32.xlu0 %v6756, 10
    %v6759 = vpop.permute.xlu0 %6758
    %v6761 = vadd.f32 %v6751, %v6759
    %v6762 = vtanh.pop %v6761
    %6764 = vrot.lane.b32.xlu0 %v6762, 20
    %v6765 = vpop.permute.xlu0 %6764
    %v6767 = vmul.f32 %v6746, %v6765
    %v6769 = vrot.slane %v6767, 4
    %6770 = vrot.lane.b32.xlu0 %v6769, 98
    %v6771 = vpop.permute.xlu0 %6770
    %v6772 = vsel %vm6374, %v6771, 0
    %6774 = vmatprep.subr.mxu0 0.0
    %6775 = vmatpush1.msra.mxu0 %v6452
    %6776 = vmatprep.subr.mxu0 0.0
    %6777 = vmatpush1.msra.mxu0 %v6458
    %6778 = vmatprep.subr.mxu0 0.0
    %6779 = vmatpush1.msra.mxu0 0.0
    %6780 = vmatprep.subr.mxu0 0.0
    %6781 = vmatpush1.msra.mxu0 0.0
    %6782 = vmatprep.subr.mxu0 0.0
    %6783 = vmatpush1.msra.mxu0 0.0
    %6784 = vmatprep.subr.mxu0 0.0
    %6785 = vmatpush1.msra.mxu0 0.0
    %6786 = vmatprep.subr.mxu0 0.0
    %6787 = vmatpush1.msra.mxu0 0.0
    %6788 = vmatprep.subr.mxu0 0.0
    %6789 = vmatpush1.msra.mxu0 0.0
    %6790 = vmatprep.subr.mxu0 0.0
    %6791 = vmatpush1.msra.mxu0 0.0
    %6792 = vmatprep.subr.mxu0 0.0
    %6793 = vmatpush1.msra.mxu0 0.0
    %6794 = vmatprep.subr.mxu0 0.0
    %6795 = vmatpush1.msra.mxu0 0.0
    %6796 = vmatprep.subr.mxu0 0.0
    %6797 = vmatpush1.msra.mxu0 0.0
    %6798 = vmatprep.subr.mxu0 0.0
    %6799 = vmatpush1.msra.mxu0 0.0
    %6800 = vmatprep.subr.mxu0 0.0
    %6801 = vmatpush1.msra.mxu0 0.0
    %6802 = vmatprep.subr.mxu0 0.0
    %6803 = vmatpush1.msra.mxu0 0.0
    %6804 = vmatprep.subr.mxu0 0.0
    %6805 = vmatpush1.msra.mxu0 0.0
    %6806 = vmatprep.subr.mxu0 0.0
    %6807 = vmatpush1.msra.mxu0 0.0
    %6808 = vmatprep.subr.mxu0 0.0
    %6809 = vmatpush1.msra.mxu0 0.0
    %6810 = vmatprep.subr.mxu0 0.0
    %6811 = vmatpush1.msra.mxu0 0.0
    %6812 = vmatprep.subr.mxu0 0.0
    %6813 = vmatpush1.msra.mxu0 0.0
    %6814 = vmatprep.subr.mxu0 0.0
    %6815 = vmatpush1.msra.mxu0 0.0
    %6816 = vmatprep.subr.mxu0 0.0
    %6817 = vmatpush1.msra.mxu0 0.0
    %6818 = vmatprep.subr.mxu0 0.0
    %6819 = vmatpush1.msra.mxu0 0.0
    %6820 = vmatprep.subr.mxu0 0.0
    %6821 = vmatpush1.msra.mxu0 0.0
    %6822 = vmatprep.subr.mxu0 0.0
    %6823 = vmatpush1.msra.mxu0 0.0
    %6824 = vmatprep.subr.mxu0 0.0
    %6825 = vmatpush1.msra.mxu0 0.0
    %6826 = vmatprep.subr.mxu0 0.0
    %6827 = vmatpush1.msra.mxu0 0.0
    %6828 = vmatprep.subr.mxu0 0.0
    %6829 = vmatpush1.msra.mxu0 0.0
    %6830 = vmatprep.subr.mxu0 0.0
    %6831 = vmatpush1.msra.mxu0 0.0
    %6832 = vmatprep.subr.mxu0 0.0
    %6833 = vmatpush1.msra.mxu0 0.0
    %6834 = vmatprep.subr.mxu0 0.0
    %6835 = vmatpush1.msra.mxu0 0.0
    %6836 = vmatprep.subr.mxu0 0.0
    %6837 = vmatpush1.msra.mxu0 0.0
    %6838 = vmatprep.mubr.f32.mxu0 0.0
    %6839 = vmatmul.mubr.f32.gmra.mrb[0].mxu0 %v6772
    %v6840 = vpop.f32.mrb[0].mxu0
    %v6841 = vadd.f32 0.0, %v6840
    %v6842 = vpop.f32.mrb[0].mxu0
    %6843 = vdwg.mxu0
    %v6845 = vrot.slane %v6841, 2
    %v6847 = vadd.f32 %v6449, %v6845
    %v6848 = vxor.u32 %v6847, 2147483648
    %v6849 = vmul.f32 %v6848, 1.442695
    %v6850 = vpow.pop %v6849
    %v6851 = vadd.f32 %v6850, 1.0
    %v6852 = vrcp.pop %v6851
    %v6853 = vmul.f32 1.0, %v6852
    %v6854 = vtanh.pop %v6847
    %v6856 = vrot.slane %v6761, 6
    %v6858 = vmul.f32 %v6853, %v6856
    %6860 = vrot.lane.b32.xlu0 %v6854, 108
    %v6861 = vpop.permute.xlu0 %6860
    %v6863 = vmul.f32 %v6853, %v6861
    %6865 = vrot.lane.b32.xlu0 %v6863, 10
    %v6866 = vpop.permute.xlu0 %6865
    %v6868 = vadd.f32 %v6858, %v6866
    %v6869 = vtanh.pop %v6868
    %6871 = vrot.lane.b32.xlu0 %v6869, 20
    %v6872 = vpop.permute.xlu0 %6871
    %v6874 = vmul.f32 %v6853, %v6872
    %v6875 = vmul.f32 %v6874, %v6874
    %6877 = vrot.lane.b32.xlu0 %v6875, 98
    %v6878 = vpop.permute.xlu0 %6877
    %vm6880 = vcmask 80902
    %v6881 = vsel %vm6880, %v6878, 0.0
    %6882 = vadd.xlane.f32.xlu0 %v6881
    %v6883 = vpop.xlane.xlu0 %6882
    %v6884 = vmax.f32 %v6883, 1e-24
    %v6885 = vrsqrt.pop %v6884
    %v6886 = vmul.f32 %v6874, %v6885
    %v6887 = vmul.f32 %v6364, %v6364
    %vm6888 = vcmask 78848
    %v6889 = vsel %vm6888, %v6887, 0.0
    %6890 = vadd.xlane.f32.xlu0 %v6889
    %v6891 = vpop.xlane.xlu0 %6890
    %v6892 = vmax.f32 %v6891, 1e-24
    %v6893 = vrsqrt.pop %v6892
    %v6894 = vmul.f32 %v6364, %v6893
    %v6896 = vrot.slane %v6886, 6
    %6897 = vrot.lane.b32.xlu0 %v6896, 98
    %v6898 = vpop.permute.xlu0 %6897
    %v6899 = vsel %vm6374, %v6898, 0
    %v6902 = vsel %vm6374, %v6894, 0
    %6904 = vmatprep.subr.mxu0 0.0
    %6905 = vmatpush1.xpose.msra.mxu0 %v6902
    %6906 = vmatprep.subr.mxu0 0.0
    %6907 = vmatpush1.xpose.msra.mxu0 0.0
    %6908 = vmatprep.subr.mxu0 0.0
    %6909 = vmatpush1.xpose.msra.mxu0 0.0
    %6910 = vmatprep.subr.mxu0 0.0
    %6911 = vmatpush1.xpose.msra.mxu0 0.0
    %6912 = vmatprep.subr.mxu0 0.0
    %6913 = vmatpush1.xpose.msra.mxu0 0.0
    %6914 = vmatprep.subr.mxu0 0.0
    %6915 = vmatpush1.xpose.msra.mxu0 0.0
    %6916 = vmatprep.subr.mxu0 0.0
    %6917 = vmatpush1.xpose.msra.mxu0 0.0
    %6918 = vmatprep.subr.mxu0 0.0
    %6919 = vmatpush1.xpose.msra.mxu0 0.0
    %6920 = vmatprep.subr.mxu0 0.0
    %6921 = vmatpush1.xpose.msra.mxu0 0.0
    %6922 = vmatprep.subr.mxu0 0.0
    %6923 = vmatpush1.xpose.msra.mxu0 0.0
    %6924 = vmatprep.subr.mxu0 0.0
    %6925 = vmatpush1.xpose.msra.mxu0 0.0
    %6926 = vmatprep.subr.mxu0 0.0
    %6927 = vmatpush1.xpose.msra.mxu0 0.0
    %6928 = vmatprep.subr.mxu0 0.0
    %6929 = vmatpush1.xpose.msra.mxu0 0.0
    %6930 = vmatprep.subr.mxu0 0.0
    %6931 = vmatpush1.xpose.msra.mxu0 0.0
    %6932 = vmatprep.subr.mxu0 0.0
    %6933 = vmatpush1.xpose.msra.mxu0 0.0
    %6934 = vmatprep.subr.mxu0 0.0
    %6935 = vmatpush1.xpose.msra.mxu0 0.0
    %6936 = vmatprep.subr.mxu0 0.0
    %6937 = vmatpush1.xpose.msra.mxu0 0.0
    %6938 = vmatprep.subr.mxu0 0.0
    %6939 = vmatpush1.xpose.msra.mxu0 0.0
    %6940 = vmatprep.subr.mxu0 0.0
    %6941 = vmatpush1.xpose.msra.mxu0 0.0
    %6942 = vmatprep.subr.mxu0 0.0
    %6943 = vmatpush1.xpose.msra.mxu0 0.0
    %6944 = vmatprep.subr.mxu0 0.0
    %6945 = vmatpush1.xpose.msra.mxu0 0.0
    %6946 = vmatprep.subr.mxu0 0.0
    %6947 = vmatpush1.xpose.msra.mxu0 0.0
    %6948 = vmatprep.subr.mxu0 0.0
    %6949 = vmatpush1.xpose.msra.mxu0 0.0
    %6950 = vmatprep.subr.mxu0 0.0
    %6951 = vmatpush1.xpose.msra.mxu0 0.0
    %6952 = vmatprep.subr.mxu0 0.0
    %6953 = vmatpush1.xpose.msra.mxu0 0.0
    %6954 = vmatprep.subr.mxu0 0.0
    %6955 = vmatpush1.xpose.msra.mxu0 0.0
    %6956 = vmatprep.subr.mxu0 0.0
    %6957 = vmatpush1.xpose.msra.mxu0 0.0
    %6958 = vmatprep.subr.mxu0 0.0
    %6959 = vmatpush1.xpose.msra.mxu0 0.0
    %6960 = vmatprep.subr.mxu0 0.0
    %6961 = vmatpush1.xpose.msra.mxu0 0.0
    %6962 = vmatprep.subr.mxu0 0.0
    %6963 = vmatpush1.xpose.msra.mxu0 0.0
    %6964 = vmatprep.subr.mxu0 0.0
    %6965 = vmatpush1.xpose.msra.mxu0 0.0
    %6966 = vmatprep.subr.mxu0 0.0
    %6967 = vmatpush1.xpose.msra.mxu0 0.0
    %6968 = vmatprep.mubr.f32.mxu0 0.0
    %6969 = vmatmul.mubr.f32.gmra.mrb[0].mxu0 %v6899
    %v6970 = vpop.f32.mrb[0].mxu0
    %v6971 = vadd.f32 0.0, %v6970
    %v6972 = vpop.f32.mrb[0].mxu0
    %6973 = vdwg.mxu0
    %v6974 = vrot.slane %v6886, 7
    %6975 = vrot.lane.b32.xlu0 %v6974, 98
    %v6976 = vpop.permute.xlu0 %6975
    %v6977 = vrot.slane %v6894, 3
    %v6978 = vsel %vm6374, %v6976, 0
    %v6980 = vsel %vm6374, %v6977, 0
    %6982 = vmatprep.subr.mxu0 0.0
    %6983 = vmatpush1.xpose.msra.mxu0 %v6980
    %6984 = vmatprep.subr.mxu0 0.0
    %6985 = vmatpush1.xpose.msra.mxu0 0.0
    %6986 = vmatprep.subr.mxu0 0.0
    %6987 = vmatpush1.xpose.msra.mxu0 0.0
    %6988 = vmatprep.subr.mxu0 0.0
    %6989 = vmatpush1.xpose.msra.mxu0 0.0
    %6990 = vmatprep.subr.mxu0 0.0
    %6991 = vmatpush1.xpose.msra.mxu0 0.0
    %6992 = vmatprep.subr.mxu0 0.0
    %6993 = vmatpush1.xpose.msra.mxu0 0.0
    %6994 = vmatprep.subr.mxu0 0.0
    %6995 = vmatpush1.xpose.msra.mxu0 0.0
    %6996 = vmatprep.subr.mxu0 0.0
    %6997 = vmatpush1.xpose.msra.mxu0 0.0
    %6998 = vmatprep.subr.mxu0 0.0
    %6999 = vmatpush1.xpose.msra.mxu0 0.0
    %7000 = vmatprep.subr.mxu0 0.0
    %7001 = vmatpush1.xpose.msra.mxu0 0.0
    %7002 = vmatprep.subr.mxu0 0.0
    %7003 = vmatpush1.xpose.msra.mxu0 0.0
    %7004 = vmatprep.subr.mxu0 0.0
    %7005 = vmatpush1.xpose.msra.mxu0 0.0
    %7006 = vmatprep.subr.mxu0 0.0
    %7007 = vmatpush1.xpose.msra.mxu0 0.0
    %7008 = vmatprep.subr.mxu0 0.0
    %7009 = vmatpush1.xpose.msra.mxu0 0.0
    %7010 = vmatprep.subr.mxu0 0.0
    %7011 = vmatpush1.xpose.msra.mxu0 0.0
    %7012 = vmatprep.subr.mxu0 0.0
    %7013 = vmatpush1.xpose.msra.mxu0 0.0
    %7014 = vmatprep.subr.mxu0 0.0
    %7015 = vmatpush1.xpose.msra.mxu0 0.0
    %7016 = vmatprep.subr.mxu0 0.0
    %7017 = vmatpush1.xpose.msra.mxu0 0.0
    %7018 = vmatprep.subr.mxu0 0.0
    %7019 = vmatpush1.xpose.msra.mxu0 0.0
    %7020 = vmatprep.subr.mxu0 0.0
    %7021 = vmatpush1.xpose.msra.mxu0 0.0
    %7022 = vmatprep.subr.mxu0 0.0
    %7023 = vmatpush1.xpose.msra.mxu0 0.0
    %7024 = vmatprep.subr.mxu0 0.0
    %7025 = vmatpush1.xpose.msra.mxu0 0.0
    %7026 = vmatprep.subr.mxu0 0.0
    %7027 = vmatpush1.xpose.msra.mxu0 0.0
    %7028 = vmatprep.subr.mxu0 0.0
    %7029 = vmatpush1.xpose.msra.mxu0 0.0
    %7030 = vmatprep.subr.mxu0 0.0
    %7031 = vmatpush1.xpose.msra.mxu0 0.0
    %7032 = vmatprep.subr.mxu0 0.0
    %7033 = vmatpush1.xpose.msra.mxu0 0.0
    %7034 = vmatprep.subr.mxu0 0.0
    %7035 = vmatpush1.xpose.msra.mxu0 0.0
    %7036 = vmatprep.subr.mxu0 0.0
    %7037 = vmatpush1.xpose.msra.mxu0 0.0
    %7038 = vmatprep.subr.mxu0 0.0
    %7039 = vmatpush1.xpose.msra.mxu0 0.0
    %7040 = vmatprep.subr.mxu0 0.0
    %7041 = vmatpush1.xpose.msra.mxu0 0.0
    %7042 = vmatprep.subr.mxu0 0.0
    %7043 = vmatpush1.xpose.msra.mxu0 0.0
    %7044 = vmatprep.subr.mxu0 0.0
    %7045 = vmatpush1.xpose.msra.mxu0 0.0
    %7046 = vmatprep.mubr.f32.mxu0 0.0
    %7047 = vmatmul.mubr.f32.gmra.mrb[0].mxu0 %v6978
    %v7048 = vpop.f32.mrb[0].mxu0
    %v7049 = vadd.f32 0.0, %v7048
    %v7050 = vpop.f32.mrb[0].mxu0
    %7051 = vdwg.mxu0
    %v7053 = vrot.slane %v7049, 7
    %v7055 = vsel %vm1280, %v6971, %v7053
    %v7056 = vld [vmem:[%s12] sm:$0x3]
    %v7057 = vlaneseq
    %v7058 = vshrl.u32 %v7057, 7
    %v7059 = vsub.s32 0, %v7058
    %v7060 = vrot.slane %v7056, %v7059
    %7062 = vbcast.lane.b32.xlu0 %v7060, 256
    %v7063 = vpop.permute.xlu0 %7062
    %v7064 = vlaneseq
    %v7065 = vshrl.u32 %v7064, 7
    %v7066 = vsub.s32 1, %v7065
    %v7067 = vrot.slane %v7056, %v7066
    %7069 = vbcast.lane.b32.xlu0 %v7067, 256
    %v7070 = vpop.permute.xlu0 %7069
    %v7071 = vld [vmem:[%s13] sm:$0x1]
    %v7073 = vlaneseq
    %v7074 = vshrl.u32 %v7073, 7
    %v7075 = vsub.s32 0, %v7074
    %v7076 = vrot.slane %v7071, %v7075
    %v7078 = vmul.f32 %v7063, %v7076
    %v7079 = vmul.f32 %v7070, %v7076
    %v7080 = vld [vmem:[%s14] sm:$0x1]
    %v7082 = vlaneseq
    %v7083 = vshrl.u32 %v7082, 7
    %v7084 = vsub.s32 0, %v7083
    %v7085 = vrot.slane %v7080, %v7084
    %v7087 = vadd.f32 %v7078, %v7085
    %v7088 = vadd.f32 %v7079, %v7085
    %v7089 = vmax.f32 %v7087, 0.0
    %v7090 = vmax.f32 %v7088, 0.0
    %v7091 = vld [vmem:[%s15] sm:$0x1]
    %v7093 = vlaneseq
    %v7094 = vshrl.u32 %v7093, 7
    %v7095 = vsub.s32 0, %v7094
    %v7096 = vrot.slane %v7091, %v7095
    %v7098 = vmul.f32 %v7089, %v7096
    %v7099 = vmul.f32 %v7090, %v7096
    %vm7100 = vcmask 518144
    %v7101 = vsel %vm7100, %v7098, 0.0
    %7102 = vadd.xlane.f32.xlu0 %v7101
    %v7103 = vpop.xlane.xlu0 %7102
    %v7104 = vsel %vm7100, %v7099, 0.0
    %7105 = vadd.xlane.f32.xlu0 %v7104
    %v7106 = vpop.xlane.xlu0 %7105
    %v7107 = vld [vmem:[#allocation6] sm:$0x1]
    %v7109 = vlaneseq
    %v7110 = vshrl.u32 %v7109, 7
    %v7111 = vsub.s32 0, %v7110
    %v7112 = vrot.slane %v7107, %v7111
    %7113 = vset.pattern.permute.xlu0 0
    %7114 = vperm.xlu0 %7113, %v7112
    %v7115 = vpop.permute.xlu0 %7114
    %v7117 = vadd.f32 %v7103, %v7115
    %v7118 = vadd.f32 %v7106, %v7115
    %v7119 = vmax.f32 %v7117, 0.0
    %v7120 = vmax.f32 %v7118, 0.0
    %v7123 = vlaneseq
    %v7124 = vand.u32 %v7123, 127
    %v7125 = vlaneseq
    %v7126 = vshrl.u32 %v7125, 7
    %v7127 = vsub.s32 %v7124, %v7126
    %v7128 = vrot.slane %v7119, %v7127
    %v7129 = vlaneseq
    %v7130 = vshrl.u32 %v7129, 7
    %v7131 = vsub.s32 %v7124, %v7130
    %v7132 = vrot.slane %v7120, %v7131
    %vm7133 = vcmask 1041409
    %v7134 = vsel %vm7133, %v7132, %v7128
    %v7136 = vmul.f32 %v7055, %v7134
    %vm7137 = vcmask 17408
    %v7138 = vsel %vm7137, %v7136, -inf
    %7139 = vmax.xlane.f32.xlu0 %v7138
    %v7140 = vpop.xlane.xlu0 %7139
    %v7141 = vsub.f32 %v7136, %v7140
    %v7142 = vmul.f32 %v7141, 1.442695
    %v7143 = vpow.pop %v7142
    %v7144 = vsel %vm7137, %v7143, 0.0
    %7145 = vadd.xlane.f32.xlu0 %v7144
    %v7146 = vpop.xlane.xlu0 %7145
    %v7147 = vrcp.pop %v7146
    %v7148 = vmul.f32 %v7143, %v7147
    %7149 = vst.msk [vmem:[#allocation7] sm:$0x3] %vm7137, %v7148
    // Predicated region
    $region100: #{_lambda_.1} parent=1 // pred_check
      _
    $region101: #{_lambda_.1} parent=1 // pred_check_branch
      %7151 = sbr.rel (0) target = $region103
    $region102: #{_lambda_.1} parent=1 // pred_region
      %s7153 = ssub.s32 32, 32
      %7154 = vsyncadd [#allocation8], %s7153
      %s7156 = sshll.u32 [#allocation7], 4
      %s7157 = int_to_ptr.vmem [resolvable:$true] %s7156
      %7159 = dma.vmem_to_hbm [thread:$0]  %s7157, 32, %s17, [#allocation8]
    $region103: #{_lambda_.1} parent=1 // pred_fallthru
      _
    // Predicated region
    $region104: #{_lambda_.1} parent=1 // pred_check
      _
    $region105: #{_lambda_.1} parent=1 // pred_check_branch
      %7161 = sbr.rel (0) target = $region107
    $region106: #{_lambda_.1} parent=1 // pred_region
      %7162 = dma.done [#allocation8], 32
    $region107: #{_lambda_.1} parent=1 // pred_fallthru
      _
    %7163 = vsyncpa [#allocation8], 1
  %7164 = vsyncmov [#allocation5]
  %s7165 = vpop.sfrf %7164
  %p7166 = scmp.eq.s32.totalorder %s7165, 0
  %p7167 = pneg %p7166
  %7169 = shalt.err (%p7167)

</llo_original>
